<compile_context>
chip_gen: v7x
topology: tpu7x:2x2x1
jax: 0.10.0
libtpu: 0.0.40
codegen_flags: <defaults>
</compile_context>

<pallas_src>
import functools

import jax
import jax.numpy as jnp
from jax.experimental import pallas as pl
from jax.experimental.pallas import tpu as pltpu


# ----------------------------- in-kernel helpers ------------------------------------

def _erf(u):
    # Abramowitz & Stegun 7.1.26 rational approximation, |error| <= 1.5e-7 (~f32 eps).
    # TODO(synk): swap for jax.lax.erf once a Mosaic erf lowering is guaranteed.
    au = jnp.where(u >= 0.0, u, -u)
    t = 1.0 / (1.0 + 0.3275911 * au)
    poly = t * (0.254829592 + t * (-0.284496736 + t * (1.421413741
             + t * (-1.453152027 + t * 1.061405429))))
    e = 1.0 - poly * jnp.exp(-au * au)
    return jnp.where(u >= 0.0, e, -e)


def _gelu_exact(x):
    # exact (erf-based) GELU, matching PyTorch nn.GELU(approximate='none')
    return 0.5 * x * (1.0 + _erf(x * 0.7071067811865476))


def _batchnorm(z, bn_ref):
    # Transpose -> BatchNorm1d(d_model) -> Transpose with training-mode batch statistics
    # over the rows (= bs * q_len), biased variance, eps=1e-5.  bn_ref rows: [gamma; beta].
    mean = jnp.mean(z, axis=0, keepdims=True)
    var = jnp.mean(jnp.square(z - mean), axis=0, keepdims=True)
    return (z - mean) * jax.lax.rsqrt(var + 1e-5) * bn_ref[0:1, :] + bn_ref[1:2, :]


# ----------------------------- Pallas kernels ---------------------------------------

def _embed_kernel(x_ref, w_ref, b_ref, pos_ref, o_ref, *, M, D):
    # rows 0:2M  -> patch embedding of [src ; tgt] + positional encoding
    # rows 2M:3M -> zeros (initial state of the cross-domain branch)
    u = (jnp.dot(x_ref[...], w_ref[...], preferred_element_type=jnp.float32)
         + b_ref[...] + pos_ref[...])
    o_ref[0:2 * M, :] = u.astype(o_ref.dtype)
    o_ref[2 * M:3 * M, :] = jnp.zeros((M, D), o_ref.dtype)


def _encoder_layer_kernel(*refs, H, dk, dv, scale, use_prev):
    """One TSTEncoderLayer branch per grid step (grid axis = src / tgt / cross branch).

    QKV projection, all attention heads, output projection, residual+BN, FFN (exact GELU)
    and the second residual+BN all stay in VMEM for the whole step.
    """
    if use_prev:
        (_, _, x_res_ref, xq_ref, xkv_ref, prev_ref, mask_ref,
         wqkv_ref, bqkv_ref, wo_ref, bo_ref, w1_ref, b1_ref, w2_ref, b2_ref,
         bn1_ref, bn2_ref, y_ref, sc_ref) = refs
    else:
        (_, _, x_res_ref, xq_ref, xkv_ref, mask_ref,
         wqkv_ref, bqkv_ref, wo_ref, bo_ref, w1_ref, b1_ref, w2_ref, b2_ref,
         bn1_ref, bn2_ref, y_ref, sc_ref) = refs
        prev_ref = None

    M, D = x_res_ref.shape
    hk = H * dk                                   # width of the fused Q (and K) block

    x_res = x_res_ref[...]                        # residual input of this branch   [M, D]
    mask = mask_ref[...]                          # block-diagonal additive mask    [M, M]
    wqkv = wqkv_ref[...]                          # [D, H*(dk+dk+dv)] = [Q | K | V]
    bqkv = bqkv_ref[...]                          # [1, H*(dk+dk+dv)]

    # fused projections: Q from the Q-routed rows, K|V from the KV-routed rows
    q_all = jnp.dot(xq_ref[...], wqkv[:, :hk],
                    preferred_element_type=jnp.float32) + bqkv[:, :hk]        # [M, H*dk]
    kv_all = jnp.dot(xkv_ref[...], wqkv[:, hk:],
                     preferred_element_type=jnp.float32) + bqkv[:, hk:]       # [M, H*(dk+dv)]

    wo = wo_ref[...]                              # [H*dv, D]
    attn_out = jnp.zeros((M, D), jnp.float32)
    for h in range(H):                            # static unroll over heads
        q = q_all[:, h * dk:(h + 1) * dk]                                     # [M, dk]
        k = kv_all[:, h * dk:(h + 1) * dk]                                    # [M, dk]
        v = kv_all[:, hk + h * dv: hk + (h + 1) * dv]                         # [M, dv]
        # scores = (q @ k^T) * scale   (NT contraction, stays on the MXU)
        s = jax.lax.dot_general(q, k, (((1,), (1,)), ((), ())),
                                preferred_element_type=jnp.float32) * scale
        if use_prev:
            s = s + prev_ref[0, h]                # residual attention: add previous raw scores
        sc_ref[0, h] = s.astype(sc_ref.dtype)     # raw scores -> next layer's `prev`
        sm = s + mask                             # keep attention within each batch block
        m = jnp.max(sm, axis=-1, keepdims=True)
        e = jnp.exp(sm - m)
        a = e / jnp.sum(e, axis=-1, keepdims=True)
        ctx = jnp.dot(a, v, preferred_element_type=jnp.float32)               # [M, dv]
        # accumulate the output projection head-by-head (== concat(heads) @ W_O)
        attn_out = attn_out + jnp.dot(ctx, wo[h * dv:(h + 1) * dv, :],
                                      preferred_element_type=jnp.float32)
    attn_out = attn_out + bo_ref[...]

    # post-norm residual blocks (pre_norm=False)
    z = _batchnorm(x_res + attn_out, bn1_ref)
    h1 = jnp.dot(z, w1_ref[...], preferred_element_type=jnp.float32) + b1_ref[...]
    f = jnp.dot(_gelu_exact(h1), w2_ref[...],
                preferred_element_type=jnp.float32) + b2_ref[...]
    y_ref[...] = _batchnorm(z + f, bn2_ref).astype(y_ref.dtype)


# ----------------------------- wrappers ----------------------------------------------

def embed_and_init(x_st, w_p, b_p, pos, M, d_model):
    """[src;tgt] patch embedding + positional encoding, plus the zero-initialised cross
    branch, all produced by a single pallas_call -> [3M, d_model]."""
    return pl.pallas_call(
        functools.partial(_embed_kernel, M=M, D=d_model),
        out_shape=jax.ShapeDtypeStruct((3 * M, d_model), x_st.dtype),
        grid=(1,),
        in_specs=[pl.BlockSpec(x_st.shape, lambda i: (0, 0)),
                  pl.BlockSpec(w_p.shape, lambda i: (0, 0)),
                  pl.BlockSpec((1, d_model), lambda i: (0, 0)),
                  pl.BlockSpec(pos.shape, lambda i: (0, 0))],
        out_specs=pl.BlockSpec((3 * M, d_model), lambda i: (0, 0)),
    )(x_st, w_p, b_p.reshape(1, d_model), pos)


def encoder_layer_fused(x_all, prev, mask_bias, p, *, n_heads):
    """One fused pallas_call for a whole encoder layer.

    x_all : [3M, D]   rows [src | tgt | cross]
    prev  : None or [3, H, M, M] raw scores from the previous layer
    returns (y_all [3M, D], scores [3, H, M, M])
    """
    M3, D = x_all.shape
    M = M3 // 3
    H = n_heads
    dk = p["wq"].shape[1] // H
    dv = p["wv"].shape[1] // H
    # _ScaledDotProductAttention: head_dim = d_model // n_heads (NOT d_k)
    scale = float(D // H) ** (-0.5)

    wqkv = jnp.concatenate([p["wq"], p["wk"], p["wv"]], axis=1)     # [D, H*(dk+dk+dv)]
    bqkv = jnp.concatenate([p["bq"], p["bk"], p["bv"]]).reshape(1, -1)
    bn1 = jnp.stack([p["bn1_w"], p["bn1_b"]])                        # [2, D]
    bn2 = jnp.stack([p["bn2_w"], p["bn2_b"]])

    use_prev = prev is not None

    # branch routing: Q rows come from branch qsel[i], K/V rows from branch kvsel[i]
    # (branch 0 = src self-attn, 1 = tgt self-attn, 2 = cross: Q from src, K/V from tgt)
    qsel = jnp.array([0, 1, 0], jnp.int32)
    kvsel = jnp.array([0, 1, 1], jnp.int32)

    def branch_map(i, qs, ks):
        return (i, 0)

    def q_map(i, qs, ks):
        return (qs[i], 0)

    def kv_map(i, qs, ks):
        return (ks[i], 0)

    def w_map(i, qs, ks):
        return (0, 0)

    def prev_map(i, qs, ks):
        return (i, 0, 0, 0)

    in_specs = [pl.BlockSpec((M, D), branch_map),      # residual input of this branch
                pl.BlockSpec((M, D), q_map),           # rows feeding Q
                pl.BlockSpec((M, D), kv_map)]          # rows feeding K / V
    inputs = [x_all, x_all, x_all]
    if use_prev:
        in_specs.append(pl.BlockSpec((1, H, M, M), prev_map))
        inputs.append(prev)
    in_specs += [pl.BlockSpec((M, M), w_map),
                 pl.BlockSpec(wqkv.shape, w_map),
                 pl.BlockSpec(bqkv.shape, w_map),
                 pl.BlockSpec(p["wo"].shape, w_map),
                 pl.BlockSpec((1, D), w_map),
                 pl.BlockSpec(p["w1"].shape, w_map),
                 pl.BlockSpec((1, p["w1"].shape[1]), w_map),
                 pl.BlockSpec(p["w2"].shape, w_map),
                 pl.BlockSpec((1, D), w_map),
                 pl.BlockSpec((2, D), w_map),
                 pl.BlockSpec((2, D), w_map)]
    inputs += [mask_bias, wqkv, bqkv, p["wo"], p["bo"].reshape(1, D),
               p["w1"], p["b1"].reshape(1, -1), p["w2"], p["b2"].reshape(1, D),
               bn1, bn2]

    kernel = functools.partial(_encoder_layer_kernel, H=H, dk=dk, dv=dv,
                               scale=scale, use_prev=use_prev)

    y, scores = pl.pallas_call(
        kernel,
        out_shape=(jax.ShapeDtypeStruct((3 * M, D), x_all.dtype),
                   jax.ShapeDtypeStruct((3, H, M, M), jnp.float32)),
        grid_spec=pltpu.PrefetchScalarGridSpec(
            num_scalar_prefetch=2,
            grid=(3,),
            in_specs=in_specs,
            out_specs=[pl.BlockSpec((M, D), branch_map),
                       pl.BlockSpec((1, H, M, M), prev_map)],
        ),
        # branches are independent -> "parallel" lets v7x shard them over 2 TensorCores.
        # Per-step VMEM footprint is < 1 MiB, far below the 32 MiB scoped default (v7x: 64 MiB
        # physical), so no vmem_limit_bytes override is needed at these model dims.
        compiler_params=pltpu.CompilerParams(dimension_semantics=("parallel",)),
    )(qsel, kvsel, *inputs)
    return y, scores


def cdtsti_forward(src, tgt, params, *, n_heads):
    """src/tgt: [bs, n_vars, patch_len, patch_num] -> 3 x [bs, n_vars, d_model, patch_num]."""
    bs, nvars, patch_len, patch_num = src.shape
    d_model = params["w_p"].shape[1]
    B, L = bs * nvars, patch_num
    M = B * L

    def flat(x):  # permute(0,1,3,2) then merge leading dims (pure layout glue)
        return jnp.transpose(x, (0, 1, 3, 2)).reshape(M, patch_len)

    x_st = jnp.concatenate([flat(src), flat(tgt)], axis=0)           # [2M, patch_len]
    pos = jnp.tile(params["w_pos"], (2 * B, 1))                      # [2M, d_model]
    x_all = embed_and_init(x_st, params["w_p"], params["b_p"], pos, M, d_model)

    # block-diagonal additive mask: attention only within the same (bs*n_vars) element
    row = jnp.arange(M, dtype=jnp.int32) // L
    mask_bias = jnp.where(row[:, None] == row[None, :], 0.0, -1e30).astype(jnp.float32)

    prev = None
    for p in params["layers"]:
        x_all, prev = encoder_layer_fused(x_all, prev, mask_bias, p, n_heads=n_heads)

    def unpack(z):
        z = z.reshape(bs, nvars, L, d_model)
        return jnp.transpose(z, (0, 1, 3, 2))

    return unpack(x_all[0:M]), unpack(x_all[M:2 * M]), unpack(x_all[2 * M:3 * M])


# ----------------------------- pure-JAX reference ------------------------------------

_HI = jax.lax.Precision.HIGHEST


def _mm(a, b):
    return jnp.matmul(a, b, precision=_HI)


def reference_forward(src, tgt, params, *, n_heads):
    bs, nvars, patch_len, patch_num = src.shape
    d_model = params["w_p"].shape[1]
    B, L = bs * nvars, patch_num

    def embed(x):
        x = jnp.transpose(x, (0, 1, 3, 2)).reshape(B, L, patch_len)
        return _mm(x, params["w_p"]) + params["b_p"] + params["w_pos"][None]

    def mha(q_in, kv_in, prev, p):
        H = n_heads
        dk = p["wq"].shape[1] // H
        dv = p["wv"].shape[1] // H
        scale = float(d_model // H) ** (-0.5)
        q = (_mm(q_in, p["wq"]) + p["bq"]).reshape(B, L, H, dk).transpose(0, 2, 1, 3)
        k = (_mm(kv_in, p["wk"]) + p["bk"]).reshape(B, L, H, dk).transpose(0, 2, 1, 3)
        v = (_mm(kv_in, p["wv"]) + p["bv"]).reshape(B, L, H, dv).transpose(0, 2, 1, 3)
        scores = jnp.einsum("bhqd,bhkd->bhqk", q, k, precision=_HI) * scale
        if prev is not None:
            scores = scores + prev
        a = jax.nn.softmax(scores, axis=-1)
        o = jnp.einsum("bhqk,bhkd->bhqd", a, v, precision=_HI)
        o = o.transpose(0, 2, 1, 3).reshape(B, L, H * dv)
        return _mm(o, p["wo"]) + p["bo"], scores

    def bn(z, w, b):
        zf = z.reshape(B * L, d_model)
        mean = zf.mean(0, keepdims=True)
        var = ((zf - mean) ** 2).mean(0, keepdims=True)
        return ((zf - mean) / jnp.sqrt(var + 1e-5) * w + b).reshape(B, L, d_model)

    def block(x_res, attn, p):
        z = bn(x_res + attn, p["bn1_w"], p["bn1_b"])
        h = jax.nn.gelu(_mm(z, p["w1"]) + p["b1"], approximate=False)
        f = _mm(h, p["w2"]) + p["b2"]
        return bn(z + f, p["bn2_w"], p["bn2_b"])

    u_s, u_t = embed(src), embed(tgt)
    u_cd = jnp.zeros_like(u_s)
    pr_s = pr_t = pr_cd = None
    for p in params["layers"]:
        a_s, sc_s = mha(u_s, u_s, pr_s, p)
        a_t, sc_t = mha(u_t, u_t, pr_t, p)
        a_cd, sc_cd = mha(u_s, u_t, pr_cd, p)     # cross-domain: Q from src, K/V from tgt
        u_s, u_t, u_cd = block(u_s, a_s, p), block(u_t, a_t, p), block(u_cd, a_cd, p)
        pr_s, pr_t, pr_cd = sc_s, sc_t, sc_cd

    def unpack(z):
        return jnp.transpose(z.reshape(bs, nvars, L, d_model), (0, 1, 3, 2))

    return unpack(u_s), unpack(u_t), unpack(u_cd)


# ----------------------------- parameter init ----------------------------------------

def init_params(key, *, patch_len, patch_num, d_model, n_heads, d_k, d_v, d_ff, n_layers):
    def dense(k, fan_in, fan_out):
        kw, kb = jax.random.split(k)
        bound = 1.0 / (fan_in ** 0.5)
        w = jax.random.uniform(kw, (fan_in, fan_out), jnp.float32, -bound, bound)
        b = jax.random.uniform(kb, (fan_out,), jnp.float32, -bound, bound)
        return w, b

    keys = jax.random.split(key, 2 + n_layers)
    w_p, b_p = dense(keys[0], patch_len, d_model)                    # nn.Linear(patch_len, d_model)
    w_pos = jax.random.uniform(keys[1], (patch_num, d_model),        # positional_encoding('zeros')
                               jnp.float32, -0.02, 0.02)
    layers = []
    for li in range(n_layers):
        lk = jax.random.split(keys[2 + li], 6)
        wq, bq = dense(lk[0], d_model, d_k * n_heads)
        wk, bk = dense(lk[1], d_model, d_k * n_heads)
        wv, bv = dense(lk[2], d_model, d_v * n_heads)
        wo, bo = dense(lk[3], d_v * n_heads, d_model)
        w1, b1 = dense(lk[4], d_model, d_ff)
        w2, b2 = dense(lk[5], d_ff, d_model)
        layers.append(dict(
            wq=wq, bq=bq, wk=wk, bk=bk, wv=wv, bv=bv, wo=wo, bo=bo,
            w1=w1, b1=b1, w2=w2, b2=b2,
            bn1_w=jnp.ones((d_model,), jnp.float32),
            bn1_b=jnp.zeros((d_model,), jnp.float32),
            bn2_w=jnp.ones((d_model,), jnp.float32),
            bn2_b=jnp.zeros((d_model,), jnp.float32)))
    return dict(w_p=w_p, b_p=b_p, w_pos=w_pos, layers=layers)


# ----------------------------- main ---------------------------------------------------

if __name__ == "__main__":
    bs, n_vars = 2, 3
    patch_len, patch_num = 16, 8
    d_model, n_heads, d_ff, n_layers = 32, 4, 64, 2
    d_k = d_v = d_model // n_heads

    key = jax.random.PRNGKey(0)
    k_src, k_tgt, k_par = jax.random.split(key, 3)
    src = jax.random.normal(k_src, (bs, n_vars, patch_len, patch_num), jnp.float32)
    tgt = jax.random.normal(k_tgt, (bs, n_vars, patch_len, patch_num), jnp.float32)
    params = init_params(k_par, patch_len=patch_len, patch_num=patch_num,
                         d_model=d_model, n_heads=n_heads, d_k=d_k, d_v=d_v,
                         d_ff=d_ff, n_layers=n_layers)

    fwd = jax.jit(functools.partial(cdtsti_forward, n_heads=n_heads))
    src_z, tgt_z, cross_z = fwd(src, tgt, params)
    jax.block_until_ready((src_z, tgt_z, cross_z))

    ref_s, ref_t, ref_cd = jax.jit(functools.partial(reference_forward, n_heads=n_heads))(
        src, tgt, params)
    jax.block_until_ready((ref_s, ref_t, ref_cd))

    for got, want in ((src_z, ref_s), (tgt_z, ref_t), (cross_z, ref_cd)):
        assert got.shape == (bs, n_vars, d_model, patch_num)
        assert bool(jnp.all(jnp.isfinite(got)))
        err = float(jnp.max(jnp.abs(got - want)))
        assert err < 1e-2, f"kernel/reference mismatch: max abs err {err}"
    print("KERNEL_OK")
</pallas_src>

<mosaic_0001>
module attributes {stable_mosaic.version = 11 : i64} {
  func.func @_embed_kernel(%arg0: i32, %arg1: memref<96x16xf32, #tpu.memory_space<vmem>>, %arg2: memref<16x32xf32, #tpu.memory_space<vmem>>, %arg3: memref<1x32xf32, #tpu.memory_space<vmem>>, %arg4: memref<96x32xf32, #tpu.memory_space<vmem>>, %arg5: memref<144x32xf32, #tpu.memory_space<vmem>>) attributes {dimension_semantics = [#tpu.dimension_semantics<arbitrary>], iteration_bounds = array<i64: 1>, scalar_prefetch = 0 : i64, scratch_operands = 0 : i64, tpu.core_type = #tpu.core_type<tc>, window_params = [{pipeline_mode = #tpu.pipeline_mode<synchronous>, transform_indices = @transform_0, window_bounds = array<i64: 96, 16>}, {pipeline_mode = #tpu.pipeline_mode<synchronous>, transform_indices = @transform_1, window_bounds = array<i64: 16, 32>}, {pipeline_mode = #tpu.pipeline_mode<synchronous>, transform_indices = @transform_2, window_bounds = array<i64: 1, 32>}, {pipeline_mode = #tpu.pipeline_mode<synchronous>, transform_indices = @transform_3, window_bounds = array<i64: 96, 32>}, {pipeline_mode = #tpu.pipeline_mode<synchronous>, transform_indices = @transform_4, window_bounds = array<i64: 144, 32>}]} {
    %c0 = arith.constant 0 : index
    %c0_0 = arith.constant 0 : index
    %0 = vector.load %arg1[%c0, %c0_0] : memref<96x16xf32, #tpu.memory_space<vmem>>, vector<96x16xf32>
    %c0_1 = arith.constant 0 : index
    %c0_2 = arith.constant 0 : index
    %1 = vector.load %arg2[%c0_1, %c0_2] : memref<16x32xf32, #tpu.memory_space<vmem>>, vector<16x32xf32>
    %cst = arith.constant dense<0.000000e+00> : vector<96x32xf32>
    %2 = tpu.matmul %0, %1, %cst {dimension_numbers = #tpu.dot_dimension_numbers<[1], [0], [0], [1], [0, 0, 1, 1], [], []>} : vector<96x16xf32>, vector<16x32xf32>, vector<96x32xf32> -> vector<96x32xf32>
    %c0_3 = arith.constant 0 : index
    %c0_4 = arith.constant 0 : index
    %3 = vector.load %arg3[%c0_3, %c0_4] : memref<1x32xf32, #tpu.memory_space<vmem>>, vector<1x32xf32>
    %4 = vector.broadcast %3 : vector<1x32xf32> to vector<96x32xf32>
    %5 = arith.addf %2, %4 : vector<96x32xf32>
    %c0_5 = arith.constant 0 : index
    %c0_6 = arith.constant 0 : index
    %6 = vector.load %arg4[%c0_5, %c0_6] : memref<96x32xf32, #tpu.memory_space<vmem>>, vector<96x32xf32>
    %7 = arith.addf %5, %6 : vector<96x32xf32>
    %c0_7 = arith.constant 0 : index
    %c0_8 = arith.constant 0 : index
    %8 = vector.load %arg5[%c0_7, %c0_8] : memref<144x32xf32, #tpu.memory_space<vmem>>, vector<96x32xf32>
    tpu.vector_store %arg5[%c0_7, %c0_8], %7 {strides = array<i32>} : memref<144x32xf32, #tpu.memory_space<vmem>>, vector<96x32xf32>,
    %cst_9 = arith.constant 0.000000e+00 : f32
    %9 = vector.broadcast %cst_9 : f32 to vector<48x32xf32>
    %c96 = arith.constant 96 : index
    %c0_10 = arith.constant 0 : index
    %10 = vector.load %arg5[%c96, %c0_10] : memref<144x32xf32, #tpu.memory_space<vmem>>, vector<48x32xf32>
    tpu.vector_store %arg5[%c96, %c0_10], %9 {strides = array<i32>} : memref<144x32xf32, #tpu.memory_space<vmem>>, vector<48x32xf32>,
    return
  }
  func.func @transform_0(%arg0: i32) -> (i32, i32) {
    %c0_i32 = arith.constant 0 : i32
    %c0_i32_0 = arith.constant 0 : i32
    %c0_i32_1 = arith.constant 0 : i32
    return %c0_i32, %c0_i32_0 : i32, i32
  }
  func.func @transform_1(%arg0: i32) -> (i32, i32) {
    %c0_i32 = arith.constant 0 : i32
    %c0_i32_0 = arith.constant 0 : i32
    %c0_i32_1 = arith.constant 0 : i32
    return %c0_i32, %c0_i32_0 : i32, i32
  }
  func.func @transform_2(%arg0: i32) -> (i32, i32) {
    %c0_i32 = arith.constant 0 : i32
    %c0_i32_0 = arith.constant 0 : i32
    %c0_i32_1 = arith.constant 0 : i32
    return %c0_i32, %c0_i32_0 : i32, i32
  }
  func.func @transform_3(%arg0: i32) -> (i32, i32) {
    %c0_i32 = arith.constant 0 : i32
    %c0_i32_0 = arith.constant 0 : i32
    %c0_i32_1 = arith.constant 0 : i32
    return %c0_i32, %c0_i32_0 : i32, i32
  }
  func.func @transform_4(%arg0: i32) -> (i32, i32) {
    %c0_i32 = arith.constant 0 : i32
    %c0_i32_0 = arith.constant 0 : i32
    %c0_i32_1 = arith.constant 0 : i32
    return %c0_i32, %c0_i32_0 : i32, i32
  }
}

module attributes {stable_mosaic.version = 11 : i64} {
  func.func @_encoder_layer_kernel(%arg0: i32, %arg1: memref<3xi32, #tpu.memory_space<smem>>, %arg2: memref<3xi32, #tpu.memory_space<smem>>, %arg3: memref<48x32xf32, #tpu.memory_space<vmem>>, %arg4: memref<48x32xf32, #tpu.memory_space<vmem>>, %arg5: memref<48x32xf32, #tpu.memory_space<vmem>>, %arg6: memref<48x48xf32, #tpu.memory_space<vmem>>, %arg7: memref<32x96xf32, #tpu.memory_space<vmem>>, %arg8: memref<1x96xf32, #tpu.memory_space<vmem>>, %arg9: memref<32x32xf32, #tpu.memory_space<vmem>>, %arg10: memref<1x32xf32, #tpu.memory_space<vmem>>, %arg11: memref<32x64xf32, #tpu.memory_space<vmem>>, %arg12: memref<1x64xf32, #tpu.memory_space<vmem>>, %arg13: memref<64x32xf32, #tpu.memory_space<vmem>>, %arg14: memref<1x32xf32, #tpu.memory_space<vmem>>, %arg15: memref<2x32xf32, #tpu.memory_space<vmem>>, %arg16: memref<2x32xf32, #tpu.memory_space<vmem>>, %arg17: memref<48x32xf32, #tpu.memory_space<vmem>>, %arg18: memref<1x4x48x48xf32, #tpu.memory_space<vmem>>) attributes {dimension_semantics = [#tpu.dimension_semantics<parallel>], iteration_bounds = array<i64: 3>, scalar_prefetch = 2 : i64, scratch_operands = 0 : i64, tpu.core_type = #tpu.core_type<tc>, window_params = [{transform_indices = @transform_0, window_bounds = array<i64: 48, 32>}, {transform_indices = @transform_1, window_bounds = array<i64: 48, 32>}, {transform_indices = @transform_2, window_bounds = array<i64: 48, 32>}, {pipeline_mode = #tpu.pipeline_mode<synchronous>, transform_indices = @transform_3, window_bounds = array<i64: 48, 48>}, {pipeline_mode = #tpu.pipeline_mode<synchronous>, transform_indices = @transform_4, window_bounds = array<i64: 32, 96>}, {pipeline_mode = #tpu.pipeline_mode<synchronous>, transform_indices = @transform_5, window_bounds = array<i64: 1, 96>}, {pipeline_mode = #tpu.pipeline_mode<synchronous>, transform_indices = @transform_6, window_bounds = array<i64: 32, 32>}, {pipeline_mode = #tpu.pipeline_mode<synchronous>, transform_indices = @transform_7, window_bounds = array<i64: 1, 32>}, {pipeline_mode = #tpu.pipeline_mode<synchronous>, transform_indices = @transform_8, window_bounds = array<i64: 32, 64>}, {pipeline_mode = #tpu.pipeline_mode<synchronous>, transform_indices = @transform_9, window_bounds = array<i64: 1, 64>}, {pipeline_mode = #tpu.pipeline_mode<synchronous>, transform_indices = @transform_10, window_bounds = array<i64: 64, 32>}, {pipeline_mode = #tpu.pipeline_mode<synchronous>, transform_indices = @transform_11, window_bounds = array<i64: 1, 32>}, {pipeline_mode = #tpu.pipeline_mode<synchronous>, transform_indices = @transform_12, window_bounds = array<i64: 2, 32>}, {pipeline_mode = #tpu.pipeline_mode<synchronous>, transform_indices = @transform_13, window_bounds = array<i64: 2, 32>}, {transform_indices = @transform_14, window_bounds = array<i64: 48, 32>}, {transform_indices = @transform_15, window_bounds = array<i64: 1, 4, 48, 48>}]} {
    %c0 = arith.constant 0 : index
    %c0_0 = arith.constant 0 : index
    %0 = vector.load %arg3[%c0, %c0_0] : memref<48x32xf32, #tpu.memory_space<vmem>>, vector<48x32xf32>
    %c0_1 = arith.constant 0 : index
    %c0_2 = arith.constant 0 : index
    %1 = vector.load %arg6[%c0_1, %c0_2] : memref<48x48xf32, #tpu.memory_space<vmem>>, vector<48x48xf32>
    %c0_3 = arith.constant 0 : index
    %c0_4 = arith.constant 0 : index
    %2 = vector.load %arg7[%c0_3, %c0_4] : memref<32x96xf32, #tpu.memory_space<vmem>>, vector<32x96xf32>
    %c0_5 = arith.constant 0 : index
    %c0_6 = arith.constant 0 : index
    %3 = vector.load %arg8[%c0_5, %c0_6] : memref<1x96xf32, #tpu.memory_space<vmem>>, vector<1x96xf32>
    %c0_7 = arith.constant 0 : index
    %c0_8 = arith.constant 0 : index
    %4 = vector.load %arg4[%c0_7, %c0_8] : memref<48x32xf32, #tpu.memory_space<vmem>>, vector<48x32xf32>
    %5 = vector.extract_strided_slice %2 {offsets = [0, 0], sizes = [32, 32], strides = [1, 1]} : vector<32x96xf32> to vector<32x32xf32>
    %cst = arith.constant dense<0.000000e+00> : vector<48x32xf32>
    %6 = tpu.matmul %4, %5, %cst {dimension_numbers = #tpu.dot_dimension_numbers<[1], [0], [0], [1], [0, 0, 1, 1], [], []>} : vector<48x32xf32>, vector<32x32xf32>, vector<48x32xf32> -> vector<48x32xf32>
    %7 = vector.extract_strided_slice %3 {offsets = [0, 0], sizes = [1, 32], strides = [1, 1]} : vector<1x96xf32> to vector<1x32xf32>
    %8 = vector.broadcast %7 : vector<1x32xf32> to vector<48x32xf32>
    %9 = arith.addf %6, %8 : vector<48x32xf32>
    %c0_9 = arith.constant 0 : index
    %c0_10 = arith.constant 0 : index
    %10 = vector.load %arg5[%c0_9, %c0_10] : memref<48x32xf32, #tpu.memory_space<vmem>>, vector<48x32xf32>
    %11 = vector.extract_strided_slice %2 {offsets = [0, 32], sizes = [32, 64], strides = [1, 1]} : vector<32x96xf32> to vector<32x64xf32>
    %cst_11 = arith.constant dense<0.000000e+00> : vector<48x64xf32>
    %12 = tpu.matmul %10, %11, %cst_11 {dimension_numbers = #tpu.dot_dimension_numbers<[1], [0], [0], [1], [0, 0, 1, 1], [], []>} : vector<48x32xf32>, vector<32x64xf32>, vector<48x64xf32> -> vector<48x64xf32>
    %13 = vector.extract_strided_slice %3 {offsets = [0, 32], sizes = [1, 64], strides = [1, 1]} : vector<1x96xf32> to vector<1x64xf32>
    %14 = vector.broadcast %13 : vector<1x64xf32> to vector<48x64xf32>
    %15 = arith.addf %12, %14 : vector<48x64xf32>
    %c0_12 = arith.constant 0 : index
    %c0_13 = arith.constant 0 : index
    %16 = vector.load %arg9[%c0_12, %c0_13] : memref<32x32xf32, #tpu.memory_space<vmem>>, vector<32x32xf32>
    %cst_14 = arith.constant 0.000000e+00 : f32
    %17 = vector.broadcast %cst_14 : f32 to vector<48x32xf32>
    %18 = vector.extract_strided_slice %9 {offsets = [0, 0], sizes = [48, 8], strides = [1, 1]} : vector<48x32xf32> to vector<48x8xf32>
    %19 = vector.extract_strided_slice %15 {offsets = [0, 0], sizes = [48, 8], strides = [1, 1]} : vector<48x64xf32> to vector<48x8xf32>
    %20 = vector.extract_strided_slice %15 {offsets = [0, 32], sizes = [48, 8], strides = [1, 1]} : vector<48x64xf32> to vector<48x8xf32>
    %cst_15 = arith.constant dense<0.000000e+00> : vector<48x48xf32>
    %21 = tpu.matmul %18, %19, %cst_15 {dimension_numbers = #tpu.dot_dimension_numbers<[1], [1], [0], [0], [0, 0, 1, 0], [], []>} : vector<48x8xf32>, vector<48x8xf32>, vector<48x48xf32> -> vector<48x48xf32>
    %cst_16 = arith.constant 0.353553385 : f32
    %22 = vector.broadcast %cst_16 : f32 to vector<48x48xf32>
    %23 = arith.mulf %21, %22 : vector<48x48xf32>
    %c0_17 = arith.constant 0 : index
    %c0_18 = arith.constant 0 : index
    %c0_19 = arith.constant 0 : index
    %c0_20 = arith.constant 0 : index
    %24 = vector.load %arg18[%c0_17, %c0_18, %c0_19, %c0_20] : memref<1x4x48x48xf32, #tpu.memory_space<vmem>>, vector<1x1x48x48xf32>
    %25 = vector.shape_cast %24 : vector<1x1x48x48xf32> to vector<48x48xf32>
    %26 = vector.shape_cast %23 : vector<48x48xf32> to vector<1x1x48x48xf32>
    tpu.vector_store %arg18[%c0_17, %c0_18, %c0_19, %c0_20], %26 {strides = array<i32>} : memref<1x4x48x48xf32, #tpu.memory_space<vmem>>, vector<1x1x48x48xf32>,
    %27 = arith.addf %23, %1 : vector<48x48xf32>
    %cst_21 = arith.constant dense<0xFF800000> : vector<48xf32>
    %28 = vector.multi_reduction <maximumf>, %27, %cst_21 [1] : vector<48x48xf32> to vector<48xf32>
    %29 = vector.shape_cast %28 : vector<48xf32> to vector<48x1xf32>
    %30 = vector.broadcast %29 : vector<48x1xf32> to vector<48x48xf32>
    %31 = arith.subf %27, %30 : vector<48x48xf32>
    %32 = math.exp %31 : vector<48x48xf32>
    %cst_22 = arith.constant dense<0.000000e+00> : vector<48xf32>
    %33 = vector.multi_reduction <add>, %32, %cst_22 [1] : vector<48x48xf32> to vector<48xf32>
    %34 = vector.shape_cast %33 : vector<48xf32> to vector<48x1xf32>
    %35 = vector.broadcast %34 : vector<48x1xf32> to vector<48x48xf32>
    %36 = arith.divf %32, %35 : vector<48x48xf32>
    %cst_23 = arith.constant dense<0.000000e+00> : vector<48x8xf32>
    %37 = tpu.matmul %36, %20, %cst_23 {dimension_numbers = #tpu.dot_dimension_numbers<[1], [0], [0], [1], [0, 0, 1, 1], [], []>} : vector<48x48xf32>, vector<48x8xf32>, vector<48x8xf32> -> vector<48x8xf32>
    %38 = vector.extract_strided_slice %16 {offsets = [0, 0], sizes = [8, 32], strides = [1, 1]} : vector<32x32xf32> to vector<8x32xf32>
    %cst_24 = arith.constant dense<0.000000e+00> : vector<48x32xf32>
    %39 = tpu.matmul %37, %38, %cst_24 {dimension_numbers = #tpu.dot_dimension_numbers<[1], [0], [0], [1], [0, 0, 1, 1], [], []>} : vector<48x8xf32>, vector<8x32xf32>, vector<48x32xf32> -> vector<48x32xf32>
    %40 = arith.addf %17, %39 : vector<48x32xf32>
    %41 = vector.extract_strided_slice %9 {offsets = [0, 8], sizes = [48, 8], strides = [1, 1]} : vector<48x32xf32> to vector<48x8xf32>
    %42 = vector.extract_strided_slice %15 {offsets = [0, 8], sizes = [48, 8], strides = [1, 1]} : vector<48x64xf32> to vector<48x8xf32>
    %43 = vector.extract_strided_slice %15 {offsets = [0, 40], sizes = [48, 8], strides = [1, 1]} : vector<48x64xf32> to vector<48x8xf32>
    %cst_25 = arith.constant dense<0.000000e+00> : vector<48x48xf32>
    %44 = tpu.matmul %41, %42, %cst_25 {dimension_numbers = #tpu.dot_dimension_numbers<[1], [1], [0], [0], [0, 0, 1, 0], [], []>} : vector<48x8xf32>, vector<48x8xf32>, vector<48x48xf32> -> vector<48x48xf32>
    %cst_26 = arith.constant 0.353553385 : f32
    %45 = vector.broadcast %cst_26 : f32 to vector<48x48xf32>
    %46 = arith.mulf %44, %45 : vector<48x48xf32>
    %c0_27 = arith.constant 0 : index
    %c1 = arith.constant 1 : index
    %c0_28 = arith.constant 0 : index
    %c0_29 = arith.constant 0 : index
    %47 = vector.load %arg18[%c0_27, %c1, %c0_28, %c0_29] : memref<1x4x48x48xf32, #tpu.memory_space<vmem>>, vector<1x1x48x48xf32>
    %48 = vector.shape_cast %47 : vector<1x1x48x48xf32> to vector<48x48xf32>
    %49 = vector.shape_cast %46 : vector<48x48xf32> to vector<1x1x48x48xf32>
    tpu.vector_store %arg18[%c0_27, %c1, %c0_28, %c0_29], %49 {strides = array<i32>} : memref<1x4x48x48xf32, #tpu.memory_space<vmem>>, vector<1x1x48x48xf32>,
    %50 = arith.addf %46, %1 : vector<48x48xf32>
    %cst_30 = arith.constant dense<0xFF800000> : vector<48xf32>
    %51 = vector.multi_reduction <maximumf>, %50, %cst_30 [1] : vector<48x48xf32> to vector<48xf32>
    %52 = vector.shape_cast %51 : vector<48xf32> to vector<48x1xf32>
    %53 = vector.broadcast %52 : vector<48x1xf32> to vector<48x48xf32>
    %54 = arith.subf %50, %53 : vector<48x48xf32>
    %55 = math.exp %54 : vector<48x48xf32>
    %cst_31 = arith.constant dense<0.000000e+00> : vector<48xf32>
    %56 = vector.multi_reduction <add>, %55, %cst_31 [1] : vector<48x48xf32> to vector<48xf32>
    %57 = vector.shape_cast %56 : vector<48xf32> to vector<48x1xf32>
    %58 = vector.broadcast %57 : vector<48x1xf32> to vector<48x48xf32>
    %59 = arith.divf %55, %58 : vector<48x48xf32>
    %cst_32 = arith.constant dense<0.000000e+00> : vector<48x8xf32>
    %60 = tpu.matmul %59, %43, %cst_32 {dimension_numbers = #tpu.dot_dimension_numbers<[1], [0], [0], [1], [0, 0, 1, 1], [], []>} : vector<48x48xf32>, vector<48x8xf32>, vector<48x8xf32> -> vector<48x8xf32>
    %61 = vector.extract_strided_slice %16 {offsets = [8, 0], sizes = [8, 32], strides = [1, 1]} : vector<32x32xf32> to vector<8x32xf32>
    %cst_33 = arith.constant dense<0.000000e+00> : vector<48x32xf32>
    %62 = tpu.matmul %60, %61, %cst_33 {dimension_numbers = #tpu.dot_dimension_numbers<[1], [0], [0], [1], [0, 0, 1, 1], [], []>} : vector<48x8xf32>, vector<8x32xf32>, vector<48x32xf32> -> vector<48x32xf32>
    %63 = arith.addf %40, %62 : vector<48x32xf32>
    %64 = vector.extract_strided_slice %9 {offsets = [0, 16], sizes = [48, 8], strides = [1, 1]} : vector<48x32xf32> to vector<48x8xf32>
    %65 = vector.extract_strided_slice %15 {offsets = [0, 16], sizes = [48, 8], strides = [1, 1]} : vector<48x64xf32> to vector<48x8xf32>
    %66 = vector.extract_strided_slice %15 {offsets = [0, 48], sizes = [48, 8], strides = [1, 1]} : vector<48x64xf32> to vector<48x8xf32>
    %cst_34 = arith.constant dense<0.000000e+00> : vector<48x48xf32>
    %67 = tpu.matmul %64, %65, %cst_34 {dimension_numbers = #tpu.dot_dimension_numbers<[1], [1], [0], [0], [0, 0, 1, 0], [], []>} : vector<48x8xf32>, vector<48x8xf32>, vector<48x48xf32> -> vector<48x48xf32>
    %cst_35 = arith.constant 0.353553385 : f32
    %68 = vector.broadcast %cst_35 : f32 to vector<48x48xf32>
    %69 = arith.mulf %67, %68 : vector<48x48xf32>
    %c0_36 = arith.constant 0 : index
    %c2 = arith.constant 2 : index
    %c0_37 = arith.constant 0 : index
    %c0_38 = arith.constant 0 : index
    %70 = vector.load %arg18[%c0_36, %c2, %c0_37, %c0_38] : memref<1x4x48x48xf32, #tpu.memory_space<vmem>>, vector<1x1x48x48xf32>
    %71 = vector.shape_cast %70 : vector<1x1x48x48xf32> to vector<48x48xf32>
    %72 = vector.shape_cast %69 : vector<48x48xf32> to vector<1x1x48x48xf32>
    tpu.vector_store %arg18[%c0_36, %c2, %c0_37, %c0_38], %72 {strides = array<i32>} : memref<1x4x48x48xf32, #tpu.memory_space<vmem>>, vector<1x1x48x48xf32>,
    %73 = arith.addf %69, %1 : vector<48x48xf32>
    %cst_39 = arith.constant dense<0xFF800000> : vector<48xf32>
    %74 = vector.multi_reduction <maximumf>, %73, %cst_39 [1] : vector<48x48xf32> to vector<48xf32>
    %75 = vector.shape_cast %74 : vector<48xf32> to vector<48x1xf32>
    %76 = vector.broadcast %75 : vector<48x1xf32> to vector<48x48xf32>
    %77 = arith.subf %73, %76 : vector<48x48xf32>
    %78 = math.exp %77 : vector<48x48xf32>
    %cst_40 = arith.constant dense<0.000000e+00> : vector<48xf32>
    %79 = vector.multi_reduction <add>, %78, %cst_40 [1] : vector<48x48xf32> to vector<48xf32>
    %80 = vector.shape_cast %79 : vector<48xf32> to vector<48x1xf32>
    %81 = vector.broadcast %80 : vector<48x1xf32> to vector<48x48xf32>
    %82 = arith.divf %78, %81 : vector<48x48xf32>
    %cst_41 = arith.constant dense<0.000000e+00> : vector<48x8xf32>
    %83 = tpu.matmul %82, %66, %cst_41 {dimension_numbers = #tpu.dot_dimension_numbers<[1], [0], [0], [1], [0, 0, 1, 1], [], []>} : vector<48x48xf32>, vector<48x8xf32>, vector<48x8xf32> -> vector<48x8xf32>
    %84 = vector.extract_strided_slice %16 {offsets = [16, 0], sizes = [8, 32], strides = [1, 1]} : vector<32x32xf32> to vector<8x32xf32>
    %cst_42 = arith.constant dense<0.000000e+00> : vector<48x32xf32>
    %85 = tpu.matmul %83, %84, %cst_42 {dimension_numbers = #tpu.dot_dimension_numbers<[1], [0], [0], [1], [0, 0, 1, 1], [], []>} : vector<48x8xf32>, vector<8x32xf32>, vector<48x32xf32> -> vector<48x32xf32>
    %86 = arith.addf %63, %85 : vector<48x32xf32>
    %87 = vector.extract_strided_slice %9 {offsets = [0, 24], sizes = [48, 8], strides = [1, 1]} : vector<48x32xf32> to vector<48x8xf32>
    %88 = vector.extract_strided_slice %15 {offsets = [0, 24], sizes = [48, 8], strides = [1, 1]} : vector<48x64xf32> to vector<48x8xf32>
    %89 = vector.extract_strided_slice %15 {offsets = [0, 56], sizes = [48, 8], strides = [1, 1]} : vector<48x64xf32> to vector<48x8xf32>
    %cst_43 = arith.constant dense<0.000000e+00> : vector<48x48xf32>
    %90 = tpu.matmul %87, %88, %cst_43 {dimension_numbers = #tpu.dot_dimension_numbers<[1], [1], [0], [0], [0, 0, 1, 0], [], []>} : vector<48x8xf32>, vector<48x8xf32>, vector<48x48xf32> -> vector<48x48xf32>
    %cst_44 = arith.constant 0.353553385 : f32
    %91 = vector.broadcast %cst_44 : f32 to vector<48x48xf32>
    %92 = arith.mulf %90, %91 : vector<48x48xf32>
    %c0_45 = arith.constant 0 : index
    %c3 = arith.constant 3 : index
    %c0_46 = arith.constant 0 : index
    %c0_47 = arith.constant 0 : index
    %93 = vector.load %arg18[%c0_45, %c3, %c0_46, %c0_47] : memref<1x4x48x48xf32, #tpu.memory_space<vmem>>, vector<1x1x48x48xf32>
    %94 = vector.shape_cast %93 : vector<1x1x48x48xf32> to vector<48x48xf32>
    %95 = vector.shape_cast %92 : vector<48x48xf32> to vector<1x1x48x48xf32>
    tpu.vector_store %arg18[%c0_45, %c3, %c0_46, %c0_47], %95 {strides = array<i32>} : memref<1x4x48x48xf32, #tpu.memory_space<vmem>>, vector<1x1x48x48xf32>,
    %96 = arith.addf %92, %1 : vector<48x48xf32>
    %cst_48 = arith.constant dense<0xFF800000> : vector<48xf32>
    %97 = vector.multi_reduction <maximumf>, %96, %cst_48 [1] : vector<48x48xf32> to vector<48xf32>
    %98 = vector.shape_cast %97 : vector<48xf32> to vector<48x1xf32>
    %99 = vector.broadcast %98 : vector<48x1xf32> to vector<48x48xf32>
    %100 = arith.subf %96, %99 : vector<48x48xf32>
    %101 = math.exp %100 : vector<48x48xf32>
    %cst_49 = arith.constant dense<0.000000e+00> : vector<48xf32>
    %102 = vector.multi_reduction <add>, %101, %cst_49 [1] : vector<48x48xf32> to vector<48xf32>
    %103 = vector.shape_cast %102 : vector<48xf32> to vector<48x1xf32>
    %104 = vector.broadcast %103 : vector<48x1xf32> to vector<48x48xf32>
    %105 = arith.divf %101, %104 : vector<48x48xf32>
    %cst_50 = arith.constant dense<0.000000e+00> : vector<48x8xf32>
    %106 = tpu.matmul %105, %89, %cst_50 {dimension_numbers = #tpu.dot_dimension_numbers<[1], [0], [0], [1], [0, 0, 1, 1], [], []>} : vector<48x48xf32>, vector<48x8xf32>, vector<48x8xf32> -> vector<48x8xf32>
    %107 = vector.extract_strided_slice %16 {offsets = [24, 0], sizes = [8, 32], strides = [1, 1]} : vector<32x32xf32> to vector<8x32xf32>
    %cst_51 = arith.constant dense<0.000000e+00> : vector<48x32xf32>
    %108 = tpu.matmul %106, %107, %cst_51 {dimension_numbers = #tpu.dot_dimension_numbers<[1], [0], [0], [1], [0, 0, 1, 1], [], []>} : vector<48x8xf32>, vector<8x32xf32>, vector<48x32xf32> -> vector<48x32xf32>
    %109 = arith.addf %86, %108 : vector<48x32xf32>
    %c0_52 = arith.constant 0 : index
    %c0_53 = arith.constant 0 : index
    %110 = vector.load %arg10[%c0_52, %c0_53] : memref<1x32xf32, #tpu.memory_space<vmem>>, vector<1x32xf32>
    %111 = vector.broadcast %110 : vector<1x32xf32> to vector<48x32xf32>
    %112 = arith.addf %109, %111 : vector<48x32xf32>
    %113 = arith.addf %0, %112 : vector<48x32xf32>
    %cst_54 = arith.constant dense<0.000000e+00> : vector<32xf32>
    %114 = vector.multi_reduction <add>, %113, %cst_54 [0] : vector<48x32xf32> to vector<32xf32>
    %115 = vector.shape_cast %114 : vector<32xf32> to vector<1x32xf32>
    %cst_55 = arith.constant 4.800000e+01 : f32
    %116 = vector.broadcast %cst_55 : f32 to vector<1x32xf32>
    %117 = arith.divf %115, %116 : vector<1x32xf32>
    %118 = vector.broadcast %117 : vector<1x32xf32> to vector<48x32xf32>
    %119 = arith.subf %113, %118 : vector<48x32xf32>
    %120 = arith.mulf %119, %119 : vector<48x32xf32>
    %cst_56 = arith.constant dense<0.000000e+00> : vector<32xf32>
    %121 = vector.multi_reduction <add>, %120, %cst_56 [0] : vector<48x32xf32> to vector<32xf32>
    %122 = vector.shape_cast %121 : vector<32xf32> to vector<1x32xf32>
    %cst_57 = arith.constant 4.800000e+01 : f32
    %123 = vector.broadcast %cst_57 : f32 to vector<1x32xf32>
    %124 = arith.divf %122, %123 : vector<1x32xf32>
    %125 = vector.broadcast %117 : vector<1x32xf32> to vector<48x32xf32>
    %126 = arith.subf %113, %125 : vector<48x32xf32>
    %cst_58 = arith.constant 9.99999974E-6 : f32
    %127 = vector.broadcast %cst_58 : f32 to vector<1x32xf32>
    %128 = arith.addf %124, %127 : vector<1x32xf32>
    %129 = math.rsqrt %128 : vector<1x32xf32>
    %130 = vector.broadcast %129 : vector<1x32xf32> to vector<48x32xf32>
    %131 = arith.mulf %126, %130 : vector<48x32xf32>
    %c0_59 = arith.constant 0 : index
    %c0_60 = arith.constant 0 : index
    %132 = vector.load %arg15[%c0_59, %c0_60] : memref<2x32xf32, #tpu.memory_space<vmem>>, vector<1x32xf32>
    %133 = vector.broadcast %132 : vector<1x32xf32> to vector<48x32xf32>
    %134 = arith.mulf %131, %133 : vector<48x32xf32>
    %c1_61 = arith.constant 1 : index
    %c0_62 = arith.constant 0 : index
    %135 = vector.load %arg15[%c1_61, %c0_62] : memref<2x32xf32, #tpu.memory_space<vmem>>, vector<1x32xf32>
    %136 = vector.broadcast %135 : vector<1x32xf32> to vector<48x32xf32>
    %137 = arith.addf %134, %136 : vector<48x32xf32>
    %c0_63 = arith.constant 0 : index
    %c0_64 = arith.constant 0 : index
    %138 = vector.load %arg11[%c0_63, %c0_64] : memref<32x64xf32, #tpu.memory_space<vmem>>, vector<32x64xf32>
    %cst_65 = arith.constant dense<0.000000e+00> : vector<48x64xf32>
    %139 = tpu.matmul %137, %138, %cst_65 {dimension_numbers = #tpu.dot_dimension_numbers<[1], [0], [0], [1], [0, 0, 1, 1], [], []>} : vector<48x32xf32>, vector<32x64xf32>, vector<48x64xf32> -> vector<48x64xf32>
    %c0_66 = arith.constant 0 : index
    %c0_67 = arith.constant 0 : index
    %140 = vector.load %arg12[%c0_66, %c0_67] : memref<1x64xf32, #tpu.memory_space<vmem>>, vector<1x64xf32>
    %141 = vector.broadcast %140 : vector<1x64xf32> to vector<48x64xf32>
    %142 = arith.addf %139, %141 : vector<48x64xf32>
    %cst_68 = arith.constant 5.000000e-01 : f32
    %143 = vector.broadcast %cst_68 : f32 to vector<48x64xf32>
    %144 = arith.mulf %143, %142 : vector<48x64xf32>
    %cst_69 = arith.constant 0.707106769 : f32
    %145 = vector.broadcast %cst_69 : f32 to vector<48x64xf32>
    %146 = arith.mulf %142, %145 : vector<48x64xf32>
    %cst_70 = arith.constant 0.000000e+00 : f32
    %147 = vector.broadcast %cst_70 : f32 to vector<48x64xf32>
    %148 = arith.cmpf oge, %146, %147 : vector<48x64xf32>
    %cst_71 = arith.constant 0.000000e+00 : f32
    %149 = vector.broadcast %cst_71 : f32 to vector<48x64xf32>
    %150 = arith.subf %149, %146 : vector<48x64xf32>
    %151 = arith.select %148, %146, %150 : vector<48x64xi1>, vector<48x64xf32>
    %cst_72 = arith.constant 0.327591091 : f32
    %152 = vector.broadcast %cst_72 : f32 to vector<48x64xf32>
    %153 = arith.mulf %152, %151 : vector<48x64xf32>
    %cst_73 = arith.constant 1.000000e+00 : f32
    %154 = vector.broadcast %cst_73 : f32 to vector<48x64xf32>
    %155 = arith.addf %154, %153 : vector<48x64xf32>
    %cst_74 = arith.constant 1.000000e+00 : f32
    %156 = vector.broadcast %cst_74 : f32 to vector<48x64xf32>
    %157 = arith.divf %156, %155 : vector<48x64xf32>
    %cst_75 = arith.constant 1.06140542 : f32
    %158 = vector.broadcast %cst_75 : f32 to vector<48x64xf32>
    %159 = arith.mulf %157, %158 : vector<48x64xf32>
    %cst_76 = arith.constant -1.45315206 : f32
    %160 = vector.broadcast %cst_76 : f32 to vector<48x64xf32>
    %161 = arith.addf %160, %159 : vector<48x64xf32>
    %162 = arith.mulf %157, %161 : vector<48x64xf32>
    %cst_77 = arith.constant 1.42141378 : f32
    %163 = vector.broadcast %cst_77 : f32 to vector<48x64xf32>
    %164 = arith.addf %163, %162 : vector<48x64xf32>
    %165 = arith.mulf %157, %164 : vector<48x64xf32>
    %cst_78 = arith.constant -0.284496725 : f32
    %166 = vector.broadcast %cst_78 : f32 to vector<48x64xf32>
    %167 = arith.addf %166, %165 : vector<48x64xf32>
    %168 = arith.mulf %157, %167 : vector<48x64xf32>
    %cst_79 = arith.constant 0.254829586 : f32
    %169 = vector.broadcast %cst_79 : f32 to vector<48x64xf32>
    %170 = arith.addf %169, %168 : vector<48x64xf32>
    %171 = arith.mulf %157, %170 : vector<48x64xf32>
    %cst_80 = arith.constant 0.000000e+00 : f32
    %172 = vector.broadcast %cst_80 : f32 to vector<48x64xf32>
    %173 = arith.subf %172, %151 : vector<48x64xf32>
    %174 = arith.mulf %173, %151 : vector<48x64xf32>
    %175 = math.exp %174 : vector<48x64xf32>
    %176 = arith.mulf %171, %175 : vector<48x64xf32>
    %cst_81 = arith.constant 1.000000e+00 : f32
    %177 = vector.broadcast %cst_81 : f32 to vector<48x64xf32>
    %178 = arith.subf %177, %176 : vector<48x64xf32>
    %cst_82 = arith.constant 0.000000e+00 : f32
    %179 = vector.broadcast %cst_82 : f32 to vector<48x64xf32>
    %180 = arith.cmpf oge, %146, %179 : vector<48x64xf32>
    %cst_83 = arith.constant 0.000000e+00 : f32
    %181 = vector.broadcast %cst_83 : f32 to vector<48x64xf32>
    %182 = arith.subf %181, %178 : vector<48x64xf32>
    %183 = arith.select %180, %178, %182 : vector<48x64xi1>, vector<48x64xf32>
    %cst_84 = arith.constant 1.000000e+00 : f32
    %184 = vector.broadcast %cst_84 : f32 to vector<48x64xf32>
    %185 = arith.addf %184, %183 : vector<48x64xf32>
    %186 = arith.mulf %144, %185 : vector<48x64xf32>
    %c0_85 = arith.constant 0 : index
    %c0_86 = arith.constant 0 : index
    %187 = vector.load %arg13[%c0_85, %c0_86] : memref<64x32xf32, #tpu.memory_space<vmem>>, vector<64x32xf32>
    %cst_87 = arith.constant dense<0.000000e+00> : vector<48x32xf32>
    %188 = tpu.matmul %186, %187, %cst_87 {dimension_numbers = #tpu.dot_dimension_numbers<[1], [0], [0], [1], [0, 0, 1, 1], [], []>} : vector<48x64xf32>, vector<64x32xf32>, vector<48x32xf32> -> vector<48x32xf32>
    %c0_88 = arith.constant 0 : index
    %c0_89 = arith.constant 0 : index
    %189 = vector.load %arg14[%c0_88, %c0_89] : memref<1x32xf32, #tpu.memory_space<vmem>>, vector<1x32xf32>
    %190 = vector.broadcast %189 : vector<1x32xf32> to vector<48x32xf32>
    %191 = arith.addf %188, %190 : vector<48x32xf32>
    %192 = arith.addf %137, %191 : vector<48x32xf32>
    %cst_90 = arith.constant dense<0.000000e+00> : vector<32xf32>
    %193 = vector.multi_reduction <add>, %192, %cst_90 [0] : vector<48x32xf32> to vector<32xf32>
    %194 = vector.shape_cast %193 : vector<32xf32> to vector<1x32xf32>
    %cst_91 = arith.constant 4.800000e+01 : f32
    %195 = vector.broadcast %cst_91 : f32 to vector<1x32xf32>
    %196 = arith.divf %194, %195 : vector<1x32xf32>
    %197 = vector.broadcast %196 : vector<1x32xf32> to vector<48x32xf32>
    %198 = arith.subf %192, %197 : vector<48x32xf32>
    %199 = arith.mulf %198, %198 : vector<48x32xf32>
    %cst_92 = arith.constant dense<0.000000e+00> : vector<32xf32>
    %200 = vector.multi_reduction <add>, %199, %cst_92 [0] : vector<48x32xf32> to vector<32xf32>
    %201 = vector.shape_cast %200 : vector<32xf32> to vector<1x32xf32>
    %cst_93 = arith.constant 4.800000e+01 : f32
    %202 = vector.broadcast %cst_93 : f32 to vector<1x32xf32>
    %203 = arith.divf %201, %202 : vector<1x32xf32>
    %204 = vector.broadcast %196 : vector<1x32xf32> to vector<48x32xf32>
    %205 = arith.subf %192, %204 : vector<48x32xf32>
    %cst_94 = arith.constant 9.99999974E-6 : f32
    %206 = vector.broadcast %cst_94 : f32 to vector<1x32xf32>
    %207 = arith.addf %203, %206 : vector<1x32xf32>
    %208 = math.rsqrt %207 : vector<1x32xf32>
    %209 = vector.broadcast %208 : vector<1x32xf32> to vector<48x32xf32>
    %210 = arith.mulf %205, %209 : vector<48x32xf32>
    %c0_95 = arith.constant 0 : index
    %c0_96 = arith.constant 0 : index
    %211 = vector.load %arg16[%c0_95, %c0_96] : memref<2x32xf32, #tpu.memory_space<vmem>>, vector<1x32xf32>
    %212 = vector.broadcast %211 : vector<1x32xf32> to vector<48x32xf32>
    %213 = arith.mulf %210, %212 : vector<48x32xf32>
    %c1_97 = arith.constant 1 : index
    %c0_98 = arith.constant 0 : index
    %214 = vector.load %arg16[%c1_97, %c0_98] : memref<2x32xf32, #tpu.memory_space<vmem>>, vector<1x32xf32>
    %215 = vector.broadcast %214 : vector<1x32xf32> to vector<48x32xf32>
    %216 = arith.addf %213, %215 : vector<48x32xf32>
    %c0_99 = arith.constant 0 : index
    %c0_100 = arith.constant 0 : index
    %217 = vector.load %arg17[%c0_99, %c0_100] : memref<48x32xf32, #tpu.memory_space<vmem>>, vector<48x32xf32>
    tpu.vector_store %arg17[%c0_99, %c0_100], %216 {strides = array<i32>} : memref<48x32xf32, #tpu.memory_space<vmem>>, vector<48x32xf32>,
    return
  }
  func.func @transform_0(%arg0: i32, %arg1: memref<3xi32, #tpu.memory_space<smem>>, %arg2: memref<3xi32, #tpu.memory_space<smem>>) -> (i32, i32) {
    %c0_i32 = arith.constant 0 : i32
    %c0_i32_0 = arith.constant 0 : i32
    return %arg0, %c0_i32 : i32, i32
  }
  func.func @transform_1(%arg0: i32, %arg1: memref<3xi32, #tpu.memory_space<smem>>, %arg2: memref<3xi32, #tpu.memory_space<smem>>) -> (i32, i32) {
    %0 = arith.index_cast %arg0 : i32 to index
    %1 = memref.load %arg1[%0] : memref<3xi32, #tpu.memory_space<smem>>
    %c0_i32 = arith.constant 0 : i32
    %c0_i32_0 = arith.constant 0 : i32
    return %1, %c0_i32 : i32, i32
  }
  func.func @transform_2(%arg0: i32, %arg1: memref<3xi32, #tpu.memory_space<smem>>, %arg2: memref<3xi32, #tpu.memory_space<smem>>) -> (i32, i32) {
    %0 = arith.index_cast %arg0 : i32 to index
    %1 = memref.load %arg2[%0] : memref<3xi32, #tpu.memory_space<smem>>
    %c0_i32 = arith.constant 0 : i32
    %c0_i32_0 = arith.constant 0 : i32
    return %1, %c0_i32 : i32, i32
  }
  func.func @transform_3(%arg0: i32, %arg1: memref<3xi32, #tpu.memory_space<smem>>, %arg2: memref<3xi32, #tpu.memory_space<smem>>) -> (i32, i32) {
    %c0_i32 = arith.constant 0 : i32
    %c0_i32_0 = arith.constant 0 : i32
    %c0_i32_1 = arith.constant 0 : i32
    return %c0_i32, %c0_i32_0 : i32, i32
  }
  func.func @transform_4(%arg0: i32, %arg1: memref<3xi32, #tpu.memory_space<smem>>, %arg2: memref<3xi32, #tpu.memory_space<smem>>) -> (i32, i32) {
    %c0_i32 = arith.constant 0 : i32
    %c0_i32_0 = arith.constant 0 : i32
    %c0_i32_1 = arith.constant 0 : i32
    return %c0_i32, %c0_i32_0 : i32, i32
  }
  func.func @transform_5(%arg0: i32, %arg1: memref<3xi32, #tpu.memory_space<smem>>, %arg2: memref<3xi32, #tpu.memory_space<smem>>) -> (i32, i32) {
    %c0_i32 = arith.constant 0 : i32
    %c0_i32_0 = arith.constant 0 : i32
    %c0_i32_1 = arith.constant 0 : i32
    return %c0_i32, %c0_i32_0 : i32, i32
  }
  func.func @transform_6(%arg0: i32, %arg1: memref<3xi32, #tpu.memory_space<smem>>, %arg2: memref<3xi32, #tpu.memory_space<smem>>) -> (i32, i32) {
    %c0_i32 = arith.constant 0 : i32
    %c0_i32_0 = arith.constant 0 : i32
    %c0_i32_1 = arith.constant 0 : i32
    return %c0_i32, %c0_i32_0 : i32, i32
  }
  func.func @transform_7(%arg0: i32, %arg1: memref<3xi32, #tpu.memory_space<smem>>, %arg2: memref<3xi32, #tpu.memory_space<smem>>) -> (i32, i32) {
    %c0_i32 = arith.constant 0 : i32
    %c0_i32_0 = arith.constant 0 : i32
    %c0_i32_1 = arith.constant 0 : i32
    return %c0_i32, %c0_i32_0 : i32, i32
  }
  func.func @transform_8(%arg0: i32, %arg1: memref<3xi32, #tpu.memory_space<smem>>, %arg2: memref<3xi32, #tpu.memory_space<smem>>) -> (i32, i32) {
    %c0_i32 = arith.constant 0 : i32
    %c0_i32_0 = arith.constant 0 : i32
    %c0_i32_1 = arith.constant 0 : i32
    return %c0_i32, %c0_i32_0 : i32, i32
  }
  func.func @transform_9(%arg0: i32, %arg1: memref<3xi32, #tpu.memory_space<smem>>, %arg2: memref<3xi32, #tpu.memory_space<smem>>) -> (i32, i32) {
    %c0_i32 = arith.constant 0 : i32
    %c0_i32_0 = arith.constant 0 : i32
    %c0_i32_1 = arith.constant 0 : i32
    return %c0_i32, %c0_i32_0 : i32, i32
  }
  func.func @transform_10(%arg0: i32, %arg1: memref<3xi32, #tpu.memory_space<smem>>, %arg2: memref<3xi32, #tpu.memory_space<smem>>) -> (i32, i32) {
    %c0_i32 = arith.constant 0 : i32
    %c0_i32_0 = arith.constant 0 : i32
    %c0_i32_1 = arith.constant 0 : i32
    return %c0_i32, %c0_i32_0 : i32, i32
  }
  func.func @transform_11(%arg0: i32, %arg1: memref<3xi32, #tpu.memory_space<smem>>, %arg2: memref<3xi32, #tpu.memory_space<smem>>) -> (i32, i32) {
    %c0_i32 = arith.constant 0 : i32
    %c0_i32_0 = arith.constant 0 : i32
    %c0_i32_1 = arith.constant 0 : i32
    return %c0_i32, %c0_i32_0 : i32, i32
  }
  func.func @transform_12(%arg0: i32, %arg1: memref<3xi32, #tpu.memory_space<smem>>, %arg2: memref<3xi32, #tpu.memory_space<smem>>) -> (i32, i32) {
    %c0_i32 = arith.constant 0 : i32
    %c0_i32_0 = arith.constant 0 : i32
    %c0_i32_1 = arith.constant 0 : i32
    return %c0_i32, %c0_i32_0 : i32, i32
  }
  func.func @transform_13(%arg0: i32, %arg1: memref<3xi32, #tpu.memory_space<smem>>, %arg2: memref<3xi32, #tpu.memory_space<smem>>) -> (i32, i32) {
    %c0_i32 = arith.constant 0 : i32
    %c0_i32_0 = arith.constant 0 : i32
    %c0_i32_1 = arith.constant 0 : i32
    return %c0_i32, %c0_i32_0 : i32, i32
  }
  func.func @transform_14(%arg0: i32, %arg1: memref<3xi32, #tpu.memory_space<smem>>, %arg2: memref<3xi32, #tpu.memory_space<smem>>) -> (i32, i32) {
    %c0_i32 = arith.constant 0 : i32
    %c0_i32_0 = arith.constant 0 : i32
    return %arg0, %c0_i32 : i32, i32
  }
  func.func @transform_15(%arg0: i32, %arg1: memref<3xi32, #tpu.memory_space<smem>>, %arg2: memref<3xi32, #tpu.memory_space<smem>>) -> (i32, i32, i32, i32) {
    %c0_i32 = arith.constant 0 : i32
    %c0_i32_0 = arith.constant 0 : i32
    %c0_i32_1 = arith.constant 0 : i32
    %c0_i32_2 = arith.constant 0 : i32
    return %arg0, %c0_i32, %c0_i32_0, %c0_i32_1 : i32, i32, i32, i32
  }
}

module attributes {stable_mosaic.version = 11 : i64} {
  func.func @_encoder_layer_kernel(%arg0: i32, %arg1: memref<3xi32, #tpu.memory_space<smem>>, %arg2: memref<3xi32, #tpu.memory_space<smem>>, %arg3: memref<48x32xf32, #tpu.memory_space<vmem>>, %arg4: memref<48x32xf32, #tpu.memory_space<vmem>>, %arg5: memref<48x32xf32, #tpu.memory_space<vmem>>, %arg6: memref<1x4x48x48xf32, #tpu.memory_space<vmem>>, %arg7: memref<48x48xf32, #tpu.memory_space<vmem>>, %arg8: memref<32x96xf32, #tpu.memory_space<vmem>>, %arg9: memref<1x96xf32, #tpu.memory_space<vmem>>, %arg10: memref<32x32xf32, #tpu.memory_space<vmem>>, %arg11: memref<1x32xf32, #tpu.memory_space<vmem>>, %arg12: memref<32x64xf32, #tpu.memory_space<vmem>>, %arg13: memref<1x64xf32, #tpu.memory_space<vmem>>, %arg14: memref<64x32xf32, #tpu.memory_space<vmem>>, %arg15: memref<1x32xf32, #tpu.memory_space<vmem>>, %arg16: memref<2x32xf32, #tpu.memory_space<vmem>>, %arg17: memref<2x32xf32, #tpu.memory_space<vmem>>, %arg18: memref<48x32xf32, #tpu.memory_space<vmem>>, %arg19: memref<1x4x48x48xf32, #tpu.memory_space<vmem>>) attributes {dimension_semantics = [#tpu.dimension_semantics<parallel>], iteration_bounds = array<i64: 3>, scalar_prefetch = 2 : i64, scratch_operands = 0 : i64, tpu.core_type = #tpu.core_type<tc>, window_params = [{transform_indices = @transform_0, window_bounds = array<i64: 48, 32>}, {transform_indices = @transform_1, window_bounds = array<i64: 48, 32>}, {transform_indices = @transform_2, window_bounds = array<i64: 48, 32>}, {transform_indices = @transform_3, window_bounds = array<i64: 1, 4, 48, 48>}, {pipeline_mode = #tpu.pipeline_mode<synchronous>, transform_indices = @transform_4, window_bounds = array<i64: 48, 48>}, {pipeline_mode = #tpu.pipeline_mode<synchronous>, transform_indices = @transform_5, window_bounds = array<i64: 32, 96>}, {pipeline_mode = #tpu.pipeline_mode<synchronous>, transform_indices = @transform_6, window_bounds = array<i64: 1, 96>}, {pipeline_mode = #tpu.pipeline_mode<synchronous>, transform_indices = @transform_7, window_bounds = array<i64: 32, 32>}, {pipeline_mode = #tpu.pipeline_mode<synchronous>, transform_indices = @transform_8, window_bounds = array<i64: 1, 32>}, {pipeline_mode = #tpu.pipeline_mode<synchronous>, transform_indices = @transform_9, window_bounds = array<i64: 32, 64>}, {pipeline_mode = #tpu.pipeline_mode<synchronous>, transform_indices = @transform_10, window_bounds = array<i64: 1, 64>}, {pipeline_mode = #tpu.pipeline_mode<synchronous>, transform_indices = @transform_11, window_bounds = array<i64: 64, 32>}, {pipeline_mode = #tpu.pipeline_mode<synchronous>, transform_indices = @transform_12, window_bounds = array<i64: 1, 32>}, {pipeline_mode = #tpu.pipeline_mode<synchronous>, transform_indices = @transform_13, window_bounds = array<i64: 2, 32>}, {pipeline_mode = #tpu.pipeline_mode<synchronous>, transform_indices = @transform_14, window_bounds = array<i64: 2, 32>}, {transform_indices = @transform_15, window_bounds = array<i64: 48, 32>}, {transform_indices = @transform_16, window_bounds = array<i64: 1, 4, 48, 48>}]} {
    %c0 = arith.constant 0 : index
    %c0_0 = arith.constant 0 : index
    %0 = vector.load %arg3[%c0, %c0_0] : memref<48x32xf32, #tpu.memory_space<vmem>>, vector<48x32xf32>
    %c0_1 = arith.constant 0 : index
    %c0_2 = arith.constant 0 : index
    %1 = vector.load %arg7[%c0_1, %c0_2] : memref<48x48xf32, #tpu.memory_space<vmem>>, vector<48x48xf32>
    %c0_3 = arith.constant 0 : index
    %c0_4 = arith.constant 0 : index
    %2 = vector.load %arg8[%c0_3, %c0_4] : memref<32x96xf32, #tpu.memory_space<vmem>>, vector<32x96xf32>
    %c0_5 = arith.constant 0 : index
    %c0_6 = arith.constant 0 : index
    %3 = vector.load %arg9[%c0_5, %c0_6] : memref<1x96xf32, #tpu.memory_space<vmem>>, vector<1x96xf32>
    %c0_7 = arith.constant 0 : index
    %c0_8 = arith.constant 0 : index
    %4 = vector.load %arg4[%c0_7, %c0_8] : memref<48x32xf32, #tpu.memory_space<vmem>>, vector<48x32xf32>
    %5 = vector.extract_strided_slice %2 {offsets = [0, 0], sizes = [32, 32], strides = [1, 1]} : vector<32x96xf32> to vector<32x32xf32>
    %cst = arith.constant dense<0.000000e+00> : vector<48x32xf32>
    %6 = tpu.matmul %4, %5, %cst {dimension_numbers = #tpu.dot_dimension_numbers<[1], [0], [0], [1], [0, 0, 1, 1], [], []>} : vector<48x32xf32>, vector<32x32xf32>, vector<48x32xf32> -> vector<48x32xf32>
    %7 = vector.extract_strided_slice %3 {offsets = [0, 0], sizes = [1, 32], strides = [1, 1]} : vector<1x96xf32> to vector<1x32xf32>
    %8 = vector.broadcast %7 : vector<1x32xf32> to vector<48x32xf32>
    %9 = arith.addf %6, %8 : vector<48x32xf32>
    %c0_9 = arith.constant 0 : index
    %c0_10 = arith.constant 0 : index
    %10 = vector.load %arg5[%c0_9, %c0_10] : memref<48x32xf32, #tpu.memory_space<vmem>>, vector<48x32xf32>
    %11 = vector.extract_strided_slice %2 {offsets = [0, 32], sizes = [32, 64], strides = [1, 1]} : vector<32x96xf32> to vector<32x64xf32>
    %cst_11 = arith.constant dense<0.000000e+00> : vector<48x64xf32>
    %12 = tpu.matmul %10, %11, %cst_11 {dimension_numbers = #tpu.dot_dimension_numbers<[1], [0], [0], [1], [0, 0, 1, 1], [], []>} : vector<48x32xf32>, vector<32x64xf32>, vector<48x64xf32> -> vector<48x64xf32>
    %13 = vector.extract_strided_slice %3 {offsets = [0, 32], sizes = [1, 64], strides = [1, 1]} : vector<1x96xf32> to vector<1x64xf32>
    %14 = vector.broadcast %13 : vector<1x64xf32> to vector<48x64xf32>
    %15 = arith.addf %12, %14 : vector<48x64xf32>
    %c0_12 = arith.constant 0 : index
    %c0_13 = arith.constant 0 : index
    %16 = vector.load %arg10[%c0_12, %c0_13] : memref<32x32xf32, #tpu.memory_space<vmem>>, vector<32x32xf32>
    %cst_14 = arith.constant 0.000000e+00 : f32
    %17 = vector.broadcast %cst_14 : f32 to vector<48x32xf32>
    %18 = vector.extract_strided_slice %9 {offsets = [0, 0], sizes = [48, 8], strides = [1, 1]} : vector<48x32xf32> to vector<48x8xf32>
    %19 = vector.extract_strided_slice %15 {offsets = [0, 0], sizes = [48, 8], strides = [1, 1]} : vector<48x64xf32> to vector<48x8xf32>
    %20 = vector.extract_strided_slice %15 {offsets = [0, 32], sizes = [48, 8], strides = [1, 1]} : vector<48x64xf32> to vector<48x8xf32>
    %cst_15 = arith.constant dense<0.000000e+00> : vector<48x48xf32>
    %21 = tpu.matmul %18, %19, %cst_15 {dimension_numbers = #tpu.dot_dimension_numbers<[1], [1], [0], [0], [0, 0, 1, 0], [], []>} : vector<48x8xf32>, vector<48x8xf32>, vector<48x48xf32> -> vector<48x48xf32>
    %cst_16 = arith.constant 0.353553385 : f32
    %22 = vector.broadcast %cst_16 : f32 to vector<48x48xf32>
    %23 = arith.mulf %21, %22 : vector<48x48xf32>
    %c0_17 = arith.constant 0 : index
    %c0_18 = arith.constant 0 : index
    %c0_19 = arith.constant 0 : index
    %c0_20 = arith.constant 0 : index
    %24 = vector.load %arg6[%c0_17, %c0_18, %c0_19, %c0_20] : memref<1x4x48x48xf32, #tpu.memory_space<vmem>>, vector<1x1x48x48xf32>
    %25 = vector.shape_cast %24 : vector<1x1x48x48xf32> to vector<48x48xf32>
    %26 = arith.addf %23, %25 : vector<48x48xf32>
    %c0_21 = arith.constant 0 : index
    %c0_22 = arith.constant 0 : index
    %c0_23 = arith.constant 0 : index
    %c0_24 = arith.constant 0 : index
    %27 = vector.load %arg19[%c0_21, %c0_22, %c0_23, %c0_24] : memref<1x4x48x48xf32, #tpu.memory_space<vmem>>, vector<1x1x48x48xf32>
    %28 = vector.shape_cast %27 : vector<1x1x48x48xf32> to vector<48x48xf32>
    %29 = vector.shape_cast %26 : vector<48x48xf32> to vector<1x1x48x48xf32>
    tpu.vector_store %arg19[%c0_21, %c0_22, %c0_23, %c0_24], %29 {strides = array<i32>} : memref<1x4x48x48xf32, #tpu.memory_space<vmem>>, vector<1x1x48x48xf32>,
    %30 = arith.addf %26, %1 : vector<48x48xf32>
    %cst_25 = arith.constant dense<0xFF800000> : vector<48xf32>
    %31 = vector.multi_reduction <maximumf>, %30, %cst_25 [1] : vector<48x48xf32> to vector<48xf32>
    %32 = vector.shape_cast %31 : vector<48xf32> to vector<48x1xf32>
    %33 = vector.broadcast %32 : vector<48x1xf32> to vector<48x48xf32>
    %34 = arith.subf %30, %33 : vector<48x48xf32>
    %35 = math.exp %34 : vector<48x48xf32>
    %cst_26 = arith.constant dense<0.000000e+00> : vector<48xf32>
    %36 = vector.multi_reduction <add>, %35, %cst_26 [1] : vector<48x48xf32> to vector<48xf32>
    %37 = vector.shape_cast %36 : vector<48xf32> to vector<48x1xf32>
    %38 = vector.broadcast %37 : vector<48x1xf32> to vector<48x48xf32>
    %39 = arith.divf %35, %38 : vector<48x48xf32>
    %cst_27 = arith.constant dense<0.000000e+00> : vector<48x8xf32>
    %40 = tpu.matmul %39, %20, %cst_27 {dimension_numbers = #tpu.dot_dimension_numbers<[1], [0], [0], [1], [0, 0, 1, 1], [], []>} : vector<48x48xf32>, vector<48x8xf32>, vector<48x8xf32> -> vector<48x8xf32>
    %41 = vector.extract_strided_slice %16 {offsets = [0, 0], sizes = [8, 32], strides = [1, 1]} : vector<32x32xf32> to vector<8x32xf32>
    %cst_28 = arith.constant dense<0.000000e+00> : vector<48x32xf32>
    %42 = tpu.matmul %40, %41, %cst_28 {dimension_numbers = #tpu.dot_dimension_numbers<[1], [0], [0], [1], [0, 0, 1, 1], [], []>} : vector<48x8xf32>, vector<8x32xf32>, vector<48x32xf32> -> vector<48x32xf32>
    %43 = arith.addf %17, %42 : vector<48x32xf32>
    %44 = vector.extract_strided_slice %9 {offsets = [0, 8], sizes = [48, 8], strides = [1, 1]} : vector<48x32xf32> to vector<48x8xf32>
    %45 = vector.extract_strided_slice %15 {offsets = [0, 8], sizes = [48, 8], strides = [1, 1]} : vector<48x64xf32> to vector<48x8xf32>
    %46 = vector.extract_strided_slice %15 {offsets = [0, 40], sizes = [48, 8], strides = [1, 1]} : vector<48x64xf32> to vector<48x8xf32>
    %cst_29 = arith.constant dense<0.000000e+00> : vector<48x48xf32>
    %47 = tpu.matmul %44, %45, %cst_29 {dimension_numbers = #tpu.dot_dimension_numbers<[1], [1], [0], [0], [0, 0, 1, 0], [], []>} : vector<48x8xf32>, vector<48x8xf32>, vector<48x48xf32> -> vector<48x48xf32>
    %cst_30 = arith.constant 0.353553385 : f32
    %48 = vector.broadcast %cst_30 : f32 to vector<48x48xf32>
    %49 = arith.mulf %47, %48 : vector<48x48xf32>
    %c0_31 = arith.constant 0 : index
    %c1 = arith.constant 1 : index
    %c0_32 = arith.constant 0 : index
    %c0_33 = arith.constant 0 : index
    %50 = vector.load %arg6[%c0_31, %c1, %c0_32, %c0_33] : memref<1x4x48x48xf32, #tpu.memory_space<vmem>>, vector<1x1x48x48xf32>
    %51 = vector.shape_cast %50 : vector<1x1x48x48xf32> to vector<48x48xf32>
    %52 = arith.addf %49, %51 : vector<48x48xf32>
    %c0_34 = arith.constant 0 : index
    %c1_35 = arith.constant 1 : index
    %c0_36 = arith.constant 0 : index
    %c0_37 = arith.constant 0 : index
    %53 = vector.load %arg19[%c0_34, %c1_35, %c0_36, %c0_37] : memref<1x4x48x48xf32, #tpu.memory_space<vmem>>, vector<1x1x48x48xf32>
    %54 = vector.shape_cast %53 : vector<1x1x48x48xf32> to vector<48x48xf32>
    %55 = vector.shape_cast %52 : vector<48x48xf32> to vector<1x1x48x48xf32>
    tpu.vector_store %arg19[%c0_34, %c1_35, %c0_36, %c0_37], %55 {strides = array<i32>} : memref<1x4x48x48xf32, #tpu.memory_space<vmem>>, vector<1x1x48x48xf32>,
    %56 = arith.addf %52, %1 : vector<48x48xf32>
    %cst_38 = arith.constant dense<0xFF800000> : vector<48xf32>
    %57 = vector.multi_reduction <maximumf>, %56, %cst_38 [1] : vector<48x48xf32> to vector<48xf32>
    %58 = vector.shape_cast %57 : vector<48xf32> to vector<48x1xf32>
    %59 = vector.broadcast %58 : vector<48x1xf32> to vector<48x48xf32>
    %60 = arith.subf %56, %59 : vector<48x48xf32>
    %61 = math.exp %60 : vector<48x48xf32>
    %cst_39 = arith.constant dense<0.000000e+00> : vector<48xf32>
    %62 = vector.multi_reduction <add>, %61, %cst_39 [1] : vector<48x48xf32> to vector<48xf32>
    %63 = vector.shape_cast %62 : vector<48xf32> to vector<48x1xf32>
    %64 = vector.broadcast %63 : vector<48x1xf32> to vector<48x48xf32>
    %65 = arith.divf %61, %64 : vector<48x48xf32>
    %cst_40 = arith.constant dense<0.000000e+00> : vector<48x8xf32>
    %66 = tpu.matmul %65, %46, %cst_40 {dimension_numbers = #tpu.dot_dimension_numbers<[1], [0], [0], [1], [0, 0, 1, 1], [], []>} : vector<48x48xf32>, vector<48x8xf32>, vector<48x8xf32> -> vector<48x8xf32>
    %67 = vector.extract_strided_slice %16 {offsets = [8, 0], sizes = [8, 32], strides = [1, 1]} : vector<32x32xf32> to vector<8x32xf32>
    %cst_41 = arith.constant dense<0.000000e+00> : vector<48x32xf32>
    %68 = tpu.matmul %66, %67, %cst_41 {dimension_numbers = #tpu.dot_dimension_numbers<[1], [0], [0], [1], [0, 0, 1, 1], [], []>} : vector<48x8xf32>, vector<8x32xf32>, vector<48x32xf32> -> vector<48x32xf32>
    %69 = arith.addf %43, %68 : vector<48x32xf32>
    %70 = vector.extract_strided_slice %9 {offsets = [0, 16], sizes = [48, 8], strides = [1, 1]} : vector<48x32xf32> to vector<48x8xf32>
    %71 = vector.extract_strided_slice %15 {offsets = [0, 16], sizes = [48, 8], strides = [1, 1]} : vector<48x64xf32> to vector<48x8xf32>
    %72 = vector.extract_strided_slice %15 {offsets = [0, 48], sizes = [48, 8], strides = [1, 1]} : vector<48x64xf32> to vector<48x8xf32>
    %cst_42 = arith.constant dense<0.000000e+00> : vector<48x48xf32>
    %73 = tpu.matmul %70, %71, %cst_42 {dimension_numbers = #tpu.dot_dimension_numbers<[1], [1], [0], [0], [0, 0, 1, 0], [], []>} : vector<48x8xf32>, vector<48x8xf32>, vector<48x48xf32> -> vector<48x48xf32>
    %cst_43 = arith.constant 0.353553385 : f32
    %74 = vector.broadcast %cst_43 : f32 to vector<48x48xf32>
    %75 = arith.mulf %73, %74 : vector<48x48xf32>
    %c0_44 = arith.constant 0 : index
    %c2 = arith.constant 2 : index
    %c0_45 = arith.constant 0 : index
    %c0_46 = arith.constant 0 : index
    %76 = vector.load %arg6[%c0_44, %c2, %c0_45, %c0_46] : memref<1x4x48x48xf32, #tpu.memory_space<vmem>>, vector<1x1x48x48xf32>
    %77 = vector.shape_cast %76 : vector<1x1x48x48xf32> to vector<48x48xf32>
    %78 = arith.addf %75, %77 : vector<48x48xf32>
    %c0_47 = arith.constant 0 : index
    %c2_48 = arith.constant 2 : index
    %c0_49 = arith.constant 0 : index
    %c0_50 = arith.constant 0 : index
    %79 = vector.load %arg19[%c0_47, %c2_48, %c0_49, %c0_50] : memref<1x4x48x48xf32, #tpu.memory_space<vmem>>, vector<1x1x48x48xf32>
    %80 = vector.shape_cast %79 : vector<1x1x48x48xf32> to vector<48x48xf32>
    %81 = vector.shape_cast %78 : vector<48x48xf32> to vector<1x1x48x48xf32>
    tpu.vector_store %arg19[%c0_47, %c2_48, %c0_49, %c0_50], %81 {strides = array<i32>} : memref<1x4x48x48xf32, #tpu.memory_space<vmem>>, vector<1x1x48x48xf32>,
    %82 = arith.addf %78, %1 : vector<48x48xf32>
    %cst_51 = arith.constant dense<0xFF800000> : vector<48xf32>
    %83 = vector.multi_reduction <maximumf>, %82, %cst_51 [1] : vector<48x48xf32> to vector<48xf32>
    %84 = vector.shape_cast %83 : vector<48xf32> to vector<48x1xf32>
    %85 = vector.broadcast %84 : vector<48x1xf32> to vector<48x48xf32>
    %86 = arith.subf %82, %85 : vector<48x48xf32>
    %87 = math.exp %86 : vector<48x48xf32>
    %cst_52 = arith.constant dense<0.000000e+00> : vector<48xf32>
    %88 = vector.multi_reduction <add>, %87, %cst_52 [1] : vector<48x48xf32> to vector<48xf32>
    %89 = vector.shape_cast %88 : vector<48xf32> to vector<48x1xf32>
    %90 = vector.broadcast %89 : vector<48x1xf32> to vector<48x48xf32>
    %91 = arith.divf %87, %90 : vector<48x48xf32>
    %cst_53 = arith.constant dense<0.000000e+00> : vector<48x8xf32>
    %92 = tpu.matmul %91, %72, %cst_53 {dimension_numbers = #tpu.dot_dimension_numbers<[1], [0], [0], [1], [0, 0, 1, 1], [], []>} : vector<48x48xf32>, vector<48x8xf32>, vector<48x8xf32> -> vector<48x8xf32>
    %93 = vector.extract_strided_slice %16 {offsets = [16, 0], sizes = [8, 32], strides = [1, 1]} : vector<32x32xf32> to vector<8x32xf32>
    %cst_54 = arith.constant dense<0.000000e+00> : vector<48x32xf32>
    %94 = tpu.matmul %92, %93, %cst_54 {dimension_numbers = #tpu.dot_dimension_numbers<[1], [0], [0], [1], [0, 0, 1, 1], [], []>} : vector<48x8xf32>, vector<8x32xf32>, vector<48x32xf32> -> vector<48x32xf32>
    %95 = arith.addf %69, %94 : vector<48x32xf32>
    %96 = vector.extract_strided_slice %9 {offsets = [0, 24], sizes = [48, 8], strides = [1, 1]} : vector<48x32xf32> to vector<48x8xf32>
    %97 = vector.extract_strided_slice %15 {offsets = [0, 24], sizes = [48, 8], strides = [1, 1]} : vector<48x64xf32> to vector<48x8xf32>
    %98 = vector.extract_strided_slice %15 {offsets = [0, 56], sizes = [48, 8], strides = [1, 1]} : vector<48x64xf32> to vector<48x8xf32>
    %cst_55 = arith.constant dense<0.000000e+00> : vector<48x48xf32>
    %99 = tpu.matmul %96, %97, %cst_55 {dimension_numbers = #tpu.dot_dimension_numbers<[1], [1], [0], [0], [0, 0, 1, 0], [], []>} : vector<48x8xf32>, vector<48x8xf32>, vector<48x48xf32> -> vector<48x48xf32>
    %cst_56 = arith.constant 0.353553385 : f32
    %100 = vector.broadcast %cst_56 : f32 to vector<48x48xf32>
    %101 = arith.mulf %99, %100 : vector<48x48xf32>
    %c0_57 = arith.constant 0 : index
    %c3 = arith.constant 3 : index
    %c0_58 = arith.constant 0 : index
    %c0_59 = arith.constant 0 : index
    %102 = vector.load %arg6[%c0_57, %c3, %c0_58, %c0_59] : memref<1x4x48x48xf32, #tpu.memory_space<vmem>>, vector<1x1x48x48xf32>
    %103 = vector.shape_cast %102 : vector<1x1x48x48xf32> to vector<48x48xf32>
    %104 = arith.addf %101, %103 : vector<48x48xf32>
    %c0_60 = arith.constant 0 : index
    %c3_61 = arith.constant 3 : index
    %c0_62 = arith.constant 0 : index
    %c0_63 = arith.constant 0 : index
    %105 = vector.load %arg19[%c0_60, %c3_61, %c0_62, %c0_63] : memref<1x4x48x48xf32, #tpu.memory_space<vmem>>, vector<1x1x48x48xf32>
    %106 = vector.shape_cast %105 : vector<1x1x48x48xf32> to vector<48x48xf32>
    %107 = vector.shape_cast %104 : vector<48x48xf32> to vector<1x1x48x48xf32>
    tpu.vector_store %arg19[%c0_60, %c3_61, %c0_62, %c0_63], %107 {strides = array<i32>} : memref<1x4x48x48xf32, #tpu.memory_space<vmem>>, vector<1x1x48x48xf32>,
    %108 = arith.addf %104, %1 : vector<48x48xf32>
    %cst_64 = arith.constant dense<0xFF800000> : vector<48xf32>
    %109 = vector.multi_reduction <maximumf>, %108, %cst_64 [1] : vector<48x48xf32> to vector<48xf32>
    %110 = vector.shape_cast %109 : vector<48xf32> to vector<48x1xf32>
    %111 = vector.broadcast %110 : vector<48x1xf32> to vector<48x48xf32>
    %112 = arith.subf %108, %111 : vector<48x48xf32>
    %113 = math.exp %112 : vector<48x48xf32>
    %cst_65 = arith.constant dense<0.000000e+00> : vector<48xf32>
    %114 = vector.multi_reduction <add>, %113, %cst_65 [1] : vector<48x48xf32> to vector<48xf32>
    %115 = vector.shape_cast %114 : vector<48xf32> to vector<48x1xf32>
    %116 = vector.broadcast %115 : vector<48x1xf32> to vector<48x48xf32>
    %117 = arith.divf %113, %116 : vector<48x48xf32>
    %cst_66 = arith.constant dense<0.000000e+00> : vector<48x8xf32>
    %118 = tpu.matmul %117, %98, %cst_66 {dimension_numbers = #tpu.dot_dimension_numbers<[1], [0], [0], [1], [0, 0, 1, 1], [], []>} : vector<48x48xf32>, vector<48x8xf32>, vector<48x8xf32> -> vector<48x8xf32>
    %119 = vector.extract_strided_slice %16 {offsets = [24, 0], sizes = [8, 32], strides = [1, 1]} : vector<32x32xf32> to vector<8x32xf32>
    %cst_67 = arith.constant dense<0.000000e+00> : vector<48x32xf32>
    %120 = tpu.matmul %118, %119, %cst_67 {dimension_numbers = #tpu.dot_dimension_numbers<[1], [0], [0], [1], [0, 0, 1, 1], [], []>} : vector<48x8xf32>, vector<8x32xf32>, vector<48x32xf32> -> vector<48x32xf32>
    %121 = arith.addf %95, %120 : vector<48x32xf32>
    %c0_68 = arith.constant 0 : index
    %c0_69 = arith.constant 0 : index
    %122 = vector.load %arg11[%c0_68, %c0_69] : memref<1x32xf32, #tpu.memory_space<vmem>>, vector<1x32xf32>
    %123 = vector.broadcast %122 : vector<1x32xf32> to vector<48x32xf32>
    %124 = arith.addf %121, %123 : vector<48x32xf32>
    %125 = arith.addf %0, %124 : vector<48x32xf32>
    %cst_70 = arith.constant dense<0.000000e+00> : vector<32xf32>
    %126 = vector.multi_reduction <add>, %125, %cst_70 [0] : vector<48x32xf32> to vector<32xf32>
    %127 = vector.shape_cast %126 : vector<32xf32> to vector<1x32xf32>
    %cst_71 = arith.constant 4.800000e+01 : f32
    %128 = vector.broadcast %cst_71 : f32 to vector<1x32xf32>
    %129 = arith.divf %127, %128 : vector<1x32xf32>
    %130 = vector.broadcast %129 : vector<1x32xf32> to vector<48x32xf32>
    %131 = arith.subf %125, %130 : vector<48x32xf32>
    %132 = arith.mulf %131, %131 : vector<48x32xf32>
    %cst_72 = arith.constant dense<0.000000e+00> : vector<32xf32>
    %133 = vector.multi_reduction <add>, %132, %cst_72 [0] : vector<48x32xf32> to vector<32xf32>
    %134 = vector.shape_cast %133 : vector<32xf32> to vector<1x32xf32>
    %cst_73 = arith.constant 4.800000e+01 : f32
    %135 = vector.broadcast %cst_73 : f32 to vector<1x32xf32>
    %136 = arith.divf %134, %135 : vector<1x32xf32>
    %137 = vector.broadcast %129 : vector<1x32xf32> to vector<48x32xf32>
    %138 = arith.subf %125, %137 : vector<48x32xf32>
    %cst_74 = arith.constant 9.99999974E-6 : f32
    %139 = vector.broadcast %cst_74 : f32 to vector<1x32xf32>
    %140 = arith.addf %136, %139 : vector<1x32xf32>
    %141 = math.rsqrt %140 : vector<1x32xf32>
    %142 = vector.broadcast %141 : vector<1x32xf32> to vector<48x32xf32>
    %143 = arith.mulf %138, %142 : vector<48x32xf32>
    %c0_75 = arith.constant 0 : index
    %c0_76 = arith.constant 0 : index
    %144 = vector.load %arg16[%c0_75, %c0_76] : memref<2x32xf32, #tpu.memory_space<vmem>>, vector<1x32xf32>
    %145 = vector.broadcast %144 : vector<1x32xf32> to vector<48x32xf32>
    %146 = arith.mulf %143, %145 : vector<48x32xf32>
    %c1_77 = arith.constant 1 : index
    %c0_78 = arith.constant 0 : index
    %147 = vector.load %arg16[%c1_77, %c0_78] : memref<2x32xf32, #tpu.memory_space<vmem>>, vector<1x32xf32>
    %148 = vector.broadcast %147 : vector<1x32xf32> to vector<48x32xf32>
    %149 = arith.addf %146, %148 : vector<48x32xf32>
    %c0_79 = arith.constant 0 : index
    %c0_80 = arith.constant 0 : index
    %150 = vector.load %arg12[%c0_79, %c0_80] : memref<32x64xf32, #tpu.memory_space<vmem>>, vector<32x64xf32>
    %cst_81 = arith.constant dense<0.000000e+00> : vector<48x64xf32>
    %151 = tpu.matmul %149, %150, %cst_81 {dimension_numbers = #tpu.dot_dimension_numbers<[1], [0], [0], [1], [0, 0, 1, 1], [], []>} : vector<48x32xf32>, vector<32x64xf32>, vector<48x64xf32> -> vector<48x64xf32>
    %c0_82 = arith.constant 0 : index
    %c0_83 = arith.constant 0 : index
    %152 = vector.load %arg13[%c0_82, %c0_83] : memref<1x64xf32, #tpu.memory_space<vmem>>, vector<1x64xf32>
    %153 = vector.broadcast %152 : vector<1x64xf32> to vector<48x64xf32>
    %154 = arith.addf %151, %153 : vector<48x64xf32>
    %cst_84 = arith.constant 5.000000e-01 : f32
    %155 = vector.broadcast %cst_84 : f32 to vector<48x64xf32>
    %156 = arith.mulf %155, %154 : vector<48x64xf32>
    %cst_85 = arith.constant 0.707106769 : f32
    %157 = vector.broadcast %cst_85 : f32 to vector<48x64xf32>
    %158 = arith.mulf %154, %157 : vector<48x64xf32>
    %cst_86 = arith.constant 0.000000e+00 : f32
    %159 = vector.broadcast %cst_86 : f32 to vector<48x64xf32>
    %160 = arith.cmpf oge, %158, %159 : vector<48x64xf32>
    %cst_87 = arith.constant 0.000000e+00 : f32
    %161 = vector.broadcast %cst_87 : f32 to vector<48x64xf32>
    %162 = arith.subf %161, %158 : vector<48x64xf32>
    %163 = arith.select %160, %158, %162 : vector<48x64xi1>, vector<48x64xf32>
    %cst_88 = arith.constant 0.327591091 : f32
    %164 = vector.broadcast %cst_88 : f32 to vector<48x64xf32>
    %165 = arith.mulf %164, %163 : vector<48x64xf32>
    %cst_89 = arith.constant 1.000000e+00 : f32
    %166 = vector.broadcast %cst_89 : f32 to vector<48x64xf32>
    %167 = arith.addf %166, %165 : vector<48x64xf32>
    %cst_90 = arith.constant 1.000000e+00 : f32
    %168 = vector.broadcast %cst_90 : f32 to vector<48x64xf32>
    %169 = arith.divf %168, %167 : vector<48x64xf32>
    %cst_91 = arith.constant 1.06140542 : f32
    %170 = vector.broadcast %cst_91 : f32 to vector<48x64xf32>
    %171 = arith.mulf %169, %170 : vector<48x64xf32>
    %cst_92 = arith.constant -1.45315206 : f32
    %172 = vector.broadcast %cst_92 : f32 to vector<48x64xf32>
    %173 = arith.addf %172, %171 : vector<48x64xf32>
    %174 = arith.mulf %169, %173 : vector<48x64xf32>
    %cst_93 = arith.constant 1.42141378 : f32
    %175 = vector.broadcast %cst_93 : f32 to vector<48x64xf32>
    %176 = arith.addf %175, %174 : vector<48x64xf32>
    %177 = arith.mulf %169, %176 : vector<48x64xf32>
    %cst_94 = arith.constant -0.284496725 : f32
    %178 = vector.broadcast %cst_94 : f32 to vector<48x64xf32>
    %179 = arith.addf %178, %177 : vector<48x64xf32>
    %180 = arith.mulf %169, %179 : vector<48x64xf32>
    %cst_95 = arith.constant 0.254829586 : f32
    %181 = vector.broadcast %cst_95 : f32 to vector<48x64xf32>
    %182 = arith.addf %181, %180 : vector<48x64xf32>
    %183 = arith.mulf %169, %182 : vector<48x64xf32>
    %cst_96 = arith.constant 0.000000e+00 : f32
    %184 = vector.broadcast %cst_96 : f32 to vector<48x64xf32>
    %185 = arith.subf %184, %163 : vector<48x64xf32>
    %186 = arith.mulf %185, %163 : vector<48x64xf32>
    %187 = math.exp %186 : vector<48x64xf32>
    %188 = arith.mulf %183, %187 : vector<48x64xf32>
    %cst_97 = arith.constant 1.000000e+00 : f32
    %189 = vector.broadcast %cst_97 : f32 to vector<48x64xf32>
    %190 = arith.subf %189, %188 : vector<48x64xf32>
    %cst_98 = arith.constant 0.000000e+00 : f32
    %191 = vector.broadcast %cst_98 : f32 to vector<48x64xf32>
    %192 = arith.cmpf oge, %158, %191 : vector<48x64xf32>
    %cst_99 = arith.constant 0.000000e+00 : f32
    %193 = vector.broadcast %cst_99 : f32 to vector<48x64xf32>
    %194 = arith.subf %193, %190 : vector<48x64xf32>
    %195 = arith.select %192, %190, %194 : vector<48x64xi1>, vector<48x64xf32>
    %cst_100 = arith.constant 1.000000e+00 : f32
    %196 = vector.broadcast %cst_100 : f32 to vector<48x64xf32>
    %197 = arith.addf %196, %195 : vector<48x64xf32>
    %198 = arith.mulf %156, %197 : vector<48x64xf32>
    %c0_101 = arith.constant 0 : index
    %c0_102 = arith.constant 0 : index
    %199 = vector.load %arg14[%c0_101, %c0_102] : memref<64x32xf32, #tpu.memory_space<vmem>>, vector<64x32xf32>
    %cst_103 = arith.constant dense<0.000000e+00> : vector<48x32xf32>
    %200 = tpu.matmul %198, %199, %cst_103 {dimension_numbers = #tpu.dot_dimension_numbers<[1], [0], [0], [1], [0, 0, 1, 1], [], []>} : vector<48x64xf32>, vector<64x32xf32>, vector<48x32xf32> -> vector<48x32xf32>
    %c0_104 = arith.constant 0 : index
    %c0_105 = arith.constant 0 : index
    %201 = vector.load %arg15[%c0_104, %c0_105] : memref<1x32xf32, #tpu.memory_space<vmem>>, vector<1x32xf32>
    %202 = vector.broadcast %201 : vector<1x32xf32> to vector<48x32xf32>
    %203 = arith.addf %200, %202 : vector<48x32xf32>
    %204 = arith.addf %149, %203 : vector<48x32xf32>
    %cst_106 = arith.constant dense<0.000000e+00> : vector<32xf32>
    %205 = vector.multi_reduction <add>, %204, %cst_106 [0] : vector<48x32xf32> to vector<32xf32>
    %206 = vector.shape_cast %205 : vector<32xf32> to vector<1x32xf32>
    %cst_107 = arith.constant 4.800000e+01 : f32
    %207 = vector.broadcast %cst_107 : f32 to vector<1x32xf32>
    %208 = arith.divf %206, %207 : vector<1x32xf32>
    %209 = vector.broadcast %208 : vector<1x32xf32> to vector<48x32xf32>
    %210 = arith.subf %204, %209 : vector<48x32xf32>
    %211 = arith.mulf %210, %210 : vector<48x32xf32>
    %cst_108 = arith.constant dense<0.000000e+00> : vector<32xf32>
    %212 = vector.multi_reduction <add>, %211, %cst_108 [0] : vector<48x32xf32> to vector<32xf32>
    %213 = vector.shape_cast %212 : vector<32xf32> to vector<1x32xf32>
    %cst_109 = arith.constant 4.800000e+01 : f32
    %214 = vector.broadcast %cst_109 : f32 to vector<1x32xf32>
    %215 = arith.divf %213, %214 : vector<1x32xf32>
    %216 = vector.broadcast %208 : vector<1x32xf32> to vector<48x32xf32>
    %217 = arith.subf %204, %216 : vector<48x32xf32>
    %cst_110 = arith.constant 9.99999974E-6 : f32
    %218 = vector.broadcast %cst_110 : f32 to vector<1x32xf32>
    %219 = arith.addf %215, %218 : vector<1x32xf32>
    %220 = math.rsqrt %219 : vector<1x32xf32>
    %221 = vector.broadcast %220 : vector<1x32xf32> to vector<48x32xf32>
    %222 = arith.mulf %217, %221 : vector<48x32xf32>
    %c0_111 = arith.constant 0 : index
    %c0_112 = arith.constant 0 : index
    %223 = vector.load %arg17[%c0_111, %c0_112] : memref<2x32xf32, #tpu.memory_space<vmem>>, vector<1x32xf32>
    %224 = vector.broadcast %223 : vector<1x32xf32> to vector<48x32xf32>
    %225 = arith.mulf %222, %224 : vector<48x32xf32>
    %c1_113 = arith.constant 1 : index
    %c0_114 = arith.constant 0 : index
    %226 = vector.load %arg17[%c1_113, %c0_114] : memref<2x32xf32, #tpu.memory_space<vmem>>, vector<1x32xf32>
    %227 = vector.broadcast %226 : vector<1x32xf32> to vector<48x32xf32>
    %228 = arith.addf %225, %227 : vector<48x32xf32>
    %c0_115 = arith.constant 0 : index
    %c0_116 = arith.constant 0 : index
    %229 = vector.load %arg18[%c0_115, %c0_116] : memref<48x32xf32, #tpu.memory_space<vmem>>, vector<48x32xf32>
    tpu.vector_store %arg18[%c0_115, %c0_116], %228 {strides = array<i32>} : memref<48x32xf32, #tpu.memory_space<vmem>>, vector<48x32xf32>,
    return
  }
  func.func @transform_0(%arg0: i32, %arg1: memref<3xi32, #tpu.memory_space<smem>>, %arg2: memref<3xi32, #tpu.memory_space<smem>>) -> (i32, i32) {
    %c0_i32 = arith.constant 0 : i32
    %c0_i32_0 = arith.constant 0 : i32
    return %arg0, %c0_i32 : i32, i32
  }
  func.func @transform_1(%arg0: i32, %arg1: memref<3xi32, #tpu.memory_space<smem>>, %arg2: memref<3xi32, #tpu.memory_space<smem>>) -> (i32, i32) {
    %0 = arith.index_cast %arg0 : i32 to index
    %1 = memref.load %arg1[%0] : memref<3xi32, #tpu.memory_space<smem>>
    %c0_i32 = arith.constant 0 : i32
    %c0_i32_0 = arith.constant 0 : i32
    return %1, %c0_i32 : i32, i32
  }
  func.func @transform_2(%arg0: i32, %arg1: memref<3xi32, #tpu.memory_space<smem>>, %arg2: memref<3xi32, #tpu.memory_space<smem>>) -> (i32, i32) {
    %0 = arith.index_cast %arg0 : i32 to index
    %1 = memref.load %arg2[%0] : memref<3xi32, #tpu.memory_space<smem>>
    %c0_i32 = arith.constant 0 : i32
    %c0_i32_0 = arith.constant 0 : i32
    return %1, %c0_i32 : i32, i32
  }
  func.func @transform_3(%arg0: i32, %arg1: memref<3xi32, #tpu.memory_space<smem>>, %arg2: memref<3xi32, #tpu.memory_space<smem>>) -> (i32, i32, i32, i32) {
    %c0_i32 = arith.constant 0 : i32
    %c0_i32_0 = arith.constant 0 : i32
    %c0_i32_1 = arith.constant 0 : i32
    %c0_i32_2 = arith.constant 0 : i32
    return %arg0, %c0_i32, %c0_i32_0, %c0_i32_1 : i32, i32, i32, i32
  }
  func.func @transform_4(%arg0: i32, %arg1: memref<3xi32, #tpu.memory_space<smem>>, %arg2: memref<3xi32, #tpu.memory_space<smem>>) -> (i32, i32) {
    %c0_i32 = arith.constant 0 : i32
    %c0_i32_0 = arith.constant 0 : i32
    %c0_i32_1 = arith.constant 0 : i32
    return %c0_i32, %c0_i32_0 : i32, i32
  }
  func.func @transform_5(%arg0: i32, %arg1: memref<3xi32, #tpu.memory_space<smem>>, %arg2: memref<3xi32, #tpu.memory_space<smem>>) -> (i32, i32) {
    %c0_i32 = arith.constant 0 : i32
    %c0_i32_0 = arith.constant 0 : i32
    %c0_i32_1 = arith.constant 0 : i32
    return %c0_i32, %c0_i32_0 : i32, i32
  }
  func.func @transform_6(%arg0: i32, %arg1: memref<3xi32, #tpu.memory_space<smem>>, %arg2: memref<3xi32, #tpu.memory_space<smem>>) -> (i32, i32) {
    %c0_i32 = arith.constant 0 : i32
    %c0_i32_0 = arith.constant 0 : i32
    %c0_i32_1 = arith.constant 0 : i32
    return %c0_i32, %c0_i32_0 : i32, i32
  }
  func.func @transform_7(%arg0: i32, %arg1: memref<3xi32, #tpu.memory_space<smem>>, %arg2: memref<3xi32, #tpu.memory_space<smem>>) -> (i32, i32) {
    %c0_i32 = arith.constant 0 : i32
    %c0_i32_0 = arith.constant 0 : i32
    %c0_i32_1 = arith.constant 0 : i32
    return %c0_i32, %c0_i32_0 : i32, i32
  }
  func.func @transform_8(%arg0: i32, %arg1: memref<3xi32, #tpu.memory_space<smem>>, %arg2: memref<3xi32, #tpu.memory_space<smem>>) -> (i32, i32) {
    %c0_i32 = arith.constant 0 : i32
    %c0_i32_0 = arith.constant 0 : i32
    %c0_i32_1 = arith.constant 0 : i32
    return %c0_i32, %c0_i32_0 : i32, i32
  }
  func.func @transform_9(%arg0: i32, %arg1: memref<3xi32, #tpu.memory_space<smem>>, %arg2: memref<3xi32, #tpu.memory_space<smem>>) -> (i32, i32) {
    %c0_i32 = arith.constant 0 : i32
    %c0_i32_0 = arith.constant 0 : i32
    %c0_i32_1 = arith.constant 0 : i32
    return %c0_i32, %c0_i32_0 : i32, i32
  }
  func.func @transform_10(%arg0: i32, %arg1: memref<3xi32, #tpu.memory_space<smem>>, %arg2: memref<3xi32, #tpu.memory_space<smem>>) -> (i32, i32) {
    %c0_i32 = arith.constant 0 : i32
    %c0_i32_0 = arith.constant 0 : i32
    %c0_i32_1 = arith.constant 0 : i32
    return %c0_i32, %c0_i32_0 : i32, i32
  }
  func.func @transform_11(%arg0: i32, %arg1: memref<3xi32, #tpu.memory_space<smem>>, %arg2: memref<3xi32, #tpu.memory_space<smem>>) -> (i32, i32) {
    %c0_i32 = arith.constant 0 : i32
    %c0_i32_0 = arith.constant 0 : i32
    %c0_i32_1 = arith.constant 0 : i32
    return %c0_i32, %c0_i32_0 : i32, i32
  }
  func.func @transform_12(%arg0: i32, %arg1: memref<3xi32, #tpu.memory_space<smem>>, %arg2: memref<3xi32, #tpu.memory_space<smem>>) -> (i32, i32) {
    %c0_i32 = arith.constant 0 : i32
    %c0_i32_0 = arith.constant 0 : i32
    %c0_i32_1 = arith.constant 0 : i32
    return %c0_i32, %c0_i32_0 : i32, i32
  }
  func.func @transform_13(%arg0: i32, %arg1: memref<3xi32, #tpu.memory_space<smem>>, %arg2: memref<3xi32, #tpu.memory_space<smem>>) -> (i32, i32) {
    %c0_i32 = arith.constant 0 : i32
    %c0_i32_0 = arith.constant 0 : i32
    %c0_i32_1 = arith.constant 0 : i32
    return %c0_i32, %c0_i32_0 : i32, i32
  }
  func.func @transform_14(%arg0: i32, %arg1: memref<3xi32, #tpu.memory_space<smem>>, %arg2: memref<3xi32, #tpu.memory_space<smem>>) -> (i32, i32) {
    %c0_i32 = arith.constant 0 : i32
    %c0_i32_0 = arith.constant 0 : i32
    %c0_i32_1 = arith.constant 0 : i32
    return %c0_i32, %c0_i32_0 : i32, i32
  }
  func.func @transform_15(%arg0: i32, %arg1: memref<3xi32, #tpu.memory_space<smem>>, %arg2: memref<3xi32, #tpu.memory_space<smem>>) -> (i32, i32) {
    %c0_i32 = arith.constant 0 : i32
    %c0_i32_0 = arith.constant 0 : i32
    return %arg0, %c0_i32 : i32, i32
  }
  func.func @transform_16(%arg0: i32, %arg1: memref<3xi32, #tpu.memory_space<smem>>, %arg2: memref<3xi32, #tpu.memory_space<smem>>) -> (i32, i32, i32, i32) {
    %c0_i32 = arith.constant 0 : i32
    %c0_i32_0 = arith.constant 0 : i32
    %c0_i32_1 = arith.constant 0 : i32
    %c0_i32_2 = arith.constant 0 : i32
    return %arg0, %c0_i32, %c0_i32_0, %c0_i32_1 : i32, i32, i32, i32
  }
}

</mosaic_0001>

<llo_original>
// kernel: cdtsti_forward.3
$region0: #{cdtsti_forward.3}
  #allocation0 [shape = 'u32[]', space=smem, size = 0x4, offset = 0x4, fixed_abs, tag = 'smem constant byte address 0x4 - core index']
  #allocation1 [shape = 'u32[144,128]{1,0:T(1,128)}', space=vmem, size = 0x12000, scoped, tag = 'internal scratch']
  %s0 = inlined_call_operand.vmem [shape: f32[96,16], index: 0, kind: input, shape index: {}]
  %s1 = inlined_call_operand.vmem [shape: f32[16,32], index: 1, kind: input, shape index: {}]
  %s2 = inlined_call_operand.vmem [shape: f32[1,32], index: 2, kind: input, shape index: {}]
  %s3 = inlined_call_operand.vmem [shape: f32[96,32], index: 3, kind: input, shape index: {}]
  %s4 = inlined_call_operand.vmem [shape: f32[144,32], index: 4, kind: output, shape index: {}]
  %s5 = sld [smem:[#allocation0]]
  $region26: #{cdtsti_forward.3} parent=0
    _
  %s7 = ssub.s32 1, %s5
  %s8 = scalar_select 0, %s7, %s5
  // Predicated region
  $region2: #{cdtsti_forward.3} parent=0 // pred_check
    _
  $region3: #{cdtsti_forward.3} parent=0 // pred_check_branch
    %10 = sbr.rel (0) target = $region5
  $region4: #{cdtsti_forward.3} parent=0 // pred_region
    _
  $region5: #{cdtsti_forward.3} parent=0 // pred_fallthru
    _
  // Predicated region
  $region6: #{cdtsti_forward.3} parent=0 // pred_check
    _
  $region7: #{cdtsti_forward.3} parent=0 // pred_check_branch
    %12 = sbr.rel (0) target = $region9
  $region8: #{cdtsti_forward.3} parent=0 // pred_region
    _
  $region9: #{cdtsti_forward.3} parent=0 // pred_fallthru
    _
  // Predicated region
  $region10: #{cdtsti_forward.3} parent=0 // pred_check
    _
  $region11: #{cdtsti_forward.3} parent=0 // pred_check_branch
    %14 = sbr.rel (0) target = $region13
  $region12: #{cdtsti_forward.3} parent=0 // pred_region
    _
  $region13: #{cdtsti_forward.3} parent=0 // pred_fallthru
    _
  // Predicated region
  $region14: #{cdtsti_forward.3} parent=0 // pred_check
    _
  $region15: #{cdtsti_forward.3} parent=0 // pred_check_branch
    %16 = sbr.rel (0) target = $region17
  $region16: #{cdtsti_forward.3} parent=0 // pred_region
    _
  $region17: #{cdtsti_forward.3} parent=0 // pred_fallthru
    _
  %v17 = vld [vmem:[%s0] sm:$0xff]
  %v18 = vld [vmem:[%s0 + $0x8] sm:$0xff]
  %v19 = vld [vmem:[%s0 + $0x10] sm:$0xff]
  %v20 = vld [vmem:[%s0 + $0x18] sm:$0xff]
  %v21 = vld [vmem:[%s0 + $0x20] sm:$0xff]
  %v22 = vld [vmem:[%s0 + $0x28] sm:$0xff]
  %v23 = vld [vmem:[%s0 + $0x30] sm:$0xff]
  %v24 = vld [vmem:[%s0 + $0x38] sm:$0xff]
  %v25 = vld [vmem:[%s0 + $0x40] sm:$0xff]
  %v26 = vld [vmem:[%s0 + $0x48] sm:$0xff]
  %v27 = vld [vmem:[%s0 + $0x50] sm:$0xff]
  %v28 = vld [vmem:[%s0 + $0x58] sm:$0xff]
  %v29 = vld [vmem:[%s1] sm:$0xff]
  %v30 = vld [vmem:[%s1 + $0x8] sm:$0xff]
  %v31 = vld [vmem:[%s2] sm:$0x1]
  %v33 = vlaneseq
  %v34 = vshrl.u32 %v33, 7
  %v35 = vsub.s32 0, %v34
  %v36 = vrot.slane %v31, %v35
  %vm38 = vcmask 130048
  %v40 = vsel %vm38, %v17, 0
  %v43 = vsel %vm38, %v18, 0
  %v46 = vsel %vm38, %v19, 0
  %v49 = vsel %vm38, %v20, 0
  %v52 = vsel %vm38, %v21, 0
  %v55 = vsel %vm38, %v22, 0
  %v58 = vsel %vm38, %v23, 0
  %v61 = vsel %vm38, %v24, 0
  %v64 = vsel %vm38, %v25, 0
  %v67 = vsel %vm38, %v26, 0
  %v70 = vsel %vm38, %v27, 0
  %v73 = vsel %vm38, %v28, 0
  %75 = vmatprep.subr.mxu0 0.0
  %76 = vmatpush1.msra.mxu0 %v29
  %77 = vmatprep.subr.mxu0 0.0
  %78 = vmatpush1.msra.mxu0 %v30
  %79 = vmatprep.subr.mxu0 0.0
  %80 = vmatpush1.msra.mxu0 0.0
  %81 = vmatprep.subr.mxu0 0.0
  %82 = vmatpush1.msra.mxu0 0.0
  %83 = vmatprep.subr.mxu0 0.0
  %84 = vmatpush1.msra.mxu0 0.0
  %85 = vmatprep.subr.mxu0 0.0
  %86 = vmatpush1.msra.mxu0 0.0
  %87 = vmatprep.subr.mxu0 0.0
  %88 = vmatpush1.msra.mxu0 0.0
  %89 = vmatprep.subr.mxu0 0.0
  %90 = vmatpush1.msra.mxu0 0.0
  %91 = vmatprep.subr.mxu0 0.0
  %92 = vmatpush1.msra.mxu0 0.0
  %93 = vmatprep.subr.mxu0 0.0
  %94 = vmatpush1.msra.mxu0 0.0
  %95 = vmatprep.subr.mxu0 0.0
  %96 = vmatpush1.msra.mxu0 0.0
  %97 = vmatprep.subr.mxu0 0.0
  %98 = vmatpush1.msra.mxu0 0.0
  %99 = vmatprep.subr.mxu0 0.0
  %100 = vmatpush1.msra.mxu0 0.0
  %101 = vmatprep.subr.mxu0 0.0
  %102 = vmatpush1.msra.mxu0 0.0
  %103 = vmatprep.subr.mxu0 0.0
  %104 = vmatpush1.msra.mxu0 0.0
  %105 = vmatprep.subr.mxu0 0.0
  %106 = vmatpush1.msra.mxu0 0.0
  %107 = vmatprep.subr.mxu0 0.0
  %108 = vmatpush1.msra.mxu0 0.0
  %109 = vmatprep.subr.mxu0 0.0
  %110 = vmatpush1.msra.mxu0 0.0
  %111 = vmatprep.subr.mxu0 0.0
  %112 = vmatpush1.msra.mxu0 0.0
  %113 = vmatprep.subr.mxu0 0.0
  %114 = vmatpush1.msra.mxu0 0.0
  %115 = vmatprep.subr.mxu0 0.0
  %116 = vmatpush1.msra.mxu0 0.0
  %117 = vmatprep.subr.mxu0 0.0
  %118 = vmatpush1.msra.mxu0 0.0
  %119 = vmatprep.subr.mxu0 0.0
  %120 = vmatpush1.msra.mxu0 0.0
  %121 = vmatprep.subr.mxu0 0.0
  %122 = vmatpush1.msra.mxu0 0.0
  %123 = vmatprep.subr.mxu0 0.0
  %124 = vmatpush1.msra.mxu0 0.0
  %125 = vmatprep.subr.mxu0 0.0
  %126 = vmatpush1.msra.mxu0 0.0
  %127 = vmatprep.subr.mxu0 0.0
  %128 = vmatpush1.msra.mxu0 0.0
  %129 = vmatprep.subr.mxu0 0.0
  %130 = vmatpush1.msra.mxu0 0.0
  %131 = vmatprep.subr.mxu0 0.0
  %132 = vmatpush1.msra.mxu0 0.0
  %133 = vmatprep.subr.mxu0 0.0
  %134 = vmatpush1.msra.mxu0 0.0
  %135 = vmatprep.subr.mxu0 0.0
  %136 = vmatpush1.msra.mxu0 0.0
  %137 = vmatprep.subr.mxu0 0.0
  %138 = vmatpush1.msra.mxu0 0.0
  %139 = vmatprep.mubr.f32.mxu0 0.0
  %140 = vmatmul.mubr.f32.gmra.mrb[0].mxu0 %v40
  %v141 = vpop.f32.mrb[0].mxu0
  %v142 = vadd.f32 %v36, %v141
  %v143 = vpop.f32.mrb[0].mxu0
  %144 = vmatprep.mubr.f32.mxu0 0.0
  %145 = vmatmul.mubr.f32.gmra.mrb[0].mxu0 %v43
  %v146 = vpop.f32.mrb[0].mxu0
  %v147 = vadd.f32 %v36, %v146
  %v148 = vpop.f32.mrb[0].mxu0
  %149 = vmatprep.mubr.f32.mxu0 0.0
  %150 = vmatmul.mubr.f32.gmra.mrb[0].mxu0 %v46
  %v151 = vpop.f32.mrb[0].mxu0
  %v152 = vadd.f32 %v36, %v151
  %v153 = vpop.f32.mrb[0].mxu0
  %154 = vmatprep.mubr.f32.mxu0 0.0
  %155 = vmatmul.mubr.f32.gmra.mrb[0].mxu0 %v49
  %v156 = vpop.f32.mrb[0].mxu0
  %v157 = vadd.f32 %v36, %v156
  %v158 = vpop.f32.mrb[0].mxu0
  %159 = vmatprep.mubr.f32.mxu0 0.0
  %160 = vmatmul.mubr.f32.gmra.mrb[0].mxu0 %v52
  %v161 = vpop.f32.mrb[0].mxu0
  %v162 = vadd.f32 %v36, %v161
  %v163 = vpop.f32.mrb[0].mxu0
  %164 = vmatprep.mubr.f32.mxu0 0.0
  %165 = vmatmul.mubr.f32.gmra.mrb[0].mxu0 %v55
  %v166 = vpop.f32.mrb[0].mxu0
  %v167 = vadd.f32 %v36, %v166
  %v168 = vpop.f32.mrb[0].mxu0
  %169 = vmatprep.mubr.f32.mxu0 0.0
  %170 = vmatmul.mubr.f32.gmra.mrb[0].mxu0 %v58
  %v171 = vpop.f32.mrb[0].mxu0
  %v172 = vadd.f32 %v36, %v171
  %v173 = vpop.f32.mrb[0].mxu0
  %174 = vmatprep.mubr.f32.mxu0 0.0
  %175 = vmatmul.mubr.f32.gmra.mrb[0].mxu0 %v61
  %v176 = vpop.f32.mrb[0].mxu0
  %v177 = vadd.f32 %v36, %v176
  %v178 = vpop.f32.mrb[0].mxu0
  %179 = vmatprep.mubr.f32.mxu0 0.0
  %180 = vmatmul.mubr.f32.gmra.mrb[0].mxu0 %v64
  %v181 = vpop.f32.mrb[0].mxu0
  %v182 = vadd.f32 %v36, %v181
  %v183 = vpop.f32.mrb[0].mxu0
  %184 = vmatprep.mubr.f32.mxu0 0.0
  %185 = vmatmul.mubr.f32.gmra.mrb[0].mxu0 %v67
  %v186 = vpop.f32.mrb[0].mxu0
  %v187 = vadd.f32 %v36, %v186
  %v188 = vpop.f32.mrb[0].mxu0
  %189 = vmatprep.mubr.f32.mxu0 0.0
  %190 = vmatmul.mubr.f32.gmra.mrb[0].mxu0 %v70
  %v191 = vpop.f32.mrb[0].mxu0
  %v192 = vadd.f32 %v36, %v191
  %v193 = vpop.f32.mrb[0].mxu0
  %194 = vmatprep.mubr.f32.mxu0 0.0
  %195 = vmatmul.mubr.f32.gmra.mrb[0].mxu0 %v73
  %v196 = vpop.f32.mrb[0].mxu0
  %v197 = vadd.f32 %v36, %v196
  %v198 = vpop.f32.mrb[0].mxu0
  %199 = vdwg.mxu0
  %v200 = vld [vmem:[%s3] sm:$0xff]
  %v201 = vld [vmem:[%s3 + $0x8] sm:$0xff]
  %v202 = vld [vmem:[%s3 + $0x10] sm:$0xff]
  %v203 = vld [vmem:[%s3 + $0x18] sm:$0xff]
  %v204 = vld [vmem:[%s3 + $0x20] sm:$0xff]
  %v205 = vld [vmem:[%s3 + $0x28] sm:$0xff]
  %v206 = vld [vmem:[%s3 + $0x30] sm:$0xff]
  %v207 = vld [vmem:[%s3 + $0x38] sm:$0xff]
  %v208 = vld [vmem:[%s3 + $0x40] sm:$0xff]
  %v209 = vld [vmem:[%s3 + $0x48] sm:$0xff]
  %v210 = vld [vmem:[%s3 + $0x50] sm:$0xff]
  %v211 = vld [vmem:[%s3 + $0x58] sm:$0xff]
  %v212 = vadd.f32 %v142, %v200
  %v213 = vadd.f32 %v147, %v201
  %v214 = vadd.f32 %v152, %v202
  %v215 = vadd.f32 %v157, %v203
  %v216 = vadd.f32 %v162, %v204
  %v217 = vadd.f32 %v167, %v205
  %v218 = vadd.f32 %v172, %v206
  %v219 = vadd.f32 %v177, %v207
  %v220 = vadd.f32 %v182, %v208
  %v221 = vadd.f32 %v187, %v209
  %v222 = vadd.f32 %v192, %v210
  %v223 = vadd.f32 %v197, %v211
  %vm224 = vcmask 261120
  %225 = vst.msk [vmem:[%s4] sm:$0xff] %vm224, %v212
  %226 = vst.msk [vmem:[%s4 + $0x8] sm:$0xff] %vm224, %v213
  %227 = vst.msk [vmem:[%s4 + $0x10] sm:$0xff] %vm224, %v214
  %228 = vst.msk [vmem:[%s4 + $0x18] sm:$0xff] %vm224, %v215
  %229 = vst.msk [vmem:[%s4 + $0x20] sm:$0xff] %vm224, %v216
  %230 = vst.msk [vmem:[%s4 + $0x28] sm:$0xff] %vm224, %v217
  %231 = vst.msk [vmem:[%s4 + $0x30] sm:$0xff] %vm224, %v218
  %232 = vst.msk [vmem:[%s4 + $0x38] sm:$0xff] %vm224, %v219
  %233 = vst.msk [vmem:[%s4 + $0x40] sm:$0xff] %vm224, %v220
  %234 = vst.msk [vmem:[%s4 + $0x48] sm:$0xff] %vm224, %v221
  %235 = vst.msk [vmem:[%s4 + $0x50] sm:$0xff] %vm224, %v222
  %236 = vst.msk [vmem:[%s4 + $0x58] sm:$0xff] %vm224, %v223
  %237 = vst.msk [vmem:[%s4 + $0x60] sm:$0xff] %vm224, 0.0
  %238 = vst.msk [vmem:[%s4 + $0x68] sm:$0xff] %vm224, 0.0
  %239 = vst.msk [vmem:[%s4 + $0x70] sm:$0xff] %vm224, 0.0
  %240 = vst.msk [vmem:[%s4 + $0x78] sm:$0xff] %vm224, 0.0
  %241 = vst.msk [vmem:[%s4 + $0x80] sm:$0xff] %vm224, 0.0
  %242 = vst.msk [vmem:[%s4 + $0x88] sm:$0xff] %vm224, 0.0
  // Predicated region
  $region18: #{cdtsti_forward.3} parent=0 // pred_check
    _
  $region19: #{cdtsti_forward.3} parent=0 // pred_check_branch
    %244 = sbr.rel (0) target = $region21
  $region20: #{cdtsti_forward.3} parent=0 // pred_region
    _
  $region21: #{cdtsti_forward.3} parent=0 // pred_fallthru
    _
  // Predicated region
  $region22: #{cdtsti_forward.3} parent=0 // pred_check
    _
  $region23: #{cdtsti_forward.3} parent=0 // pred_check_branch
    %246 = sbr.rel (0) target = $region25
  $region24: #{cdtsti_forward.3} parent=0 // pred_region
    _
  $region25: #{cdtsti_forward.3} parent=0 // pred_fallthru
    _

// kernel: cdtsti_forward.4
$region0: #{cdtsti_forward.4}
  #allocation0 [shape = 'u32[]', space=smem, size = 0x4, offset = 0x4, fixed_abs, tag = 'smem constant byte address 0x4 - core index']
  #allocation1 [shape = 'u32[144,128]{1,0:T(1,128)}', space=vmem, size = 0x12000, scoped, tag = 'internal scratch']
  #allocation2 [shape = 's32[1]{0}', space=sflag, size = 0x4, scoped, tag = 'scoped memory for cdtsti_forward.4']
  #allocation3 [shape = 'u8[512]{0}', space=smem, size = 0x200, scoped, tag = 'prefetched SMEM operand 0']
  #allocation4 [shape = 'u8[512]{0}', space=smem, size = 0x200, scoped, tag = 'prefetched SMEM operand 1']
  %s0 = inlined_call_operand.vmem [shape: s32[3], index: 0, kind: input, shape index: {}]
  %s1 = inlined_call_operand.vmem [shape: s32[3], index: 1, kind: input, shape index: {}]
  %s2 = inlined_call_operand.vmem [shape: f32[144,32], index: 2, kind: input, shape index: {}, may-alias: {2,3,4}]
  %s3 = inlined_call_operand.vmem [shape: f32[144,32], index: 3, kind: input, shape index: {}, may-alias: {2,3,4}]
  %s4 = inlined_call_operand.vmem [shape: f32[144,32], index: 4, kind: input, shape index: {}, may-alias: {2,3,4}]
  %s5 = inlined_call_operand.vmem [shape: f32[48,48], index: 5, kind: input, shape index: {}]
  %s6 = inlined_call_operand.vmem [shape: f32[32,96], index: 6, kind: input, shape index: {}]
  %s7 = inlined_call_operand.vmem [shape: f32[1,96], index: 7, kind: input, shape index: {}]
  %s8 = inlined_call_operand.vmem [shape: f32[32,32], index: 8, kind: input, shape index: {}]
  %s9 = inlined_call_operand.vmem [shape: f32[1,32], index: 9, kind: input, shape index: {}]
  %s10 = inlined_call_operand.vmem [shape: f32[32,64], index: 10, kind: input, shape index: {}]
  %s11 = inlined_call_operand.vmem [shape: f32[1,64], index: 11, kind: input, shape index: {}]
  %s12 = inlined_call_operand.vmem [shape: f32[64,32], index: 12, kind: input, shape index: {}]
  %s13 = inlined_call_operand.vmem [shape: f32[1,32], index: 13, kind: input, shape index: {}]
  %s14 = inlined_call_operand.vmem [shape: f32[2,32], index: 14, kind: input, shape index: {}]
  %s15 = inlined_call_operand.vmem [shape: f32[2,32], index: 15, kind: input, shape index: {}]
  %s16 = inlined_call_operand.vmem [shape: f32[144,32], index: 16, kind: output, shape index: {0}]
  %s17 = inlined_call_operand.vmem [shape: f32[3,4,48,48], index: 17, kind: output, shape index: {1}]
  %18 = xla_tuple %s16, %s17
  %s19 = sld [smem:[#allocation0]]
  $region97: #{cdtsti_forward.4} parent=0
    _
  %s21 = ssub.s32 1, %s19
  %s22 = scalar_select 0, %s21, %s19
  %s23 = sshll.u32 %s0, 4
  %s24 = int_to_ptr.vmem [resolvable:$true] %s23
  %26 = dma.vmem_to_smem %s24, 16, [#allocation3], [#allocation2]
  %s27 = sshll.u32 %s1, 4
  %s28 = int_to_ptr.vmem [resolvable:$true] %s27
  %30 = dma.vmem_to_smem %s28, 16, [#allocation4], [#allocation2]
  %31 = dma.done [#allocation2], 32
  %32 = sfence
  loop: start=0, step=1, limit=5
  $region2: #{cdtsti_forward.4} parent=0 // loop_pre_header
    _
  $region3: #{cdtsti_forward.4} parent=0 // loop_header
    %s34 = sphi 0, %s38
    %p35 = scmp.ge.s32.totalorder %s34, 5
    %s44 = sphi 0, %s46
    %s47 = sphi 0, %s44
    %s48 = sphi 0, %s47
    %s64 = sphi 0, %s48
    %s72 = sphi 0, %s74
    %s75 = sphi 0, %s72
    %s76 = sphi 0, %s75
    %s92 = sphi 0, %s76
    %s100 = sphi 0, %s102
    %s103 = sphi 0, %s100
    %s104 = sphi 0, %s103
    %s120 = sphi 0, %s104
    %s124 = sphi 0, %s124
    %s126 = sphi 0, %s124
    %s127 = sphi 0, %s126
    %s141 = sphi 0, %s127
    %s145 = sphi 0, %s145
    %s147 = sphi 0, %s145
    %s148 = sphi 0, %s147
    %s162 = sphi 0, %s148
    %s166 = sphi 0, %s166
    %s168 = sphi 0, %s166
    %s169 = sphi 0, %s168
    %s183 = sphi 0, %s169
    %s187 = sphi 0, %s187
    %s189 = sphi 0, %s187
    %s190 = sphi 0, %s189
    %s204 = sphi 0, %s190
    %s208 = sphi 0, %s208
    %s210 = sphi 0, %s208
    %s211 = sphi 0, %s210
    %s225 = sphi 0, %s211
    %s229 = sphi 0, %s229
    %s231 = sphi 0, %s229
    %s232 = sphi 0, %s231
    %s246 = sphi 0, %s232
    %s250 = sphi 0, %s250
    %s252 = sphi 0, %s250
    %s253 = sphi 0, %s252
    %s267 = sphi 0, %s253
    %s271 = sphi 0, %s271
    %s273 = sphi 0, %s271
    %s274 = sphi 0, %s273
    %s288 = sphi 0, %s274
    %s292 = sphi 0, %s292
    %s294 = sphi 0, %s292
    %s295 = sphi 0, %s294
    %s309 = sphi 0, %s295
    %s313 = sphi 0, %s313
    %s315 = sphi 0, %s313
    %s316 = sphi 0, %s315
    %s330 = sphi 0, %s316
    %s334 = sphi 0, %s334
    %s336 = sphi 0, %s334
    %s337 = sphi 0, %s336
    %s351 = sphi 0, %s337
    %s357 = sphi 0, %s359
    %s360 = sphi 0, %s357
    %s361 = sphi 0, %s360
    %s377 = sphi 0, %s361
    %s383 = sphi 0, %s385
    %s386 = sphi 0, %s383
    %s387 = sphi 0, %s386
    %s403 = sphi 0, %s387
  $region4: #{cdtsti_forward.4} parent=0 // loop_header_branch
    %37 = sbr.rel (%p35) target = $region8
  $region5: #{cdtsti_forward.4} parent=0 // loop_body
    %s39 = ssub.s32 %s34, 1
    %s40 = ssub.s32 %s34, 2
    %s41 = sadd.s32 %s34, 1
    %s42 = ssub.s32 %s34, %s41
    %p43 = scmp.eq.s32.totalorder %s42, 0
    %s45 = sadd.s32 %s44, 1
    %s46 = scalar_select %p43, %s44, %s45
    %p49 = pneg %p43
    %p50 = scmp.eq.s32.totalorder %s34, 2
    %p51 = por %p49, %p50
    %p52 = scmp.ne.s32.totalorder %s44, %s47
    %p53 = scmp.eq.s32.totalorder %s34, 0
    %p54 = por %p52, %p53
    %p55 = scmp.ne.s32.totalorder %s44, %s47
    %p56 = scmp.eq.s32.totalorder %s39, 2
    %p57 = por %p55, %p56
    %p58 = scmp.ne.s32.totalorder %s47, %s48
    %p59 = scmp.eq.s32.totalorder %s39, 0
    %p60 = por %p58, %p59
    %p61 = scmp.ne.s32.totalorder %s47, %s48
    %p62 = scmp.eq.s32.totalorder %s40, 2
    %p63 = por %p61, %p62
    %p65 = scmp.ne.s32.totalorder %s48, %s64
    %p66 = scmp.eq.s32.totalorder %s40, 0
    %p67 = por %p65, %p66
    %s68 = sld [smem:[#allocation3 + %s34]]
    %s69 = sld [smem:[#allocation3 + %s41]]
    %s70 = ssub.s32 %s68, %s69
    %p71 = scmp.eq.s32.totalorder %s70, 0
    %s73 = sadd.s32 %s72, 1
    %s74 = scalar_select %p71, %s72, %s73
    %p77 = pneg %p71
    %p78 = scmp.eq.s32.totalorder %s34, 2
    %p79 = por %p77, %p78
    %p80 = scmp.ne.s32.totalorder %s72, %s75
    %p81 = scmp.eq.s32.totalorder %s34, 0
    %p82 = por %p80, %p81
    %p83 = scmp.ne.s32.totalorder %s72, %s75
    %p84 = scmp.eq.s32.totalorder %s39, 2
    %p85 = por %p83, %p84
    %p86 = scmp.ne.s32.totalorder %s75, %s76
    %p87 = scmp.eq.s32.totalorder %s39, 0
    %p88 = por %p86, %p87
    %p89 = scmp.ne.s32.totalorder %s75, %s76
    %p90 = scmp.eq.s32.totalorder %s40, 2
    %p91 = por %p89, %p90
    %p93 = scmp.ne.s32.totalorder %s76, %s92
    %p94 = scmp.eq.s32.totalorder %s40, 0
    %p95 = por %p93, %p94
    %s96 = sld [smem:[#allocation4 + %s34]]
    %s97 = sld [smem:[#allocation4 + %s41]]
    %s98 = ssub.s32 %s96, %s97
    %p99 = scmp.eq.s32.totalorder %s98, 0
    %s101 = sadd.s32 %s100, 1
    %s102 = scalar_select %p99, %s100, %s101
    %p105 = pneg %p99
    %p106 = scmp.eq.s32.totalorder %s34, 2
    %p107 = por %p105, %p106
    %p108 = scmp.ne.s32.totalorder %s100, %s103
    %p109 = scmp.eq.s32.totalorder %s34, 0
    %p110 = por %p108, %p109
    %p111 = scmp.ne.s32.totalorder %s100, %s103
    %p112 = scmp.eq.s32.totalorder %s39, 2
    %p113 = por %p111, %p112
    %p114 = scmp.ne.s32.totalorder %s103, %s104
    %p115 = scmp.eq.s32.totalorder %s39, 0
    %p116 = por %p114, %p115
    %p117 = scmp.ne.s32.totalorder %s103, %s104
    %p118 = scmp.eq.s32.totalorder %s40, 2
    %p119 = por %p117, %p118
    %p121 = scmp.ne.s32.totalorder %s104, %s120
    %p122 = scmp.eq.s32.totalorder %s40, 0
    %p123 = por %p121, %p122
    %s125 = sadd.s32 %s124, 1
    %p128 = scmp.eq.s32.totalorder %s34, 2
    %p129 = scmp.ne.s32.totalorder %s124, %s126
    %p130 = scmp.eq.s32.totalorder %s34, 0
    %p131 = por %p129, %p130
    %p132 = scmp.ne.s32.totalorder %s124, %s126
    %p133 = scmp.eq.s32.totalorder %s39, 2
    %p134 = por %p132, %p133
    %p135 = scmp.ne.s32.totalorder %s126, %s127
    %p136 = scmp.eq.s32.totalorder %s39, 0
    %p137 = por %p135, %p136
    %p138 = scmp.ne.s32.totalorder %s126, %s127
    %p139 = scmp.eq.s32.totalorder %s40, 2
    %p140 = por %p138, %p139
    %p142 = scmp.ne.s32.totalorder %s127, %s141
    %p143 = scmp.eq.s32.totalorder %s40, 0
    %p144 = por %p142, %p143
    %s146 = sadd.s32 %s145, 1
    %p149 = scmp.eq.s32.totalorder %s34, 2
    %p150 = scmp.ne.s32.totalorder %s145, %s147
    %p151 = scmp.eq.s32.totalorder %s34, 0
    %p152 = por %p150, %p151
    %p153 = scmp.ne.s32.totalorder %s145, %s147
    %p154 = scmp.eq.s32.totalorder %s39, 2
    %p155 = por %p153, %p154
    %p156 = scmp.ne.s32.totalorder %s147, %s148
    %p157 = scmp.eq.s32.totalorder %s39, 0
    %p158 = por %p156, %p157
    %p159 = scmp.ne.s32.totalorder %s147, %s148
    %p160 = scmp.eq.s32.totalorder %s40, 2
    %p161 = por %p159, %p160
    %p163 = scmp.ne.s32.totalorder %s148, %s162
    %p164 = scmp.eq.s32.totalorder %s40, 0
    %p165 = por %p163, %p164
    %s167 = sadd.s32 %s166, 1
    %p170 = scmp.eq.s32.totalorder %s34, 2
    %p171 = scmp.ne.s32.totalorder %s166, %s168
    %p172 = scmp.eq.s32.totalorder %s34, 0
    %p173 = por %p171, %p172
    %p174 = scmp.ne.s32.totalorder %s166, %s168
    %p175 = scmp.eq.s32.totalorder %s39, 2
    %p176 = por %p174, %p175
    %p177 = scmp.ne.s32.totalorder %s168, %s169
    %p178 = scmp.eq.s32.totalorder %s39, 0
    %p179 = por %p177, %p178
    %p180 = scmp.ne.s32.totalorder %s168, %s169
    %p181 = scmp.eq.s32.totalorder %s40, 2
    %p182 = por %p180, %p181
    %p184 = scmp.ne.s32.totalorder %s169, %s183
    %p185 = scmp.eq.s32.totalorder %s40, 0
    %p186 = por %p184, %p185
    %s188 = sadd.s32 %s187, 1
    %p191 = scmp.eq.s32.totalorder %s34, 2
    %p192 = scmp.ne.s32.totalorder %s187, %s189
    %p193 = scmp.eq.s32.totalorder %s34, 0
    %p194 = por %p192, %p193
    %p195 = scmp.ne.s32.totalorder %s187, %s189
    %p196 = scmp.eq.s32.totalorder %s39, 2
    %p197 = por %p195, %p196
    %p198 = scmp.ne.s32.totalorder %s189, %s190
    %p199 = scmp.eq.s32.totalorder %s39, 0
    %p200 = por %p198, %p199
    %p201 = scmp.ne.s32.totalorder %s189, %s190
    %p202 = scmp.eq.s32.totalorder %s40, 2
    %p203 = por %p201, %p202
    %p205 = scmp.ne.s32.totalorder %s190, %s204
    %p206 = scmp.eq.s32.totalorder %s40, 0
    %p207 = por %p205, %p206
    %s209 = sadd.s32 %s208, 1
    %p212 = scmp.eq.s32.totalorder %s34, 2
    %p213 = scmp.ne.s32.totalorder %s208, %s210
    %p214 = scmp.eq.s32.totalorder %s34, 0
    %p215 = por %p213, %p214
    %p216 = scmp.ne.s32.totalorder %s208, %s210
    %p217 = scmp.eq.s32.totalorder %s39, 2
    %p218 = por %p216, %p217
    %p219 = scmp.ne.s32.totalorder %s210, %s211
    %p220 = scmp.eq.s32.totalorder %s39, 0
    %p221 = por %p219, %p220
    %p222 = scmp.ne.s32.totalorder %s210, %s211
    %p223 = scmp.eq.s32.totalorder %s40, 2
    %p224 = por %p222, %p223
    %p226 = scmp.ne.s32.totalorder %s211, %s225
    %p227 = scmp.eq.s32.totalorder %s40, 0
    %p228 = por %p226, %p227
    %s230 = sadd.s32 %s229, 1
    %p233 = scmp.eq.s32.totalorder %s34, 2
    %p234 = scmp.ne.s32.totalorder %s229, %s231
    %p235 = scmp.eq.s32.totalorder %s34, 0
    %p236 = por %p234, %p235
    %p237 = scmp.ne.s32.totalorder %s229, %s231
    %p238 = scmp.eq.s32.totalorder %s39, 2
    %p239 = por %p237, %p238
    %p240 = scmp.ne.s32.totalorder %s231, %s232
    %p241 = scmp.eq.s32.totalorder %s39, 0
    %p242 = por %p240, %p241
    %p243 = scmp.ne.s32.totalorder %s231, %s232
    %p244 = scmp.eq.s32.totalorder %s40, 2
    %p245 = por %p243, %p244
    %p247 = scmp.ne.s32.totalorder %s232, %s246
    %p248 = scmp.eq.s32.totalorder %s40, 0
    %p249 = por %p247, %p248
    %s251 = sadd.s32 %s250, 1
    %p254 = scmp.eq.s32.totalorder %s34, 2
    %p255 = scmp.ne.s32.totalorder %s250, %s252
    %p256 = scmp.eq.s32.totalorder %s34, 0
    %p257 = por %p255, %p256
    %p258 = scmp.ne.s32.totalorder %s250, %s252
    %p259 = scmp.eq.s32.totalorder %s39, 2
    %p260 = por %p258, %p259
    %p261 = scmp.ne.s32.totalorder %s252, %s253
    %p262 = scmp.eq.s32.totalorder %s39, 0
    %p263 = por %p261, %p262
    %p264 = scmp.ne.s32.totalorder %s252, %s253
    %p265 = scmp.eq.s32.totalorder %s40, 2
    %p266 = por %p264, %p265
    %p268 = scmp.ne.s32.totalorder %s253, %s267
    %p269 = scmp.eq.s32.totalorder %s40, 0
    %p270 = por %p268, %p269
    %s272 = sadd.s32 %s271, 1
    %p275 = scmp.eq.s32.totalorder %s34, 2
    %p276 = scmp.ne.s32.totalorder %s271, %s273
    %p277 = scmp.eq.s32.totalorder %s34, 0
    %p278 = por %p276, %p277
    %p279 = scmp.ne.s32.totalorder %s271, %s273
    %p280 = scmp.eq.s32.totalorder %s39, 2
    %p281 = por %p279, %p280
    %p282 = scmp.ne.s32.totalorder %s273, %s274
    %p283 = scmp.eq.s32.totalorder %s39, 0
    %p284 = por %p282, %p283
    %p285 = scmp.ne.s32.totalorder %s273, %s274
    %p286 = scmp.eq.s32.totalorder %s40, 2
    %p287 = por %p285, %p286
    %p289 = scmp.ne.s32.totalorder %s274, %s288
    %p290 = scmp.eq.s32.totalorder %s40, 0
    %p291 = por %p289, %p290
    %s293 = sadd.s32 %s292, 1
    %p296 = scmp.eq.s32.totalorder %s34, 2
    %p297 = scmp.ne.s32.totalorder %s292, %s294
    %p298 = scmp.eq.s32.totalorder %s34, 0
    %p299 = por %p297, %p298
    %p300 = scmp.ne.s32.totalorder %s292, %s294
    %p301 = scmp.eq.s32.totalorder %s39, 2
    %p302 = por %p300, %p301
    %p303 = scmp.ne.s32.totalorder %s294, %s295
    %p304 = scmp.eq.s32.totalorder %s39, 0
    %p305 = por %p303, %p304
    %p306 = scmp.ne.s32.totalorder %s294, %s295
    %p307 = scmp.eq.s32.totalorder %s40, 2
    %p308 = por %p306, %p307
    %p310 = scmp.ne.s32.totalorder %s295, %s309
    %p311 = scmp.eq.s32.totalorder %s40, 0
    %p312 = por %p310, %p311
    %s314 = sadd.s32 %s313, 1
    %p317 = scmp.eq.s32.totalorder %s34, 2
    %p318 = scmp.ne.s32.totalorder %s313, %s315
    %p319 = scmp.eq.s32.totalorder %s34, 0
    %p320 = por %p318, %p319
    %p321 = scmp.ne.s32.totalorder %s313, %s315
    %p322 = scmp.eq.s32.totalorder %s39, 2
    %p323 = por %p321, %p322
    %p324 = scmp.ne.s32.totalorder %s315, %s316
    %p325 = scmp.eq.s32.totalorder %s39, 0
    %p326 = por %p324, %p325
    %p327 = scmp.ne.s32.totalorder %s315, %s316
    %p328 = scmp.eq.s32.totalorder %s40, 2
    %p329 = por %p327, %p328
    %p331 = scmp.ne.s32.totalorder %s316, %s330
    %p332 = scmp.eq.s32.totalorder %s40, 0
    %p333 = por %p331, %p332
    %s335 = sadd.s32 %s334, 1
    %p338 = scmp.eq.s32.totalorder %s34, 2
    %p339 = scmp.ne.s32.totalorder %s334, %s336
    %p340 = scmp.eq.s32.totalorder %s34, 0
    %p341 = por %p339, %p340
    %p342 = scmp.ne.s32.totalorder %s334, %s336
    %p343 = scmp.eq.s32.totalorder %s39, 2
    %p344 = por %p342, %p343
    %p345 = scmp.ne.s32.totalorder %s336, %s337
    %p346 = scmp.eq.s32.totalorder %s39, 0
    %p347 = por %p345, %p346
    %p348 = scmp.ne.s32.totalorder %s336, %s337
    %p349 = scmp.eq.s32.totalorder %s40, 2
    %p350 = por %p348, %p349
    %p352 = scmp.ne.s32.totalorder %s337, %s351
    %p353 = scmp.eq.s32.totalorder %s40, 0
    %p354 = por %p352, %p353
    %s355 = ssub.s32 %s34, %s41
    %p356 = scmp.eq.s32.totalorder %s355, 0
    %s358 = sadd.s32 %s357, 1
    %s359 = scalar_select %p356, %s357, %s358
    %p362 = pneg %p356
    %p363 = scmp.eq.s32.totalorder %s34, 2
    %p364 = por %p362, %p363
    %p365 = scmp.ne.s32.totalorder %s357, %s360
    %p366 = scmp.eq.s32.totalorder %s34, 0
    %p367 = por %p365, %p366
    %p368 = scmp.ne.s32.totalorder %s357, %s360
    %p369 = scmp.eq.s32.totalorder %s39, 2
    %p370 = por %p368, %p369
    %p371 = scmp.ne.s32.totalorder %s360, %s361
    %p372 = scmp.eq.s32.totalorder %s39, 0
    %p373 = por %p371, %p372
    %p374 = scmp.ne.s32.totalorder %s360, %s361
    %p375 = scmp.eq.s32.totalorder %s40, 2
    %p376 = por %p374, %p375
    %p378 = scmp.ne.s32.totalorder %s361, %s377
    %p379 = scmp.eq.s32.totalorder %s40, 0
    %p380 = por %p378, %p379
    %s381 = ssub.s32 %s34, %s41
    %p382 = scmp.eq.s32.totalorder %s381, 0
    %s384 = sadd.s32 %s383, 1
    %s385 = scalar_select %p382, %s383, %s384
    %p388 = pneg %p382
    %p389 = scmp.eq.s32.totalorder %s34, 2
    %p390 = por %p388, %p389
    %p391 = scmp.ne.s32.totalorder %s383, %s386
    %p392 = scmp.eq.s32.totalorder %s34, 0
    %p393 = por %p391, %p392
    %p394 = scmp.ne.s32.totalorder %s383, %s386
    %p395 = scmp.eq.s32.totalorder %s39, 2
    %p396 = por %p394, %p395
    %p397 = scmp.ne.s32.totalorder %s386, %s387
    %p398 = scmp.eq.s32.totalorder %s39, 0
    %p399 = por %p397, %p398
    %p400 = scmp.ne.s32.totalorder %s386, %s387
    %p401 = scmp.eq.s32.totalorder %s40, 2
    %p402 = por %p400, %p401
    %p404 = scmp.ne.s32.totalorder %s387, %s403
    %p405 = scmp.eq.s32.totalorder %s40, 0
    %p406 = por %p404, %p405
    %p407 = scmp.le.s32.totalorder 1, %s34
    %p408 = scmp.lt.s32.totalorder %s34, 4
    %p409 = pnand %p407, %p408
    %p410 = pneg %p409
    // Predicated region
    $region9: #{cdtsti_forward.4} parent=5 // pred_check
      _
    $region10: #{cdtsti_forward.4} parent=5 // pred_check_branch
      %412 = sbr.rel (%p409) target = $region12
    $region11: #{cdtsti_forward.4} parent=5 // pred_region
      %s413 = ssub.s32 %s34, 1
      // Predicated region
      $region13: #{cdtsti_forward.4} parent=11 // pred_check
        %p414 = pneg %p137
      $region14: #{cdtsti_forward.4} parent=11 // pred_check_branch
        %416 = sbr.rel (%p414) target = $region16
      $region15: #{cdtsti_forward.4} parent=11 // pred_region
        _
      $region16: #{cdtsti_forward.4} parent=11 // pred_fallthru
        _
      // Predicated region
      $region17: #{cdtsti_forward.4} parent=11 // pred_check
        %p417 = pneg %p158
      $region18: #{cdtsti_forward.4} parent=11 // pred_check_branch
        %419 = sbr.rel (%p417) target = $region20
      $region19: #{cdtsti_forward.4} parent=11 // pred_region
        _
      $region20: #{cdtsti_forward.4} parent=11 // pred_fallthru
        _
      // Predicated region
      $region21: #{cdtsti_forward.4} parent=11 // pred_check
        %p420 = pneg %p179
      $region22: #{cdtsti_forward.4} parent=11 // pred_check_branch
        %422 = sbr.rel (%p420) target = $region24
      $region23: #{cdtsti_forward.4} parent=11 // pred_region
        _
      $region24: #{cdtsti_forward.4} parent=11 // pred_fallthru
        _
      // Predicated region
      $region25: #{cdtsti_forward.4} parent=11 // pred_check
        %p423 = pneg %p200
      $region26: #{cdtsti_forward.4} parent=11 // pred_check_branch
        %425 = sbr.rel (%p423) target = $region28
      $region27: #{cdtsti_forward.4} parent=11 // pred_region
        _
      $region28: #{cdtsti_forward.4} parent=11 // pred_fallthru
        _
      // Predicated region
      $region29: #{cdtsti_forward.4} parent=11 // pred_check
        %p426 = pneg %p221
      $region30: #{cdtsti_forward.4} parent=11 // pred_check_branch
        %428 = sbr.rel (%p426) target = $region32
      $region31: #{cdtsti_forward.4} parent=11 // pred_region
        _
      $region32: #{cdtsti_forward.4} parent=11 // pred_fallthru
        _
      // Predicated region
      $region33: #{cdtsti_forward.4} parent=11 // pred_check
        %p429 = pneg %p242
      $region34: #{cdtsti_forward.4} parent=11 // pred_check_branch
        %431 = sbr.rel (%p429) target = $region36
      $region35: #{cdtsti_forward.4} parent=11 // pred_region
        _
      $region36: #{cdtsti_forward.4} parent=11 // pred_fallthru
        _
      // Predicated region
      $region37: #{cdtsti_forward.4} parent=11 // pred_check
        %p432 = pneg %p263
      $region38: #{cdtsti_forward.4} parent=11 // pred_check_branch
        %434 = sbr.rel (%p432) target = $region40
      $region39: #{cdtsti_forward.4} parent=11 // pred_region
        _
      $region40: #{cdtsti_forward.4} parent=11 // pred_fallthru
        _
      // Predicated region
      $region41: #{cdtsti_forward.4} parent=11 // pred_check
        %p435 = pneg %p284
      $region42: #{cdtsti_forward.4} parent=11 // pred_check_branch
        %437 = sbr.rel (%p435) target = $region44
      $region43: #{cdtsti_forward.4} parent=11 // pred_region
        _
      $region44: #{cdtsti_forward.4} parent=11 // pred_fallthru
        _
      // Predicated region
      $region45: #{cdtsti_forward.4} parent=11 // pred_check
        %p438 = pneg %p305
      $region46: #{cdtsti_forward.4} parent=11 // pred_check_branch
        %440 = sbr.rel (%p438) target = $region48
      $region47: #{cdtsti_forward.4} parent=11 // pred_region
        _
      $region48: #{cdtsti_forward.4} parent=11 // pred_fallthru
        _
      // Predicated region
      $region49: #{cdtsti_forward.4} parent=11 // pred_check
        %p441 = pneg %p326
      $region50: #{cdtsti_forward.4} parent=11 // pred_check_branch
        %443 = sbr.rel (%p441) target = $region52
      $region51: #{cdtsti_forward.4} parent=11 // pred_region
        _
      $region52: #{cdtsti_forward.4} parent=11 // pred_fallthru
        _
      // Predicated region
      $region53: #{cdtsti_forward.4} parent=11 // pred_check
        %p444 = pneg %p347
      $region54: #{cdtsti_forward.4} parent=11 // pred_check_branch
        %446 = sbr.rel (%p444) target = $region56
      $region55: #{cdtsti_forward.4} parent=11 // pred_region
        _
      $region56: #{cdtsti_forward.4} parent=11 // pred_fallthru
        _
    $region12: #{cdtsti_forward.4} parent=5 // pred_fallthru
      _
    %p447 = scmp.lt.s32.totalorder %s34, 3
    // Predicated region
    $region57: #{cdtsti_forward.4} parent=5 // pred_check
      %p448 = pneg %p447
    $region58: #{cdtsti_forward.4} parent=5 // pred_check_branch
      %450 = sbr.rel (%p448) target = $region60
    $region59: #{cdtsti_forward.4} parent=5 // pred_region
      // Predicated region
      $region61: #{cdtsti_forward.4} parent=59 // pred_check
        %p451 = pneg %p54
      $region62: #{cdtsti_forward.4} parent=59 // pred_check_branch
        %453 = sbr.rel (%p451) target = $region64
      $region63: #{cdtsti_forward.4} parent=59 // pred_region
        %s454 = smul.u32 6, %s34
        %p455 = scmp.lt.s32.totalorder %s454, 17
        %s456 = scalar_select %p455, %s454, 17
        %s457 = smul.addr %s456, 8
        %s458 = scalar_lea.vmem %s2, %s457
        %s459 = smul.u32 6, %s34
      $region64: #{cdtsti_forward.4} parent=59 // pred_fallthru
        _
      // Predicated region
      $region65: #{cdtsti_forward.4} parent=59 // pred_check
        %p460 = pneg %p82
      $region66: #{cdtsti_forward.4} parent=59 // pred_check_branch
        %462 = sbr.rel (%p460) target = $region68
      $region67: #{cdtsti_forward.4} parent=59 // pred_region
        %s463 = sld [smem:[#allocation3 + %s34]]
        %s464 = smul.u32 6, %s463
        %p465 = scmp.lt.s32.totalorder %s464, 17
        %s466 = scalar_select %p465, %s464, 17
        %s467 = smul.addr %s466, 8
        %s468 = scalar_lea.vmem %s3, %s467
        %s469 = sld [smem:[#allocation3 + %s34]]
        %s470 = smul.u32 6, %s469
      $region68: #{cdtsti_forward.4} parent=59 // pred_fallthru
        _
      // Predicated region
      $region69: #{cdtsti_forward.4} parent=59 // pred_check
        %p471 = pneg %p110
      $region70: #{cdtsti_forward.4} parent=59 // pred_check_branch
        %473 = sbr.rel (%p471) target = $region72
      $region71: #{cdtsti_forward.4} parent=59 // pred_region
        %s474 = sld [smem:[#allocation4 + %s34]]
        %s475 = smul.u32 6, %s474
        %p476 = scmp.lt.s32.totalorder %s475, 17
        %s477 = scalar_select %p476, %s475, 17
        %s478 = smul.addr %s477, 8
        %s479 = scalar_lea.vmem %s4, %s478
        %s480 = sld [smem:[#allocation4 + %s34]]
        %s481 = smul.u32 6, %s480
      $region72: #{cdtsti_forward.4} parent=59 // pred_fallthru
        _
    $region60: #{cdtsti_forward.4} parent=5 // pred_fallthru
      _
    %p482 = scmp.le.s32.totalorder 1, %s34
    %p483 = scmp.lt.s32.totalorder %s34, 4
    %p484 = pnand %p482, %p483
    %p485 = pneg %p484
    // Predicated region
    $region73: #{cdtsti_forward.4} parent=5 // pred_check
      _
    $region74: #{cdtsti_forward.4} parent=5 // pred_check_branch
      %487 = sbr.rel (%p484) target = $region76
    $region75: #{cdtsti_forward.4} parent=5 // pred_region
      %s488 = ssub.s32 %s34, 1
      %s489 = smul.u32 6, %s39
      %p490 = scmp.lt.s32.totalorder %s489, 17
      %s491 = scalar_select %p490, %s489, 17
      %s492 = smul.addr %s491, 8
      %s493 = scalar_lea.vmem %s2, %s492
      %p494 = pneg %p60
      %p495 = pneg %p57
      %s496 = sld [smem:[#allocation3 + %s39]]
      %s497 = smul.u32 6, %s496
      %p498 = scmp.lt.s32.totalorder %s497, 17
      %s499 = scalar_select %p498, %s497, 17
      %s500 = smul.addr %s499, 8
      %s501 = scalar_lea.vmem %s3, %s500
      %p502 = pneg %p88
      %p503 = pneg %p85
      %s504 = sld [smem:[#allocation4 + %s39]]
      %s505 = smul.u32 6, %s504
      %p506 = scmp.lt.s32.totalorder %s505, 17
      %s507 = scalar_select %p506, %s505, 17
      %s508 = smul.addr %s507, 8
      %s509 = scalar_lea.vmem %s4, %s508
      %p510 = pneg %p116
      %p511 = pneg %p113
      %p512 = pneg %p137
      %p513 = pneg %p134
      %p514 = pneg %p158
      %p515 = pneg %p155
      %p516 = pneg %p179
      %p517 = pneg %p176
      %p518 = pneg %p200
      %p519 = pneg %p197
      %p520 = pneg %p221
      %p521 = pneg %p218
      %p522 = pneg %p242
      %p523 = pneg %p239
      %p524 = pneg %p263
      %p525 = pneg %p260
      %p526 = pneg %p284
      %p527 = pneg %p281
      %p528 = pneg %p305
      %p529 = pneg %p302
      %p530 = pneg %p326
      %p531 = pneg %p323
      %p532 = pneg %p347
      %p533 = pneg %p344
      %p534 = pneg %p373
      %p535 = pneg %p370
      %s536 = smul.u32 6, %s39
      %p537 = scmp.lt.s32.totalorder %s536, 17
      %s538 = scalar_select %p537, %s536, 17
      %s539 = smul.addr %s538, 8
      %s540 = scalar_lea.vmem %s16, %s539
      %p541 = pneg %p399
      %p542 = pneg %p396
      %p543 = scmp.lt.s32.totalorder %s39, 2
      %s544 = scalar_select %p543, %s39, 2
      %s545 = smul.addr %s544, 24
      %s546 = smul.addr %s545, 8
      %s547 = scalar_lea.vmem %s17, %s546
      %s548 = smul.u32 6, %s39
      %p549 = scmp.lt.s32.totalorder %s548, 17
      %s550 = scalar_select %p549, %s548, 17
      %s551 = smul.addr %s550, 8
      %s552 = scalar_lea.vmem %s2, %s551
      %s553 = smul.u32 6, %s39
      %s554 = sld [smem:[#allocation3 + %s39]]
      %s555 = smul.u32 6, %s554
      %p556 = scmp.lt.s32.totalorder %s555, 17
      %s557 = scalar_select %p556, %s555, 17
      %s558 = smul.addr %s557, 8
      %s559 = scalar_lea.vmem %s3, %s558
      %s560 = sld [smem:[#allocation3 + %s39]]
      %s561 = smul.u32 6, %s560
      %s562 = sld [smem:[#allocation4 + %s39]]
      %s563 = smul.u32 6, %s562
      %p564 = scmp.lt.s32.totalorder %s563, 17
      %s565 = scalar_select %p564, %s563, 17
      %s566 = smul.addr %s565, 8
      %s567 = scalar_lea.vmem %s4, %s566
      %s568 = sld [smem:[#allocation4 + %s39]]
      %s569 = smul.u32 6, %s568
      %s570 = smul.u32 6, %s39
      %p571 = scmp.lt.s32.totalorder %s570, 17
      %s572 = scalar_select %p571, %s570, 17
      %s573 = smul.addr %s572, 8
      %s574 = scalar_lea.vmem %s16, %s573
      %s575 = smul.u32 6, %s39
      %p576 = scmp.lt.s32.totalorder %s39, 2
      %s577 = scalar_select %p576, %s39, 2
      %s578 = smul.addr %s577, 24
      %s579 = smul.addr %s578, 8
      %s580 = scalar_lea.vmem %s17, %s579
      %v581 = vld [vmem:[%s552] sm:$0xff]
      %v582 = vld [vmem:[%s552 + $0x8] sm:$0xff]
      %v583 = vld [vmem:[%s552 + $0x10] sm:$0xff]
      %v584 = vld [vmem:[%s552 + $0x18] sm:$0xff]
      %v585 = vld [vmem:[%s552 + $0x20] sm:$0xff]
      %v586 = vld [vmem:[%s552 + $0x28] sm:$0xff]
      %v587 = vld [vmem:[%s5] sm:$0xff]
      %v588 = vld [vmem:[%s5 + $0x8] sm:$0xff]
      %v589 = vld [vmem:[%s5 + $0x10] sm:$0xff]
      %v590 = vld [vmem:[%s5 + $0x18] sm:$0xff]
      %v591 = vld [vmem:[%s5 + $0x20] sm:$0xff]
      %v592 = vld [vmem:[%s5 + $0x28] sm:$0xff]
      %v593 = vld [vmem:[%s6] sm:$0xff]
      %v594 = vld [vmem:[%s6 + $0x8] sm:$0xff]
      %v595 = vld [vmem:[%s6 + $0x10] sm:$0xff]
      %v596 = vld [vmem:[%s6 + $0x18] sm:$0xff]
      %v597 = vld [vmem:[%s7] sm:$0x1]
      %v598 = vld [vmem:[%s559] sm:$0xff]
      %v599 = vld [vmem:[%s559 + $0x8] sm:$0xff]
      %v600 = vld [vmem:[%s559 + $0x10] sm:$0xff]
      %v601 = vld [vmem:[%s559 + $0x18] sm:$0xff]
      %v602 = vld [vmem:[%s559 + $0x20] sm:$0xff]
      %v603 = vld [vmem:[%s559 + $0x28] sm:$0xff]
      %v605 = vlaneseq
      %v606 = vshrl.u32 %v605, 7
      %v607 = vsub.s32 0, %v606
      %v608 = vrot.slane %v597, %v607
      %vm610 = vcmask 261120
      %v612 = vsel %vm610, %v598, 0
      %v615 = vsel %vm610, %v599, 0
      %v618 = vsel %vm610, %v600, 0
      %v621 = vsel %vm610, %v601, 0
      %v624 = vsel %vm610, %v602, 0
      %v627 = vsel %vm610, %v603, 0
      %629 = vmatprep.subr.mxu0 0.0
      %630 = vmatpush1.msra.mxu0 %v593
      %631 = vmatprep.subr.mxu0 0.0
      %632 = vmatpush1.msra.mxu0 %v594
      %633 = vmatprep.subr.mxu0 0.0
      %634 = vmatpush1.msra.mxu0 %v595
      %635 = vmatprep.subr.mxu0 0.0
      %636 = vmatpush1.msra.mxu0 %v596
      %637 = vmatprep.subr.mxu0 0.0
      %638 = vmatpush1.msra.mxu0 0.0
      %639 = vmatprep.subr.mxu0 0.0
      %640 = vmatpush1.msra.mxu0 0.0
      %641 = vmatprep.subr.mxu0 0.0
      %642 = vmatpush1.msra.mxu0 0.0
      %643 = vmatprep.subr.mxu0 0.0
      %644 = vmatpush1.msra.mxu0 0.0
      %645 = vmatprep.subr.mxu0 0.0
      %646 = vmatpush1.msra.mxu0 0.0
      %647 = vmatprep.subr.mxu0 0.0
      %648 = vmatpush1.msra.mxu0 0.0
      %649 = vmatprep.subr.mxu0 0.0
      %650 = vmatpush1.msra.mxu0 0.0
      %651 = vmatprep.subr.mxu0 0.0
      %652 = vmatpush1.msra.mxu0 0.0
      %653 = vmatprep.subr.mxu0 0.0
      %654 = vmatpush1.msra.mxu0 0.0
      %655 = vmatprep.subr.mxu0 0.0
      %656 = vmatpush1.msra.mxu0 0.0
      %657 = vmatprep.subr.mxu0 0.0
      %658 = vmatpush1.msra.mxu0 0.0
      %659 = vmatprep.subr.mxu0 0.0
      %660 = vmatpush1.msra.mxu0 0.0
      %661 = vmatprep.subr.mxu0 0.0
      %662 = vmatpush1.msra.mxu0 0.0
      %663 = vmatprep.subr.mxu0 0.0
      %664 = vmatpush1.msra.mxu0 0.0
      %665 = vmatprep.subr.mxu0 0.0
      %666 = vmatpush1.msra.mxu0 0.0
      %667 = vmatprep.subr.mxu0 0.0
      %668 = vmatpush1.msra.mxu0 0.0
      %669 = vmatprep.subr.mxu0 0.0
      %670 = vmatpush1.msra.mxu0 0.0
      %671 = vmatprep.subr.mxu0 0.0
      %672 = vmatpush1.msra.mxu0 0.0
      %673 = vmatprep.subr.mxu0 0.0
      %674 = vmatpush1.msra.mxu0 0.0
      %675 = vmatprep.subr.mxu0 0.0
      %676 = vmatpush1.msra.mxu0 0.0
      %677 = vmatprep.subr.mxu0 0.0
      %678 = vmatpush1.msra.mxu0 0.0
      %679 = vmatprep.subr.mxu0 0.0
      %680 = vmatpush1.msra.mxu0 0.0
      %681 = vmatprep.subr.mxu0 0.0
      %682 = vmatpush1.msra.mxu0 0.0
      %683 = vmatprep.subr.mxu0 0.0
      %684 = vmatpush1.msra.mxu0 0.0
      %685 = vmatprep.subr.mxu0 0.0
      %686 = vmatpush1.msra.mxu0 0.0
      %687 = vmatprep.subr.mxu0 0.0
      %688 = vmatpush1.msra.mxu0 0.0
      %689 = vmatprep.subr.mxu0 0.0
      %690 = vmatpush1.msra.mxu0 0.0
      %691 = vmatprep.subr.mxu0 0.0
      %692 = vmatpush1.msra.mxu0 0.0
      %693 = vmatprep.mubr.f32.mxu0 0.0
      %694 = vmatmul.mubr.f32.gmra.mrb[0].mxu0 %v612
      %v695 = vpop.f32.mrb[0].mxu0
      %v696 = vadd.f32 %v608, %v695
      %v697 = vpop.f32.mrb[0].mxu0
      %698 = vmatprep.mubr.f32.mxu0 0.0
      %699 = vmatmul.mubr.f32.gmra.mrb[0].mxu0 %v615
      %v700 = vpop.f32.mrb[0].mxu0
      %v701 = vadd.f32 %v608, %v700
      %v702 = vpop.f32.mrb[0].mxu0
      %703 = vmatprep.mubr.f32.mxu0 0.0
      %704 = vmatmul.mubr.f32.gmra.mrb[0].mxu0 %v618
      %v705 = vpop.f32.mrb[0].mxu0
      %v706 = vadd.f32 %v608, %v705
      %v707 = vpop.f32.mrb[0].mxu0
      %708 = vmatprep.mubr.f32.mxu0 0.0
      %709 = vmatmul.mubr.f32.gmra.mrb[0].mxu0 %v621
      %v710 = vpop.f32.mrb[0].mxu0
      %v711 = vadd.f32 %v608, %v710
      %v712 = vpop.f32.mrb[0].mxu0
      %713 = vmatprep.mubr.f32.mxu0 0.0
      %714 = vmatmul.mubr.f32.gmra.mrb[0].mxu0 %v624
      %v715 = vpop.f32.mrb[0].mxu0
      %v716 = vadd.f32 %v608, %v715
      %v717 = vpop.f32.mrb[0].mxu0
      %718 = vmatprep.mubr.f32.mxu0 0.0
      %719 = vmatmul.mubr.f32.gmra.mrb[0].mxu0 %v627
      %v720 = vpop.f32.mrb[0].mxu0
      %v721 = vadd.f32 %v608, %v720
      %v722 = vpop.f32.mrb[0].mxu0
      %723 = vdwg.mxu0
      %v724 = vld [vmem:[%s567] sm:$0xff]
      %v725 = vld [vmem:[%s567 + $0x8] sm:$0xff]
      %v726 = vld [vmem:[%s567 + $0x10] sm:$0xff]
      %v727 = vld [vmem:[%s567 + $0x18] sm:$0xff]
      %v728 = vld [vmem:[%s567 + $0x20] sm:$0xff]
      %v729 = vld [vmem:[%s567 + $0x28] sm:$0xff]
      %734 = vrot.lane.b32.xlu0 %v593, 96
      %v735 = vpop.permute.xlu0 %734
      %736 = vrot.lane.b32.xlu0 %v594, 96
      %v737 = vpop.permute.xlu0 %736
      %738 = vrot.lane.b32.xlu0 %v595, 96
      %v739 = vpop.permute.xlu0 %738
      %740 = vrot.lane.b32.xlu0 %v596, 96
      %v741 = vpop.permute.xlu0 %740
      %746 = vrot.lane.b32.xlu0 %v608, 96
      %v747 = vpop.permute.xlu0 %746
      %v750 = vsel %vm610, %v724, 0
      %v753 = vsel %vm610, %v725, 0
      %v756 = vsel %vm610, %v726, 0
      %v759 = vsel %vm610, %v727, 0
      %v762 = vsel %vm610, %v728, 0
      %v765 = vsel %vm610, %v729, 0
      %767 = vmatprep.subr.mxu0 0.0
      %768 = vmatpush1.msra.mxu0 %v735
      %769 = vmatprep.subr.mxu0 0.0
      %770 = vmatpush1.msra.mxu0 %v737
      %771 = vmatprep.subr.mxu0 0.0
      %772 = vmatpush1.msra.mxu0 %v739
      %773 = vmatprep.subr.mxu0 0.0
      %774 = vmatpush1.msra.mxu0 %v741
      %775 = vmatprep.subr.mxu0 0.0
      %776 = vmatpush1.msra.mxu0 0.0
      %777 = vmatprep.subr.mxu0 0.0
      %778 = vmatpush1.msra.mxu0 0.0
      %779 = vmatprep.subr.mxu0 0.0
      %780 = vmatpush1.msra.mxu0 0.0
      %781 = vmatprep.subr.mxu0 0.0
      %782 = vmatpush1.msra.mxu0 0.0
      %783 = vmatprep.subr.mxu0 0.0
      %784 = vmatpush1.msra.mxu0 0.0
      %785 = vmatprep.subr.mxu0 0.0
      %786 = vmatpush1.msra.mxu0 0.0
      %787 = vmatprep.subr.mxu0 0.0
      %788 = vmatpush1.msra.mxu0 0.0
      %789 = vmatprep.subr.mxu0 0.0
      %790 = vmatpush1.msra.mxu0 0.0
      %791 = vmatprep.subr.mxu0 0.0
      %792 = vmatpush1.msra.mxu0 0.0
      %793 = vmatprep.subr.mxu0 0.0
      %794 = vmatpush1.msra.mxu0 0.0
      %795 = vmatprep.subr.mxu0 0.0
      %796 = vmatpush1.msra.mxu0 0.0
      %797 = vmatprep.subr.mxu0 0.0
      %798 = vmatpush1.msra.mxu0 0.0
      %799 = vmatprep.subr.mxu0 0.0
      %800 = vmatpush1.msra.mxu0 0.0
      %801 = vmatprep.subr.mxu0 0.0
      %802 = vmatpush1.msra.mxu0 0.0
      %803 = vmatprep.subr.mxu0 0.0
      %804 = vmatpush1.msra.mxu0 0.0
      %805 = vmatprep.subr.mxu0 0.0
      %806 = vmatpush1.msra.mxu0 0.0
      %807 = vmatprep.subr.mxu0 0.0
      %808 = vmatpush1.msra.mxu0 0.0
      %809 = vmatprep.subr.mxu0 0.0
      %810 = vmatpush1.msra.mxu0 0.0
      %811 = vmatprep.subr.mxu0 0.0
      %812 = vmatpush1.msra.mxu0 0.0
      %813 = vmatprep.subr.mxu0 0.0
      %814 = vmatpush1.msra.mxu0 0.0
      %815 = vmatprep.subr.mxu0 0.0
      %816 = vmatpush1.msra.mxu0 0.0
      %817 = vmatprep.subr.mxu0 0.0
      %818 = vmatpush1.msra.mxu0 0.0
      %819 = vmatprep.subr.mxu0 0.0
      %820 = vmatpush1.msra.mxu0 0.0
      %821 = vmatprep.subr.mxu0 0.0
      %822 = vmatpush1.msra.mxu0 0.0
      %823 = vmatprep.subr.mxu0 0.0
      %824 = vmatpush1.msra.mxu0 0.0
      %825 = vmatprep.subr.mxu0 0.0
      %826 = vmatpush1.msra.mxu0 0.0
      %827 = vmatprep.subr.mxu0 0.0
      %828 = vmatpush1.msra.mxu0 0.0
      %829 = vmatprep.subr.mxu0 0.0
      %830 = vmatpush1.msra.mxu0 0.0
      %831 = vmatprep.mubr.f32.mxu0 0.0
      %832 = vmatmul.mubr.f32.gmra.mrb[0].mxu0 %v750
      %v833 = vpop.f32.mrb[0].mxu0
      %v834 = vadd.f32 %v747, %v833
      %v835 = vpop.f32.mrb[0].mxu0
      %836 = vmatprep.mubr.f32.mxu0 0.0
      %837 = vmatmul.mubr.f32.gmra.mrb[0].mxu0 %v753
      %v838 = vpop.f32.mrb[0].mxu0
      %v839 = vadd.f32 %v747, %v838
      %v840 = vpop.f32.mrb[0].mxu0
      %841 = vmatprep.mubr.f32.mxu0 0.0
      %842 = vmatmul.mubr.f32.gmra.mrb[0].mxu0 %v756
      %v843 = vpop.f32.mrb[0].mxu0
      %v844 = vadd.f32 %v747, %v843
      %v845 = vpop.f32.mrb[0].mxu0
      %846 = vmatprep.mubr.f32.mxu0 0.0
      %847 = vmatmul.mubr.f32.gmra.mrb[0].mxu0 %v759
      %v848 = vpop.f32.mrb[0].mxu0
      %v849 = vadd.f32 %v747, %v848
      %v850 = vpop.f32.mrb[0].mxu0
      %851 = vmatprep.mubr.f32.mxu0 0.0
      %852 = vmatmul.mubr.f32.gmra.mrb[0].mxu0 %v762
      %v853 = vpop.f32.mrb[0].mxu0
      %v854 = vadd.f32 %v747, %v853
      %v855 = vpop.f32.mrb[0].mxu0
      %856 = vmatprep.mubr.f32.mxu0 0.0
      %857 = vmatmul.mubr.f32.gmra.mrb[0].mxu0 %v765
      %v858 = vpop.f32.mrb[0].mxu0
      %v859 = vadd.f32 %v747, %v858
      %v860 = vpop.f32.mrb[0].mxu0
      %861 = vdwg.mxu0
      %v862 = vld [vmem:[%s8] sm:$0xff]
      %v863 = vld [vmem:[%s8 + $0x8] sm:$0xff]
      %v864 = vld [vmem:[%s8 + $0x10] sm:$0xff]
      %v865 = vld [vmem:[%s8 + $0x18] sm:$0xff]
      %vm866 = vcmask 64512
      %v868 = vsel %vm866, %v696, 0
      %v871 = vsel %vm866, %v701, 0
      %v874 = vsel %vm866, %v706, 0
      %v877 = vsel %vm866, %v711, 0
      %v880 = vsel %vm866, %v716, 0
      %v883 = vsel %vm866, %v721, 0
      %v886 = vsel %vm866, %v834, 0
      %v889 = vsel %vm866, %v839, 0
      %v892 = vsel %vm866, %v844, 0
      %v895 = vsel %vm866, %v849, 0
      %v898 = vsel %vm866, %v854, 0
      %v901 = vsel %vm866, %v859, 0
      %903 = vmatprep.subr.mxu0 0.0
      %904 = vmatpush1.xpose.msra.mxu0 %v886
      %905 = vmatprep.subr.mxu0 0.0
      %906 = vmatpush1.xpose.msra.mxu0 %v889
      %907 = vmatprep.subr.mxu0 0.0
      %908 = vmatpush1.xpose.msra.mxu0 %v892
      %909 = vmatprep.subr.mxu0 0.0
      %910 = vmatpush1.xpose.msra.mxu0 %v895
      %911 = vmatprep.subr.mxu0 0.0
      %912 = vmatpush1.xpose.msra.mxu0 %v898
      %913 = vmatprep.subr.mxu0 0.0
      %914 = vmatpush1.xpose.msra.mxu0 %v901
      %915 = vmatprep.subr.mxu0 0.0
      %916 = vmatpush1.xpose.msra.mxu0 0.0
      %917 = vmatprep.subr.mxu0 0.0
      %918 = vmatpush1.xpose.msra.mxu0 0.0
      %919 = vmatprep.subr.mxu0 0.0
      %920 = vmatpush1.xpose.msra.mxu0 0.0
      %921 = vmatprep.subr.mxu0 0.0
      %922 = vmatpush1.xpose.msra.mxu0 0.0
      %923 = vmatprep.subr.mxu0 0.0
      %924 = vmatpush1.xpose.msra.mxu0 0.0
      %925 = vmatprep.subr.mxu0 0.0
      %926 = vmatpush1.xpose.msra.mxu0 0.0
      %927 = vmatprep.subr.mxu0 0.0
      %928 = vmatpush1.xpose.msra.mxu0 0.0
      %929 = vmatprep.subr.mxu0 0.0
      %930 = vmatpush1.xpose.msra.mxu0 0.0
      %931 = vmatprep.subr.mxu0 0.0
      %932 = vmatpush1.xpose.msra.mxu0 0.0
      %933 = vmatprep.subr.mxu0 0.0
      %934 = vmatpush1.xpose.msra.mxu0 0.0
      %935 = vmatprep.subr.mxu0 0.0
      %936 = vmatpush1.xpose.msra.mxu0 0.0
      %937 = vmatprep.subr.mxu0 0.0
      %938 = vmatpush1.xpose.msra.mxu0 0.0
      %939 = vmatprep.subr.mxu0 0.0
      %940 = vmatpush1.xpose.msra.mxu0 0.0
      %941 = vmatprep.subr.mxu0 0.0
      %942 = vmatpush1.xpose.msra.mxu0 0.0
      %943 = vmatprep.subr.mxu0 0.0
      %944 = vmatpush1.xpose.msra.mxu0 0.0
      %945 = vmatprep.subr.mxu0 0.0
      %946 = vmatpush1.xpose.msra.mxu0 0.0
      %947 = vmatprep.subr.mxu0 0.0
      %948 = vmatpush1.xpose.msra.mxu0 0.0
      %949 = vmatprep.subr.mxu0 0.0
      %950 = vmatpush1.xpose.msra.mxu0 0.0
      %951 = vmatprep.subr.mxu0 0.0
      %952 = vmatpush1.xpose.msra.mxu0 0.0
      %953 = vmatprep.subr.mxu0 0.0
      %954 = vmatpush1.xpose.msra.mxu0 0.0
      %955 = vmatprep.subr.mxu0 0.0
      %956 = vmatpush1.xpose.msra.mxu0 0.0
      %957 = vmatprep.subr.mxu0 0.0
      %958 = vmatpush1.xpose.msra.mxu0 0.0
      %959 = vmatprep.subr.mxu0 0.0
      %960 = vmatpush1.xpose.msra.mxu0 0.0
      %961 = vmatprep.subr.mxu0 0.0
      %962 = vmatpush1.xpose.msra.mxu0 0.0
      %963 = vmatprep.subr.mxu0 0.0
      %964 = vmatpush1.xpose.msra.mxu0 0.0
      %965 = vmatprep.subr.mxu0 0.0
      %966 = vmatpush1.xpose.msra.mxu0 0.0
      %967 = vmatprep.mubr.f32.mxu0 0.0
      %968 = vmatmul.mubr.f32.gmra.mrb[0].mxu0 %v868
      %v969 = vpop.f32.mrb[0].mxu0
      %v970 = vadd.f32 0.0, %v969
      %v971 = vpop.f32.mrb[0].mxu0
      %972 = vmatprep.mubr.f32.mxu0 0.0
      %973 = vmatmul.mubr.f32.gmra.mrb[0].mxu0 %v871
      %v974 = vpop.f32.mrb[0].mxu0
      %v975 = vadd.f32 0.0, %v974
      %v976 = vpop.f32.mrb[0].mxu0
      %977 = vmatprep.mubr.f32.mxu0 0.0
      %978 = vmatmul.mubr.f32.gmra.mrb[0].mxu0 %v874
      %v979 = vpop.f32.mrb[0].mxu0
      %v980 = vadd.f32 0.0, %v979
      %v981 = vpop.f32.mrb[0].mxu0
      %982 = vmatprep.mubr.f32.mxu0 0.0
      %983 = vmatmul.mubr.f32.gmra.mrb[0].mxu0 %v877
      %v984 = vpop.f32.mrb[0].mxu0
      %v985 = vadd.f32 0.0, %v984
      %v986 = vpop.f32.mrb[0].mxu0
      %987 = vmatprep.mubr.f32.mxu0 0.0
      %988 = vmatmul.mubr.f32.gmra.mrb[0].mxu0 %v880
      %v989 = vpop.f32.mrb[0].mxu0
      %v990 = vadd.f32 0.0, %v989
      %v991 = vpop.f32.mrb[0].mxu0
      %992 = vmatprep.mubr.f32.mxu0 0.0
      %993 = vmatmul.mubr.f32.gmra.mrb[0].mxu0 %v883
      %v994 = vpop.f32.mrb[0].mxu0
      %v995 = vadd.f32 0.0, %v994
      %v996 = vpop.f32.mrb[0].mxu0
      %997 = vdwg.mxu0
      %v998 = vmul.f32 %v970, 0.35355338
      %v999 = vmul.f32 %v975, 0.35355338
      %v1000 = vmul.f32 %v980, 0.35355338
      %v1001 = vmul.f32 %v985, 0.35355338
      %v1002 = vmul.f32 %v990, 0.35355338
      %v1003 = vmul.f32 %v995, 0.35355338
      %vm1004 = vcmask 392192
      %1005 = vst.msk [vmem:[%s580] sm:$0xff] %vm1004, %v998
      %1006 = vst.msk [vmem:[%s580 + $0x8] sm:$0xff] %vm1004, %v999
      %1007 = vst.msk [vmem:[%s580 + $0x10] sm:$0xff] %vm1004, %v1000
      %1008 = vst.msk [vmem:[%s580 + $0x18] sm:$0xff] %vm1004, %v1001
      %1009 = vst.msk [vmem:[%s580 + $0x20] sm:$0xff] %vm1004, %v1002
      %1010 = vst.msk [vmem:[%s580 + $0x28] sm:$0xff] %vm1004, %v1003
      %v1011 = vadd.f32 %v998, %v587
      %v1012 = vadd.f32 %v999, %v588
      %v1013 = vadd.f32 %v1000, %v589
      %v1014 = vadd.f32 %v1001, %v590
      %v1015 = vadd.f32 %v1002, %v591
      %v1016 = vadd.f32 %v1003, %v592
      %v1017 = vsel %vm1004, %v1011, -inf
      %1018 = vmax.xlane.f32.xlu0 %v1017
      %v1019 = vpop.xlane.xlu0 %1018
      %v1020 = vsel %vm1004, %v1012, -inf
      %1021 = vmax.xlane.f32.xlu0 %v1020
      %v1022 = vpop.xlane.xlu0 %1021
      %v1023 = vsel %vm1004, %v1013, -inf
      %1024 = vmax.xlane.f32.xlu0 %v1023
      %v1025 = vpop.xlane.xlu0 %1024
      %v1026 = vsel %vm1004, %v1014, -inf
      %1027 = vmax.xlane.f32.xlu0 %v1026
      %v1028 = vpop.xlane.xlu0 %1027
      %v1029 = vsel %vm1004, %v1015, -inf
      %1030 = vmax.xlane.f32.xlu0 %v1029
      %v1031 = vpop.xlane.xlu0 %1030
      %v1032 = vsel %vm1004, %v1016, -inf
      %1033 = vmax.xlane.f32.xlu0 %v1032
      %v1034 = vpop.xlane.xlu0 %1033
      %v1035 = vsub.f32 %v1011, %v1019
      %v1036 = vsub.f32 %v1012, %v1022
      %v1037 = vsub.f32 %v1013, %v1025
      %v1038 = vsub.f32 %v1014, %v1028
      %v1039 = vsub.f32 %v1015, %v1031
      %v1040 = vsub.f32 %v1016, %v1034
      %v1041 = vmul.f32 %v1035, 1.442695
      %v1042 = vpow.pop %v1041
      %v1043 = vmul.f32 %v1036, 1.442695
      %v1044 = vpow.pop %v1043
      %v1045 = vmul.f32 %v1037, 1.442695
      %v1046 = vpow.pop %v1045
      %v1047 = vmul.f32 %v1038, 1.442695
      %v1048 = vpow.pop %v1047
      %v1049 = vmul.f32 %v1039, 1.442695
      %v1050 = vpow.pop %v1049
      %v1051 = vmul.f32 %v1040, 1.442695
      %v1052 = vpow.pop %v1051
      %v1053 = vsel %vm1004, %v1042, 0.0
      %1054 = vadd.xlane.f32.xlu0 %v1053
      %v1055 = vpop.xlane.xlu0 %1054
      %v1056 = vsel %vm1004, %v1044, 0.0
      %1057 = vadd.xlane.f32.xlu0 %v1056
      %v1058 = vpop.xlane.xlu0 %1057
      %v1059 = vsel %vm1004, %v1046, 0.0
      %1060 = vadd.xlane.f32.xlu0 %v1059
      %v1061 = vpop.xlane.xlu0 %1060
      %v1062 = vsel %vm1004, %v1048, 0.0
      %1063 = vadd.xlane.f32.xlu0 %v1062
      %v1064 = vpop.xlane.xlu0 %1063
      %v1065 = vsel %vm1004, %v1050, 0.0
      %1066 = vadd.xlane.f32.xlu0 %v1065
      %v1067 = vpop.xlane.xlu0 %1066
      %v1068 = vsel %vm1004, %v1052, 0.0
      %1069 = vadd.xlane.f32.xlu0 %v1068
      %v1070 = vpop.xlane.xlu0 %1069
      %v1071 = vrcp.pop %v1055
      %v1072 = vmul.f32 %v1042, %v1071
      %v1073 = vrcp.pop %v1058
      %v1074 = vmul.f32 %v1044, %v1073
      %v1075 = vrcp.pop %v1061
      %v1076 = vmul.f32 %v1046, %v1075
      %v1077 = vrcp.pop %v1064
      %v1078 = vmul.f32 %v1048, %v1077
      %v1079 = vrcp.pop %v1067
      %v1080 = vmul.f32 %v1050, %v1079
      %v1081 = vrcp.pop %v1070
      %v1082 = vmul.f32 %v1052, %v1081
      %1083 = vrot.lane.b32.xlu0 %v834, 96
      %v1084 = vpop.permute.xlu0 %1083
      %1085 = vrot.lane.b32.xlu0 %v839, 96
      %v1086 = vpop.permute.xlu0 %1085
      %1087 = vrot.lane.b32.xlu0 %v844, 96
      %v1088 = vpop.permute.xlu0 %1087
      %1089 = vrot.lane.b32.xlu0 %v849, 96
      %v1090 = vpop.permute.xlu0 %1089
      %1091 = vrot.lane.b32.xlu0 %v854, 96
      %v1092 = vpop.permute.xlu0 %1091
      %1093 = vrot.lane.b32.xlu0 %v859, 96
      %v1094 = vpop.permute.xlu0 %1093
      %v1102 = vsel %vm1004, %v1072, 0
      %v1105 = vsel %vm1004, %v1074, 0
      %v1108 = vsel %vm1004, %v1076, 0
      %v1111 = vsel %vm1004, %v1078, 0
      %v1114 = vsel %vm1004, %v1080, 0
      %v1117 = vsel %vm1004, %v1082, 0
      %1119 = vmatprep.subr.mxu0 0.0
      %1120 = vmatpush1.msra.mxu0 %v1084
      %1121 = vmatprep.subr.mxu0 0.0
      %1122 = vmatpush1.msra.mxu0 %v1086
      %1123 = vmatprep.subr.mxu0 0.0
      %1124 = vmatpush1.msra.mxu0 %v1088
      %1125 = vmatprep.subr.mxu0 0.0
      %1126 = vmatpush1.msra.mxu0 %v1090
      %1127 = vmatprep.subr.mxu0 0.0
      %1128 = vmatpush1.msra.mxu0 %v1092
      %1129 = vmatprep.subr.mxu0 0.0
      %1130 = vmatpush1.msra.mxu0 %v1094
      %1131 = vmatprep.subr.mxu0 0.0
      %1132 = vmatpush1.msra.mxu0 0.0
      %1133 = vmatprep.subr.mxu0 0.0
      %1134 = vmatpush1.msra.mxu0 0.0
      %1135 = vmatprep.subr.mxu0 0.0
      %1136 = vmatpush1.msra.mxu0 0.0
      %1137 = vmatprep.subr.mxu0 0.0
      %1138 = vmatpush1.msra.mxu0 0.0
      %1139 = vmatprep.subr.mxu0 0.0
      %1140 = vmatpush1.msra.mxu0 0.0
      %1141 = vmatprep.subr.mxu0 0.0
      %1142 = vmatpush1.msra.mxu0 0.0
      %1143 = vmatprep.subr.mxu0 0.0
      %1144 = vmatpush1.msra.mxu0 0.0
      %1145 = vmatprep.subr.mxu0 0.0
      %1146 = vmatpush1.msra.mxu0 0.0
      %1147 = vmatprep.subr.mxu0 0.0
      %1148 = vmatpush1.msra.mxu0 0.0
      %1149 = vmatprep.subr.mxu0 0.0
      %1150 = vmatpush1.msra.mxu0 0.0
      %1151 = vmatprep.subr.mxu0 0.0
      %1152 = vmatpush1.msra.mxu0 0.0
      %1153 = vmatprep.subr.mxu0 0.0
      %1154 = vmatpush1.msra.mxu0 0.0
      %1155 = vmatprep.subr.mxu0 0.0
      %1156 = vmatpush1.msra.mxu0 0.0
      %1157 = vmatprep.subr.mxu0 0.0
      %1158 = vmatpush1.msra.mxu0 0.0
      %1159 = vmatprep.subr.mxu0 0.0
      %1160 = vmatpush1.msra.mxu0 0.0
      %1161 = vmatprep.subr.mxu0 0.0
      %1162 = vmatpush1.msra.mxu0 0.0
      %1163 = vmatprep.subr.mxu0 0.0
      %1164 = vmatpush1.msra.mxu0 0.0
      %1165 = vmatprep.subr.mxu0 0.0
      %1166 = vmatpush1.msra.mxu0 0.0
      %1167 = vmatprep.subr.mxu0 0.0
      %1168 = vmatpush1.msra.mxu0 0.0
      %1169 = vmatprep.subr.mxu0 0.0
      %1170 = vmatpush1.msra.mxu0 0.0
      %1171 = vmatprep.subr.mxu0 0.0
      %1172 = vmatpush1.msra.mxu0 0.0
      %1173 = vmatprep.subr.mxu0 0.0
      %1174 = vmatpush1.msra.mxu0 0.0
      %1175 = vmatprep.subr.mxu0 0.0
      %1176 = vmatpush1.msra.mxu0 0.0
      %1177 = vmatprep.subr.mxu0 0.0
      %1178 = vmatpush1.msra.mxu0 0.0
      %1179 = vmatprep.subr.mxu0 0.0
      %1180 = vmatpush1.msra.mxu0 0.0
      %1181 = vmatprep.subr.mxu0 0.0
      %1182 = vmatpush1.msra.mxu0 0.0
      %1183 = vmatprep.mubr.f32.mxu0 0.0
      %1184 = vmatmul.mubr.f32.gmra.mrb[0].mxu0 %v1102
      %v1185 = vpop.f32.mrb[0].mxu0
      %v1186 = vadd.f32 0.0, %v1185
      %v1187 = vpop.f32.mrb[0].mxu0
      %1188 = vmatprep.mubr.f32.mxu0 0.0
      %1189 = vmatmul.mubr.f32.gmra.mrb[0].mxu0 %v1105
      %v1190 = vpop.f32.mrb[0].mxu0
      %v1191 = vadd.f32 0.0, %v1190
      %v1192 = vpop.f32.mrb[0].mxu0
      %1193 = vmatprep.mubr.f32.mxu0 0.0
      %1194 = vmatmul.mubr.f32.gmra.mrb[0].mxu0 %v1108
      %v1195 = vpop.f32.mrb[0].mxu0
      %v1196 = vadd.f32 0.0, %v1195
      %v1197 = vpop.f32.mrb[0].mxu0
      %1198 = vmatprep.mubr.f32.mxu0 0.0
      %1199 = vmatmul.mubr.f32.gmra.mrb[0].mxu0 %v1111
      %v1200 = vpop.f32.mrb[0].mxu0
      %v1201 = vadd.f32 0.0, %v1200
      %v1202 = vpop.f32.mrb[0].mxu0
      %1203 = vmatprep.mubr.f32.mxu0 0.0
      %1204 = vmatmul.mubr.f32.gmra.mrb[0].mxu0 %v1114
      %v1205 = vpop.f32.mrb[0].mxu0
      %v1206 = vadd.f32 0.0, %v1205
      %v1207 = vpop.f32.mrb[0].mxu0
      %1208 = vmatprep.mubr.f32.mxu0 0.0
      %1209 = vmatmul.mubr.f32.gmra.mrb[0].mxu0 %v1117
      %v1210 = vpop.f32.mrb[0].mxu0
      %v1211 = vadd.f32 0.0, %v1210
      %v1212 = vpop.f32.mrb[0].mxu0
      %1213 = vdwg.mxu0
      %1214 = vrot.lane.b32.xlu0 %v696, 120
      %v1215 = vpop.permute.xlu0 %1214
      %1216 = vrot.lane.b32.xlu0 %v701, 120
      %v1217 = vpop.permute.xlu0 %1216
      %1218 = vrot.lane.b32.xlu0 %v706, 120
      %v1219 = vpop.permute.xlu0 %1218
      %1220 = vrot.lane.b32.xlu0 %v711, 120
      %v1221 = vpop.permute.xlu0 %1220
      %1222 = vrot.lane.b32.xlu0 %v716, 120
      %v1223 = vpop.permute.xlu0 %1222
      %1224 = vrot.lane.b32.xlu0 %v721, 120
      %v1225 = vpop.permute.xlu0 %1224
      %1226 = vrot.lane.b32.xlu0 %v834, 120
      %v1227 = vpop.permute.xlu0 %1226
      %1228 = vrot.lane.b32.xlu0 %v839, 120
      %v1229 = vpop.permute.xlu0 %1228
      %1230 = vrot.lane.b32.xlu0 %v844, 120
      %v1231 = vpop.permute.xlu0 %1230
      %1232 = vrot.lane.b32.xlu0 %v849, 120
      %v1233 = vpop.permute.xlu0 %1232
      %1234 = vrot.lane.b32.xlu0 %v854, 120
      %v1235 = vpop.permute.xlu0 %1234
      %1236 = vrot.lane.b32.xlu0 %v859, 120
      %v1237 = vpop.permute.xlu0 %1236
      %v1238 = vsel %vm866, %v1215, 0
      %v1240 = vsel %vm866, %v1217, 0
      %v1242 = vsel %vm866, %v1219, 0
      %v1244 = vsel %vm866, %v1221, 0
      %v1246 = vsel %vm866, %v1223, 0
      %v1248 = vsel %vm866, %v1225, 0
      %v1250 = vsel %vm866, %v1227, 0
      %v1252 = vsel %vm866, %v1229, 0
      %v1254 = vsel %vm866, %v1231, 0
      %v1256 = vsel %vm866, %v1233, 0
      %v1258 = vsel %vm866, %v1235, 0
      %v1260 = vsel %vm866, %v1237, 0
      %1262 = vmatprep.subr.mxu0 0.0
      %1263 = vmatpush1.xpose.msra.mxu0 %v1250
      %1264 = vmatprep.subr.mxu0 0.0
      %1265 = vmatpush1.xpose.msra.mxu0 %v1252
      %1266 = vmatprep.subr.mxu0 0.0
      %1267 = vmatpush1.xpose.msra.mxu0 %v1254
      %1268 = vmatprep.subr.mxu0 0.0
      %1269 = vmatpush1.xpose.msra.mxu0 %v1256
      %1270 = vmatprep.subr.mxu0 0.0
      %1271 = vmatpush1.xpose.msra.mxu0 %v1258
      %1272 = vmatprep.subr.mxu0 0.0
      %1273 = vmatpush1.xpose.msra.mxu0 %v1260
      %1274 = vmatprep.subr.mxu0 0.0
      %1275 = vmatpush1.xpose.msra.mxu0 0.0
      %1276 = vmatprep.subr.mxu0 0.0
      %1277 = vmatpush1.xpose.msra.mxu0 0.0
      %1278 = vmatprep.subr.mxu0 0.0
      %1279 = vmatpush1.xpose.msra.mxu0 0.0
      %1280 = vmatprep.subr.mxu0 0.0
      %1281 = vmatpush1.xpose.msra.mxu0 0.0
      %1282 = vmatprep.subr.mxu0 0.0
      %1283 = vmatpush1.xpose.msra.mxu0 0.0
      %1284 = vmatprep.subr.mxu0 0.0
      %1285 = vmatpush1.xpose.msra.mxu0 0.0
      %1286 = vmatprep.subr.mxu0 0.0
      %1287 = vmatpush1.xpose.msra.mxu0 0.0
      %1288 = vmatprep.subr.mxu0 0.0
      %1289 = vmatpush1.xpose.msra.mxu0 0.0
      %1290 = vmatprep.subr.mxu0 0.0
      %1291 = vmatpush1.xpose.msra.mxu0 0.0
      %1292 = vmatprep.subr.mxu0 0.0
      %1293 = vmatpush1.xpose.msra.mxu0 0.0
      %1294 = vmatprep.subr.mxu0 0.0
      %1295 = vmatpush1.xpose.msra.mxu0 0.0
      %1296 = vmatprep.subr.mxu0 0.0
      %1297 = vmatpush1.xpose.msra.mxu0 0.0
      %1298 = vmatprep.subr.mxu0 0.0
      %1299 = vmatpush1.xpose.msra.mxu0 0.0
      %1300 = vmatprep.subr.mxu0 0.0
      %1301 = vmatpush1.xpose.msra.mxu0 0.0
      %1302 = vmatprep.subr.mxu0 0.0
      %1303 = vmatpush1.xpose.msra.mxu0 0.0
      %1304 = vmatprep.subr.mxu0 0.0
      %1305 = vmatpush1.xpose.msra.mxu0 0.0
      %1306 = vmatprep.subr.mxu0 0.0
      %1307 = vmatpush1.xpose.msra.mxu0 0.0
      %1308 = vmatprep.subr.mxu0 0.0
      %1309 = vmatpush1.xpose.msra.mxu0 0.0
      %1310 = vmatprep.subr.mxu0 0.0
      %1311 = vmatpush1.xpose.msra.mxu0 0.0
      %1312 = vmatprep.subr.mxu0 0.0
      %1313 = vmatpush1.xpose.msra.mxu0 0.0
      %1314 = vmatprep.subr.mxu0 0.0
      %1315 = vmatpush1.xpose.msra.mxu0 0.0
      %1316 = vmatprep.subr.mxu0 0.0
      %1317 = vmatpush1.xpose.msra.mxu0 0.0
      %1318 = vmatprep.subr.mxu0 0.0
      %1319 = vmatpush1.xpose.msra.mxu0 0.0
      %1320 = vmatprep.subr.mxu0 0.0
      %1321 = vmatpush1.xpose.msra.mxu0 0.0
      %1322 = vmatprep.subr.mxu0 0.0
      %1323 = vmatpush1.xpose.msra.mxu0 0.0
      %1324 = vmatprep.subr.mxu0 0.0
      %1325 = vmatpush1.xpose.msra.mxu0 0.0
      %1326 = vmatprep.mubr.f32.mxu0 0.0
      %1327 = vmatmul.mubr.f32.gmra.mrb[0].mxu0 %v1238
      %v1328 = vpop.f32.mrb[0].mxu0
      %v1329 = vadd.f32 0.0, %v1328
      %v1330 = vpop.f32.mrb[0].mxu0
      %1331 = vmatprep.mubr.f32.mxu0 0.0
      %1332 = vmatmul.mubr.f32.gmra.mrb[0].mxu0 %v1240
      %v1333 = vpop.f32.mrb[0].mxu0
      %v1334 = vadd.f32 0.0, %v1333
      %v1335 = vpop.f32.mrb[0].mxu0
      %1336 = vmatprep.mubr.f32.mxu0 0.0
      %1337 = vmatmul.mubr.f32.gmra.mrb[0].mxu0 %v1242
      %v1338 = vpop.f32.mrb[0].mxu0
      %v1339 = vadd.f32 0.0, %v1338
      %v1340 = vpop.f32.mrb[0].mxu0
      %1341 = vmatprep.mubr.f32.mxu0 0.0
      %1342 = vmatmul.mubr.f32.gmra.mrb[0].mxu0 %v1244
      %v1343 = vpop.f32.mrb[0].mxu0
      %v1344 = vadd.f32 0.0, %v1343
      %v1345 = vpop.f32.mrb[0].mxu0
      %1346 = vmatprep.mubr.f32.mxu0 0.0
      %1347 = vmatmul.mubr.f32.gmra.mrb[0].mxu0 %v1246
      %v1348 = vpop.f32.mrb[0].mxu0
      %v1349 = vadd.f32 0.0, %v1348
      %v1350 = vpop.f32.mrb[0].mxu0
      %1351 = vmatprep.mubr.f32.mxu0 0.0
      %1352 = vmatmul.mubr.f32.gmra.mrb[0].mxu0 %v1248
      %v1353 = vpop.f32.mrb[0].mxu0
      %v1354 = vadd.f32 0.0, %v1353
      %v1355 = vpop.f32.mrb[0].mxu0
      %1356 = vdwg.mxu0
      %v1357 = vmul.f32 %v1329, 0.35355338
      %v1358 = vmul.f32 %v1334, 0.35355338
      %v1359 = vmul.f32 %v1339, 0.35355338
      %v1360 = vmul.f32 %v1344, 0.35355338
      %v1361 = vmul.f32 %v1349, 0.35355338
      %v1362 = vmul.f32 %v1354, 0.35355338
      %s1363 = scalar_lea.vmem %s580, 48
      %1364 = vst.msk [vmem:[%s1363] sm:$0xff] %vm1004, %v1357
      %1365 = vst.msk [vmem:[%s1363 + $0x8] sm:$0xff] %vm1004, %v1358
      %1366 = vst.msk [vmem:[%s1363 + $0x10] sm:$0xff] %vm1004, %v1359
      %1367 = vst.msk [vmem:[%s1363 + $0x18] sm:$0xff] %vm1004, %v1360
      %1368 = vst.msk [vmem:[%s1363 + $0x20] sm:$0xff] %vm1004, %v1361
      %1369 = vst.msk [vmem:[%s1363 + $0x28] sm:$0xff] %vm1004, %v1362
      %v1370 = vadd.f32 %v1357, %v587
      %v1371 = vadd.f32 %v1358, %v588
      %v1372 = vadd.f32 %v1359, %v589
      %v1373 = vadd.f32 %v1360, %v590
      %v1374 = vadd.f32 %v1361, %v591
      %v1375 = vadd.f32 %v1362, %v592
      %v1376 = vsel %vm1004, %v1370, -inf
      %1377 = vmax.xlane.f32.xlu0 %v1376
      %v1378 = vpop.xlane.xlu0 %1377
      %v1379 = vsel %vm1004, %v1371, -inf
      %1380 = vmax.xlane.f32.xlu0 %v1379
      %v1381 = vpop.xlane.xlu0 %1380
      %v1382 = vsel %vm1004, %v1372, -inf
      %1383 = vmax.xlane.f32.xlu0 %v1382
      %v1384 = vpop.xlane.xlu0 %1383
      %v1385 = vsel %vm1004, %v1373, -inf
      %1386 = vmax.xlane.f32.xlu0 %v1385
      %v1387 = vpop.xlane.xlu0 %1386
      %v1388 = vsel %vm1004, %v1374, -inf
      %1389 = vmax.xlane.f32.xlu0 %v1388
      %v1390 = vpop.xlane.xlu0 %1389
      %v1391 = vsel %vm1004, %v1375, -inf
      %1392 = vmax.xlane.f32.xlu0 %v1391
      %v1393 = vpop.xlane.xlu0 %1392
      %v1394 = vsub.f32 %v1370, %v1378
      %v1395 = vsub.f32 %v1371, %v1381
      %v1396 = vsub.f32 %v1372, %v1384
      %v1397 = vsub.f32 %v1373, %v1387
      %v1398 = vsub.f32 %v1374, %v1390
      %v1399 = vsub.f32 %v1375, %v1393
      %v1400 = vmul.f32 %v1394, 1.442695
      %v1401 = vpow.pop %v1400
      %v1402 = vmul.f32 %v1395, 1.442695
      %v1403 = vpow.pop %v1402
      %v1404 = vmul.f32 %v1396, 1.442695
      %v1405 = vpow.pop %v1404
      %v1406 = vmul.f32 %v1397, 1.442695
      %v1407 = vpow.pop %v1406
      %v1408 = vmul.f32 %v1398, 1.442695
      %v1409 = vpow.pop %v1408
      %v1410 = vmul.f32 %v1399, 1.442695
      %v1411 = vpow.pop %v1410
      %v1412 = vsel %vm1004, %v1401, 0.0
      %1413 = vadd.xlane.f32.xlu0 %v1412
      %v1414 = vpop.xlane.xlu0 %1413
      %v1415 = vsel %vm1004, %v1403, 0.0
      %1416 = vadd.xlane.f32.xlu0 %v1415
      %v1417 = vpop.xlane.xlu0 %1416
      %v1418 = vsel %vm1004, %v1405, 0.0
      %1419 = vadd.xlane.f32.xlu0 %v1418
      %v1420 = vpop.xlane.xlu0 %1419
      %v1421 = vsel %vm1004, %v1407, 0.0
      %1422 = vadd.xlane.f32.xlu0 %v1421
      %v1423 = vpop.xlane.xlu0 %1422
      %v1424 = vsel %vm1004, %v1409, 0.0
      %1425 = vadd.xlane.f32.xlu0 %v1424
      %v1426 = vpop.xlane.xlu0 %1425
      %v1427 = vsel %vm1004, %v1411, 0.0
      %1428 = vadd.xlane.f32.xlu0 %v1427
      %v1429 = vpop.xlane.xlu0 %1428
      %v1430 = vrcp.pop %v1414
      %v1431 = vmul.f32 %v1401, %v1430
      %v1432 = vrcp.pop %v1417
      %v1433 = vmul.f32 %v1403, %v1432
      %v1434 = vrcp.pop %v1420
      %v1435 = vmul.f32 %v1405, %v1434
      %v1436 = vrcp.pop %v1423
      %v1437 = vmul.f32 %v1407, %v1436
      %v1438 = vrcp.pop %v1426
      %v1439 = vmul.f32 %v1409, %v1438
      %v1440 = vrcp.pop %v1429
      %v1441 = vmul.f32 %v1411, %v1440
      %1442 = vrot.lane.b32.xlu0 %v834, 88
      %v1443 = vpop.permute.xlu0 %1442
      %1444 = vrot.lane.b32.xlu0 %v839, 88
      %v1445 = vpop.permute.xlu0 %1444
      %1446 = vrot.lane.b32.xlu0 %v844, 88
      %v1447 = vpop.permute.xlu0 %1446
      %1448 = vrot.lane.b32.xlu0 %v849, 88
      %v1449 = vpop.permute.xlu0 %1448
      %1450 = vrot.lane.b32.xlu0 %v854, 88
      %v1451 = vpop.permute.xlu0 %1450
      %1452 = vrot.lane.b32.xlu0 %v859, 88
      %v1453 = vpop.permute.xlu0 %1452
      %v1461 = vsel %vm1004, %v1431, 0
      %v1464 = vsel %vm1004, %v1433, 0
      %v1467 = vsel %vm1004, %v1435, 0
      %v1470 = vsel %vm1004, %v1437, 0
      %v1473 = vsel %vm1004, %v1439, 0
      %v1476 = vsel %vm1004, %v1441, 0
      %1478 = vmatprep.subr.mxu0 0.0
      %1479 = vmatpush1.msra.mxu0 %v1443
      %1480 = vmatprep.subr.mxu0 0.0
      %1481 = vmatpush1.msra.mxu0 %v1445
      %1482 = vmatprep.subr.mxu0 0.0
      %1483 = vmatpush1.msra.mxu0 %v1447
      %1484 = vmatprep.subr.mxu0 0.0
      %1485 = vmatpush1.msra.mxu0 %v1449
      %1486 = vmatprep.subr.mxu0 0.0
      %1487 = vmatpush1.msra.mxu0 %v1451
      %1488 = vmatprep.subr.mxu0 0.0
      %1489 = vmatpush1.msra.mxu0 %v1453
      %1490 = vmatprep.subr.mxu0 0.0
      %1491 = vmatpush1.msra.mxu0 0.0
      %1492 = vmatprep.subr.mxu0 0.0
      %1493 = vmatpush1.msra.mxu0 0.0
      %1494 = vmatprep.subr.mxu0 0.0
      %1495 = vmatpush1.msra.mxu0 0.0
      %1496 = vmatprep.subr.mxu0 0.0
      %1497 = vmatpush1.msra.mxu0 0.0
      %1498 = vmatprep.subr.mxu0 0.0
      %1499 = vmatpush1.msra.mxu0 0.0
      %1500 = vmatprep.subr.mxu0 0.0
      %1501 = vmatpush1.msra.mxu0 0.0
      %1502 = vmatprep.subr.mxu0 0.0
      %1503 = vmatpush1.msra.mxu0 0.0
      %1504 = vmatprep.subr.mxu0 0.0
      %1505 = vmatpush1.msra.mxu0 0.0
      %1506 = vmatprep.subr.mxu0 0.0
      %1507 = vmatpush1.msra.mxu0 0.0
      %1508 = vmatprep.subr.mxu0 0.0
      %1509 = vmatpush1.msra.mxu0 0.0
      %1510 = vmatprep.subr.mxu0 0.0
      %1511 = vmatpush1.msra.mxu0 0.0
      %1512 = vmatprep.subr.mxu0 0.0
      %1513 = vmatpush1.msra.mxu0 0.0
      %1514 = vmatprep.subr.mxu0 0.0
      %1515 = vmatpush1.msra.mxu0 0.0
      %1516 = vmatprep.subr.mxu0 0.0
      %1517 = vmatpush1.msra.mxu0 0.0
      %1518 = vmatprep.subr.mxu0 0.0
      %1519 = vmatpush1.msra.mxu0 0.0
      %1520 = vmatprep.subr.mxu0 0.0
      %1521 = vmatpush1.msra.mxu0 0.0
      %1522 = vmatprep.subr.mxu0 0.0
      %1523 = vmatpush1.msra.mxu0 0.0
      %1524 = vmatprep.subr.mxu0 0.0
      %1525 = vmatpush1.msra.mxu0 0.0
      %1526 = vmatprep.subr.mxu0 0.0
      %1527 = vmatpush1.msra.mxu0 0.0
      %1528 = vmatprep.subr.mxu0 0.0
      %1529 = vmatpush1.msra.mxu0 0.0
      %1530 = vmatprep.subr.mxu0 0.0
      %1531 = vmatpush1.msra.mxu0 0.0
      %1532 = vmatprep.subr.mxu0 0.0
      %1533 = vmatpush1.msra.mxu0 0.0
      %1534 = vmatprep.subr.mxu0 0.0
      %1535 = vmatpush1.msra.mxu0 0.0
      %1536 = vmatprep.subr.mxu0 0.0
      %1537 = vmatpush1.msra.mxu0 0.0
      %1538 = vmatprep.subr.mxu0 0.0
      %1539 = vmatpush1.msra.mxu0 0.0
      %1540 = vmatprep.subr.mxu0 0.0
      %1541 = vmatpush1.msra.mxu0 0.0
      %1542 = vmatprep.mubr.f32.mxu0 0.0
      %1543 = vmatmul.mubr.f32.gmra.mrb[0].mxu0 %v1461
      %v1544 = vpop.f32.mrb[0].mxu0
      %v1545 = vadd.f32 0.0, %v1544
      %v1546 = vpop.f32.mrb[0].mxu0
      %1547 = vmatprep.mubr.f32.mxu0 0.0
      %1548 = vmatmul.mubr.f32.gmra.mrb[0].mxu0 %v1464
      %v1549 = vpop.f32.mrb[0].mxu0
      %v1550 = vadd.f32 0.0, %v1549
      %v1551 = vpop.f32.mrb[0].mxu0
      %1552 = vmatprep.mubr.f32.mxu0 0.0
      %1553 = vmatmul.mubr.f32.gmra.mrb[0].mxu0 %v1467
      %v1554 = vpop.f32.mrb[0].mxu0
      %v1555 = vadd.f32 0.0, %v1554
      %v1556 = vpop.f32.mrb[0].mxu0
      %1557 = vmatprep.mubr.f32.mxu0 0.0
      %1558 = vmatmul.mubr.f32.gmra.mrb[0].mxu0 %v1470
      %v1559 = vpop.f32.mrb[0].mxu0
      %v1560 = vadd.f32 0.0, %v1559
      %v1561 = vpop.f32.mrb[0].mxu0
      %1562 = vmatprep.mubr.f32.mxu0 0.0
      %1563 = vmatmul.mubr.f32.gmra.mrb[0].mxu0 %v1473
      %v1564 = vpop.f32.mrb[0].mxu0
      %v1565 = vadd.f32 0.0, %v1564
      %v1566 = vpop.f32.mrb[0].mxu0
      %1567 = vmatprep.mubr.f32.mxu0 0.0
      %1568 = vmatmul.mubr.f32.gmra.mrb[0].mxu0 %v1476
      %v1569 = vpop.f32.mrb[0].mxu0
      %v1570 = vadd.f32 0.0, %v1569
      %v1571 = vpop.f32.mrb[0].mxu0
      %1572 = vdwg.mxu0
      %v1574 = vsel %vm866, %v1545, 0
      %v1577 = vsel %vm866, %v1550, 0
      %v1580 = vsel %vm866, %v1555, 0
      %v1583 = vsel %vm866, %v1560, 0
      %v1586 = vsel %vm866, %v1565, 0
      %v1589 = vsel %vm866, %v1570, 0
      %1591 = vmatprep.subr.mxu0 0.0
      %1592 = vmatpush1.msra.mxu0 %v863
      %1593 = vmatprep.subr.mxu0 0.0
      %1594 = vmatpush1.msra.mxu0 0.0
      %1595 = vmatprep.subr.mxu0 0.0
      %1596 = vmatpush1.msra.mxu0 0.0
      %1597 = vmatprep.subr.mxu0 0.0
      %1598 = vmatpush1.msra.mxu0 0.0
      %1599 = vmatprep.subr.mxu0 0.0
      %1600 = vmatpush1.msra.mxu0 0.0
      %1601 = vmatprep.subr.mxu0 0.0
      %1602 = vmatpush1.msra.mxu0 0.0
      %1603 = vmatprep.subr.mxu0 0.0
      %1604 = vmatpush1.msra.mxu0 0.0
      %1605 = vmatprep.subr.mxu0 0.0
      %1606 = vmatpush1.msra.mxu0 0.0
      %1607 = vmatprep.subr.mxu0 0.0
      %1608 = vmatpush1.msra.mxu0 0.0
      %1609 = vmatprep.subr.mxu0 0.0
      %1610 = vmatpush1.msra.mxu0 0.0
      %1611 = vmatprep.subr.mxu0 0.0
      %1612 = vmatpush1.msra.mxu0 0.0
      %1613 = vmatprep.subr.mxu0 0.0
      %1614 = vmatpush1.msra.mxu0 0.0
      %1615 = vmatprep.subr.mxu0 0.0
      %1616 = vmatpush1.msra.mxu0 0.0
      %1617 = vmatprep.subr.mxu0 0.0
      %1618 = vmatpush1.msra.mxu0 0.0
      %1619 = vmatprep.subr.mxu0 0.0
      %1620 = vmatpush1.msra.mxu0 0.0
      %1621 = vmatprep.subr.mxu0 0.0
      %1622 = vmatpush1.msra.mxu0 0.0
      %1623 = vmatprep.subr.mxu0 0.0
      %1624 = vmatpush1.msra.mxu0 0.0
      %1625 = vmatprep.subr.mxu0 0.0
      %1626 = vmatpush1.msra.mxu0 0.0
      %1627 = vmatprep.subr.mxu0 0.0
      %1628 = vmatpush1.msra.mxu0 0.0
      %1629 = vmatprep.subr.mxu0 0.0
      %1630 = vmatpush1.msra.mxu0 0.0
      %1631 = vmatprep.subr.mxu0 0.0
      %1632 = vmatpush1.msra.mxu0 0.0
      %1633 = vmatprep.subr.mxu0 0.0
      %1634 = vmatpush1.msra.mxu0 0.0
      %1635 = vmatprep.subr.mxu0 0.0
      %1636 = vmatpush1.msra.mxu0 0.0
      %1637 = vmatprep.subr.mxu0 0.0
      %1638 = vmatpush1.msra.mxu0 0.0
      %1639 = vmatprep.subr.mxu0 0.0
      %1640 = vmatpush1.msra.mxu0 0.0
      %1641 = vmatprep.subr.mxu0 0.0
      %1642 = vmatpush1.msra.mxu0 0.0
      %1643 = vmatprep.subr.mxu0 0.0
      %1644 = vmatpush1.msra.mxu0 0.0
      %1645 = vmatprep.subr.mxu0 0.0
      %1646 = vmatpush1.msra.mxu0 0.0
      %1647 = vmatprep.subr.mxu0 0.0
      %1648 = vmatpush1.msra.mxu0 0.0
      %1649 = vmatprep.subr.mxu0 0.0
      %1650 = vmatpush1.msra.mxu0 0.0
      %1651 = vmatprep.subr.mxu0 0.0
      %1652 = vmatpush1.msra.mxu0 0.0
      %1653 = vmatprep.subr.mxu0 0.0
      %1654 = vmatpush1.msra.mxu0 0.0
      %1655 = vmatprep.mubr.f32.mxu0 0.0
      %1656 = vmatmul.mubr.f32.gmra.mrb[0].mxu0 %v1574
      %v1657 = vpop.f32.mrb[0].mxu0
      %v1658 = vadd.f32 0.0, %v1657
      %v1659 = vpop.f32.mrb[0].mxu0
      %1660 = vmatprep.mubr.f32.mxu0 0.0
      %1661 = vmatmul.mubr.f32.gmra.mrb[0].mxu0 %v1577
      %v1662 = vpop.f32.mrb[0].mxu0
      %v1663 = vadd.f32 0.0, %v1662
      %v1664 = vpop.f32.mrb[0].mxu0
      %1665 = vmatprep.mubr.f32.mxu0 0.0
      %1666 = vmatmul.mubr.f32.gmra.mrb[0].mxu0 %v1580
      %v1667 = vpop.f32.mrb[0].mxu0
      %v1668 = vadd.f32 0.0, %v1667
      %v1669 = vpop.f32.mrb[0].mxu0
      %1670 = vmatprep.mubr.f32.mxu0 0.0
      %1671 = vmatmul.mubr.f32.gmra.mrb[0].mxu0 %v1583
      %v1672 = vpop.f32.mrb[0].mxu0
      %v1673 = vadd.f32 0.0, %v1672
      %v1674 = vpop.f32.mrb[0].mxu0
      %1675 = vmatprep.mubr.f32.mxu0 0.0
      %1676 = vmatmul.mubr.f32.gmra.mrb[0].mxu0 %v1586
      %v1677 = vpop.f32.mrb[0].mxu0
      %v1678 = vadd.f32 0.0, %v1677
      %v1679 = vpop.f32.mrb[0].mxu0
      %1680 = vmatprep.mubr.f32.mxu0 0.0
      %1681 = vmatmul.mubr.f32.gmra.mrb[0].mxu0 %v1589
      %v1682 = vpop.f32.mrb[0].mxu0
      %v1683 = vadd.f32 0.0, %v1682
      %v1684 = vpop.f32.mrb[0].mxu0
      %1685 = vdwg.mxu0
      %v1687 = vsel %vm866, %v1186, 0
      %v1690 = vsel %vm866, %v1191, 0
      %v1693 = vsel %vm866, %v1196, 0
      %v1696 = vsel %vm866, %v1201, 0
      %v1699 = vsel %vm866, %v1206, 0
      %v1702 = vsel %vm866, %v1211, 0
      %1704 = vmatprep.subr.mxu0 0.0
      %1705 = vmatpush1.msra.mxu0 %v862
      %1706 = vmatprep.subr.mxu0 0.0
      %1707 = vmatpush1.msra.mxu0 0.0
      %1708 = vmatprep.subr.mxu0 0.0
      %1709 = vmatpush1.msra.mxu0 0.0
      %1710 = vmatprep.subr.mxu0 0.0
      %1711 = vmatpush1.msra.mxu0 0.0
      %1712 = vmatprep.subr.mxu0 0.0
      %1713 = vmatpush1.msra.mxu0 0.0
      %1714 = vmatprep.subr.mxu0 0.0
      %1715 = vmatpush1.msra.mxu0 0.0
      %1716 = vmatprep.subr.mxu0 0.0
      %1717 = vmatpush1.msra.mxu0 0.0
      %1718 = vmatprep.subr.mxu0 0.0
      %1719 = vmatpush1.msra.mxu0 0.0
      %1720 = vmatprep.subr.mxu0 0.0
      %1721 = vmatpush1.msra.mxu0 0.0
      %1722 = vmatprep.subr.mxu0 0.0
      %1723 = vmatpush1.msra.mxu0 0.0
      %1724 = vmatprep.subr.mxu0 0.0
      %1725 = vmatpush1.msra.mxu0 0.0
      %1726 = vmatprep.subr.mxu0 0.0
      %1727 = vmatpush1.msra.mxu0 0.0
      %1728 = vmatprep.subr.mxu0 0.0
      %1729 = vmatpush1.msra.mxu0 0.0
      %1730 = vmatprep.subr.mxu0 0.0
      %1731 = vmatpush1.msra.mxu0 0.0
      %1732 = vmatprep.subr.mxu0 0.0
      %1733 = vmatpush1.msra.mxu0 0.0
      %1734 = vmatprep.subr.mxu0 0.0
      %1735 = vmatpush1.msra.mxu0 0.0
      %1736 = vmatprep.subr.mxu0 0.0
      %1737 = vmatpush1.msra.mxu0 0.0
      %1738 = vmatprep.subr.mxu0 0.0
      %1739 = vmatpush1.msra.mxu0 0.0
      %1740 = vmatprep.subr.mxu0 0.0
      %1741 = vmatpush1.msra.mxu0 0.0
      %1742 = vmatprep.subr.mxu0 0.0
      %1743 = vmatpush1.msra.mxu0 0.0
      %1744 = vmatprep.subr.mxu0 0.0
      %1745 = vmatpush1.msra.mxu0 0.0
      %1746 = vmatprep.subr.mxu0 0.0
      %1747 = vmatpush1.msra.mxu0 0.0
      %1748 = vmatprep.subr.mxu0 0.0
      %1749 = vmatpush1.msra.mxu0 0.0
      %1750 = vmatprep.subr.mxu0 0.0
      %1751 = vmatpush1.msra.mxu0 0.0
      %1752 = vmatprep.subr.mxu0 0.0
      %1753 = vmatpush1.msra.mxu0 0.0
      %1754 = vmatprep.subr.mxu0 0.0
      %1755 = vmatpush1.msra.mxu0 0.0
      %1756 = vmatprep.subr.mxu0 0.0
      %1757 = vmatpush1.msra.mxu0 0.0
      %1758 = vmatprep.subr.mxu0 0.0
      %1759 = vmatpush1.msra.mxu0 0.0
      %1760 = vmatprep.subr.mxu0 0.0
      %1761 = vmatpush1.msra.mxu0 0.0
      %1762 = vmatprep.subr.mxu0 0.0
      %1763 = vmatpush1.msra.mxu0 0.0
      %1764 = vmatprep.subr.mxu0 0.0
      %1765 = vmatpush1.msra.mxu0 0.0
      %1766 = vmatprep.subr.mxu0 0.0
      %1767 = vmatpush1.msra.mxu0 0.0
      %1768 = vmatprep.mubr.f32.mxu0 0.0
      %1769 = vmatmul.mubr.f32.gmra.mrb[0].mxu0 %v1687
      %v1770 = vpop.f32.mrb[0].mxu0
      %v1771 = vadd.f32 %v1658, %v1770
      %v1772 = vpop.f32.mrb[0].mxu0
      %1773 = vmatprep.mubr.f32.mxu0 0.0
      %1774 = vmatmul.mubr.f32.gmra.mrb[0].mxu0 %v1690
      %v1775 = vpop.f32.mrb[0].mxu0
      %v1776 = vadd.f32 %v1663, %v1775
      %v1777 = vpop.f32.mrb[0].mxu0
      %1778 = vmatprep.mubr.f32.mxu0 0.0
      %1779 = vmatmul.mubr.f32.gmra.mrb[0].mxu0 %v1693
      %v1780 = vpop.f32.mrb[0].mxu0
      %v1781 = vadd.f32 %v1668, %v1780
      %v1782 = vpop.f32.mrb[0].mxu0
      %1783 = vmatprep.mubr.f32.mxu0 0.0
      %1784 = vmatmul.mubr.f32.gmra.mrb[0].mxu0 %v1696
      %v1785 = vpop.f32.mrb[0].mxu0
      %v1786 = vadd.f32 %v1673, %v1785
      %v1787 = vpop.f32.mrb[0].mxu0
      %1788 = vmatprep.mubr.f32.mxu0 0.0
      %1789 = vmatmul.mubr.f32.gmra.mrb[0].mxu0 %v1699
      %v1790 = vpop.f32.mrb[0].mxu0
      %v1791 = vadd.f32 %v1678, %v1790
      %v1792 = vpop.f32.mrb[0].mxu0
      %1793 = vmatprep.mubr.f32.mxu0 0.0
      %1794 = vmatmul.mubr.f32.gmra.mrb[0].mxu0 %v1702
      %v1795 = vpop.f32.mrb[0].mxu0
      %v1796 = vadd.f32 %v1683, %v1795
      %v1797 = vpop.f32.mrb[0].mxu0
      %1798 = vdwg.mxu0
      %1799 = vrot.lane.b32.xlu0 %v696, 112
      %v1800 = vpop.permute.xlu0 %1799
      %1801 = vrot.lane.b32.xlu0 %v701, 112
      %v1802 = vpop.permute.xlu0 %1801
      %1803 = vrot.lane.b32.xlu0 %v706, 112
      %v1804 = vpop.permute.xlu0 %1803
      %1805 = vrot.lane.b32.xlu0 %v711, 112
      %v1806 = vpop.permute.xlu0 %1805
      %1807 = vrot.lane.b32.xlu0 %v716, 112
      %v1808 = vpop.permute.xlu0 %1807
      %1809 = vrot.lane.b32.xlu0 %v721, 112
      %v1810 = vpop.permute.xlu0 %1809
      %1811 = vrot.lane.b32.xlu0 %v834, 112
      %v1812 = vpop.permute.xlu0 %1811
      %1813 = vrot.lane.b32.xlu0 %v839, 112
      %v1814 = vpop.permute.xlu0 %1813
      %1815 = vrot.lane.b32.xlu0 %v844, 112
      %v1816 = vpop.permute.xlu0 %1815
      %1817 = vrot.lane.b32.xlu0 %v849, 112
      %v1818 = vpop.permute.xlu0 %1817
      %1819 = vrot.lane.b32.xlu0 %v854, 112
      %v1820 = vpop.permute.xlu0 %1819
      %1821 = vrot.lane.b32.xlu0 %v859, 112
      %v1822 = vpop.permute.xlu0 %1821
      %v1823 = vsel %vm866, %v1800, 0
      %v1825 = vsel %vm866, %v1802, 0
      %v1827 = vsel %vm866, %v1804, 0
      %v1829 = vsel %vm866, %v1806, 0
      %v1831 = vsel %vm866, %v1808, 0
      %v1833 = vsel %vm866, %v1810, 0
      %v1835 = vsel %vm866, %v1812, 0
      %v1837 = vsel %vm866, %v1814, 0
      %v1839 = vsel %vm866, %v1816, 0
      %v1841 = vsel %vm866, %v1818, 0
      %v1843 = vsel %vm866, %v1820, 0
      %v1845 = vsel %vm866, %v1822, 0
      %1847 = vmatprep.subr.mxu0 0.0
      %1848 = vmatpush1.xpose.msra.mxu0 %v1835
      %1849 = vmatprep.subr.mxu0 0.0
      %1850 = vmatpush1.xpose.msra.mxu0 %v1837
      %1851 = vmatprep.subr.mxu0 0.0
      %1852 = vmatpush1.xpose.msra.mxu0 %v1839
      %1853 = vmatprep.subr.mxu0 0.0
      %1854 = vmatpush1.xpose.msra.mxu0 %v1841
      %1855 = vmatprep.subr.mxu0 0.0
      %1856 = vmatpush1.xpose.msra.mxu0 %v1843
      %1857 = vmatprep.subr.mxu0 0.0
      %1858 = vmatpush1.xpose.msra.mxu0 %v1845
      %1859 = vmatprep.subr.mxu0 0.0
      %1860 = vmatpush1.xpose.msra.mxu0 0.0
      %1861 = vmatprep.subr.mxu0 0.0
      %1862 = vmatpush1.xpose.msra.mxu0 0.0
      %1863 = vmatprep.subr.mxu0 0.0
      %1864 = vmatpush1.xpose.msra.mxu0 0.0
      %1865 = vmatprep.subr.mxu0 0.0
      %1866 = vmatpush1.xpose.msra.mxu0 0.0
      %1867 = vmatprep.subr.mxu0 0.0
      %1868 = vmatpush1.xpose.msra.mxu0 0.0
      %1869 = vmatprep.subr.mxu0 0.0
      %1870 = vmatpush1.xpose.msra.mxu0 0.0
      %1871 = vmatprep.subr.mxu0 0.0
      %1872 = vmatpush1.xpose.msra.mxu0 0.0
      %1873 = vmatprep.subr.mxu0 0.0
      %1874 = vmatpush1.xpose.msra.mxu0 0.0
      %1875 = vmatprep.subr.mxu0 0.0
      %1876 = vmatpush1.xpose.msra.mxu0 0.0
      %1877 = vmatprep.subr.mxu0 0.0
      %1878 = vmatpush1.xpose.msra.mxu0 0.0
      %1879 = vmatprep.subr.mxu0 0.0
      %1880 = vmatpush1.xpose.msra.mxu0 0.0
      %1881 = vmatprep.subr.mxu0 0.0
      %1882 = vmatpush1.xpose.msra.mxu0 0.0
      %1883 = vmatprep.subr.mxu0 0.0
      %1884 = vmatpush1.xpose.msra.mxu0 0.0
      %1885 = vmatprep.subr.mxu0 0.0
      %1886 = vmatpush1.xpose.msra.mxu0 0.0
      %1887 = vmatprep.subr.mxu0 0.0
      %1888 = vmatpush1.xpose.msra.mxu0 0.0
      %1889 = vmatprep.subr.mxu0 0.0
      %1890 = vmatpush1.xpose.msra.mxu0 0.0
      %1891 = vmatprep.subr.mxu0 0.0
      %1892 = vmatpush1.xpose.msra.mxu0 0.0
      %1893 = vmatprep.subr.mxu0 0.0
      %1894 = vmatpush1.xpose.msra.mxu0 0.0
      %1895 = vmatprep.subr.mxu0 0.0
      %1896 = vmatpush1.xpose.msra.mxu0 0.0
      %1897 = vmatprep.subr.mxu0 0.0
      %1898 = vmatpush1.xpose.msra.mxu0 0.0
      %1899 = vmatprep.subr.mxu0 0.0
      %1900 = vmatpush1.xpose.msra.mxu0 0.0
      %1901 = vmatprep.subr.mxu0 0.0
      %1902 = vmatpush1.xpose.msra.mxu0 0.0
      %1903 = vmatprep.subr.mxu0 0.0
      %1904 = vmatpush1.xpose.msra.mxu0 0.0
      %1905 = vmatprep.subr.mxu0 0.0
      %1906 = vmatpush1.xpose.msra.mxu0 0.0
      %1907 = vmatprep.subr.mxu0 0.0
      %1908 = vmatpush1.xpose.msra.mxu0 0.0
      %1909 = vmatprep.subr.mxu0 0.0
      %1910 = vmatpush1.xpose.msra.mxu0 0.0
      %1911 = vmatprep.mubr.f32.mxu0 0.0
      %1912 = vmatmul.mubr.f32.gmra.mrb[0].mxu0 %v1823
      %v1913 = vpop.f32.mrb[0].mxu0
      %v1914 = vadd.f32 0.0, %v1913
      %v1915 = vpop.f32.mrb[0].mxu0
      %1916 = vmatprep.mubr.f32.mxu0 0.0
      %1917 = vmatmul.mubr.f32.gmra.mrb[0].mxu0 %v1825
      %v1918 = vpop.f32.mrb[0].mxu0
      %v1919 = vadd.f32 0.0, %v1918
      %v1920 = vpop.f32.mrb[0].mxu0
      %1921 = vmatprep.mubr.f32.mxu0 0.0
      %1922 = vmatmul.mubr.f32.gmra.mrb[0].mxu0 %v1827
      %v1923 = vpop.f32.mrb[0].mxu0
      %v1924 = vadd.f32 0.0, %v1923
      %v1925 = vpop.f32.mrb[0].mxu0
      %1926 = vmatprep.mubr.f32.mxu0 0.0
      %1927 = vmatmul.mubr.f32.gmra.mrb[0].mxu0 %v1829
      %v1928 = vpop.f32.mrb[0].mxu0
      %v1929 = vadd.f32 0.0, %v1928
      %v1930 = vpop.f32.mrb[0].mxu0
      %1931 = vmatprep.mubr.f32.mxu0 0.0
      %1932 = vmatmul.mubr.f32.gmra.mrb[0].mxu0 %v1831
      %v1933 = vpop.f32.mrb[0].mxu0
      %v1934 = vadd.f32 0.0, %v1933
      %v1935 = vpop.f32.mrb[0].mxu0
      %1936 = vmatprep.mubr.f32.mxu0 0.0
      %1937 = vmatmul.mubr.f32.gmra.mrb[0].mxu0 %v1833
      %v1938 = vpop.f32.mrb[0].mxu0
      %v1939 = vadd.f32 0.0, %v1938
      %v1940 = vpop.f32.mrb[0].mxu0
      %1941 = vdwg.mxu0
      %v1942 = vmul.f32 %v1914, 0.35355338
      %v1943 = vmul.f32 %v1919, 0.35355338
      %v1944 = vmul.f32 %v1924, 0.35355338
      %v1945 = vmul.f32 %v1929, 0.35355338
      %v1946 = vmul.f32 %v1934, 0.35355338
      %v1947 = vmul.f32 %v1939, 0.35355338
      %s1948 = scalar_lea.vmem %s580, 96
      %1949 = vst.msk [vmem:[%s1948] sm:$0xff] %vm1004, %v1942
      %1950 = vst.msk [vmem:[%s1948 + $0x8] sm:$0xff] %vm1004, %v1943
      %1951 = vst.msk [vmem:[%s1948 + $0x10] sm:$0xff] %vm1004, %v1944
      %1952 = vst.msk [vmem:[%s1948 + $0x18] sm:$0xff] %vm1004, %v1945
      %1953 = vst.msk [vmem:[%s1948 + $0x20] sm:$0xff] %vm1004, %v1946
      %1954 = vst.msk [vmem:[%s1948 + $0x28] sm:$0xff] %vm1004, %v1947
      %v1955 = vadd.f32 %v1942, %v587
      %v1956 = vadd.f32 %v1943, %v588
      %v1957 = vadd.f32 %v1944, %v589
      %v1958 = vadd.f32 %v1945, %v590
      %v1959 = vadd.f32 %v1946, %v591
      %v1960 = vadd.f32 %v1947, %v592
      %v1961 = vsel %vm1004, %v1955, -inf
      %1962 = vmax.xlane.f32.xlu0 %v1961
      %v1963 = vpop.xlane.xlu0 %1962
      %v1964 = vsel %vm1004, %v1956, -inf
      %1965 = vmax.xlane.f32.xlu0 %v1964
      %v1966 = vpop.xlane.xlu0 %1965
      %v1967 = vsel %vm1004, %v1957, -inf
      %1968 = vmax.xlane.f32.xlu0 %v1967
      %v1969 = vpop.xlane.xlu0 %1968
      %v1970 = vsel %vm1004, %v1958, -inf
      %1971 = vmax.xlane.f32.xlu0 %v1970
      %v1972 = vpop.xlane.xlu0 %1971
      %v1973 = vsel %vm1004, %v1959, -inf
      %1974 = vmax.xlane.f32.xlu0 %v1973
      %v1975 = vpop.xlane.xlu0 %1974
      %v1976 = vsel %vm1004, %v1960, -inf
      %1977 = vmax.xlane.f32.xlu0 %v1976
      %v1978 = vpop.xlane.xlu0 %1977
      %v1979 = vsub.f32 %v1955, %v1963
      %v1980 = vsub.f32 %v1956, %v1966
      %v1981 = vsub.f32 %v1957, %v1969
      %v1982 = vsub.f32 %v1958, %v1972
      %v1983 = vsub.f32 %v1959, %v1975
      %v1984 = vsub.f32 %v1960, %v1978
      %v1985 = vmul.f32 %v1979, 1.442695
      %v1986 = vpow.pop %v1985
      %v1987 = vmul.f32 %v1980, 1.442695
      %v1988 = vpow.pop %v1987
      %v1989 = vmul.f32 %v1981, 1.442695
      %v1990 = vpow.pop %v1989
      %v1991 = vmul.f32 %v1982, 1.442695
      %v1992 = vpow.pop %v1991
      %v1993 = vmul.f32 %v1983, 1.442695
      %v1994 = vpow.pop %v1993
      %v1995 = vmul.f32 %v1984, 1.442695
      %v1996 = vpow.pop %v1995
      %v1997 = vsel %vm1004, %v1986, 0.0
      %1998 = vadd.xlane.f32.xlu0 %v1997
      %v1999 = vpop.xlane.xlu0 %1998
      %v2000 = vsel %vm1004, %v1988, 0.0
      %2001 = vadd.xlane.f32.xlu0 %v2000
      %v2002 = vpop.xlane.xlu0 %2001
      %v2003 = vsel %vm1004, %v1990, 0.0
      %2004 = vadd.xlane.f32.xlu0 %v2003
      %v2005 = vpop.xlane.xlu0 %2004
      %v2006 = vsel %vm1004, %v1992, 0.0
      %2007 = vadd.xlane.f32.xlu0 %v2006
      %v2008 = vpop.xlane.xlu0 %2007
      %v2009 = vsel %vm1004, %v1994, 0.0
      %2010 = vadd.xlane.f32.xlu0 %v2009
      %v2011 = vpop.xlane.xlu0 %2010
      %v2012 = vsel %vm1004, %v1996, 0.0
      %2013 = vadd.xlane.f32.xlu0 %v2012
      %v2014 = vpop.xlane.xlu0 %2013
      %v2015 = vrcp.pop %v1999
      %v2016 = vmul.f32 %v1986, %v2015
      %v2017 = vrcp.pop %v2002
      %v2018 = vmul.f32 %v1988, %v2017
      %v2019 = vrcp.pop %v2005
      %v2020 = vmul.f32 %v1990, %v2019
      %v2021 = vrcp.pop %v2008
      %v2022 = vmul.f32 %v1992, %v2021
      %v2023 = vrcp.pop %v2011
      %v2024 = vmul.f32 %v1994, %v2023
      %v2025 = vrcp.pop %v2014
      %v2026 = vmul.f32 %v1996, %v2025
      %2027 = vrot.lane.b32.xlu0 %v834, 80
      %v2028 = vpop.permute.xlu0 %2027
      %2029 = vrot.lane.b32.xlu0 %v839, 80
      %v2030 = vpop.permute.xlu0 %2029
      %2031 = vrot.lane.b32.xlu0 %v844, 80
      %v2032 = vpop.permute.xlu0 %2031
      %2033 = vrot.lane.b32.xlu0 %v849, 80
      %v2034 = vpop.permute.xlu0 %2033
      %2035 = vrot.lane.b32.xlu0 %v854, 80
      %v2036 = vpop.permute.xlu0 %2035
      %2037 = vrot.lane.b32.xlu0 %v859, 80
      %v2038 = vpop.permute.xlu0 %2037
      %v2046 = vsel %vm1004, %v2016, 0
      %v2049 = vsel %vm1004, %v2018, 0
      %v2052 = vsel %vm1004, %v2020, 0
      %v2055 = vsel %vm1004, %v2022, 0
      %v2058 = vsel %vm1004, %v2024, 0
      %v2061 = vsel %vm1004, %v2026, 0
      %2063 = vmatprep.subr.mxu0 0.0
      %2064 = vmatpush1.msra.mxu0 %v2028
      %2065 = vmatprep.subr.mxu0 0.0
      %2066 = vmatpush1.msra.mxu0 %v2030
      %2067 = vmatprep.subr.mxu0 0.0
      %2068 = vmatpush1.msra.mxu0 %v2032
      %2069 = vmatprep.subr.mxu0 0.0
      %2070 = vmatpush1.msra.mxu0 %v2034
      %2071 = vmatprep.subr.mxu0 0.0
      %2072 = vmatpush1.msra.mxu0 %v2036
      %2073 = vmatprep.subr.mxu0 0.0
      %2074 = vmatpush1.msra.mxu0 %v2038
      %2075 = vmatprep.subr.mxu0 0.0
      %2076 = vmatpush1.msra.mxu0 0.0
      %2077 = vmatprep.subr.mxu0 0.0
      %2078 = vmatpush1.msra.mxu0 0.0
      %2079 = vmatprep.subr.mxu0 0.0
      %2080 = vmatpush1.msra.mxu0 0.0
      %2081 = vmatprep.subr.mxu0 0.0
      %2082 = vmatpush1.msra.mxu0 0.0
      %2083 = vmatprep.subr.mxu0 0.0
      %2084 = vmatpush1.msra.mxu0 0.0
      %2085 = vmatprep.subr.mxu0 0.0
      %2086 = vmatpush1.msra.mxu0 0.0
      %2087 = vmatprep.subr.mxu0 0.0
      %2088 = vmatpush1.msra.mxu0 0.0
      %2089 = vmatprep.subr.mxu0 0.0
      %2090 = vmatpush1.msra.mxu0 0.0
      %2091 = vmatprep.subr.mxu0 0.0
      %2092 = vmatpush1.msra.mxu0 0.0
      %2093 = vmatprep.subr.mxu0 0.0
      %2094 = vmatpush1.msra.mxu0 0.0
      %2095 = vmatprep.subr.mxu0 0.0
      %2096 = vmatpush1.msra.mxu0 0.0
      %2097 = vmatprep.subr.mxu0 0.0
      %2098 = vmatpush1.msra.mxu0 0.0
      %2099 = vmatprep.subr.mxu0 0.0
      %2100 = vmatpush1.msra.mxu0 0.0
      %2101 = vmatprep.subr.mxu0 0.0
      %2102 = vmatpush1.msra.mxu0 0.0
      %2103 = vmatprep.subr.mxu0 0.0
      %2104 = vmatpush1.msra.mxu0 0.0
      %2105 = vmatprep.subr.mxu0 0.0
      %2106 = vmatpush1.msra.mxu0 0.0
      %2107 = vmatprep.subr.mxu0 0.0
      %2108 = vmatpush1.msra.mxu0 0.0
      %2109 = vmatprep.subr.mxu0 0.0
      %2110 = vmatpush1.msra.mxu0 0.0
      %2111 = vmatprep.subr.mxu0 0.0
      %2112 = vmatpush1.msra.mxu0 0.0
      %2113 = vmatprep.subr.mxu0 0.0
      %2114 = vmatpush1.msra.mxu0 0.0
      %2115 = vmatprep.subr.mxu0 0.0
      %2116 = vmatpush1.msra.mxu0 0.0
      %2117 = vmatprep.subr.mxu0 0.0
      %2118 = vmatpush1.msra.mxu0 0.0
      %2119 = vmatprep.subr.mxu0 0.0
      %2120 = vmatpush1.msra.mxu0 0.0
      %2121 = vmatprep.subr.mxu0 0.0
      %2122 = vmatpush1.msra.mxu0 0.0
      %2123 = vmatprep.subr.mxu0 0.0
      %2124 = vmatpush1.msra.mxu0 0.0
      %2125 = vmatprep.subr.mxu0 0.0
      %2126 = vmatpush1.msra.mxu0 0.0
      %2127 = vmatprep.mubr.f32.mxu0 0.0
      %2128 = vmatmul.mubr.f32.gmra.mrb[0].mxu0 %v2046
      %v2129 = vpop.f32.mrb[0].mxu0
      %v2130 = vadd.f32 0.0, %v2129
      %v2131 = vpop.f32.mrb[0].mxu0
      %2132 = vmatprep.mubr.f32.mxu0 0.0
      %2133 = vmatmul.mubr.f32.gmra.mrb[0].mxu0 %v2049
      %v2134 = vpop.f32.mrb[0].mxu0
      %v2135 = vadd.f32 0.0, %v2134
      %v2136 = vpop.f32.mrb[0].mxu0
      %2137 = vmatprep.mubr.f32.mxu0 0.0
      %2138 = vmatmul.mubr.f32.gmra.mrb[0].mxu0 %v2052
      %v2139 = vpop.f32.mrb[0].mxu0
      %v2140 = vadd.f32 0.0, %v2139
      %v2141 = vpop.f32.mrb[0].mxu0
      %2142 = vmatprep.mubr.f32.mxu0 0.0
      %2143 = vmatmul.mubr.f32.gmra.mrb[0].mxu0 %v2055
      %v2144 = vpop.f32.mrb[0].mxu0
      %v2145 = vadd.f32 0.0, %v2144
      %v2146 = vpop.f32.mrb[0].mxu0
      %2147 = vmatprep.mubr.f32.mxu0 0.0
      %2148 = vmatmul.mubr.f32.gmra.mrb[0].mxu0 %v2058
      %v2149 = vpop.f32.mrb[0].mxu0
      %v2150 = vadd.f32 0.0, %v2149
      %v2151 = vpop.f32.mrb[0].mxu0
      %2152 = vmatprep.mubr.f32.mxu0 0.0
      %2153 = vmatmul.mubr.f32.gmra.mrb[0].mxu0 %v2061
      %v2154 = vpop.f32.mrb[0].mxu0
      %v2155 = vadd.f32 0.0, %v2154
      %v2156 = vpop.f32.mrb[0].mxu0
      %2157 = vdwg.mxu0
      %v2159 = vsel %vm866, %v2130, 0
      %v2162 = vsel %vm866, %v2135, 0
      %v2165 = vsel %vm866, %v2140, 0
      %v2168 = vsel %vm866, %v2145, 0
      %v2171 = vsel %vm866, %v2150, 0
      %v2174 = vsel %vm866, %v2155, 0
      %2176 = vmatprep.subr.mxu0 0.0
      %2177 = vmatpush1.msra.mxu0 %v864
      %2178 = vmatprep.subr.mxu0 0.0
      %2179 = vmatpush1.msra.mxu0 0.0
      %2180 = vmatprep.subr.mxu0 0.0
      %2181 = vmatpush1.msra.mxu0 0.0
      %2182 = vmatprep.subr.mxu0 0.0
      %2183 = vmatpush1.msra.mxu0 0.0
      %2184 = vmatprep.subr.mxu0 0.0
      %2185 = vmatpush1.msra.mxu0 0.0
      %2186 = vmatprep.subr.mxu0 0.0
      %2187 = vmatpush1.msra.mxu0 0.0
      %2188 = vmatprep.subr.mxu0 0.0
      %2189 = vmatpush1.msra.mxu0 0.0
      %2190 = vmatprep.subr.mxu0 0.0
      %2191 = vmatpush1.msra.mxu0 0.0
      %2192 = vmatprep.subr.mxu0 0.0
      %2193 = vmatpush1.msra.mxu0 0.0
      %2194 = vmatprep.subr.mxu0 0.0
      %2195 = vmatpush1.msra.mxu0 0.0
      %2196 = vmatprep.subr.mxu0 0.0
      %2197 = vmatpush1.msra.mxu0 0.0
      %2198 = vmatprep.subr.mxu0 0.0
      %2199 = vmatpush1.msra.mxu0 0.0
      %2200 = vmatprep.subr.mxu0 0.0
      %2201 = vmatpush1.msra.mxu0 0.0
      %2202 = vmatprep.subr.mxu0 0.0
      %2203 = vmatpush1.msra.mxu0 0.0
      %2204 = vmatprep.subr.mxu0 0.0
      %2205 = vmatpush1.msra.mxu0 0.0
      %2206 = vmatprep.subr.mxu0 0.0
      %2207 = vmatpush1.msra.mxu0 0.0
      %2208 = vmatprep.subr.mxu0 0.0
      %2209 = vmatpush1.msra.mxu0 0.0
      %2210 = vmatprep.subr.mxu0 0.0
      %2211 = vmatpush1.msra.mxu0 0.0
      %2212 = vmatprep.subr.mxu0 0.0
      %2213 = vmatpush1.msra.mxu0 0.0
      %2214 = vmatprep.subr.mxu0 0.0
      %2215 = vmatpush1.msra.mxu0 0.0
      %2216 = vmatprep.subr.mxu0 0.0
      %2217 = vmatpush1.msra.mxu0 0.0
      %2218 = vmatprep.subr.mxu0 0.0
      %2219 = vmatpush1.msra.mxu0 0.0
      %2220 = vmatprep.subr.mxu0 0.0
      %2221 = vmatpush1.msra.mxu0 0.0
      %2222 = vmatprep.subr.mxu0 0.0
      %2223 = vmatpush1.msra.mxu0 0.0
      %2224 = vmatprep.subr.mxu0 0.0
      %2225 = vmatpush1.msra.mxu0 0.0
      %2226 = vmatprep.subr.mxu0 0.0
      %2227 = vmatpush1.msra.mxu0 0.0
      %2228 = vmatprep.subr.mxu0 0.0
      %2229 = vmatpush1.msra.mxu0 0.0
      %2230 = vmatprep.subr.mxu0 0.0
      %2231 = vmatpush1.msra.mxu0 0.0
      %2232 = vmatprep.subr.mxu0 0.0
      %2233 = vmatpush1.msra.mxu0 0.0
      %2234 = vmatprep.subr.mxu0 0.0
      %2235 = vmatpush1.msra.mxu0 0.0
      %2236 = vmatprep.subr.mxu0 0.0
      %2237 = vmatpush1.msra.mxu0 0.0
      %2238 = vmatprep.subr.mxu0 0.0
      %2239 = vmatpush1.msra.mxu0 0.0
      %2240 = vmatprep.mubr.f32.mxu0 0.0
      %2241 = vmatmul.mubr.f32.gmra.mrb[0].mxu0 %v2159
      %v2242 = vpop.f32.mrb[0].mxu0
      %v2243 = vadd.f32 0.0, %v2242
      %v2244 = vpop.f32.mrb[0].mxu0
      %2245 = vmatprep.mubr.f32.mxu0 0.0
      %2246 = vmatmul.mubr.f32.gmra.mrb[0].mxu0 %v2162
      %v2247 = vpop.f32.mrb[0].mxu0
      %v2248 = vadd.f32 0.0, %v2247
      %v2249 = vpop.f32.mrb[0].mxu0
      %2250 = vmatprep.mubr.f32.mxu0 0.0
      %2251 = vmatmul.mubr.f32.gmra.mrb[0].mxu0 %v2165
      %v2252 = vpop.f32.mrb[0].mxu0
      %v2253 = vadd.f32 0.0, %v2252
      %v2254 = vpop.f32.mrb[0].mxu0
      %2255 = vmatprep.mubr.f32.mxu0 0.0
      %2256 = vmatmul.mubr.f32.gmra.mrb[0].mxu0 %v2168
      %v2257 = vpop.f32.mrb[0].mxu0
      %v2258 = vadd.f32 0.0, %v2257
      %v2259 = vpop.f32.mrb[0].mxu0
      %2260 = vmatprep.mubr.f32.mxu0 0.0
      %2261 = vmatmul.mubr.f32.gmra.mrb[0].mxu0 %v2171
      %v2262 = vpop.f32.mrb[0].mxu0
      %v2263 = vadd.f32 0.0, %v2262
      %v2264 = vpop.f32.mrb[0].mxu0
      %2265 = vmatprep.mubr.f32.mxu0 0.0
      %2266 = vmatmul.mubr.f32.gmra.mrb[0].mxu0 %v2174
      %v2267 = vpop.f32.mrb[0].mxu0
      %v2268 = vadd.f32 0.0, %v2267
      %v2269 = vpop.f32.mrb[0].mxu0
      %2270 = vdwg.mxu0
      %v2271 = vadd.f32 %v1771, %v2243
      %v2272 = vadd.f32 %v1776, %v2248
      %v2273 = vadd.f32 %v1781, %v2253
      %v2274 = vadd.f32 %v1786, %v2258
      %v2275 = vadd.f32 %v1791, %v2263
      %v2276 = vadd.f32 %v1796, %v2268
      %2277 = vrot.lane.b32.xlu0 %v696, 104
      %v2278 = vpop.permute.xlu0 %2277
      %2279 = vrot.lane.b32.xlu0 %v701, 104
      %v2280 = vpop.permute.xlu0 %2279
      %2281 = vrot.lane.b32.xlu0 %v706, 104
      %v2282 = vpop.permute.xlu0 %2281
      %2283 = vrot.lane.b32.xlu0 %v711, 104
      %v2284 = vpop.permute.xlu0 %2283
      %2285 = vrot.lane.b32.xlu0 %v716, 104
      %v2286 = vpop.permute.xlu0 %2285
      %2287 = vrot.lane.b32.xlu0 %v721, 104
      %v2288 = vpop.permute.xlu0 %2287
      %2289 = vrot.lane.b32.xlu0 %v834, 104
      %v2290 = vpop.permute.xlu0 %2289
      %2291 = vrot.lane.b32.xlu0 %v839, 104
      %v2292 = vpop.permute.xlu0 %2291
      %2293 = vrot.lane.b32.xlu0 %v844, 104
      %v2294 = vpop.permute.xlu0 %2293
      %2295 = vrot.lane.b32.xlu0 %v849, 104
      %v2296 = vpop.permute.xlu0 %2295
      %2297 = vrot.lane.b32.xlu0 %v854, 104
      %v2298 = vpop.permute.xlu0 %2297
      %2299 = vrot.lane.b32.xlu0 %v859, 104
      %v2300 = vpop.permute.xlu0 %2299
      %v2301 = vsel %vm866, %v2278, 0
      %v2303 = vsel %vm866, %v2280, 0
      %v2305 = vsel %vm866, %v2282, 0
      %v2307 = vsel %vm866, %v2284, 0
      %v2309 = vsel %vm866, %v2286, 0
      %v2311 = vsel %vm866, %v2288, 0
      %v2313 = vsel %vm866, %v2290, 0
      %v2315 = vsel %vm866, %v2292, 0
      %v2317 = vsel %vm866, %v2294, 0
      %v2319 = vsel %vm866, %v2296, 0
      %v2321 = vsel %vm866, %v2298, 0
      %v2323 = vsel %vm866, %v2300, 0
      %2325 = vmatprep.subr.mxu0 0.0
      %2326 = vmatpush1.xpose.msra.mxu0 %v2313
      %2327 = vmatprep.subr.mxu0 0.0
      %2328 = vmatpush1.xpose.msra.mxu0 %v2315
      %2329 = vmatprep.subr.mxu0 0.0
      %2330 = vmatpush1.xpose.msra.mxu0 %v2317
      %2331 = vmatprep.subr.mxu0 0.0
      %2332 = vmatpush1.xpose.msra.mxu0 %v2319
      %2333 = vmatprep.subr.mxu0 0.0
      %2334 = vmatpush1.xpose.msra.mxu0 %v2321
      %2335 = vmatprep.subr.mxu0 0.0
      %2336 = vmatpush1.xpose.msra.mxu0 %v2323
      %2337 = vmatprep.subr.mxu0 0.0
      %2338 = vmatpush1.xpose.msra.mxu0 0.0
      %2339 = vmatprep.subr.mxu0 0.0
      %2340 = vmatpush1.xpose.msra.mxu0 0.0
      %2341 = vmatprep.subr.mxu0 0.0
      %2342 = vmatpush1.xpose.msra.mxu0 0.0
      %2343 = vmatprep.subr.mxu0 0.0
      %2344 = vmatpush1.xpose.msra.mxu0 0.0
      %2345 = vmatprep.subr.mxu0 0.0
      %2346 = vmatpush1.xpose.msra.mxu0 0.0
      %2347 = vmatprep.subr.mxu0 0.0
      %2348 = vmatpush1.xpose.msra.mxu0 0.0
      %2349 = vmatprep.subr.mxu0 0.0
      %2350 = vmatpush1.xpose.msra.mxu0 0.0
      %2351 = vmatprep.subr.mxu0 0.0
      %2352 = vmatpush1.xpose.msra.mxu0 0.0
      %2353 = vmatprep.subr.mxu0 0.0
      %2354 = vmatpush1.xpose.msra.mxu0 0.0
      %2355 = vmatprep.subr.mxu0 0.0
      %2356 = vmatpush1.xpose.msra.mxu0 0.0
      %2357 = vmatprep.subr.mxu0 0.0
      %2358 = vmatpush1.xpose.msra.mxu0 0.0
      %2359 = vmatprep.subr.mxu0 0.0
      %2360 = vmatpush1.xpose.msra.mxu0 0.0
      %2361 = vmatprep.subr.mxu0 0.0
      %2362 = vmatpush1.xpose.msra.mxu0 0.0
      %2363 = vmatprep.subr.mxu0 0.0
      %2364 = vmatpush1.xpose.msra.mxu0 0.0
      %2365 = vmatprep.subr.mxu0 0.0
      %2366 = vmatpush1.xpose.msra.mxu0 0.0
      %2367 = vmatprep.subr.mxu0 0.0
      %2368 = vmatpush1.xpose.msra.mxu0 0.0
      %2369 = vmatprep.subr.mxu0 0.0
      %2370 = vmatpush1.xpose.msra.mxu0 0.0
      %2371 = vmatprep.subr.mxu0 0.0
      %2372 = vmatpush1.xpose.msra.mxu0 0.0
      %2373 = vmatprep.subr.mxu0 0.0
      %2374 = vmatpush1.xpose.msra.mxu0 0.0
      %2375 = vmatprep.subr.mxu0 0.0
      %2376 = vmatpush1.xpose.msra.mxu0 0.0
      %2377 = vmatprep.subr.mxu0 0.0
      %2378 = vmatpush1.xpose.msra.mxu0 0.0
      %2379 = vmatprep.subr.mxu0 0.0
      %2380 = vmatpush1.xpose.msra.mxu0 0.0
      %2381 = vmatprep.subr.mxu0 0.0
      %2382 = vmatpush1.xpose.msra.mxu0 0.0
      %2383 = vmatprep.subr.mxu0 0.0
      %2384 = vmatpush1.xpose.msra.mxu0 0.0
      %2385 = vmatprep.subr.mxu0 0.0
      %2386 = vmatpush1.xpose.msra.mxu0 0.0
      %2387 = vmatprep.subr.mxu0 0.0
      %2388 = vmatpush1.xpose.msra.mxu0 0.0
      %2389 = vmatprep.mubr.f32.mxu0 0.0
      %2390 = vmatmul.mubr.f32.gmra.mrb[0].mxu0 %v2301
      %v2391 = vpop.f32.mrb[0].mxu0
      %v2392 = vadd.f32 0.0, %v2391
      %v2393 = vpop.f32.mrb[0].mxu0
      %2394 = vmatprep.mubr.f32.mxu0 0.0
      %2395 = vmatmul.mubr.f32.gmra.mrb[0].mxu0 %v2303
      %v2396 = vpop.f32.mrb[0].mxu0
      %v2397 = vadd.f32 0.0, %v2396
      %v2398 = vpop.f32.mrb[0].mxu0
      %2399 = vmatprep.mubr.f32.mxu0 0.0
      %2400 = vmatmul.mubr.f32.gmra.mrb[0].mxu0 %v2305
      %v2401 = vpop.f32.mrb[0].mxu0
      %v2402 = vadd.f32 0.0, %v2401
      %v2403 = vpop.f32.mrb[0].mxu0
      %2404 = vmatprep.mubr.f32.mxu0 0.0
      %2405 = vmatmul.mubr.f32.gmra.mrb[0].mxu0 %v2307
      %v2406 = vpop.f32.mrb[0].mxu0
      %v2407 = vadd.f32 0.0, %v2406
      %v2408 = vpop.f32.mrb[0].mxu0
      %2409 = vmatprep.mubr.f32.mxu0 0.0
      %2410 = vmatmul.mubr.f32.gmra.mrb[0].mxu0 %v2309
      %v2411 = vpop.f32.mrb[0].mxu0
      %v2412 = vadd.f32 0.0, %v2411
      %v2413 = vpop.f32.mrb[0].mxu0
      %2414 = vmatprep.mubr.f32.mxu0 0.0
      %2415 = vmatmul.mubr.f32.gmra.mrb[0].mxu0 %v2311
      %v2416 = vpop.f32.mrb[0].mxu0
      %v2417 = vadd.f32 0.0, %v2416
      %v2418 = vpop.f32.mrb[0].mxu0
      %2419 = vdwg.mxu0
      %v2420 = vmul.f32 %v2392, 0.35355338
      %v2421 = vmul.f32 %v2397, 0.35355338
      %v2422 = vmul.f32 %v2402, 0.35355338
      %v2423 = vmul.f32 %v2407, 0.35355338
      %v2424 = vmul.f32 %v2412, 0.35355338
      %v2425 = vmul.f32 %v2417, 0.35355338
      %s2426 = scalar_lea.vmem %s580, 144
      %2427 = vst.msk [vmem:[%s2426] sm:$0xff] %vm1004, %v2420
      %2428 = vst.msk [vmem:[%s2426 + $0x8] sm:$0xff] %vm1004, %v2421
      %2429 = vst.msk [vmem:[%s2426 + $0x10] sm:$0xff] %vm1004, %v2422
      %2430 = vst.msk [vmem:[%s2426 + $0x18] sm:$0xff] %vm1004, %v2423
      %2431 = vst.msk [vmem:[%s2426 + $0x20] sm:$0xff] %vm1004, %v2424
      %2432 = vst.msk [vmem:[%s2426 + $0x28] sm:$0xff] %vm1004, %v2425
      %v2433 = vadd.f32 %v2420, %v587
      %v2434 = vadd.f32 %v2421, %v588
      %v2435 = vadd.f32 %v2422, %v589
      %v2436 = vadd.f32 %v2423, %v590
      %v2437 = vadd.f32 %v2424, %v591
      %v2438 = vadd.f32 %v2425, %v592
      %v2439 = vsel %vm1004, %v2433, -inf
      %2440 = vmax.xlane.f32.xlu0 %v2439
      %v2441 = vpop.xlane.xlu0 %2440
      %v2442 = vsel %vm1004, %v2434, -inf
      %2443 = vmax.xlane.f32.xlu0 %v2442
      %v2444 = vpop.xlane.xlu0 %2443
      %v2445 = vsel %vm1004, %v2435, -inf
      %2446 = vmax.xlane.f32.xlu0 %v2445
      %v2447 = vpop.xlane.xlu0 %2446
      %v2448 = vsel %vm1004, %v2436, -inf
      %2449 = vmax.xlane.f32.xlu0 %v2448
      %v2450 = vpop.xlane.xlu0 %2449
      %v2451 = vsel %vm1004, %v2437, -inf
      %2452 = vmax.xlane.f32.xlu0 %v2451
      %v2453 = vpop.xlane.xlu0 %2452
      %v2454 = vsel %vm1004, %v2438, -inf
      %2455 = vmax.xlane.f32.xlu0 %v2454
      %v2456 = vpop.xlane.xlu0 %2455
      %v2457 = vsub.f32 %v2433, %v2441
      %v2458 = vsub.f32 %v2434, %v2444
      %v2459 = vsub.f32 %v2435, %v2447
      %v2460 = vsub.f32 %v2436, %v2450
      %v2461 = vsub.f32 %v2437, %v2453
      %v2462 = vsub.f32 %v2438, %v2456
      %v2463 = vmul.f32 %v2457, 1.442695
      %v2464 = vpow.pop %v2463
      %v2465 = vmul.f32 %v2458, 1.442695
      %v2466 = vpow.pop %v2465
      %v2467 = vmul.f32 %v2459, 1.442695
      %v2468 = vpow.pop %v2467
      %v2469 = vmul.f32 %v2460, 1.442695
      %v2470 = vpow.pop %v2469
      %v2471 = vmul.f32 %v2461, 1.442695
      %v2472 = vpow.pop %v2471
      %v2473 = vmul.f32 %v2462, 1.442695
      %v2474 = vpow.pop %v2473
      %v2475 = vsel %vm1004, %v2464, 0.0
      %2476 = vadd.xlane.f32.xlu0 %v2475
      %v2477 = vpop.xlane.xlu0 %2476
      %v2478 = vsel %vm1004, %v2466, 0.0
      %2479 = vadd.xlane.f32.xlu0 %v2478
      %v2480 = vpop.xlane.xlu0 %2479
      %v2481 = vsel %vm1004, %v2468, 0.0
      %2482 = vadd.xlane.f32.xlu0 %v2481
      %v2483 = vpop.xlane.xlu0 %2482
      %v2484 = vsel %vm1004, %v2470, 0.0
      %2485 = vadd.xlane.f32.xlu0 %v2484
      %v2486 = vpop.xlane.xlu0 %2485
      %v2487 = vsel %vm1004, %v2472, 0.0
      %2488 = vadd.xlane.f32.xlu0 %v2487
      %v2489 = vpop.xlane.xlu0 %2488
      %v2490 = vsel %vm1004, %v2474, 0.0
      %2491 = vadd.xlane.f32.xlu0 %v2490
      %v2492 = vpop.xlane.xlu0 %2491
      %v2493 = vrcp.pop %v2477
      %v2494 = vmul.f32 %v2464, %v2493
      %v2495 = vrcp.pop %v2480
      %v2496 = vmul.f32 %v2466, %v2495
      %v2497 = vrcp.pop %v2483
      %v2498 = vmul.f32 %v2468, %v2497
      %v2499 = vrcp.pop %v2486
      %v2500 = vmul.f32 %v2470, %v2499
      %v2501 = vrcp.pop %v2489
      %v2502 = vmul.f32 %v2472, %v2501
      %v2503 = vrcp.pop %v2492
      %v2504 = vmul.f32 %v2474, %v2503
      %2505 = vrot.lane.b32.xlu0 %v834, 72
      %v2506 = vpop.permute.xlu0 %2505
      %2507 = vrot.lane.b32.xlu0 %v839, 72
      %v2508 = vpop.permute.xlu0 %2507
      %2509 = vrot.lane.b32.xlu0 %v844, 72
      %v2510 = vpop.permute.xlu0 %2509
      %2511 = vrot.lane.b32.xlu0 %v849, 72
      %v2512 = vpop.permute.xlu0 %2511
      %2513 = vrot.lane.b32.xlu0 %v854, 72
      %v2514 = vpop.permute.xlu0 %2513
      %2515 = vrot.lane.b32.xlu0 %v859, 72
      %v2516 = vpop.permute.xlu0 %2515
      %v2524 = vsel %vm1004, %v2494, 0
      %v2527 = vsel %vm1004, %v2496, 0
      %v2530 = vsel %vm1004, %v2498, 0
      %v2533 = vsel %vm1004, %v2500, 0
      %v2536 = vsel %vm1004, %v2502, 0
      %v2539 = vsel %vm1004, %v2504, 0
      %2541 = vmatprep.subr.mxu0 0.0
      %2542 = vmatpush1.msra.mxu0 %v2506
      %2543 = vmatprep.subr.mxu0 0.0
      %2544 = vmatpush1.msra.mxu0 %v2508
      %2545 = vmatprep.subr.mxu0 0.0
      %2546 = vmatpush1.msra.mxu0 %v2510
      %2547 = vmatprep.subr.mxu0 0.0
      %2548 = vmatpush1.msra.mxu0 %v2512
      %2549 = vmatprep.subr.mxu0 0.0
      %2550 = vmatpush1.msra.mxu0 %v2514
      %2551 = vmatprep.subr.mxu0 0.0
      %2552 = vmatpush1.msra.mxu0 %v2516
      %2553 = vmatprep.subr.mxu0 0.0
      %2554 = vmatpush1.msra.mxu0 0.0
      %2555 = vmatprep.subr.mxu0 0.0
      %2556 = vmatpush1.msra.mxu0 0.0
      %2557 = vmatprep.subr.mxu0 0.0
      %2558 = vmatpush1.msra.mxu0 0.0
      %2559 = vmatprep.subr.mxu0 0.0
      %2560 = vmatpush1.msra.mxu0 0.0
      %2561 = vmatprep.subr.mxu0 0.0
      %2562 = vmatpush1.msra.mxu0 0.0
      %2563 = vmatprep.subr.mxu0 0.0
      %2564 = vmatpush1.msra.mxu0 0.0
      %2565 = vmatprep.subr.mxu0 0.0
      %2566 = vmatpush1.msra.mxu0 0.0
      %2567 = vmatprep.subr.mxu0 0.0
      %2568 = vmatpush1.msra.mxu0 0.0
      %2569 = vmatprep.subr.mxu0 0.0
      %2570 = vmatpush1.msra.mxu0 0.0
      %2571 = vmatprep.subr.mxu0 0.0
      %2572 = vmatpush1.msra.mxu0 0.0
      %2573 = vmatprep.subr.mxu0 0.0
      %2574 = vmatpush1.msra.mxu0 0.0
      %2575 = vmatprep.subr.mxu0 0.0
      %2576 = vmatpush1.msra.mxu0 0.0
      %2577 = vmatprep.subr.mxu0 0.0
      %2578 = vmatpush1.msra.mxu0 0.0
      %2579 = vmatprep.subr.mxu0 0.0
      %2580 = vmatpush1.msra.mxu0 0.0
      %2581 = vmatprep.subr.mxu0 0.0
      %2582 = vmatpush1.msra.mxu0 0.0
      %2583 = vmatprep.subr.mxu0 0.0
      %2584 = vmatpush1.msra.mxu0 0.0
      %2585 = vmatprep.subr.mxu0 0.0
      %2586 = vmatpush1.msra.mxu0 0.0
      %2587 = vmatprep.subr.mxu0 0.0
      %2588 = vmatpush1.msra.mxu0 0.0
      %2589 = vmatprep.subr.mxu0 0.0
      %2590 = vmatpush1.msra.mxu0 0.0
      %2591 = vmatprep.subr.mxu0 0.0
      %2592 = vmatpush1.msra.mxu0 0.0
      %2593 = vmatprep.subr.mxu0 0.0
      %2594 = vmatpush1.msra.mxu0 0.0
      %2595 = vmatprep.subr.mxu0 0.0
      %2596 = vmatpush1.msra.mxu0 0.0
      %2597 = vmatprep.subr.mxu0 0.0
      %2598 = vmatpush1.msra.mxu0 0.0
      %2599 = vmatprep.subr.mxu0 0.0
      %2600 = vmatpush1.msra.mxu0 0.0
      %2601 = vmatprep.subr.mxu0 0.0
      %2602 = vmatpush1.msra.mxu0 0.0
      %2603 = vmatprep.subr.mxu0 0.0
      %2604 = vmatpush1.msra.mxu0 0.0
      %2605 = vmatprep.mubr.f32.mxu0 0.0
      %2606 = vmatmul.mubr.f32.gmra.mrb[0].mxu0 %v2524
      %v2607 = vpop.f32.mrb[0].mxu0
      %v2608 = vadd.f32 0.0, %v2607
      %v2609 = vpop.f32.mrb[0].mxu0
      %2610 = vmatprep.mubr.f32.mxu0 0.0
      %2611 = vmatmul.mubr.f32.gmra.mrb[0].mxu0 %v2527
      %v2612 = vpop.f32.mrb[0].mxu0
      %v2613 = vadd.f32 0.0, %v2612
      %v2614 = vpop.f32.mrb[0].mxu0
      %2615 = vmatprep.mubr.f32.mxu0 0.0
      %2616 = vmatmul.mubr.f32.gmra.mrb[0].mxu0 %v2530
      %v2617 = vpop.f32.mrb[0].mxu0
      %v2618 = vadd.f32 0.0, %v2617
      %v2619 = vpop.f32.mrb[0].mxu0
      %2620 = vmatprep.mubr.f32.mxu0 0.0
      %2621 = vmatmul.mubr.f32.gmra.mrb[0].mxu0 %v2533
      %v2622 = vpop.f32.mrb[0].mxu0
      %v2623 = vadd.f32 0.0, %v2622
      %v2624 = vpop.f32.mrb[0].mxu0
      %2625 = vmatprep.mubr.f32.mxu0 0.0
      %2626 = vmatmul.mubr.f32.gmra.mrb[0].mxu0 %v2536
      %v2627 = vpop.f32.mrb[0].mxu0
      %v2628 = vadd.f32 0.0, %v2627
      %v2629 = vpop.f32.mrb[0].mxu0
      %2630 = vmatprep.mubr.f32.mxu0 0.0
      %2631 = vmatmul.mubr.f32.gmra.mrb[0].mxu0 %v2539
      %v2632 = vpop.f32.mrb[0].mxu0
      %v2633 = vadd.f32 0.0, %v2632
      %v2634 = vpop.f32.mrb[0].mxu0
      %2635 = vdwg.mxu0
      %v2637 = vsel %vm866, %v2608, 0
      %v2640 = vsel %vm866, %v2613, 0
      %v2643 = vsel %vm866, %v2618, 0
      %v2646 = vsel %vm866, %v2623, 0
      %v2649 = vsel %vm866, %v2628, 0
      %v2652 = vsel %vm866, %v2633, 0
      %2654 = vmatprep.subr.mxu0 0.0
      %2655 = vmatpush1.msra.mxu0 %v865
      %2656 = vmatprep.subr.mxu0 0.0
      %2657 = vmatpush1.msra.mxu0 0.0
      %2658 = vmatprep.subr.mxu0 0.0
      %2659 = vmatpush1.msra.mxu0 0.0
      %2660 = vmatprep.subr.mxu0 0.0
      %2661 = vmatpush1.msra.mxu0 0.0
      %2662 = vmatprep.subr.mxu0 0.0
      %2663 = vmatpush1.msra.mxu0 0.0
      %2664 = vmatprep.subr.mxu0 0.0
      %2665 = vmatpush1.msra.mxu0 0.0
      %2666 = vmatprep.subr.mxu0 0.0
      %2667 = vmatpush1.msra.mxu0 0.0
      %2668 = vmatprep.subr.mxu0 0.0
      %2669 = vmatpush1.msra.mxu0 0.0
      %2670 = vmatprep.subr.mxu0 0.0
      %2671 = vmatpush1.msra.mxu0 0.0
      %2672 = vmatprep.subr.mxu0 0.0
      %2673 = vmatpush1.msra.mxu0 0.0
      %2674 = vmatprep.subr.mxu0 0.0
      %2675 = vmatpush1.msra.mxu0 0.0
      %2676 = vmatprep.subr.mxu0 0.0
      %2677 = vmatpush1.msra.mxu0 0.0
      %2678 = vmatprep.subr.mxu0 0.0
      %2679 = vmatpush1.msra.mxu0 0.0
      %2680 = vmatprep.subr.mxu0 0.0
      %2681 = vmatpush1.msra.mxu0 0.0
      %2682 = vmatprep.subr.mxu0 0.0
      %2683 = vmatpush1.msra.mxu0 0.0
      %2684 = vmatprep.subr.mxu0 0.0
      %2685 = vmatpush1.msra.mxu0 0.0
      %2686 = vmatprep.subr.mxu0 0.0
      %2687 = vmatpush1.msra.mxu0 0.0
      %2688 = vmatprep.subr.mxu0 0.0
      %2689 = vmatpush1.msra.mxu0 0.0
      %2690 = vmatprep.subr.mxu0 0.0
      %2691 = vmatpush1.msra.mxu0 0.0
      %2692 = vmatprep.subr.mxu0 0.0
      %2693 = vmatpush1.msra.mxu0 0.0
      %2694 = vmatprep.subr.mxu0 0.0
      %2695 = vmatpush1.msra.mxu0 0.0
      %2696 = vmatprep.subr.mxu0 0.0
      %2697 = vmatpush1.msra.mxu0 0.0
      %2698 = vmatprep.subr.mxu0 0.0
      %2699 = vmatpush1.msra.mxu0 0.0
      %2700 = vmatprep.subr.mxu0 0.0
      %2701 = vmatpush1.msra.mxu0 0.0
      %2702 = vmatprep.subr.mxu0 0.0
      %2703 = vmatpush1.msra.mxu0 0.0
      %2704 = vmatprep.subr.mxu0 0.0
      %2705 = vmatpush1.msra.mxu0 0.0
      %2706 = vmatprep.subr.mxu0 0.0
      %2707 = vmatpush1.msra.mxu0 0.0
      %2708 = vmatprep.subr.mxu0 0.0
      %2709 = vmatpush1.msra.mxu0 0.0
      %2710 = vmatprep.subr.mxu0 0.0
      %2711 = vmatpush1.msra.mxu0 0.0
      %2712 = vmatprep.subr.mxu0 0.0
      %2713 = vmatpush1.msra.mxu0 0.0
      %2714 = vmatprep.subr.mxu0 0.0
      %2715 = vmatpush1.msra.mxu0 0.0
      %2716 = vmatprep.subr.mxu0 0.0
      %2717 = vmatpush1.msra.mxu0 0.0
      %2718 = vmatprep.mubr.f32.mxu0 0.0
      %2719 = vmatmul.mubr.f32.gmra.mrb[0].mxu0 %v2637
      %v2720 = vpop.f32.mrb[0].mxu0
      %v2721 = vadd.f32 0.0, %v2720
      %v2722 = vpop.f32.mrb[0].mxu0
      %2723 = vmatprep.mubr.f32.mxu0 0.0
      %2724 = vmatmul.mubr.f32.gmra.mrb[0].mxu0 %v2640
      %v2725 = vpop.f32.mrb[0].mxu0
      %v2726 = vadd.f32 0.0, %v2725
      %v2727 = vpop.f32.mrb[0].mxu0
      %2728 = vmatprep.mubr.f32.mxu0 0.0
      %2729 = vmatmul.mubr.f32.gmra.mrb[0].mxu0 %v2643
      %v2730 = vpop.f32.mrb[0].mxu0
      %v2731 = vadd.f32 0.0, %v2730
      %v2732 = vpop.f32.mrb[0].mxu0
      %2733 = vmatprep.mubr.f32.mxu0 0.0
      %2734 = vmatmul.mubr.f32.gmra.mrb[0].mxu0 %v2646
      %v2735 = vpop.f32.mrb[0].mxu0
      %v2736 = vadd.f32 0.0, %v2735
      %v2737 = vpop.f32.mrb[0].mxu0
      %2738 = vmatprep.mubr.f32.mxu0 0.0
      %2739 = vmatmul.mubr.f32.gmra.mrb[0].mxu0 %v2649
      %v2740 = vpop.f32.mrb[0].mxu0
      %v2741 = vadd.f32 0.0, %v2740
      %v2742 = vpop.f32.mrb[0].mxu0
      %2743 = vmatprep.mubr.f32.mxu0 0.0
      %2744 = vmatmul.mubr.f32.gmra.mrb[0].mxu0 %v2652
      %v2745 = vpop.f32.mrb[0].mxu0
      %v2746 = vadd.f32 0.0, %v2745
      %v2747 = vpop.f32.mrb[0].mxu0
      %2748 = vdwg.mxu0
      %v2749 = vadd.f32 %v2271, %v2721
      %v2750 = vadd.f32 %v2272, %v2726
      %v2751 = vadd.f32 %v2273, %v2731
      %v2752 = vadd.f32 %v2274, %v2736
      %v2753 = vadd.f32 %v2275, %v2741
      %v2754 = vadd.f32 %v2276, %v2746
      %v2755 = vld [vmem:[%s9] sm:$0x1]
      %v2757 = vlaneseq
      %v2758 = vshrl.u32 %v2757, 7
      %v2759 = vsub.s32 0, %v2758
      %v2760 = vrot.slane %v2755, %v2759
      %v2762 = vadd.f32 %v2749, %v2760
      %v2763 = vadd.f32 %v2750, %v2760
      %v2764 = vadd.f32 %v2751, %v2760
      %v2765 = vadd.f32 %v2752, %v2760
      %v2766 = vadd.f32 %v2753, %v2760
      %v2767 = vadd.f32 %v2754, %v2760
      %v2768 = vadd.f32 %v581, %v2762
      %v2769 = vadd.f32 %v582, %v2763
      %v2770 = vadd.f32 %v583, %v2764
      %v2771 = vadd.f32 %v584, %v2765
      %v2772 = vadd.f32 %v585, %v2766
      %v2773 = vadd.f32 %v586, %v2767
      %v2774 = vsel %vm610, %v2768, 0.0
      %v2775 = vsel %vm610, %v2769, 0.0
      %v2776 = vadd.f32 %v2774, %v2775
      %v2777 = vsel %vm610, %v2770, 0.0
      %v2778 = vadd.f32 %v2776, %v2777
      %v2779 = vsel %vm610, %v2771, 0.0
      %v2780 = vadd.f32 %v2778, %v2779
      %v2781 = vsel %vm610, %v2772, 0.0
      %v2782 = vadd.f32 %v2780, %v2781
      %v2783 = vsel %vm610, %v2773, 0.0
      %v2784 = vadd.f32 %v2782, %v2783
      %v2785 = vrot.slane %v2784, 4
      %v2786 = vadd.f32 %v2784, %v2785
      %v2787 = vrot.slane %v2786, 2
      %v2788 = vadd.f32 %v2786, %v2787
      %v2789 = vrot.slane %v2788, 1
      %v2790 = vadd.f32 %v2788, %v2789
      %v2791 = vrcp.pop 48.0
      %v2792 = vmul.f32 %v2790, %v2791
      %v2793 = vsub.f32 %v2768, %v2792
      %v2794 = vsub.f32 %v2769, %v2792
      %v2795 = vsub.f32 %v2770, %v2792
      %v2796 = vsub.f32 %v2771, %v2792
      %v2797 = vsub.f32 %v2772, %v2792
      %v2798 = vsub.f32 %v2773, %v2792
      %v2799 = vmul.f32 %v2793, %v2793
      %v2800 = vmul.f32 %v2794, %v2794
      %v2801 = vmul.f32 %v2795, %v2795
      %v2802 = vmul.f32 %v2796, %v2796
      %v2803 = vmul.f32 %v2797, %v2797
      %v2804 = vmul.f32 %v2798, %v2798
      %v2805 = vsel %vm610, %v2799, 0.0
      %v2806 = vsel %vm610, %v2800, 0.0
      %v2807 = vadd.f32 %v2805, %v2806
      %v2808 = vsel %vm610, %v2801, 0.0
      %v2809 = vadd.f32 %v2807, %v2808
      %v2810 = vsel %vm610, %v2802, 0.0
      %v2811 = vadd.f32 %v2809, %v2810
      %v2812 = vsel %vm610, %v2803, 0.0
      %v2813 = vadd.f32 %v2811, %v2812
      %v2814 = vsel %vm610, %v2804, 0.0
      %v2815 = vadd.f32 %v2813, %v2814
      %v2816 = vrot.slane %v2815, 4
      %v2817 = vadd.f32 %v2815, %v2816
      %v2818 = vrot.slane %v2817, 2
      %v2819 = vadd.f32 %v2817, %v2818
      %v2820 = vrot.slane %v2819, 1
      %v2821 = vadd.f32 %v2819, %v2820
      %v2822 = vmul.f32 %v2821, %v2791
      %v2823 = vadd.f32 %v2822, 1e-05
      %v2824 = vrsqrt.pop %v2823
      %v2825 = vmul.f32 %v2793, %v2824
      %v2826 = vmul.f32 %v2794, %v2824
      %v2827 = vmul.f32 %v2795, %v2824
      %v2828 = vmul.f32 %v2796, %v2824
      %v2829 = vmul.f32 %v2797, %v2824
      %v2830 = vmul.f32 %v2798, %v2824
      %v2831 = vld [vmem:[%s14] sm:$0x1]
      %v2832 = vlaneseq
      %v2833 = vshrl.u32 %v2832, 7
      %v2834 = vsub.s32 0, %v2833
      %v2835 = vrot.slane %v2831, %v2834
      %v2836 = vmul.f32 %v2825, %v2835
      %v2837 = vmul.f32 %v2826, %v2835
      %v2838 = vmul.f32 %v2827, %v2835
      %v2839 = vmul.f32 %v2828, %v2835
      %v2840 = vmul.f32 %v2829, %v2835
      %v2841 = vmul.f32 %v2830, %v2835
      %v2842 = vld [vmem:[%s14 + $0x1] sm:$0x1]
      %v2843 = vlaneseq
      %v2844 = vshrl.u32 %v2843, 7
      %v2845 = vsub.s32 0, %v2844
      %v2846 = vrot.slane %v2842, %v2845
      %v2847 = vadd.f32 %v2836, %v2846
      %v2848 = vadd.f32 %v2837, %v2846
      %v2849 = vadd.f32 %v2838, %v2846
      %v2850 = vadd.f32 %v2839, %v2846
      %v2851 = vadd.f32 %v2840, %v2846
      %v2852 = vadd.f32 %v2841, %v2846
      %v2853 = vld [vmem:[%s10] sm:$0xff]
      %v2854 = vld [vmem:[%s10 + $0x8] sm:$0xff]
      %v2855 = vld [vmem:[%s10 + $0x10] sm:$0xff]
      %v2856 = vld [vmem:[%s10 + $0x18] sm:$0xff]
      %v2857 = vld [vmem:[%s11] sm:$0x1]
      %v2859 = vlaneseq
      %v2860 = vshrl.u32 %v2859, 7
      %v2861 = vsub.s32 0, %v2860
      %v2862 = vrot.slane %v2857, %v2861
      %v2865 = vsel %vm610, %v2847, 0
      %v2868 = vsel %vm610, %v2848, 0
      %v2871 = vsel %vm610, %v2849, 0
      %v2874 = vsel %vm610, %v2850, 0
      %v2877 = vsel %vm610, %v2851, 0
      %v2880 = vsel %vm610, %v2852, 0
      %2882 = vmatprep.subr.mxu0 0.0
      %2883 = vmatpush1.msra.mxu0 %v2853
      %2884 = vmatprep.subr.mxu0 0.0
      %2885 = vmatpush1.msra.mxu0 %v2854
      %2886 = vmatprep.subr.mxu0 0.0
      %2887 = vmatpush1.msra.mxu0 %v2855
      %2888 = vmatprep.subr.mxu0 0.0
      %2889 = vmatpush1.msra.mxu0 %v2856
      %2890 = vmatprep.subr.mxu0 0.0
      %2891 = vmatpush1.msra.mxu0 0.0
      %2892 = vmatprep.subr.mxu0 0.0
      %2893 = vmatpush1.msra.mxu0 0.0
      %2894 = vmatprep.subr.mxu0 0.0
      %2895 = vmatpush1.msra.mxu0 0.0
      %2896 = vmatprep.subr.mxu0 0.0
      %2897 = vmatpush1.msra.mxu0 0.0
      %2898 = vmatprep.subr.mxu0 0.0
      %2899 = vmatpush1.msra.mxu0 0.0
      %2900 = vmatprep.subr.mxu0 0.0
      %2901 = vmatpush1.msra.mxu0 0.0
      %2902 = vmatprep.subr.mxu0 0.0
      %2903 = vmatpush1.msra.mxu0 0.0
      %2904 = vmatprep.subr.mxu0 0.0
      %2905 = vmatpush1.msra.mxu0 0.0
      %2906 = vmatprep.subr.mxu0 0.0
      %2907 = vmatpush1.msra.mxu0 0.0
      %2908 = vmatprep.subr.mxu0 0.0
      %2909 = vmatpush1.msra.mxu0 0.0
      %2910 = vmatprep.subr.mxu0 0.0
      %2911 = vmatpush1.msra.mxu0 0.0
      %2912 = vmatprep.subr.mxu0 0.0
      %2913 = vmatpush1.msra.mxu0 0.0
      %2914 = vmatprep.subr.mxu0 0.0
      %2915 = vmatpush1.msra.mxu0 0.0
      %2916 = vmatprep.subr.mxu0 0.0
      %2917 = vmatpush1.msra.mxu0 0.0
      %2918 = vmatprep.subr.mxu0 0.0
      %2919 = vmatpush1.msra.mxu0 0.0
      %2920 = vmatprep.subr.mxu0 0.0
      %2921 = vmatpush1.msra.mxu0 0.0
      %2922 = vmatprep.subr.mxu0 0.0
      %2923 = vmatpush1.msra.mxu0 0.0
      %2924 = vmatprep.subr.mxu0 0.0
      %2925 = vmatpush1.msra.mxu0 0.0
      %2926 = vmatprep.subr.mxu0 0.0
      %2927 = vmatpush1.msra.mxu0 0.0
      %2928 = vmatprep.subr.mxu0 0.0
      %2929 = vmatpush1.msra.mxu0 0.0
      %2930 = vmatprep.subr.mxu0 0.0
      %2931 = vmatpush1.msra.mxu0 0.0
      %2932 = vmatprep.subr.mxu0 0.0
      %2933 = vmatpush1.msra.mxu0 0.0
      %2934 = vmatprep.subr.mxu0 0.0
      %2935 = vmatpush1.msra.mxu0 0.0
      %2936 = vmatprep.subr.mxu0 0.0
      %2937 = vmatpush1.msra.mxu0 0.0
      %2938 = vmatprep.subr.mxu0 0.0
      %2939 = vmatpush1.msra.mxu0 0.0
      %2940 = vmatprep.subr.mxu0 0.0
      %2941 = vmatpush1.msra.mxu0 0.0
      %2942 = vmatprep.subr.mxu0 0.0
      %2943 = vmatpush1.msra.mxu0 0.0
      %2944 = vmatprep.subr.mxu0 0.0
      %2945 = vmatpush1.msra.mxu0 0.0
      %2946 = vmatprep.mubr.f32.mxu0 0.0
      %2947 = vmatmul.mubr.f32.gmra.mrb[0].mxu0 %v2865
      %v2948 = vpop.f32.mrb[0].mxu0
      %v2949 = vadd.f32 %v2862, %v2948
      %v2950 = vpop.f32.mrb[0].mxu0
      %2951 = vmatprep.mubr.f32.mxu0 0.0
      %2952 = vmatmul.mubr.f32.gmra.mrb[0].mxu0 %v2868
      %v2953 = vpop.f32.mrb[0].mxu0
      %v2954 = vadd.f32 %v2862, %v2953
      %v2955 = vpop.f32.mrb[0].mxu0
      %2956 = vmatprep.mubr.f32.mxu0 0.0
      %2957 = vmatmul.mubr.f32.gmra.mrb[0].mxu0 %v2871
      %v2958 = vpop.f32.mrb[0].mxu0
      %v2959 = vadd.f32 %v2862, %v2958
      %v2960 = vpop.f32.mrb[0].mxu0
      %2961 = vmatprep.mubr.f32.mxu0 0.0
      %2962 = vmatmul.mubr.f32.gmra.mrb[0].mxu0 %v2874
      %v2963 = vpop.f32.mrb[0].mxu0
      %v2964 = vadd.f32 %v2862, %v2963
      %v2965 = vpop.f32.mrb[0].mxu0
      %2966 = vmatprep.mubr.f32.mxu0 0.0
      %2967 = vmatmul.mubr.f32.gmra.mrb[0].mxu0 %v2877
      %v2968 = vpop.f32.mrb[0].mxu0
      %v2969 = vadd.f32 %v2862, %v2968
      %v2970 = vpop.f32.mrb[0].mxu0
      %2971 = vmatprep.mubr.f32.mxu0 0.0
      %2972 = vmatmul.mubr.f32.gmra.mrb[0].mxu0 %v2880
      %v2973 = vpop.f32.mrb[0].mxu0
      %v2974 = vadd.f32 %v2862, %v2973
      %v2975 = vpop.f32.mrb[0].mxu0
      %2976 = vdwg.mxu0
      %v2977 = vmul.f32 %v2949, 0.5
      %v2978 = vmul.f32 %v2954, 0.5
      %v2979 = vmul.f32 %v2959, 0.5
      %v2980 = vmul.f32 %v2964, 0.5
      %v2981 = vmul.f32 %v2969, 0.5
      %v2982 = vmul.f32 %v2974, 0.5
      %v2983 = vmul.f32 %v2949, 0.70710677
      %v2984 = vmul.f32 %v2954, 0.70710677
      %v2985 = vmul.f32 %v2959, 0.70710677
      %v2986 = vmul.f32 %v2964, 0.70710677
      %v2987 = vmul.f32 %v2969, 0.70710677
      %v2988 = vmul.f32 %v2974, 0.70710677
      %vm2989 = vcmp.ge.f32.partialorder %v2983, 0.0
      %vm2990 = vcmp.ge.f32.partialorder %v2984, 0.0
      %vm2991 = vcmp.ge.f32.partialorder %v2985, 0.0
      %vm2992 = vcmp.ge.f32.partialorder %v2986, 0.0
      %vm2993 = vcmp.ge.f32.partialorder %v2987, 0.0
      %vm2994 = vcmp.ge.f32.partialorder %v2988, 0.0
      %v2995 = vsub.f32 0.0, %v2983
      %v2996 = vsub.f32 0.0, %v2984
      %v2997 = vsub.f32 0.0, %v2985
      %v2998 = vsub.f32 0.0, %v2986
      %v2999 = vsub.f32 0.0, %v2987
      %v3000 = vsub.f32 0.0, %v2988
      %v3001 = vsel %vm2989, %v2983, %v2995
      %v3002 = vsel %vm2990, %v2984, %v2996
      %v3003 = vsel %vm2991, %v2985, %v2997
      %v3004 = vsel %vm2992, %v2986, %v2998
      %v3005 = vsel %vm2993, %v2987, %v2999
      %v3006 = vsel %vm2994, %v2988, %v3000
      %v3007 = vmul.f32 %v3001, 0.3275911
      %v3008 = vmul.f32 %v3002, 0.3275911
      %v3009 = vmul.f32 %v3003, 0.3275911
      %v3010 = vmul.f32 %v3004, 0.3275911
      %v3011 = vmul.f32 %v3005, 0.3275911
      %v3012 = vmul.f32 %v3006, 0.3275911
      %v3013 = vadd.f32 %v3007, 1.0
      %v3014 = vadd.f32 %v3008, 1.0
      %v3015 = vadd.f32 %v3009, 1.0
      %v3016 = vadd.f32 %v3010, 1.0
      %v3017 = vadd.f32 %v3011, 1.0
      %v3018 = vadd.f32 %v3012, 1.0
      %v3019 = vrcp.pop %v3013
      %v3020 = vmul.f32 1.0, %v3019
      %v3021 = vrcp.pop %v3014
      %v3022 = vmul.f32 1.0, %v3021
      %v3023 = vrcp.pop %v3015
      %v3024 = vmul.f32 1.0, %v3023
      %v3025 = vrcp.pop %v3016
      %v3026 = vmul.f32 1.0, %v3025
      %v3027 = vrcp.pop %v3017
      %v3028 = vmul.f32 1.0, %v3027
      %v3029 = vrcp.pop %v3018
      %v3030 = vmul.f32 1.0, %v3029
      %v3031 = vmul.f32 %v3020, 1.0614054
      %v3032 = vmul.f32 %v3022, 1.0614054
      %v3033 = vmul.f32 %v3024, 1.0614054
      %v3034 = vmul.f32 %v3026, 1.0614054
      %v3035 = vmul.f32 %v3028, 1.0614054
      %v3036 = vmul.f32 %v3030, 1.0614054
      %v3037 = vadd.f32 %v3031, -1.4531521
      %v3038 = vadd.f32 %v3032, -1.4531521
      %v3039 = vadd.f32 %v3033, -1.4531521
      %v3040 = vadd.f32 %v3034, -1.4531521
      %v3041 = vadd.f32 %v3035, -1.4531521
      %v3042 = vadd.f32 %v3036, -1.4531521
      %v3043 = vmul.f32 %v3020, %v3037
      %v3044 = vmul.f32 %v3022, %v3038
      %v3045 = vmul.f32 %v3024, %v3039
      %v3046 = vmul.f32 %v3026, %v3040
      %v3047 = vmul.f32 %v3028, %v3041
      %v3048 = vmul.f32 %v3030, %v3042
      %v3049 = vadd.f32 %v3043, 1.4214138
      %v3050 = vadd.f32 %v3044, 1.4214138
      %v3051 = vadd.f32 %v3045, 1.4214138
      %v3052 = vadd.f32 %v3046, 1.4214138
      %v3053 = vadd.f32 %v3047, 1.4214138
      %v3054 = vadd.f32 %v3048, 1.4214138
      %v3055 = vmul.f32 %v3020, %v3049
      %v3056 = vmul.f32 %v3022, %v3050
      %v3057 = vmul.f32 %v3024, %v3051
      %v3058 = vmul.f32 %v3026, %v3052
      %v3059 = vmul.f32 %v3028, %v3053
      %v3060 = vmul.f32 %v3030, %v3054
      %v3061 = vadd.f32 %v3055, -0.28449672
      %v3062 = vadd.f32 %v3056, -0.28449672
      %v3063 = vadd.f32 %v3057, -0.28449672
      %v3064 = vadd.f32 %v3058, -0.28449672
      %v3065 = vadd.f32 %v3059, -0.28449672
      %v3066 = vadd.f32 %v3060, -0.28449672
      %v3067 = vmul.f32 %v3020, %v3061
      %v3068 = vmul.f32 %v3022, %v3062
      %v3069 = vmul.f32 %v3024, %v3063
      %v3070 = vmul.f32 %v3026, %v3064
      %v3071 = vmul.f32 %v3028, %v3065
      %v3072 = vmul.f32 %v3030, %v3066
      %v3073 = vadd.f32 %v3067, 0.2548296
      %v3074 = vadd.f32 %v3068, 0.2548296
      %v3075 = vadd.f32 %v3069, 0.2548296
      %v3076 = vadd.f32 %v3070, 0.2548296
      %v3077 = vadd.f32 %v3071, 0.2548296
      %v3078 = vadd.f32 %v3072, 0.2548296
      %v3079 = vmul.f32 %v3020, %v3073
      %v3080 = vmul.f32 %v3022, %v3074
      %v3081 = vmul.f32 %v3024, %v3075
      %v3082 = vmul.f32 %v3026, %v3076
      %v3083 = vmul.f32 %v3028, %v3077
      %v3084 = vmul.f32 %v3030, %v3078
      %v3085 = vsub.f32 0.0, %v3001
      %v3086 = vsub.f32 0.0, %v3002
      %v3087 = vsub.f32 0.0, %v3003
      %v3088 = vsub.f32 0.0, %v3004
      %v3089 = vsub.f32 0.0, %v3005
      %v3090 = vsub.f32 0.0, %v3006
      %v3091 = vmul.f32 %v3085, %v3001
      %v3092 = vmul.f32 %v3086, %v3002
      %v3093 = vmul.f32 %v3087, %v3003
      %v3094 = vmul.f32 %v3088, %v3004
      %v3095 = vmul.f32 %v3089, %v3005
      %v3096 = vmul.f32 %v3090, %v3006
      %v3097 = vmul.f32 %v3091, 1.442695
      %v3098 = vpow.pop %v3097
      %v3099 = vmul.f32 %v3092, 1.442695
      %v3100 = vpow.pop %v3099
      %v3101 = vmul.f32 %v3093, 1.442695
      %v3102 = vpow.pop %v3101
      %v3103 = vmul.f32 %v3094, 1.442695
      %v3104 = vpow.pop %v3103
      %v3105 = vmul.f32 %v3095, 1.442695
      %v3106 = vpow.pop %v3105
      %v3107 = vmul.f32 %v3096, 1.442695
      %v3108 = vpow.pop %v3107
      %v3109 = vmul.f32 %v3079, %v3098
      %v3110 = vmul.f32 %v3080, %v3100
      %v3111 = vmul.f32 %v3081, %v3102
      %v3112 = vmul.f32 %v3082, %v3104
      %v3113 = vmul.f32 %v3083, %v3106
      %v3114 = vmul.f32 %v3084, %v3108
      %v3115 = vsub.f32 1.0, %v3109
      %v3116 = vsub.f32 1.0, %v3110
      %v3117 = vsub.f32 1.0, %v3111
      %v3118 = vsub.f32 1.0, %v3112
      %v3119 = vsub.f32 1.0, %v3113
      %v3120 = vsub.f32 1.0, %v3114
      %v3121 = vsub.f32 0.0, %v3115
      %v3122 = vsub.f32 0.0, %v3116
      %v3123 = vsub.f32 0.0, %v3117
      %v3124 = vsub.f32 0.0, %v3118
      %v3125 = vsub.f32 0.0, %v3119
      %v3126 = vsub.f32 0.0, %v3120
      %v3127 = vsel %vm2989, %v3115, %v3121
      %v3128 = vsel %vm2990, %v3116, %v3122
      %v3129 = vsel %vm2991, %v3117, %v3123
      %v3130 = vsel %vm2992, %v3118, %v3124
      %v3131 = vsel %vm2993, %v3119, %v3125
      %v3132 = vsel %vm2994, %v3120, %v3126
      %v3133 = vadd.f32 %v3127, 1.0
      %v3134 = vadd.f32 %v3128, 1.0
      %v3135 = vadd.f32 %v3129, 1.0
      %v3136 = vadd.f32 %v3130, 1.0
      %v3137 = vadd.f32 %v3131, 1.0
      %v3138 = vadd.f32 %v3132, 1.0
      %v3139 = vmul.f32 %v2977, %v3133
      %v3140 = vmul.f32 %v2978, %v3134
      %v3141 = vmul.f32 %v2979, %v3135
      %v3142 = vmul.f32 %v2980, %v3136
      %v3143 = vmul.f32 %v2981, %v3137
      %v3144 = vmul.f32 %v2982, %v3138
      %v3145 = vld [vmem:[%s12] sm:$0xff]
      %v3146 = vld [vmem:[%s12 + $0x8] sm:$0xff]
      %v3147 = vld [vmem:[%s12 + $0x10] sm:$0xff]
      %v3148 = vld [vmem:[%s12 + $0x18] sm:$0xff]
      %v3149 = vld [vmem:[%s12 + $0x20] sm:$0xff]
      %v3150 = vld [vmem:[%s12 + $0x28] sm:$0xff]
      %v3151 = vld [vmem:[%s12 + $0x30] sm:$0xff]
      %v3152 = vld [vmem:[%s12 + $0x38] sm:$0xff]
      %v3153 = vld [vmem:[%s13] sm:$0x1]
      %v3155 = vlaneseq
      %v3156 = vshrl.u32 %v3155, 7
      %v3157 = vsub.s32 0, %v3156
      %v3158 = vrot.slane %v3153, %v3157
      %vm3160 = vcmask 523264
      %v3162 = vsel %vm3160, %v3139, 0
      %v3165 = vsel %vm3160, %v3140, 0
      %v3168 = vsel %vm3160, %v3141, 0
      %v3171 = vsel %vm3160, %v3142, 0
      %v3174 = vsel %vm3160, %v3143, 0
      %v3177 = vsel %vm3160, %v3144, 0
      %3179 = vmatprep.subr.mxu0 0.0
      %3180 = vmatpush1.msra.mxu0 %v3145
      %3181 = vmatprep.subr.mxu0 0.0
      %3182 = vmatpush1.msra.mxu0 %v3146
      %3183 = vmatprep.subr.mxu0 0.0
      %3184 = vmatpush1.msra.mxu0 %v3147
      %3185 = vmatprep.subr.mxu0 0.0
      %3186 = vmatpush1.msra.mxu0 %v3148
      %3187 = vmatprep.subr.mxu0 0.0
      %3188 = vmatpush1.msra.mxu0 %v3149
      %3189 = vmatprep.subr.mxu0 0.0
      %3190 = vmatpush1.msra.mxu0 %v3150
      %3191 = vmatprep.subr.mxu0 0.0
      %3192 = vmatpush1.msra.mxu0 %v3151
      %3193 = vmatprep.subr.mxu0 0.0
      %3194 = vmatpush1.msra.mxu0 %v3152
      %3195 = vmatprep.subr.mxu0 0.0
      %3196 = vmatpush1.msra.mxu0 0.0
      %3197 = vmatprep.subr.mxu0 0.0
      %3198 = vmatpush1.msra.mxu0 0.0
      %3199 = vmatprep.subr.mxu0 0.0
      %3200 = vmatpush1.msra.mxu0 0.0
      %3201 = vmatprep.subr.mxu0 0.0
      %3202 = vmatpush1.msra.mxu0 0.0
      %3203 = vmatprep.subr.mxu0 0.0
      %3204 = vmatpush1.msra.mxu0 0.0
      %3205 = vmatprep.subr.mxu0 0.0
      %3206 = vmatpush1.msra.mxu0 0.0
      %3207 = vmatprep.subr.mxu0 0.0
      %3208 = vmatpush1.msra.mxu0 0.0
      %3209 = vmatprep.subr.mxu0 0.0
      %3210 = vmatpush1.msra.mxu0 0.0
      %3211 = vmatprep.subr.mxu0 0.0
      %3212 = vmatpush1.msra.mxu0 0.0
      %3213 = vmatprep.subr.mxu0 0.0
      %3214 = vmatpush1.msra.mxu0 0.0
      %3215 = vmatprep.subr.mxu0 0.0
      %3216 = vmatpush1.msra.mxu0 0.0
      %3217 = vmatprep.subr.mxu0 0.0
      %3218 = vmatpush1.msra.mxu0 0.0
      %3219 = vmatprep.subr.mxu0 0.0
      %3220 = vmatpush1.msra.mxu0 0.0
      %3221 = vmatprep.subr.mxu0 0.0
      %3222 = vmatpush1.msra.mxu0 0.0
      %3223 = vmatprep.subr.mxu0 0.0
      %3224 = vmatpush1.msra.mxu0 0.0
      %3225 = vmatprep.subr.mxu0 0.0
      %3226 = vmatpush1.msra.mxu0 0.0
      %3227 = vmatprep.subr.mxu0 0.0
      %3228 = vmatpush1.msra.mxu0 0.0
      %3229 = vmatprep.subr.mxu0 0.0
      %3230 = vmatpush1.msra.mxu0 0.0
      %3231 = vmatprep.subr.mxu0 0.0
      %3232 = vmatpush1.msra.mxu0 0.0
      %3233 = vmatprep.subr.mxu0 0.0
      %3234 = vmatpush1.msra.mxu0 0.0
      %3235 = vmatprep.subr.mxu0 0.0
      %3236 = vmatpush1.msra.mxu0 0.0
      %3237 = vmatprep.subr.mxu0 0.0
      %3238 = vmatpush1.msra.mxu0 0.0
      %3239 = vmatprep.subr.mxu0 0.0
      %3240 = vmatpush1.msra.mxu0 0.0
      %3241 = vmatprep.subr.mxu0 0.0
      %3242 = vmatpush1.msra.mxu0 0.0
      %3243 = vmatprep.mubr.f32.mxu0 0.0
      %3244 = vmatmul.mubr.f32.gmra.mrb[0].mxu0 %v3162
      %v3245 = vpop.f32.mrb[0].mxu0
      %v3246 = vadd.f32 %v3158, %v3245
      %v3247 = vpop.f32.mrb[0].mxu0
      %3248 = vmatprep.mubr.f32.mxu0 0.0
      %3249 = vmatmul.mubr.f32.gmra.mrb[0].mxu0 %v3165
      %v3250 = vpop.f32.mrb[0].mxu0
      %v3251 = vadd.f32 %v3158, %v3250
      %v3252 = vpop.f32.mrb[0].mxu0
      %3253 = vmatprep.mubr.f32.mxu0 0.0
      %3254 = vmatmul.mubr.f32.gmra.mrb[0].mxu0 %v3168
      %v3255 = vpop.f32.mrb[0].mxu0
      %v3256 = vadd.f32 %v3158, %v3255
      %v3257 = vpop.f32.mrb[0].mxu0
      %3258 = vmatprep.mubr.f32.mxu0 0.0
      %3259 = vmatmul.mubr.f32.gmra.mrb[0].mxu0 %v3171
      %v3260 = vpop.f32.mrb[0].mxu0
      %v3261 = vadd.f32 %v3158, %v3260
      %v3262 = vpop.f32.mrb[0].mxu0
      %3263 = vmatprep.mubr.f32.mxu0 0.0
      %3264 = vmatmul.mubr.f32.gmra.mrb[0].mxu0 %v3174
      %v3265 = vpop.f32.mrb[0].mxu0
      %v3266 = vadd.f32 %v3158, %v3265
      %v3267 = vpop.f32.mrb[0].mxu0
      %3268 = vmatprep.mubr.f32.mxu0 0.0
      %3269 = vmatmul.mubr.f32.gmra.mrb[0].mxu0 %v3177
      %v3270 = vpop.f32.mrb[0].mxu0
      %v3271 = vadd.f32 %v3158, %v3270
      %v3272 = vpop.f32.mrb[0].mxu0
      %3273 = vdwg.mxu0
      %v3274 = vadd.f32 %v2847, %v3246
      %v3275 = vadd.f32 %v2848, %v3251
      %v3276 = vadd.f32 %v2849, %v3256
      %v3277 = vadd.f32 %v2850, %v3261
      %v3278 = vadd.f32 %v2851, %v3266
      %v3279 = vadd.f32 %v2852, %v3271
      %v3280 = vsel %vm610, %v3274, 0.0
      %v3281 = vsel %vm610, %v3275, 0.0
      %v3282 = vadd.f32 %v3280, %v3281
      %v3283 = vsel %vm610, %v3276, 0.0
      %v3284 = vadd.f32 %v3282, %v3283
      %v3285 = vsel %vm610, %v3277, 0.0
      %v3286 = vadd.f32 %v3284, %v3285
      %v3287 = vsel %vm610, %v3278, 0.0
      %v3288 = vadd.f32 %v3286, %v3287
      %v3289 = vsel %vm610, %v3279, 0.0
      %v3290 = vadd.f32 %v3288, %v3289
      %v3291 = vrot.slane %v3290, 4
      %v3292 = vadd.f32 %v3290, %v3291
      %v3293 = vrot.slane %v3292, 2
      %v3294 = vadd.f32 %v3292, %v3293
      %v3295 = vrot.slane %v3294, 1
      %v3296 = vadd.f32 %v3294, %v3295
      %v3297 = vmul.f32 %v3296, %v2791
      %v3298 = vsub.f32 %v3274, %v3297
      %v3299 = vsub.f32 %v3275, %v3297
      %v3300 = vsub.f32 %v3276, %v3297
      %v3301 = vsub.f32 %v3277, %v3297
      %v3302 = vsub.f32 %v3278, %v3297
      %v3303 = vsub.f32 %v3279, %v3297
      %v3304 = vmul.f32 %v3298, %v3298
      %v3305 = vmul.f32 %v3299, %v3299
      %v3306 = vmul.f32 %v3300, %v3300
      %v3307 = vmul.f32 %v3301, %v3301
      %v3308 = vmul.f32 %v3302, %v3302
      %v3309 = vmul.f32 %v3303, %v3303
      %v3310 = vsel %vm610, %v3304, 0.0
      %v3311 = vsel %vm610, %v3305, 0.0
      %v3312 = vadd.f32 %v3310, %v3311
      %v3313 = vsel %vm610, %v3306, 0.0
      %v3314 = vadd.f32 %v3312, %v3313
      %v3315 = vsel %vm610, %v3307, 0.0
      %v3316 = vadd.f32 %v3314, %v3315
      %v3317 = vsel %vm610, %v3308, 0.0
      %v3318 = vadd.f32 %v3316, %v3317
      %v3319 = vsel %vm610, %v3309, 0.0
      %v3320 = vadd.f32 %v3318, %v3319
      %v3321 = vrot.slane %v3320, 4
      %v3322 = vadd.f32 %v3320, %v3321
      %v3323 = vrot.slane %v3322, 2
      %v3324 = vadd.f32 %v3322, %v3323
      %v3325 = vrot.slane %v3324, 1
      %v3326 = vadd.f32 %v3324, %v3325
      %v3327 = vmul.f32 %v3326, %v2791
      %v3328 = vadd.f32 %v3327, 1e-05
      %v3329 = vrsqrt.pop %v3328
      %v3330 = vmul.f32 %v3298, %v3329
      %v3331 = vmul.f32 %v3299, %v3329
      %v3332 = vmul.f32 %v3300, %v3329
      %v3333 = vmul.f32 %v3301, %v3329
      %v3334 = vmul.f32 %v3302, %v3329
      %v3335 = vmul.f32 %v3303, %v3329
      %v3336 = vld [vmem:[%s15] sm:$0x1]
      %v3337 = vlaneseq
      %v3338 = vshrl.u32 %v3337, 7
      %v3339 = vsub.s32 0, %v3338
      %v3340 = vrot.slane %v3336, %v3339
      %v3341 = vmul.f32 %v3330, %v3340
      %v3342 = vmul.f32 %v3331, %v3340
      %v3343 = vmul.f32 %v3332, %v3340
      %v3344 = vmul.f32 %v3333, %v3340
      %v3345 = vmul.f32 %v3334, %v3340
      %v3346 = vmul.f32 %v3335, %v3340
      %v3347 = vld [vmem:[%s15 + $0x1] sm:$0x1]
      %v3348 = vlaneseq
      %v3349 = vshrl.u32 %v3348, 7
      %v3350 = vsub.s32 0, %v3349
      %v3351 = vrot.slane %v3347, %v3350
      %v3352 = vadd.f32 %v3341, %v3351
      %v3353 = vadd.f32 %v3342, %v3351
      %v3354 = vadd.f32 %v3343, %v3351
      %v3355 = vadd.f32 %v3344, %v3351
      %v3356 = vadd.f32 %v3345, %v3351
      %v3357 = vadd.f32 %v3346, %v3351
      %3358 = vst.msk [vmem:[%s574] sm:$0xff] %vm610, %v3352
      %3359 = vst.msk [vmem:[%s574 + $0x8] sm:$0xff] %vm610, %v3353
      %3360 = vst.msk [vmem:[%s574 + $0x10] sm:$0xff] %vm610, %v3354
      %3361 = vst.msk [vmem:[%s574 + $0x18] sm:$0xff] %vm610, %v3355
      %3362 = vst.msk [vmem:[%s574 + $0x20] sm:$0xff] %vm610, %v3356
      %3363 = vst.msk [vmem:[%s574 + $0x28] sm:$0xff] %vm610, %v3357
      %s3364 = smul.u32 6, %s39
      %p3365 = scmp.lt.s32.totalorder %s3364, 17
      %s3366 = scalar_select %p3365, %s3364, 17
      %s3367 = smul.addr %s3366, 8
      %s3368 = scalar_lea.vmem %s16, %s3367
      %p3369 = scmp.lt.s32.totalorder %s39, 2
      %s3370 = scalar_select %p3369, %s39, 2
      %s3371 = smul.addr %s3370, 24
      %s3372 = smul.addr %s3371, 8
      %s3373 = scalar_lea.vmem %s17, %s3372
      // Predicated region
      $region77: #{cdtsti_forward.4} parent=75 // pred_check
        %p3374 = pneg %p370
      $region78: #{cdtsti_forward.4} parent=75 // pred_check_branch
        %3376 = sbr.rel (%p3374) target = $region80
      $region79: #{cdtsti_forward.4} parent=75 // pred_region
        %s3377 = smul.u32 6, %s39
      $region80: #{cdtsti_forward.4} parent=75 // pred_fallthru
        _
      // Predicated region
      $region81: #{cdtsti_forward.4} parent=75 // pred_check
        %p3378 = pneg %p396
      $region82: #{cdtsti_forward.4} parent=75 // pred_check_branch
        %3380 = sbr.rel (%p3378) target = $region84
      $region83: #{cdtsti_forward.4} parent=75 // pred_region
        _
      $region84: #{cdtsti_forward.4} parent=75 // pred_fallthru
        _
    $region76: #{cdtsti_forward.4} parent=5 // pred_fallthru
      _
    %p3381 = scmp.le.s32.totalorder 2, %s34
    // Predicated region
    $region85: #{cdtsti_forward.4} parent=5 // pred_check
      %p3382 = pneg %p3381
    $region86: #{cdtsti_forward.4} parent=5 // pred_check_branch
      %3384 = sbr.rel (%p3382) target = $region88
    $region87: #{cdtsti_forward.4} parent=5 // pred_region
      %s3385 = ssub.s32 %s34, 2
      // Predicated region
      $region89: #{cdtsti_forward.4} parent=87 // pred_check
        %p3386 = pneg %p376
      $region90: #{cdtsti_forward.4} parent=87 // pred_check_branch
        %3388 = sbr.rel (%p3386) target = $region92
      $region91: #{cdtsti_forward.4} parent=87 // pred_region
        %s3389 = smul.u32 6, %s40
        %p3390 = scmp.lt.s32.totalorder %s3389, 17
        %s3391 = scalar_select %p3390, %s3389, 17
        %s3392 = smul.addr %s3391, 8
        %s3393 = scalar_lea.vmem %s16, %s3392
      $region92: #{cdtsti_forward.4} parent=87 // pred_fallthru
        _
      // Predicated region
      $region93: #{cdtsti_forward.4} parent=87 // pred_check
        %p3394 = pneg %p402
      $region94: #{cdtsti_forward.4} parent=87 // pred_check_branch
        %3396 = sbr.rel (%p3394) target = $region96
      $region95: #{cdtsti_forward.4} parent=87 // pred_region
        %p3397 = scmp.lt.s32.totalorder %s40, 2
        %s3398 = scalar_select %p3397, %s40, 2
        %s3399 = smul.addr %s3398, 24
        %s3400 = smul.addr %s3399, 8
        %s3401 = scalar_lea.vmem %s17, %s3400
      $region96: #{cdtsti_forward.4} parent=87 // pred_fallthru
        _
    $region88: #{cdtsti_forward.4} parent=5 // pred_fallthru
      _
  $region6: #{cdtsti_forward.4} parent=0 // loop_footer
    %s38 = sadd.s32 1, %s34
  $region7: #{cdtsti_forward.4} parent=0 // loop_footer_branch
    %33 = sbr.rel target = $region3
  $region8: #{cdtsti_forward.4} parent=0 // loop_exit
    _

// kernel: cdtsti_forward.5
$region0: #{cdtsti_forward.5}
  #allocation0 [shape = 'u32[]', space=smem, size = 0x4, offset = 0x4, fixed_abs, tag = 'smem constant byte address 0x4 - core index']
  #allocation1 [shape = 'u32[144,128]{1,0:T(1,128)}', space=vmem, size = 0x12000, scoped, tag = 'internal scratch']
  #allocation2 [shape = 's32[1]{0}', space=sflag, size = 0x4, scoped, tag = 'scoped memory for cdtsti_forward.5']
  #allocation3 [shape = 'u8[512]{0}', space=smem, size = 0x200, scoped, tag = 'prefetched SMEM operand 0']
  #allocation4 [shape = 'u8[512]{0}', space=smem, size = 0x200, scoped, tag = 'prefetched SMEM operand 1']
  %s0 = inlined_call_operand.vmem [shape: s32[3], index: 0, kind: input, shape index: {}]
  %s1 = inlined_call_operand.vmem [shape: s32[3], index: 1, kind: input, shape index: {}]
  %s2 = inlined_call_operand.vmem [shape: f32[144,32], index: 2, kind: input, shape index: {}, may-alias: {2,3,4}]
  %s3 = inlined_call_operand.vmem [shape: f32[144,32], index: 3, kind: input, shape index: {}, may-alias: {2,3,4}]
  %s4 = inlined_call_operand.vmem [shape: f32[144,32], index: 4, kind: input, shape index: {}, may-alias: {2,3,4}]
  %s5 = inlined_call_operand.vmem [shape: f32[3,4,48,48], index: 5, kind: input, shape index: {}]
  %s6 = inlined_call_operand.vmem [shape: f32[48,48], index: 6, kind: input, shape index: {}]
  %s7 = inlined_call_operand.vmem [shape: f32[32,96], index: 7, kind: input, shape index: {}]
  %s8 = inlined_call_operand.vmem [shape: f32[1,96], index: 8, kind: input, shape index: {}]
  %s9 = inlined_call_operand.vmem [shape: f32[32,32], index: 9, kind: input, shape index: {}]
  %s10 = inlined_call_operand.vmem [shape: f32[1,32], index: 10, kind: input, shape index: {}]
  %s11 = inlined_call_operand.vmem [shape: f32[32,64], index: 11, kind: input, shape index: {}]
  %s12 = inlined_call_operand.vmem [shape: f32[1,64], index: 12, kind: input, shape index: {}]
  %s13 = inlined_call_operand.vmem [shape: f32[64,32], index: 13, kind: input, shape index: {}]
  %s14 = inlined_call_operand.vmem [shape: f32[1,32], index: 14, kind: input, shape index: {}]
  %s15 = inlined_call_operand.vmem [shape: f32[2,32], index: 15, kind: input, shape index: {}]
  %s16 = inlined_call_operand.vmem [shape: f32[2,32], index: 16, kind: input, shape index: {}]
  %s17 = inlined_call_operand.vmem [shape: f32[144,32], index: 17, kind: output, shape index: {0}]
  %s18 = inlined_call_operand.hbm [shape: f32[3,4,48,48], index: 18, kind: output, shape index: {1}]
  %19 = xla_tuple %s17, %s18
  %s20 = sld [smem:[#allocation0]]
  $region101: #{cdtsti_forward.5} parent=0
    _
  %s22 = ssub.s32 1, %s20
  %s23 = scalar_select 0, %s22, %s20
  %s24 = sshll.u32 %s0, 4
  %s25 = int_to_ptr.vmem [resolvable:$true] %s24
  %27 = dma.vmem_to_smem %s25, 16, [#allocation3], [#allocation2]
  %s28 = sshll.u32 %s1, 4
  %s29 = int_to_ptr.vmem [resolvable:$true] %s28
  %31 = dma.vmem_to_smem %s29, 16, [#allocation4], [#allocation2]
  %32 = dma.done [#allocation2], 32
  %33 = sfence
  $region1: #{cdtsti_forward.5} parent=0
    #allocation5 [shape = 'u8[196608]{0}', space=vmem, size = 0x30000, scoped, tag = 'output window, operand 1']
    #allocation6 [shape = 's32[2]{0}', space=sflag, size = 0x8, scoped, tag = 'scoped memory for cdtsti_forward.5']
    %34 = vsyncpa [#allocation6], 0
    %s35 = scalar_lea.sflag [#allocation6], 1
    %36 = vsyncpa %s35, 0
    loop: start=0, step=1, limit=5
    $region2: #{cdtsti_forward.5} parent=1 // loop_pre_header
      _
    $region3: #{cdtsti_forward.5} parent=1 // loop_header
      %s38 = sphi 0, %s42
      %p39 = scmp.ge.s32.totalorder %s38, 5
      %s48 = sphi 0, %s50
      %s51 = sphi 0, %s48
      %s52 = sphi 0, %s51
      %s68 = sphi 0, %s52
      %s76 = sphi 0, %s78
      %s79 = sphi 0, %s76
      %s80 = sphi 0, %s79
      %s96 = sphi 0, %s80
      %s104 = sphi 0, %s106
      %s107 = sphi 0, %s104
      %s108 = sphi 0, %s107
      %s124 = sphi 0, %s108
      %s130 = sphi 0, %s132
      %s133 = sphi 0, %s130
      %s134 = sphi 0, %s133
      %s150 = sphi 0, %s134
      %s154 = sphi 0, %s154
      %s156 = sphi 0, %s154
      %s157 = sphi 0, %s156
      %s171 = sphi 0, %s157
      %s175 = sphi 0, %s175
      %s177 = sphi 0, %s175
      %s178 = sphi 0, %s177
      %s192 = sphi 0, %s178
      %s196 = sphi 0, %s196
      %s198 = sphi 0, %s196
      %s199 = sphi 0, %s198
      %s213 = sphi 0, %s199
      %s217 = sphi 0, %s217
      %s219 = sphi 0, %s217
      %s220 = sphi 0, %s219
      %s234 = sphi 0, %s220
      %s238 = sphi 0, %s238
      %s240 = sphi 0, %s238
      %s241 = sphi 0, %s240
      %s255 = sphi 0, %s241
      %s259 = sphi 0, %s259
      %s261 = sphi 0, %s259
      %s262 = sphi 0, %s261
      %s276 = sphi 0, %s262
      %s280 = sphi 0, %s280
      %s282 = sphi 0, %s280
      %s283 = sphi 0, %s282
      %s297 = sphi 0, %s283
      %s301 = sphi 0, %s301
      %s303 = sphi 0, %s301
      %s304 = sphi 0, %s303
      %s318 = sphi 0, %s304
      %s322 = sphi 0, %s322
      %s324 = sphi 0, %s322
      %s325 = sphi 0, %s324
      %s339 = sphi 0, %s325
      %s343 = sphi 0, %s343
      %s345 = sphi 0, %s343
      %s346 = sphi 0, %s345
      %s360 = sphi 0, %s346
      %s364 = sphi 0, %s364
      %s366 = sphi 0, %s364
      %s367 = sphi 0, %s366
      %s381 = sphi 0, %s367
      %s387 = sphi 0, %s389
      %s390 = sphi 0, %s387
      %s391 = sphi 0, %s390
      %s407 = sphi 0, %s391
      %s413 = sphi 0, %s415
      %s416 = sphi 0, %s413
      %s417 = sphi 0, %s416
      %s433 = sphi 0, %s417
    $region4: #{cdtsti_forward.5} parent=1 // loop_header_branch
      %41 = sbr.rel (%p39) target = $region8
    $region5: #{cdtsti_forward.5} parent=1 // loop_body
      %s43 = ssub.s32 %s38, 1
      %s44 = ssub.s32 %s38, 2
      %s45 = sadd.s32 %s38, 1
      %s46 = ssub.s32 %s38, %s45
      %p47 = scmp.eq.s32.totalorder %s46, 0
      %s49 = sadd.s32 %s48, 1
      %s50 = scalar_select %p47, %s48, %s49
      %p53 = pneg %p47
      %p54 = scmp.eq.s32.totalorder %s38, 2
      %p55 = por %p53, %p54
      %p56 = scmp.ne.s32.totalorder %s48, %s51
      %p57 = scmp.eq.s32.totalorder %s38, 0
      %p58 = por %p56, %p57
      %p59 = scmp.ne.s32.totalorder %s48, %s51
      %p60 = scmp.eq.s32.totalorder %s43, 2
      %p61 = por %p59, %p60
      %p62 = scmp.ne.s32.totalorder %s51, %s52
      %p63 = scmp.eq.s32.totalorder %s43, 0
      %p64 = por %p62, %p63
      %p65 = scmp.ne.s32.totalorder %s51, %s52
      %p66 = scmp.eq.s32.totalorder %s44, 2
      %p67 = por %p65, %p66
      %p69 = scmp.ne.s32.totalorder %s52, %s68
      %p70 = scmp.eq.s32.totalorder %s44, 0
      %p71 = por %p69, %p70
      %s72 = sld [smem:[#allocation3 + %s38]]
      %s73 = sld [smem:[#allocation3 + %s45]]
      %s74 = ssub.s32 %s72, %s73
      %p75 = scmp.eq.s32.totalorder %s74, 0
      %s77 = sadd.s32 %s76, 1
      %s78 = scalar_select %p75, %s76, %s77
      %p81 = pneg %p75
      %p82 = scmp.eq.s32.totalorder %s38, 2
      %p83 = por %p81, %p82
      %p84 = scmp.ne.s32.totalorder %s76, %s79
      %p85 = scmp.eq.s32.totalorder %s38, 0
      %p86 = por %p84, %p85
      %p87 = scmp.ne.s32.totalorder %s76, %s79
      %p88 = scmp.eq.s32.totalorder %s43, 2
      %p89 = por %p87, %p88
      %p90 = scmp.ne.s32.totalorder %s79, %s80
      %p91 = scmp.eq.s32.totalorder %s43, 0
      %p92 = por %p90, %p91
      %p93 = scmp.ne.s32.totalorder %s79, %s80
      %p94 = scmp.eq.s32.totalorder %s44, 2
      %p95 = por %p93, %p94
      %p97 = scmp.ne.s32.totalorder %s80, %s96
      %p98 = scmp.eq.s32.totalorder %s44, 0
      %p99 = por %p97, %p98
      %s100 = sld [smem:[#allocation4 + %s38]]
      %s101 = sld [smem:[#allocation4 + %s45]]
      %s102 = ssub.s32 %s100, %s101
      %p103 = scmp.eq.s32.totalorder %s102, 0
      %s105 = sadd.s32 %s104, 1
      %s106 = scalar_select %p103, %s104, %s105
      %p109 = pneg %p103
      %p110 = scmp.eq.s32.totalorder %s38, 2
      %p111 = por %p109, %p110
      %p112 = scmp.ne.s32.totalorder %s104, %s107
      %p113 = scmp.eq.s32.totalorder %s38, 0
      %p114 = por %p112, %p113
      %p115 = scmp.ne.s32.totalorder %s104, %s107
      %p116 = scmp.eq.s32.totalorder %s43, 2
      %p117 = por %p115, %p116
      %p118 = scmp.ne.s32.totalorder %s107, %s108
      %p119 = scmp.eq.s32.totalorder %s43, 0
      %p120 = por %p118, %p119
      %p121 = scmp.ne.s32.totalorder %s107, %s108
      %p122 = scmp.eq.s32.totalorder %s44, 2
      %p123 = por %p121, %p122
      %p125 = scmp.ne.s32.totalorder %s108, %s124
      %p126 = scmp.eq.s32.totalorder %s44, 0
      %p127 = por %p125, %p126
      %s128 = ssub.s32 %s38, %s45
      %p129 = scmp.eq.s32.totalorder %s128, 0
      %s131 = sadd.s32 %s130, 1
      %s132 = scalar_select %p129, %s130, %s131
      %p135 = pneg %p129
      %p136 = scmp.eq.s32.totalorder %s38, 2
      %p137 = por %p135, %p136
      %p138 = scmp.ne.s32.totalorder %s130, %s133
      %p139 = scmp.eq.s32.totalorder %s38, 0
      %p140 = por %p138, %p139
      %p141 = scmp.ne.s32.totalorder %s130, %s133
      %p142 = scmp.eq.s32.totalorder %s43, 2
      %p143 = por %p141, %p142
      %p144 = scmp.ne.s32.totalorder %s133, %s134
      %p145 = scmp.eq.s32.totalorder %s43, 0
      %p146 = por %p144, %p145
      %p147 = scmp.ne.s32.totalorder %s133, %s134
      %p148 = scmp.eq.s32.totalorder %s44, 2
      %p149 = por %p147, %p148
      %p151 = scmp.ne.s32.totalorder %s134, %s150
      %p152 = scmp.eq.s32.totalorder %s44, 0
      %p153 = por %p151, %p152
      %s155 = sadd.s32 %s154, 1
      %p158 = scmp.eq.s32.totalorder %s38, 2
      %p159 = scmp.ne.s32.totalorder %s154, %s156
      %p160 = scmp.eq.s32.totalorder %s38, 0
      %p161 = por %p159, %p160
      %p162 = scmp.ne.s32.totalorder %s154, %s156
      %p163 = scmp.eq.s32.totalorder %s43, 2
      %p164 = por %p162, %p163
      %p165 = scmp.ne.s32.totalorder %s156, %s157
      %p166 = scmp.eq.s32.totalorder %s43, 0
      %p167 = por %p165, %p166
      %p168 = scmp.ne.s32.totalorder %s156, %s157
      %p169 = scmp.eq.s32.totalorder %s44, 2
      %p170 = por %p168, %p169
      %p172 = scmp.ne.s32.totalorder %s157, %s171
      %p173 = scmp.eq.s32.totalorder %s44, 0
      %p174 = por %p172, %p173
      %s176 = sadd.s32 %s175, 1
      %p179 = scmp.eq.s32.totalorder %s38, 2
      %p180 = scmp.ne.s32.totalorder %s175, %s177
      %p181 = scmp.eq.s32.totalorder %s38, 0
      %p182 = por %p180, %p181
      %p183 = scmp.ne.s32.totalorder %s175, %s177
      %p184 = scmp.eq.s32.totalorder %s43, 2
      %p185 = por %p183, %p184
      %p186 = scmp.ne.s32.totalorder %s177, %s178
      %p187 = scmp.eq.s32.totalorder %s43, 0
      %p188 = por %p186, %p187
      %p189 = scmp.ne.s32.totalorder %s177, %s178
      %p190 = scmp.eq.s32.totalorder %s44, 2
      %p191 = por %p189, %p190
      %p193 = scmp.ne.s32.totalorder %s178, %s192
      %p194 = scmp.eq.s32.totalorder %s44, 0
      %p195 = por %p193, %p194
      %s197 = sadd.s32 %s196, 1
      %p200 = scmp.eq.s32.totalorder %s38, 2
      %p201 = scmp.ne.s32.totalorder %s196, %s198
      %p202 = scmp.eq.s32.totalorder %s38, 0
      %p203 = por %p201, %p202
      %p204 = scmp.ne.s32.totalorder %s196, %s198
      %p205 = scmp.eq.s32.totalorder %s43, 2
      %p206 = por %p204, %p205
      %p207 = scmp.ne.s32.totalorder %s198, %s199
      %p208 = scmp.eq.s32.totalorder %s43, 0
      %p209 = por %p207, %p208
      %p210 = scmp.ne.s32.totalorder %s198, %s199
      %p211 = scmp.eq.s32.totalorder %s44, 2
      %p212 = por %p210, %p211
      %p214 = scmp.ne.s32.totalorder %s199, %s213
      %p215 = scmp.eq.s32.totalorder %s44, 0
      %p216 = por %p214, %p215
      %s218 = sadd.s32 %s217, 1
      %p221 = scmp.eq.s32.totalorder %s38, 2
      %p222 = scmp.ne.s32.totalorder %s217, %s219
      %p223 = scmp.eq.s32.totalorder %s38, 0
      %p224 = por %p222, %p223
      %p225 = scmp.ne.s32.totalorder %s217, %s219
      %p226 = scmp.eq.s32.totalorder %s43, 2
      %p227 = por %p225, %p226
      %p228 = scmp.ne.s32.totalorder %s219, %s220
      %p229 = scmp.eq.s32.totalorder %s43, 0
      %p230 = por %p228, %p229
      %p231 = scmp.ne.s32.totalorder %s219, %s220
      %p232 = scmp.eq.s32.totalorder %s44, 2
      %p233 = por %p231, %p232
      %p235 = scmp.ne.s32.totalorder %s220, %s234
      %p236 = scmp.eq.s32.totalorder %s44, 0
      %p237 = por %p235, %p236
      %s239 = sadd.s32 %s238, 1
      %p242 = scmp.eq.s32.totalorder %s38, 2
      %p243 = scmp.ne.s32.totalorder %s238, %s240
      %p244 = scmp.eq.s32.totalorder %s38, 0
      %p245 = por %p243, %p244
      %p246 = scmp.ne.s32.totalorder %s238, %s240
      %p247 = scmp.eq.s32.totalorder %s43, 2
      %p248 = por %p246, %p247
      %p249 = scmp.ne.s32.totalorder %s240, %s241
      %p250 = scmp.eq.s32.totalorder %s43, 0
      %p251 = por %p249, %p250
      %p252 = scmp.ne.s32.totalorder %s240, %s241
      %p253 = scmp.eq.s32.totalorder %s44, 2
      %p254 = por %p252, %p253
      %p256 = scmp.ne.s32.totalorder %s241, %s255
      %p257 = scmp.eq.s32.totalorder %s44, 0
      %p258 = por %p256, %p257
      %s260 = sadd.s32 %s259, 1
      %p263 = scmp.eq.s32.totalorder %s38, 2
      %p264 = scmp.ne.s32.totalorder %s259, %s261
      %p265 = scmp.eq.s32.totalorder %s38, 0
      %p266 = por %p264, %p265
      %p267 = scmp.ne.s32.totalorder %s259, %s261
      %p268 = scmp.eq.s32.totalorder %s43, 2
      %p269 = por %p267, %p268
      %p270 = scmp.ne.s32.totalorder %s261, %s262
      %p271 = scmp.eq.s32.totalorder %s43, 0
      %p272 = por %p270, %p271
      %p273 = scmp.ne.s32.totalorder %s261, %s262
      %p274 = scmp.eq.s32.totalorder %s44, 2
      %p275 = por %p273, %p274
      %p277 = scmp.ne.s32.totalorder %s262, %s276
      %p278 = scmp.eq.s32.totalorder %s44, 0
      %p279 = por %p277, %p278
      %s281 = sadd.s32 %s280, 1
      %p284 = scmp.eq.s32.totalorder %s38, 2
      %p285 = scmp.ne.s32.totalorder %s280, %s282
      %p286 = scmp.eq.s32.totalorder %s38, 0
      %p287 = por %p285, %p286
      %p288 = scmp.ne.s32.totalorder %s280, %s282
      %p289 = scmp.eq.s32.totalorder %s43, 2
      %p290 = por %p288, %p289
      %p291 = scmp.ne.s32.totalorder %s282, %s283
      %p292 = scmp.eq.s32.totalorder %s43, 0
      %p293 = por %p291, %p292
      %p294 = scmp.ne.s32.totalorder %s282, %s283
      %p295 = scmp.eq.s32.totalorder %s44, 2
      %p296 = por %p294, %p295
      %p298 = scmp.ne.s32.totalorder %s283, %s297
      %p299 = scmp.eq.s32.totalorder %s44, 0
      %p300 = por %p298, %p299
      %s302 = sadd.s32 %s301, 1
      %p305 = scmp.eq.s32.totalorder %s38, 2
      %p306 = scmp.ne.s32.totalorder %s301, %s303
      %p307 = scmp.eq.s32.totalorder %s38, 0
      %p308 = por %p306, %p307
      %p309 = scmp.ne.s32.totalorder %s301, %s303
      %p310 = scmp.eq.s32.totalorder %s43, 2
      %p311 = por %p309, %p310
      %p312 = scmp.ne.s32.totalorder %s303, %s304
      %p313 = scmp.eq.s32.totalorder %s43, 0
      %p314 = por %p312, %p313
      %p315 = scmp.ne.s32.totalorder %s303, %s304
      %p316 = scmp.eq.s32.totalorder %s44, 2
      %p317 = por %p315, %p316
      %p319 = scmp.ne.s32.totalorder %s304, %s318
      %p320 = scmp.eq.s32.totalorder %s44, 0
      %p321 = por %p319, %p320
      %s323 = sadd.s32 %s322, 1
      %p326 = scmp.eq.s32.totalorder %s38, 2
      %p327 = scmp.ne.s32.totalorder %s322, %s324
      %p328 = scmp.eq.s32.totalorder %s38, 0
      %p329 = por %p327, %p328
      %p330 = scmp.ne.s32.totalorder %s322, %s324
      %p331 = scmp.eq.s32.totalorder %s43, 2
      %p332 = por %p330, %p331
      %p333 = scmp.ne.s32.totalorder %s324, %s325
      %p334 = scmp.eq.s32.totalorder %s43, 0
      %p335 = por %p333, %p334
      %p336 = scmp.ne.s32.totalorder %s324, %s325
      %p337 = scmp.eq.s32.totalorder %s44, 2
      %p338 = por %p336, %p337
      %p340 = scmp.ne.s32.totalorder %s325, %s339
      %p341 = scmp.eq.s32.totalorder %s44, 0
      %p342 = por %p340, %p341
      %s344 = sadd.s32 %s343, 1
      %p347 = scmp.eq.s32.totalorder %s38, 2
      %p348 = scmp.ne.s32.totalorder %s343, %s345
      %p349 = scmp.eq.s32.totalorder %s38, 0
      %p350 = por %p348, %p349
      %p351 = scmp.ne.s32.totalorder %s343, %s345
      %p352 = scmp.eq.s32.totalorder %s43, 2
      %p353 = por %p351, %p352
      %p354 = scmp.ne.s32.totalorder %s345, %s346
      %p355 = scmp.eq.s32.totalorder %s43, 0
      %p356 = por %p354, %p355
      %p357 = scmp.ne.s32.totalorder %s345, %s346
      %p358 = scmp.eq.s32.totalorder %s44, 2
      %p359 = por %p357, %p358
      %p361 = scmp.ne.s32.totalorder %s346, %s360
      %p362 = scmp.eq.s32.totalorder %s44, 0
      %p363 = por %p361, %p362
      %s365 = sadd.s32 %s364, 1
      %p368 = scmp.eq.s32.totalorder %s38, 2
      %p369 = scmp.ne.s32.totalorder %s364, %s366
      %p370 = scmp.eq.s32.totalorder %s38, 0
      %p371 = por %p369, %p370
      %p372 = scmp.ne.s32.totalorder %s364, %s366
      %p373 = scmp.eq.s32.totalorder %s43, 2
      %p374 = por %p372, %p373
      %p375 = scmp.ne.s32.totalorder %s366, %s367
      %p376 = scmp.eq.s32.totalorder %s43, 0
      %p377 = por %p375, %p376
      %p378 = scmp.ne.s32.totalorder %s366, %s367
      %p379 = scmp.eq.s32.totalorder %s44, 2
      %p380 = por %p378, %p379
      %p382 = scmp.ne.s32.totalorder %s367, %s381
      %p383 = scmp.eq.s32.totalorder %s44, 0
      %p384 = por %p382, %p383
      %s385 = ssub.s32 %s38, %s45
      %p386 = scmp.eq.s32.totalorder %s385, 0
      %s388 = sadd.s32 %s387, 1
      %s389 = scalar_select %p386, %s387, %s388
      %p392 = pneg %p386
      %p393 = scmp.eq.s32.totalorder %s38, 2
      %p394 = por %p392, %p393
      %p395 = scmp.ne.s32.totalorder %s387, %s390
      %p396 = scmp.eq.s32.totalorder %s38, 0
      %p397 = por %p395, %p396
      %p398 = scmp.ne.s32.totalorder %s387, %s390
      %p399 = scmp.eq.s32.totalorder %s43, 2
      %p400 = por %p398, %p399
      %p401 = scmp.ne.s32.totalorder %s390, %s391
      %p402 = scmp.eq.s32.totalorder %s43, 0
      %p403 = por %p401, %p402
      %p404 = scmp.ne.s32.totalorder %s390, %s391
      %p405 = scmp.eq.s32.totalorder %s44, 2
      %p406 = por %p404, %p405
      %p408 = scmp.ne.s32.totalorder %s391, %s407
      %p409 = scmp.eq.s32.totalorder %s44, 0
      %p410 = por %p408, %p409
      %s411 = ssub.s32 %s38, %s45
      %p412 = scmp.eq.s32.totalorder %s411, 0
      %s414 = sadd.s32 %s413, 1
      %s415 = scalar_select %p412, %s413, %s414
      %p418 = pneg %p412
      %p419 = scmp.eq.s32.totalorder %s38, 2
      %p420 = por %p418, %p419
      %p421 = scmp.ne.s32.totalorder %s413, %s416
      %p422 = scmp.eq.s32.totalorder %s38, 0
      %p423 = por %p421, %p422
      %p424 = scmp.ne.s32.totalorder %s413, %s416
      %p425 = scmp.eq.s32.totalorder %s43, 2
      %p426 = por %p424, %p425
      %p427 = scmp.ne.s32.totalorder %s416, %s417
      %p428 = scmp.eq.s32.totalorder %s43, 0
      %p429 = por %p427, %p428
      %p430 = scmp.ne.s32.totalorder %s416, %s417
      %p431 = scmp.eq.s32.totalorder %s44, 2
      %p432 = por %p430, %p431
      %p434 = scmp.ne.s32.totalorder %s417, %s433
      %p435 = scmp.eq.s32.totalorder %s44, 0
      %p436 = por %p434, %p435
      %p437 = scmp.le.s32.totalorder 1, %s38
      %p438 = scmp.lt.s32.totalorder %s38, 4
      %p439 = pnand %p437, %p438
      %p440 = pneg %p439
      // Predicated region
      $region9: #{cdtsti_forward.5} parent=5 // pred_check
        _
      $region10: #{cdtsti_forward.5} parent=5 // pred_check_branch
        %442 = sbr.rel (%p439) target = $region12
      $region11: #{cdtsti_forward.5} parent=5 // pred_region
        %s443 = ssub.s32 %s38, 1
        // Predicated region
        $region13: #{cdtsti_forward.5} parent=11 // pred_check
          %p444 = pneg %p167
        $region14: #{cdtsti_forward.5} parent=11 // pred_check_branch
          %446 = sbr.rel (%p444) target = $region16
        $region15: #{cdtsti_forward.5} parent=11 // pred_region
          _
        $region16: #{cdtsti_forward.5} parent=11 // pred_fallthru
          _
        // Predicated region
        $region17: #{cdtsti_forward.5} parent=11 // pred_check
          %p447 = pneg %p188
        $region18: #{cdtsti_forward.5} parent=11 // pred_check_branch
          %449 = sbr.rel (%p447) target = $region20
        $region19: #{cdtsti_forward.5} parent=11 // pred_region
          _
        $region20: #{cdtsti_forward.5} parent=11 // pred_fallthru
          _
        // Predicated region
        $region21: #{cdtsti_forward.5} parent=11 // pred_check
          %p450 = pneg %p209
        $region22: #{cdtsti_forward.5} parent=11 // pred_check_branch
          %452 = sbr.rel (%p450) target = $region24
        $region23: #{cdtsti_forward.5} parent=11 // pred_region
          _
        $region24: #{cdtsti_forward.5} parent=11 // pred_fallthru
          _
        // Predicated region
        $region25: #{cdtsti_forward.5} parent=11 // pred_check
          %p453 = pneg %p230
        $region26: #{cdtsti_forward.5} parent=11 // pred_check_branch
          %455 = sbr.rel (%p453) target = $region28
        $region27: #{cdtsti_forward.5} parent=11 // pred_region
          _
        $region28: #{cdtsti_forward.5} parent=11 // pred_fallthru
          _
        // Predicated region
        $region29: #{cdtsti_forward.5} parent=11 // pred_check
          %p456 = pneg %p251
        $region30: #{cdtsti_forward.5} parent=11 // pred_check_branch
          %458 = sbr.rel (%p456) target = $region32
        $region31: #{cdtsti_forward.5} parent=11 // pred_region
          _
        $region32: #{cdtsti_forward.5} parent=11 // pred_fallthru
          _
        // Predicated region
        $region33: #{cdtsti_forward.5} parent=11 // pred_check
          %p459 = pneg %p272
        $region34: #{cdtsti_forward.5} parent=11 // pred_check_branch
          %461 = sbr.rel (%p459) target = $region36
        $region35: #{cdtsti_forward.5} parent=11 // pred_region
          _
        $region36: #{cdtsti_forward.5} parent=11 // pred_fallthru
          _
        // Predicated region
        $region37: #{cdtsti_forward.5} parent=11 // pred_check
          %p462 = pneg %p293
        $region38: #{cdtsti_forward.5} parent=11 // pred_check_branch
          %464 = sbr.rel (%p462) target = $region40
        $region39: #{cdtsti_forward.5} parent=11 // pred_region
          _
        $region40: #{cdtsti_forward.5} parent=11 // pred_fallthru
          _
        // Predicated region
        $region41: #{cdtsti_forward.5} parent=11 // pred_check
          %p465 = pneg %p314
        $region42: #{cdtsti_forward.5} parent=11 // pred_check_branch
          %467 = sbr.rel (%p465) target = $region44
        $region43: #{cdtsti_forward.5} parent=11 // pred_region
          _
        $region44: #{cdtsti_forward.5} parent=11 // pred_fallthru
          _
        // Predicated region
        $region45: #{cdtsti_forward.5} parent=11 // pred_check
          %p468 = pneg %p335
        $region46: #{cdtsti_forward.5} parent=11 // pred_check_branch
          %470 = sbr.rel (%p468) target = $region48
        $region47: #{cdtsti_forward.5} parent=11 // pred_region
          _
        $region48: #{cdtsti_forward.5} parent=11 // pred_fallthru
          _
        // Predicated region
        $region49: #{cdtsti_forward.5} parent=11 // pred_check
          %p471 = pneg %p356
        $region50: #{cdtsti_forward.5} parent=11 // pred_check_branch
          %473 = sbr.rel (%p471) target = $region52
        $region51: #{cdtsti_forward.5} parent=11 // pred_region
          _
        $region52: #{cdtsti_forward.5} parent=11 // pred_fallthru
          _
        // Predicated region
        $region53: #{cdtsti_forward.5} parent=11 // pred_check
          %p474 = pneg %p377
        $region54: #{cdtsti_forward.5} parent=11 // pred_check_branch
          %476 = sbr.rel (%p474) target = $region56
        $region55: #{cdtsti_forward.5} parent=11 // pred_region
          _
        $region56: #{cdtsti_forward.5} parent=11 // pred_fallthru
          _
      $region12: #{cdtsti_forward.5} parent=5 // pred_fallthru
        _
      %p477 = scmp.lt.s32.totalorder %s38, 3
      // Predicated region
      $region57: #{cdtsti_forward.5} parent=5 // pred_check
        %p478 = pneg %p477
      $region58: #{cdtsti_forward.5} parent=5 // pred_check_branch
        %480 = sbr.rel (%p478) target = $region60
      $region59: #{cdtsti_forward.5} parent=5 // pred_region
        // Predicated region
        $region61: #{cdtsti_forward.5} parent=59 // pred_check
          %p481 = pneg %p58
        $region62: #{cdtsti_forward.5} parent=59 // pred_check_branch
          %483 = sbr.rel (%p481) target = $region64
        $region63: #{cdtsti_forward.5} parent=59 // pred_region
          %s484 = smul.u32 6, %s38
          %p485 = scmp.lt.s32.totalorder %s484, 17
          %s486 = scalar_select %p485, %s484, 17
          %s487 = smul.addr %s486, 8
          %s488 = scalar_lea.vmem %s2, %s487
          %s489 = smul.u32 6, %s38
        $region64: #{cdtsti_forward.5} parent=59 // pred_fallthru
          _
        // Predicated region
        $region65: #{cdtsti_forward.5} parent=59 // pred_check
          %p490 = pneg %p86
        $region66: #{cdtsti_forward.5} parent=59 // pred_check_branch
          %492 = sbr.rel (%p490) target = $region68
        $region67: #{cdtsti_forward.5} parent=59 // pred_region
          %s493 = sld [smem:[#allocation3 + %s38]]
          %s494 = smul.u32 6, %s493
          %p495 = scmp.lt.s32.totalorder %s494, 17
          %s496 = scalar_select %p495, %s494, 17
          %s497 = smul.addr %s496, 8
          %s498 = scalar_lea.vmem %s3, %s497
          %s499 = sld [smem:[#allocation3 + %s38]]
          %s500 = smul.u32 6, %s499
        $region68: #{cdtsti_forward.5} parent=59 // pred_fallthru
          _
        // Predicated region
        $region69: #{cdtsti_forward.5} parent=59 // pred_check
          %p501 = pneg %p114
        $region70: #{cdtsti_forward.5} parent=59 // pred_check_branch
          %503 = sbr.rel (%p501) target = $region72
        $region71: #{cdtsti_forward.5} parent=59 // pred_region
          %s504 = sld [smem:[#allocation4 + %s38]]
          %s505 = smul.u32 6, %s504
          %p506 = scmp.lt.s32.totalorder %s505, 17
          %s507 = scalar_select %p506, %s505, 17
          %s508 = smul.addr %s507, 8
          %s509 = scalar_lea.vmem %s4, %s508
          %s510 = sld [smem:[#allocation4 + %s38]]
          %s511 = smul.u32 6, %s510
        $region72: #{cdtsti_forward.5} parent=59 // pred_fallthru
          _
        // Predicated region
        $region73: #{cdtsti_forward.5} parent=59 // pred_check
          %p512 = pneg %p140
        $region74: #{cdtsti_forward.5} parent=59 // pred_check_branch
          %514 = sbr.rel (%p512) target = $region76
        $region75: #{cdtsti_forward.5} parent=59 // pred_region
          %p515 = scmp.lt.s32.totalorder %s38, 2
          %s516 = scalar_select %p515, %s38, 2
          %s517 = smul.addr %s516, 24
          %s518 = smul.addr %s517, 8
          %s519 = scalar_lea.vmem %s5, %s518
        $region76: #{cdtsti_forward.5} parent=59 // pred_fallthru
          _
      $region60: #{cdtsti_forward.5} parent=5 // pred_fallthru
        _
      %p520 = scmp.le.s32.totalorder 1, %s38
      %p521 = scmp.lt.s32.totalorder %s38, 4
      %p522 = pnand %p520, %p521
      %p523 = pneg %p522
      // Predicated region
      $region77: #{cdtsti_forward.5} parent=5 // pred_check
        _
      $region78: #{cdtsti_forward.5} parent=5 // pred_check_branch
        %525 = sbr.rel (%p522) target = $region80
      $region79: #{cdtsti_forward.5} parent=5 // pred_region
        %s526 = ssub.s32 %s38, 1
        %s527 = smul.u32 6, %s43
        %p528 = scmp.lt.s32.totalorder %s527, 17
        %s529 = scalar_select %p528, %s527, 17
        %s530 = smul.addr %s529, 8
        %s531 = scalar_lea.vmem %s2, %s530
        %p532 = pneg %p64
        %p533 = pneg %p61
        %s534 = sld [smem:[#allocation3 + %s43]]
        %s535 = smul.u32 6, %s534
        %p536 = scmp.lt.s32.totalorder %s535, 17
        %s537 = scalar_select %p536, %s535, 17
        %s538 = smul.addr %s537, 8
        %s539 = scalar_lea.vmem %s3, %s538
        %p540 = pneg %p92
        %p541 = pneg %p89
        %s542 = sld [smem:[#allocation4 + %s43]]
        %s543 = smul.u32 6, %s542
        %p544 = scmp.lt.s32.totalorder %s543, 17
        %s545 = scalar_select %p544, %s543, 17
        %s546 = smul.addr %s545, 8
        %s547 = scalar_lea.vmem %s4, %s546
        %p548 = pneg %p120
        %p549 = pneg %p117
        %p550 = scmp.lt.s32.totalorder %s43, 2
        %s551 = scalar_select %p550, %s43, 2
        %s552 = smul.addr %s551, 24
        %s553 = smul.addr %s552, 8
        %s554 = scalar_lea.vmem %s5, %s553
        %p555 = pneg %p146
        %p556 = pneg %p143
        %p557 = pneg %p167
        %p558 = pneg %p164
        %p559 = pneg %p188
        %p560 = pneg %p185
        %p561 = pneg %p209
        %p562 = pneg %p206
        %p563 = pneg %p230
        %p564 = pneg %p227
        %p565 = pneg %p251
        %p566 = pneg %p248
        %p567 = pneg %p272
        %p568 = pneg %p269
        %p569 = pneg %p293
        %p570 = pneg %p290
        %p571 = pneg %p314
        %p572 = pneg %p311
        %p573 = pneg %p335
        %p574 = pneg %p332
        %p575 = pneg %p356
        %p576 = pneg %p353
        %p577 = pneg %p377
        %p578 = pneg %p374
        %p579 = pneg %p403
        %p580 = pneg %p400
        %s581 = smul.u32 6, %s43
        %p582 = scmp.lt.s32.totalorder %s581, 17
        %s583 = scalar_select %p582, %s581, 17
        %s584 = smul.addr %s583, 8
        %s585 = scalar_lea.vmem %s17, %s584
        %p586 = pneg %p429
        %p587 = pneg %p426
        %s588 = sand.u32 %s416, 1
        %s589 = scalar_lea.sflag [#allocation6], %s588
        %s590 = sand.u32 %s416, 1
        %s591 = smul.addr %s590, 192
        %s592 = scalar_lea.vmem [#allocation5], %s591
        %s593 = smul.u32 6, %s43
        %p594 = scmp.lt.s32.totalorder %s593, 17
        %s595 = scalar_select %p594, %s593, 17
        %s596 = smul.addr %s595, 8
        %s597 = scalar_lea.vmem %s2, %s596
        %s598 = smul.u32 6, %s43
        %s599 = sld [smem:[#allocation3 + %s43]]
        %s600 = smul.u32 6, %s599
        %p601 = scmp.lt.s32.totalorder %s600, 17
        %s602 = scalar_select %p601, %s600, 17
        %s603 = smul.addr %s602, 8
        %s604 = scalar_lea.vmem %s3, %s603
        %s605 = sld [smem:[#allocation3 + %s43]]
        %s606 = smul.u32 6, %s605
        %s607 = sld [smem:[#allocation4 + %s43]]
        %s608 = smul.u32 6, %s607
        %p609 = scmp.lt.s32.totalorder %s608, 17
        %s610 = scalar_select %p609, %s608, 17
        %s611 = smul.addr %s610, 8
        %s612 = scalar_lea.vmem %s4, %s611
        %s613 = sld [smem:[#allocation4 + %s43]]
        %s614 = smul.u32 6, %s613
        %p615 = scmp.lt.s32.totalorder %s43, 2
        %s616 = scalar_select %p615, %s43, 2
        %s617 = smul.addr %s616, 24
        %s618 = smul.addr %s617, 8
        %s619 = scalar_lea.vmem %s5, %s618
        %s620 = smul.u32 6, %s43
        %p621 = scmp.lt.s32.totalorder %s620, 17
        %s622 = scalar_select %p621, %s620, 17
        %s623 = smul.addr %s622, 8
        %s624 = scalar_lea.vmem %s17, %s623
        %s625 = smul.u32 6, %s43
        %v626 = vld [vmem:[%s597] sm:$0xff]
        %v627 = vld [vmem:[%s597 + $0x8] sm:$0xff]
        %v628 = vld [vmem:[%s597 + $0x10] sm:$0xff]
        %v629 = vld [vmem:[%s597 + $0x18] sm:$0xff]
        %v630 = vld [vmem:[%s597 + $0x20] sm:$0xff]
        %v631 = vld [vmem:[%s597 + $0x28] sm:$0xff]
        %v632 = vld [vmem:[%s6] sm:$0xff]
        %v633 = vld [vmem:[%s6 + $0x8] sm:$0xff]
        %v634 = vld [vmem:[%s6 + $0x10] sm:$0xff]
        %v635 = vld [vmem:[%s6 + $0x18] sm:$0xff]
        %v636 = vld [vmem:[%s6 + $0x20] sm:$0xff]
        %v637 = vld [vmem:[%s6 + $0x28] sm:$0xff]
        %v638 = vld [vmem:[%s7] sm:$0xff]
        %v639 = vld [vmem:[%s7 + $0x8] sm:$0xff]
        %v640 = vld [vmem:[%s7 + $0x10] sm:$0xff]
        %v641 = vld [vmem:[%s7 + $0x18] sm:$0xff]
        %v642 = vld [vmem:[%s8] sm:$0x1]
        %v643 = vld [vmem:[%s604] sm:$0xff]
        %v644 = vld [vmem:[%s604 + $0x8] sm:$0xff]
        %v645 = vld [vmem:[%s604 + $0x10] sm:$0xff]
        %v646 = vld [vmem:[%s604 + $0x18] sm:$0xff]
        %v647 = vld [vmem:[%s604 + $0x20] sm:$0xff]
        %v648 = vld [vmem:[%s604 + $0x28] sm:$0xff]
        %v650 = vlaneseq
        %v651 = vshrl.u32 %v650, 7
        %v652 = vsub.s32 0, %v651
        %v653 = vrot.slane %v642, %v652
        %vm655 = vcmask 261120
        %v657 = vsel %vm655, %v643, 0
        %v660 = vsel %vm655, %v644, 0
        %v663 = vsel %vm655, %v645, 0
        %v666 = vsel %vm655, %v646, 0
        %v669 = vsel %vm655, %v647, 0
        %v672 = vsel %vm655, %v648, 0
        %674 = vmatprep.subr.mxu0 0.0
        %675 = vmatpush1.msra.mxu0 %v638
        %676 = vmatprep.subr.mxu0 0.0
        %677 = vmatpush1.msra.mxu0 %v639
        %678 = vmatprep.subr.mxu0 0.0
        %679 = vmatpush1.msra.mxu0 %v640
        %680 = vmatprep.subr.mxu0 0.0
        %681 = vmatpush1.msra.mxu0 %v641
        %682 = vmatprep.subr.mxu0 0.0
        %683 = vmatpush1.msra.mxu0 0.0
        %684 = vmatprep.subr.mxu0 0.0
        %685 = vmatpush1.msra.mxu0 0.0
        %686 = vmatprep.subr.mxu0 0.0
        %687 = vmatpush1.msra.mxu0 0.0
        %688 = vmatprep.subr.mxu0 0.0
        %689 = vmatpush1.msra.mxu0 0.0
        %690 = vmatprep.subr.mxu0 0.0
        %691 = vmatpush1.msra.mxu0 0.0
        %692 = vmatprep.subr.mxu0 0.0
        %693 = vmatpush1.msra.mxu0 0.0
        %694 = vmatprep.subr.mxu0 0.0
        %695 = vmatpush1.msra.mxu0 0.0
        %696 = vmatprep.subr.mxu0 0.0
        %697 = vmatpush1.msra.mxu0 0.0
        %698 = vmatprep.subr.mxu0 0.0
        %699 = vmatpush1.msra.mxu0 0.0
        %700 = vmatprep.subr.mxu0 0.0
        %701 = vmatpush1.msra.mxu0 0.0
        %702 = vmatprep.subr.mxu0 0.0
        %703 = vmatpush1.msra.mxu0 0.0
        %704 = vmatprep.subr.mxu0 0.0
        %705 = vmatpush1.msra.mxu0 0.0
        %706 = vmatprep.subr.mxu0 0.0
        %707 = vmatpush1.msra.mxu0 0.0
        %708 = vmatprep.subr.mxu0 0.0
        %709 = vmatpush1.msra.mxu0 0.0
        %710 = vmatprep.subr.mxu0 0.0
        %711 = vmatpush1.msra.mxu0 0.0
        %712 = vmatprep.subr.mxu0 0.0
        %713 = vmatpush1.msra.mxu0 0.0
        %714 = vmatprep.subr.mxu0 0.0
        %715 = vmatpush1.msra.mxu0 0.0
        %716 = vmatprep.subr.mxu0 0.0
        %717 = vmatpush1.msra.mxu0 0.0
        %718 = vmatprep.subr.mxu0 0.0
        %719 = vmatpush1.msra.mxu0 0.0
        %720 = vmatprep.subr.mxu0 0.0
        %721 = vmatpush1.msra.mxu0 0.0
        %722 = vmatprep.subr.mxu0 0.0
        %723 = vmatpush1.msra.mxu0 0.0
        %724 = vmatprep.subr.mxu0 0.0
        %725 = vmatpush1.msra.mxu0 0.0
        %726 = vmatprep.subr.mxu0 0.0
        %727 = vmatpush1.msra.mxu0 0.0
        %728 = vmatprep.subr.mxu0 0.0
        %729 = vmatpush1.msra.mxu0 0.0
        %730 = vmatprep.subr.mxu0 0.0
        %731 = vmatpush1.msra.mxu0 0.0
        %732 = vmatprep.subr.mxu0 0.0
        %733 = vmatpush1.msra.mxu0 0.0
        %734 = vmatprep.subr.mxu0 0.0
        %735 = vmatpush1.msra.mxu0 0.0
        %736 = vmatprep.subr.mxu0 0.0
        %737 = vmatpush1.msra.mxu0 0.0
        %738 = vmatprep.mubr.f32.mxu0 0.0
        %739 = vmatmul.mubr.f32.gmra.mrb[0].mxu0 %v657
        %v740 = vpop.f32.mrb[0].mxu0
        %v741 = vadd.f32 %v653, %v740
        %v742 = vpop.f32.mrb[0].mxu0
        %743 = vmatprep.mubr.f32.mxu0 0.0
        %744 = vmatmul.mubr.f32.gmra.mrb[0].mxu0 %v660
        %v745 = vpop.f32.mrb[0].mxu0
        %v746 = vadd.f32 %v653, %v745
        %v747 = vpop.f32.mrb[0].mxu0
        %748 = vmatprep.mubr.f32.mxu0 0.0
        %749 = vmatmul.mubr.f32.gmra.mrb[0].mxu0 %v663
        %v750 = vpop.f32.mrb[0].mxu0
        %v751 = vadd.f32 %v653, %v750
        %v752 = vpop.f32.mrb[0].mxu0
        %753 = vmatprep.mubr.f32.mxu0 0.0
        %754 = vmatmul.mubr.f32.gmra.mrb[0].mxu0 %v666
        %v755 = vpop.f32.mrb[0].mxu0
        %v756 = vadd.f32 %v653, %v755
        %v757 = vpop.f32.mrb[0].mxu0
        %758 = vmatprep.mubr.f32.mxu0 0.0
        %759 = vmatmul.mubr.f32.gmra.mrb[0].mxu0 %v669
        %v760 = vpop.f32.mrb[0].mxu0
        %v761 = vadd.f32 %v653, %v760
        %v762 = vpop.f32.mrb[0].mxu0
        %763 = vmatprep.mubr.f32.mxu0 0.0
        %764 = vmatmul.mubr.f32.gmra.mrb[0].mxu0 %v672
        %v765 = vpop.f32.mrb[0].mxu0
        %v766 = vadd.f32 %v653, %v765
        %v767 = vpop.f32.mrb[0].mxu0
        %768 = vdwg.mxu0
        %v769 = vld [vmem:[%s612] sm:$0xff]
        %v770 = vld [vmem:[%s612 + $0x8] sm:$0xff]
        %v771 = vld [vmem:[%s612 + $0x10] sm:$0xff]
        %v772 = vld [vmem:[%s612 + $0x18] sm:$0xff]
        %v773 = vld [vmem:[%s612 + $0x20] sm:$0xff]
        %v774 = vld [vmem:[%s612 + $0x28] sm:$0xff]
        %779 = vrot.lane.b32.xlu0 %v638, 96
        %v780 = vpop.permute.xlu0 %779
        %781 = vrot.lane.b32.xlu0 %v639, 96
        %v782 = vpop.permute.xlu0 %781
        %783 = vrot.lane.b32.xlu0 %v640, 96
        %v784 = vpop.permute.xlu0 %783
        %785 = vrot.lane.b32.xlu0 %v641, 96
        %v786 = vpop.permute.xlu0 %785
        %791 = vrot.lane.b32.xlu0 %v653, 96
        %v792 = vpop.permute.xlu0 %791
        %v795 = vsel %vm655, %v769, 0
        %v798 = vsel %vm655, %v770, 0
        %v801 = vsel %vm655, %v771, 0
        %v804 = vsel %vm655, %v772, 0
        %v807 = vsel %vm655, %v773, 0
        %v810 = vsel %vm655, %v774, 0
        %812 = vmatprep.subr.mxu0 0.0
        %813 = vmatpush1.msra.mxu0 %v780
        %814 = vmatprep.subr.mxu0 0.0
        %815 = vmatpush1.msra.mxu0 %v782
        %816 = vmatprep.subr.mxu0 0.0
        %817 = vmatpush1.msra.mxu0 %v784
        %818 = vmatprep.subr.mxu0 0.0
        %819 = vmatpush1.msra.mxu0 %v786
        %820 = vmatprep.subr.mxu0 0.0
        %821 = vmatpush1.msra.mxu0 0.0
        %822 = vmatprep.subr.mxu0 0.0
        %823 = vmatpush1.msra.mxu0 0.0
        %824 = vmatprep.subr.mxu0 0.0
        %825 = vmatpush1.msra.mxu0 0.0
        %826 = vmatprep.subr.mxu0 0.0
        %827 = vmatpush1.msra.mxu0 0.0
        %828 = vmatprep.subr.mxu0 0.0
        %829 = vmatpush1.msra.mxu0 0.0
        %830 = vmatprep.subr.mxu0 0.0
        %831 = vmatpush1.msra.mxu0 0.0
        %832 = vmatprep.subr.mxu0 0.0
        %833 = vmatpush1.msra.mxu0 0.0
        %834 = vmatprep.subr.mxu0 0.0
        %835 = vmatpush1.msra.mxu0 0.0
        %836 = vmatprep.subr.mxu0 0.0
        %837 = vmatpush1.msra.mxu0 0.0
        %838 = vmatprep.subr.mxu0 0.0
        %839 = vmatpush1.msra.mxu0 0.0
        %840 = vmatprep.subr.mxu0 0.0
        %841 = vmatpush1.msra.mxu0 0.0
        %842 = vmatprep.subr.mxu0 0.0
        %843 = vmatpush1.msra.mxu0 0.0
        %844 = vmatprep.subr.mxu0 0.0
        %845 = vmatpush1.msra.mxu0 0.0
        %846 = vmatprep.subr.mxu0 0.0
        %847 = vmatpush1.msra.mxu0 0.0
        %848 = vmatprep.subr.mxu0 0.0
        %849 = vmatpush1.msra.mxu0 0.0
        %850 = vmatprep.subr.mxu0 0.0
        %851 = vmatpush1.msra.mxu0 0.0
        %852 = vmatprep.subr.mxu0 0.0
        %853 = vmatpush1.msra.mxu0 0.0
        %854 = vmatprep.subr.mxu0 0.0
        %855 = vmatpush1.msra.mxu0 0.0
        %856 = vmatprep.subr.mxu0 0.0
        %857 = vmatpush1.msra.mxu0 0.0
        %858 = vmatprep.subr.mxu0 0.0
        %859 = vmatpush1.msra.mxu0 0.0
        %860 = vmatprep.subr.mxu0 0.0
        %861 = vmatpush1.msra.mxu0 0.0
        %862 = vmatprep.subr.mxu0 0.0
        %863 = vmatpush1.msra.mxu0 0.0
        %864 = vmatprep.subr.mxu0 0.0
        %865 = vmatpush1.msra.mxu0 0.0
        %866 = vmatprep.subr.mxu0 0.0
        %867 = vmatpush1.msra.mxu0 0.0
        %868 = vmatprep.subr.mxu0 0.0
        %869 = vmatpush1.msra.mxu0 0.0
        %870 = vmatprep.subr.mxu0 0.0
        %871 = vmatpush1.msra.mxu0 0.0
        %872 = vmatprep.subr.mxu0 0.0
        %873 = vmatpush1.msra.mxu0 0.0
        %874 = vmatprep.subr.mxu0 0.0
        %875 = vmatpush1.msra.mxu0 0.0
        %876 = vmatprep.mubr.f32.mxu0 0.0
        %877 = vmatmul.mubr.f32.gmra.mrb[0].mxu0 %v795
        %v878 = vpop.f32.mrb[0].mxu0
        %v879 = vadd.f32 %v792, %v878
        %v880 = vpop.f32.mrb[0].mxu0
        %881 = vmatprep.mubr.f32.mxu0 0.0
        %882 = vmatmul.mubr.f32.gmra.mrb[0].mxu0 %v798
        %v883 = vpop.f32.mrb[0].mxu0
        %v884 = vadd.f32 %v792, %v883
        %v885 = vpop.f32.mrb[0].mxu0
        %886 = vmatprep.mubr.f32.mxu0 0.0
        %887 = vmatmul.mubr.f32.gmra.mrb[0].mxu0 %v801
        %v888 = vpop.f32.mrb[0].mxu0
        %v889 = vadd.f32 %v792, %v888
        %v890 = vpop.f32.mrb[0].mxu0
        %891 = vmatprep.mubr.f32.mxu0 0.0
        %892 = vmatmul.mubr.f32.gmra.mrb[0].mxu0 %v804
        %v893 = vpop.f32.mrb[0].mxu0
        %v894 = vadd.f32 %v792, %v893
        %v895 = vpop.f32.mrb[0].mxu0
        %896 = vmatprep.mubr.f32.mxu0 0.0
        %897 = vmatmul.mubr.f32.gmra.mrb[0].mxu0 %v807
        %v898 = vpop.f32.mrb[0].mxu0
        %v899 = vadd.f32 %v792, %v898
        %v900 = vpop.f32.mrb[0].mxu0
        %901 = vmatprep.mubr.f32.mxu0 0.0
        %902 = vmatmul.mubr.f32.gmra.mrb[0].mxu0 %v810
        %v903 = vpop.f32.mrb[0].mxu0
        %v904 = vadd.f32 %v792, %v903
        %v905 = vpop.f32.mrb[0].mxu0
        %906 = vdwg.mxu0
        %v907 = vld [vmem:[%s9] sm:$0xff]
        %v908 = vld [vmem:[%s9 + $0x8] sm:$0xff]
        %v909 = vld [vmem:[%s9 + $0x10] sm:$0xff]
        %v910 = vld [vmem:[%s9 + $0x18] sm:$0xff]
        %vm911 = vcmask 64512
        %v913 = vsel %vm911, %v741, 0
        %v916 = vsel %vm911, %v746, 0
        %v919 = vsel %vm911, %v751, 0
        %v922 = vsel %vm911, %v756, 0
        %v925 = vsel %vm911, %v761, 0
        %v928 = vsel %vm911, %v766, 0
        %v931 = vsel %vm911, %v879, 0
        %v934 = vsel %vm911, %v884, 0
        %v937 = vsel %vm911, %v889, 0
        %v940 = vsel %vm911, %v894, 0
        %v943 = vsel %vm911, %v899, 0
        %v946 = vsel %vm911, %v904, 0
        %948 = vmatprep.subr.mxu0 0.0
        %949 = vmatpush1.xpose.msra.mxu0 %v931
        %950 = vmatprep.subr.mxu0 0.0
        %951 = vmatpush1.xpose.msra.mxu0 %v934
        %952 = vmatprep.subr.mxu0 0.0
        %953 = vmatpush1.xpose.msra.mxu0 %v937
        %954 = vmatprep.subr.mxu0 0.0
        %955 = vmatpush1.xpose.msra.mxu0 %v940
        %956 = vmatprep.subr.mxu0 0.0
        %957 = vmatpush1.xpose.msra.mxu0 %v943
        %958 = vmatprep.subr.mxu0 0.0
        %959 = vmatpush1.xpose.msra.mxu0 %v946
        %960 = vmatprep.subr.mxu0 0.0
        %961 = vmatpush1.xpose.msra.mxu0 0.0
        %962 = vmatprep.subr.mxu0 0.0
        %963 = vmatpush1.xpose.msra.mxu0 0.0
        %964 = vmatprep.subr.mxu0 0.0
        %965 = vmatpush1.xpose.msra.mxu0 0.0
        %966 = vmatprep.subr.mxu0 0.0
        %967 = vmatpush1.xpose.msra.mxu0 0.0
        %968 = vmatprep.subr.mxu0 0.0
        %969 = vmatpush1.xpose.msra.mxu0 0.0
        %970 = vmatprep.subr.mxu0 0.0
        %971 = vmatpush1.xpose.msra.mxu0 0.0
        %972 = vmatprep.subr.mxu0 0.0
        %973 = vmatpush1.xpose.msra.mxu0 0.0
        %974 = vmatprep.subr.mxu0 0.0
        %975 = vmatpush1.xpose.msra.mxu0 0.0
        %976 = vmatprep.subr.mxu0 0.0
        %977 = vmatpush1.xpose.msra.mxu0 0.0
        %978 = vmatprep.subr.mxu0 0.0
        %979 = vmatpush1.xpose.msra.mxu0 0.0
        %980 = vmatprep.subr.mxu0 0.0
        %981 = vmatpush1.xpose.msra.mxu0 0.0
        %982 = vmatprep.subr.mxu0 0.0
        %983 = vmatpush1.xpose.msra.mxu0 0.0
        %984 = vmatprep.subr.mxu0 0.0
        %985 = vmatpush1.xpose.msra.mxu0 0.0
        %986 = vmatprep.subr.mxu0 0.0
        %987 = vmatpush1.xpose.msra.mxu0 0.0
        %988 = vmatprep.subr.mxu0 0.0
        %989 = vmatpush1.xpose.msra.mxu0 0.0
        %990 = vmatprep.subr.mxu0 0.0
        %991 = vmatpush1.xpose.msra.mxu0 0.0
        %992 = vmatprep.subr.mxu0 0.0
        %993 = vmatpush1.xpose.msra.mxu0 0.0
        %994 = vmatprep.subr.mxu0 0.0
        %995 = vmatpush1.xpose.msra.mxu0 0.0
        %996 = vmatprep.subr.mxu0 0.0
        %997 = vmatpush1.xpose.msra.mxu0 0.0
        %998 = vmatprep.subr.mxu0 0.0
        %999 = vmatpush1.xpose.msra.mxu0 0.0
        %1000 = vmatprep.subr.mxu0 0.0
        %1001 = vmatpush1.xpose.msra.mxu0 0.0
        %1002 = vmatprep.subr.mxu0 0.0
        %1003 = vmatpush1.xpose.msra.mxu0 0.0
        %1004 = vmatprep.subr.mxu0 0.0
        %1005 = vmatpush1.xpose.msra.mxu0 0.0
        %1006 = vmatprep.subr.mxu0 0.0
        %1007 = vmatpush1.xpose.msra.mxu0 0.0
        %1008 = vmatprep.subr.mxu0 0.0
        %1009 = vmatpush1.xpose.msra.mxu0 0.0
        %1010 = vmatprep.subr.mxu0 0.0
        %1011 = vmatpush1.xpose.msra.mxu0 0.0
        %1012 = vmatprep.mubr.f32.mxu0 0.0
        %1013 = vmatmul.mubr.f32.gmra.mrb[0].mxu0 %v913
        %v1014 = vpop.f32.mrb[0].mxu0
        %v1015 = vadd.f32 0.0, %v1014
        %v1016 = vpop.f32.mrb[0].mxu0
        %1017 = vmatprep.mubr.f32.mxu0 0.0
        %1018 = vmatmul.mubr.f32.gmra.mrb[0].mxu0 %v916
        %v1019 = vpop.f32.mrb[0].mxu0
        %v1020 = vadd.f32 0.0, %v1019
        %v1021 = vpop.f32.mrb[0].mxu0
        %1022 = vmatprep.mubr.f32.mxu0 0.0
        %1023 = vmatmul.mubr.f32.gmra.mrb[0].mxu0 %v919
        %v1024 = vpop.f32.mrb[0].mxu0
        %v1025 = vadd.f32 0.0, %v1024
        %v1026 = vpop.f32.mrb[0].mxu0
        %1027 = vmatprep.mubr.f32.mxu0 0.0
        %1028 = vmatmul.mubr.f32.gmra.mrb[0].mxu0 %v922
        %v1029 = vpop.f32.mrb[0].mxu0
        %v1030 = vadd.f32 0.0, %v1029
        %v1031 = vpop.f32.mrb[0].mxu0
        %1032 = vmatprep.mubr.f32.mxu0 0.0
        %1033 = vmatmul.mubr.f32.gmra.mrb[0].mxu0 %v925
        %v1034 = vpop.f32.mrb[0].mxu0
        %v1035 = vadd.f32 0.0, %v1034
        %v1036 = vpop.f32.mrb[0].mxu0
        %1037 = vmatprep.mubr.f32.mxu0 0.0
        %1038 = vmatmul.mubr.f32.gmra.mrb[0].mxu0 %v928
        %v1039 = vpop.f32.mrb[0].mxu0
        %v1040 = vadd.f32 0.0, %v1039
        %v1041 = vpop.f32.mrb[0].mxu0
        %1042 = vdwg.mxu0
        %v1043 = vmul.f32 %v1015, 0.35355338
        %v1044 = vmul.f32 %v1020, 0.35355338
        %v1045 = vmul.f32 %v1025, 0.35355338
        %v1046 = vmul.f32 %v1030, 0.35355338
        %v1047 = vmul.f32 %v1035, 0.35355338
        %v1048 = vmul.f32 %v1040, 0.35355338
        %v1049 = vld [vmem:[%s619] sm:$0xff]
        %v1050 = vld [vmem:[%s619 + $0x8] sm:$0xff]
        %v1051 = vld [vmem:[%s619 + $0x10] sm:$0xff]
        %v1052 = vld [vmem:[%s619 + $0x18] sm:$0xff]
        %v1053 = vld [vmem:[%s619 + $0x20] sm:$0xff]
        %v1054 = vld [vmem:[%s619 + $0x28] sm:$0xff]
        %v1055 = vadd.f32 %v1043, %v1049
        %v1056 = vadd.f32 %v1044, %v1050
        %v1057 = vadd.f32 %v1045, %v1051
        %v1058 = vadd.f32 %v1046, %v1052
        %v1059 = vadd.f32 %v1047, %v1053
        %v1060 = vadd.f32 %v1048, %v1054
        %vm1061 = vcmask 392192
        %1062 = vst.msk [vmem:[%s592] sm:$0xff] %vm1061, %v1055
        %1063 = vst.msk [vmem:[%s592 + $0x8] sm:$0xff] %vm1061, %v1056
        %1064 = vst.msk [vmem:[%s592 + $0x10] sm:$0xff] %vm1061, %v1057
        %1065 = vst.msk [vmem:[%s592 + $0x18] sm:$0xff] %vm1061, %v1058
        %1066 = vst.msk [vmem:[%s592 + $0x20] sm:$0xff] %vm1061, %v1059
        %1067 = vst.msk [vmem:[%s592 + $0x28] sm:$0xff] %vm1061, %v1060
        %v1068 = vadd.f32 %v1055, %v632
        %v1069 = vadd.f32 %v1056, %v633
        %v1070 = vadd.f32 %v1057, %v634
        %v1071 = vadd.f32 %v1058, %v635
        %v1072 = vadd.f32 %v1059, %v636
        %v1073 = vadd.f32 %v1060, %v637
        %v1074 = vsel %vm1061, %v1068, -inf
        %1075 = vmax.xlane.f32.xlu0 %v1074
        %v1076 = vpop.xlane.xlu0 %1075
        %v1077 = vsel %vm1061, %v1069, -inf
        %1078 = vmax.xlane.f32.xlu0 %v1077
        %v1079 = vpop.xlane.xlu0 %1078
        %v1080 = vsel %vm1061, %v1070, -inf
        %1081 = vmax.xlane.f32.xlu0 %v1080
        %v1082 = vpop.xlane.xlu0 %1081
        %v1083 = vsel %vm1061, %v1071, -inf
        %1084 = vmax.xlane.f32.xlu0 %v1083
        %v1085 = vpop.xlane.xlu0 %1084
        %v1086 = vsel %vm1061, %v1072, -inf
        %1087 = vmax.xlane.f32.xlu0 %v1086
        %v1088 = vpop.xlane.xlu0 %1087
        %v1089 = vsel %vm1061, %v1073, -inf
        %1090 = vmax.xlane.f32.xlu0 %v1089
        %v1091 = vpop.xlane.xlu0 %1090
        %v1092 = vsub.f32 %v1068, %v1076
        %v1093 = vsub.f32 %v1069, %v1079
        %v1094 = vsub.f32 %v1070, %v1082
        %v1095 = vsub.f32 %v1071, %v1085
        %v1096 = vsub.f32 %v1072, %v1088
        %v1097 = vsub.f32 %v1073, %v1091
        %v1098 = vmul.f32 %v1092, 1.442695
        %v1099 = vpow.pop %v1098
        %v1100 = vmul.f32 %v1093, 1.442695
        %v1101 = vpow.pop %v1100
        %v1102 = vmul.f32 %v1094, 1.442695
        %v1103 = vpow.pop %v1102
        %v1104 = vmul.f32 %v1095, 1.442695
        %v1105 = vpow.pop %v1104
        %v1106 = vmul.f32 %v1096, 1.442695
        %v1107 = vpow.pop %v1106
        %v1108 = vmul.f32 %v1097, 1.442695
        %v1109 = vpow.pop %v1108
        %v1110 = vsel %vm1061, %v1099, 0.0
        %1111 = vadd.xlane.f32.xlu0 %v1110
        %v1112 = vpop.xlane.xlu0 %1111
        %v1113 = vsel %vm1061, %v1101, 0.0
        %1114 = vadd.xlane.f32.xlu0 %v1113
        %v1115 = vpop.xlane.xlu0 %1114
        %v1116 = vsel %vm1061, %v1103, 0.0
        %1117 = vadd.xlane.f32.xlu0 %v1116
        %v1118 = vpop.xlane.xlu0 %1117
        %v1119 = vsel %vm1061, %v1105, 0.0
        %1120 = vadd.xlane.f32.xlu0 %v1119
        %v1121 = vpop.xlane.xlu0 %1120
        %v1122 = vsel %vm1061, %v1107, 0.0
        %1123 = vadd.xlane.f32.xlu0 %v1122
        %v1124 = vpop.xlane.xlu0 %1123
        %v1125 = vsel %vm1061, %v1109, 0.0
        %1126 = vadd.xlane.f32.xlu0 %v1125
        %v1127 = vpop.xlane.xlu0 %1126
        %v1128 = vrcp.pop %v1112
        %v1129 = vmul.f32 %v1099, %v1128
        %v1130 = vrcp.pop %v1115
        %v1131 = vmul.f32 %v1101, %v1130
        %v1132 = vrcp.pop %v1118
        %v1133 = vmul.f32 %v1103, %v1132
        %v1134 = vrcp.pop %v1121
        %v1135 = vmul.f32 %v1105, %v1134
        %v1136 = vrcp.pop %v1124
        %v1137 = vmul.f32 %v1107, %v1136
        %v1138 = vrcp.pop %v1127
        %v1139 = vmul.f32 %v1109, %v1138
        %1140 = vrot.lane.b32.xlu0 %v879, 96
        %v1141 = vpop.permute.xlu0 %1140
        %1142 = vrot.lane.b32.xlu0 %v884, 96
        %v1143 = vpop.permute.xlu0 %1142
        %1144 = vrot.lane.b32.xlu0 %v889, 96
        %v1145 = vpop.permute.xlu0 %1144
        %1146 = vrot.lane.b32.xlu0 %v894, 96
        %v1147 = vpop.permute.xlu0 %1146
        %1148 = vrot.lane.b32.xlu0 %v899, 96
        %v1149 = vpop.permute.xlu0 %1148
        %1150 = vrot.lane.b32.xlu0 %v904, 96
        %v1151 = vpop.permute.xlu0 %1150
        %v1159 = vsel %vm1061, %v1129, 0
        %v1162 = vsel %vm1061, %v1131, 0
        %v1165 = vsel %vm1061, %v1133, 0
        %v1168 = vsel %vm1061, %v1135, 0
        %v1171 = vsel %vm1061, %v1137, 0
        %v1174 = vsel %vm1061, %v1139, 0
        %1176 = vmatprep.subr.mxu0 0.0
        %1177 = vmatpush1.msra.mxu0 %v1141
        %1178 = vmatprep.subr.mxu0 0.0
        %1179 = vmatpush1.msra.mxu0 %v1143
        %1180 = vmatprep.subr.mxu0 0.0
        %1181 = vmatpush1.msra.mxu0 %v1145
        %1182 = vmatprep.subr.mxu0 0.0
        %1183 = vmatpush1.msra.mxu0 %v1147
        %1184 = vmatprep.subr.mxu0 0.0
        %1185 = vmatpush1.msra.mxu0 %v1149
        %1186 = vmatprep.subr.mxu0 0.0
        %1187 = vmatpush1.msra.mxu0 %v1151
        %1188 = vmatprep.subr.mxu0 0.0
        %1189 = vmatpush1.msra.mxu0 0.0
        %1190 = vmatprep.subr.mxu0 0.0
        %1191 = vmatpush1.msra.mxu0 0.0
        %1192 = vmatprep.subr.mxu0 0.0
        %1193 = vmatpush1.msra.mxu0 0.0
        %1194 = vmatprep.subr.mxu0 0.0
        %1195 = vmatpush1.msra.mxu0 0.0
        %1196 = vmatprep.subr.mxu0 0.0
        %1197 = vmatpush1.msra.mxu0 0.0
        %1198 = vmatprep.subr.mxu0 0.0
        %1199 = vmatpush1.msra.mxu0 0.0
        %1200 = vmatprep.subr.mxu0 0.0
        %1201 = vmatpush1.msra.mxu0 0.0
        %1202 = vmatprep.subr.mxu0 0.0
        %1203 = vmatpush1.msra.mxu0 0.0
        %1204 = vmatprep.subr.mxu0 0.0
        %1205 = vmatpush1.msra.mxu0 0.0
        %1206 = vmatprep.subr.mxu0 0.0
        %1207 = vmatpush1.msra.mxu0 0.0
        %1208 = vmatprep.subr.mxu0 0.0
        %1209 = vmatpush1.msra.mxu0 0.0
        %1210 = vmatprep.subr.mxu0 0.0
        %1211 = vmatpush1.msra.mxu0 0.0
        %1212 = vmatprep.subr.mxu0 0.0
        %1213 = vmatpush1.msra.mxu0 0.0
        %1214 = vmatprep.subr.mxu0 0.0
        %1215 = vmatpush1.msra.mxu0 0.0
        %1216 = vmatprep.subr.mxu0 0.0
        %1217 = vmatpush1.msra.mxu0 0.0
        %1218 = vmatprep.subr.mxu0 0.0
        %1219 = vmatpush1.msra.mxu0 0.0
        %1220 = vmatprep.subr.mxu0 0.0
        %1221 = vmatpush1.msra.mxu0 0.0
        %1222 = vmatprep.subr.mxu0 0.0
        %1223 = vmatpush1.msra.mxu0 0.0
        %1224 = vmatprep.subr.mxu0 0.0
        %1225 = vmatpush1.msra.mxu0 0.0
        %1226 = vmatprep.subr.mxu0 0.0
        %1227 = vmatpush1.msra.mxu0 0.0
        %1228 = vmatprep.subr.mxu0 0.0
        %1229 = vmatpush1.msra.mxu0 0.0
        %1230 = vmatprep.subr.mxu0 0.0
        %1231 = vmatpush1.msra.mxu0 0.0
        %1232 = vmatprep.subr.mxu0 0.0
        %1233 = vmatpush1.msra.mxu0 0.0
        %1234 = vmatprep.subr.mxu0 0.0
        %1235 = vmatpush1.msra.mxu0 0.0
        %1236 = vmatprep.subr.mxu0 0.0
        %1237 = vmatpush1.msra.mxu0 0.0
        %1238 = vmatprep.subr.mxu0 0.0
        %1239 = vmatpush1.msra.mxu0 0.0
        %1240 = vmatprep.mubr.f32.mxu0 0.0
        %1241 = vmatmul.mubr.f32.gmra.mrb[0].mxu0 %v1159
        %v1242 = vpop.f32.mrb[0].mxu0
        %v1243 = vadd.f32 0.0, %v1242
        %v1244 = vpop.f32.mrb[0].mxu0
        %1245 = vmatprep.mubr.f32.mxu0 0.0
        %1246 = vmatmul.mubr.f32.gmra.mrb[0].mxu0 %v1162
        %v1247 = vpop.f32.mrb[0].mxu0
        %v1248 = vadd.f32 0.0, %v1247
        %v1249 = vpop.f32.mrb[0].mxu0
        %1250 = vmatprep.mubr.f32.mxu0 0.0
        %1251 = vmatmul.mubr.f32.gmra.mrb[0].mxu0 %v1165
        %v1252 = vpop.f32.mrb[0].mxu0
        %v1253 = vadd.f32 0.0, %v1252
        %v1254 = vpop.f32.mrb[0].mxu0
        %1255 = vmatprep.mubr.f32.mxu0 0.0
        %1256 = vmatmul.mubr.f32.gmra.mrb[0].mxu0 %v1168
        %v1257 = vpop.f32.mrb[0].mxu0
        %v1258 = vadd.f32 0.0, %v1257
        %v1259 = vpop.f32.mrb[0].mxu0
        %1260 = vmatprep.mubr.f32.mxu0 0.0
        %1261 = vmatmul.mubr.f32.gmra.mrb[0].mxu0 %v1171
        %v1262 = vpop.f32.mrb[0].mxu0
        %v1263 = vadd.f32 0.0, %v1262
        %v1264 = vpop.f32.mrb[0].mxu0
        %1265 = vmatprep.mubr.f32.mxu0 0.0
        %1266 = vmatmul.mubr.f32.gmra.mrb[0].mxu0 %v1174
        %v1267 = vpop.f32.mrb[0].mxu0
        %v1268 = vadd.f32 0.0, %v1267
        %v1269 = vpop.f32.mrb[0].mxu0
        %1270 = vdwg.mxu0
        %1271 = vrot.lane.b32.xlu0 %v741, 120
        %v1272 = vpop.permute.xlu0 %1271
        %1273 = vrot.lane.b32.xlu0 %v746, 120
        %v1274 = vpop.permute.xlu0 %1273
        %1275 = vrot.lane.b32.xlu0 %v751, 120
        %v1276 = vpop.permute.xlu0 %1275
        %1277 = vrot.lane.b32.xlu0 %v756, 120
        %v1278 = vpop.permute.xlu0 %1277
        %1279 = vrot.lane.b32.xlu0 %v761, 120
        %v1280 = vpop.permute.xlu0 %1279
        %1281 = vrot.lane.b32.xlu0 %v766, 120
        %v1282 = vpop.permute.xlu0 %1281
        %1283 = vrot.lane.b32.xlu0 %v879, 120
        %v1284 = vpop.permute.xlu0 %1283
        %1285 = vrot.lane.b32.xlu0 %v884, 120
        %v1286 = vpop.permute.xlu0 %1285
        %1287 = vrot.lane.b32.xlu0 %v889, 120
        %v1288 = vpop.permute.xlu0 %1287
        %1289 = vrot.lane.b32.xlu0 %v894, 120
        %v1290 = vpop.permute.xlu0 %1289
        %1291 = vrot.lane.b32.xlu0 %v899, 120
        %v1292 = vpop.permute.xlu0 %1291
        %1293 = vrot.lane.b32.xlu0 %v904, 120
        %v1294 = vpop.permute.xlu0 %1293
        %v1295 = vsel %vm911, %v1272, 0
        %v1297 = vsel %vm911, %v1274, 0
        %v1299 = vsel %vm911, %v1276, 0
        %v1301 = vsel %vm911, %v1278, 0
        %v1303 = vsel %vm911, %v1280, 0
        %v1305 = vsel %vm911, %v1282, 0
        %v1307 = vsel %vm911, %v1284, 0
        %v1309 = vsel %vm911, %v1286, 0
        %v1311 = vsel %vm911, %v1288, 0
        %v1313 = vsel %vm911, %v1290, 0
        %v1315 = vsel %vm911, %v1292, 0
        %v1317 = vsel %vm911, %v1294, 0
        %1319 = vmatprep.subr.mxu0 0.0
        %1320 = vmatpush1.xpose.msra.mxu0 %v1307
        %1321 = vmatprep.subr.mxu0 0.0
        %1322 = vmatpush1.xpose.msra.mxu0 %v1309
        %1323 = vmatprep.subr.mxu0 0.0
        %1324 = vmatpush1.xpose.msra.mxu0 %v1311
        %1325 = vmatprep.subr.mxu0 0.0
        %1326 = vmatpush1.xpose.msra.mxu0 %v1313
        %1327 = vmatprep.subr.mxu0 0.0
        %1328 = vmatpush1.xpose.msra.mxu0 %v1315
        %1329 = vmatprep.subr.mxu0 0.0
        %1330 = vmatpush1.xpose.msra.mxu0 %v1317
        %1331 = vmatprep.subr.mxu0 0.0
        %1332 = vmatpush1.xpose.msra.mxu0 0.0
        %1333 = vmatprep.subr.mxu0 0.0
        %1334 = vmatpush1.xpose.msra.mxu0 0.0
        %1335 = vmatprep.subr.mxu0 0.0
        %1336 = vmatpush1.xpose.msra.mxu0 0.0
        %1337 = vmatprep.subr.mxu0 0.0
        %1338 = vmatpush1.xpose.msra.mxu0 0.0
        %1339 = vmatprep.subr.mxu0 0.0
        %1340 = vmatpush1.xpose.msra.mxu0 0.0
        %1341 = vmatprep.subr.mxu0 0.0
        %1342 = vmatpush1.xpose.msra.mxu0 0.0
        %1343 = vmatprep.subr.mxu0 0.0
        %1344 = vmatpush1.xpose.msra.mxu0 0.0
        %1345 = vmatprep.subr.mxu0 0.0
        %1346 = vmatpush1.xpose.msra.mxu0 0.0
        %1347 = vmatprep.subr.mxu0 0.0
        %1348 = vmatpush1.xpose.msra.mxu0 0.0
        %1349 = vmatprep.subr.mxu0 0.0
        %1350 = vmatpush1.xpose.msra.mxu0 0.0
        %1351 = vmatprep.subr.mxu0 0.0
        %1352 = vmatpush1.xpose.msra.mxu0 0.0
        %1353 = vmatprep.subr.mxu0 0.0
        %1354 = vmatpush1.xpose.msra.mxu0 0.0
        %1355 = vmatprep.subr.mxu0 0.0
        %1356 = vmatpush1.xpose.msra.mxu0 0.0
        %1357 = vmatprep.subr.mxu0 0.0
        %1358 = vmatpush1.xpose.msra.mxu0 0.0
        %1359 = vmatprep.subr.mxu0 0.0
        %1360 = vmatpush1.xpose.msra.mxu0 0.0
        %1361 = vmatprep.subr.mxu0 0.0
        %1362 = vmatpush1.xpose.msra.mxu0 0.0
        %1363 = vmatprep.subr.mxu0 0.0
        %1364 = vmatpush1.xpose.msra.mxu0 0.0
        %1365 = vmatprep.subr.mxu0 0.0
        %1366 = vmatpush1.xpose.msra.mxu0 0.0
        %1367 = vmatprep.subr.mxu0 0.0
        %1368 = vmatpush1.xpose.msra.mxu0 0.0
        %1369 = vmatprep.subr.mxu0 0.0
        %1370 = vmatpush1.xpose.msra.mxu0 0.0
        %1371 = vmatprep.subr.mxu0 0.0
        %1372 = vmatpush1.xpose.msra.mxu0 0.0
        %1373 = vmatprep.subr.mxu0 0.0
        %1374 = vmatpush1.xpose.msra.mxu0 0.0
        %1375 = vmatprep.subr.mxu0 0.0
        %1376 = vmatpush1.xpose.msra.mxu0 0.0
        %1377 = vmatprep.subr.mxu0 0.0
        %1378 = vmatpush1.xpose.msra.mxu0 0.0
        %1379 = vmatprep.subr.mxu0 0.0
        %1380 = vmatpush1.xpose.msra.mxu0 0.0
        %1381 = vmatprep.subr.mxu0 0.0
        %1382 = vmatpush1.xpose.msra.mxu0 0.0
        %1383 = vmatprep.mubr.f32.mxu0 0.0
        %1384 = vmatmul.mubr.f32.gmra.mrb[0].mxu0 %v1295
        %v1385 = vpop.f32.mrb[0].mxu0
        %v1386 = vadd.f32 0.0, %v1385
        %v1387 = vpop.f32.mrb[0].mxu0
        %1388 = vmatprep.mubr.f32.mxu0 0.0
        %1389 = vmatmul.mubr.f32.gmra.mrb[0].mxu0 %v1297
        %v1390 = vpop.f32.mrb[0].mxu0
        %v1391 = vadd.f32 0.0, %v1390
        %v1392 = vpop.f32.mrb[0].mxu0
        %1393 = vmatprep.mubr.f32.mxu0 0.0
        %1394 = vmatmul.mubr.f32.gmra.mrb[0].mxu0 %v1299
        %v1395 = vpop.f32.mrb[0].mxu0
        %v1396 = vadd.f32 0.0, %v1395
        %v1397 = vpop.f32.mrb[0].mxu0
        %1398 = vmatprep.mubr.f32.mxu0 0.0
        %1399 = vmatmul.mubr.f32.gmra.mrb[0].mxu0 %v1301
        %v1400 = vpop.f32.mrb[0].mxu0
        %v1401 = vadd.f32 0.0, %v1400
        %v1402 = vpop.f32.mrb[0].mxu0
        %1403 = vmatprep.mubr.f32.mxu0 0.0
        %1404 = vmatmul.mubr.f32.gmra.mrb[0].mxu0 %v1303
        %v1405 = vpop.f32.mrb[0].mxu0
        %v1406 = vadd.f32 0.0, %v1405
        %v1407 = vpop.f32.mrb[0].mxu0
        %1408 = vmatprep.mubr.f32.mxu0 0.0
        %1409 = vmatmul.mubr.f32.gmra.mrb[0].mxu0 %v1305
        %v1410 = vpop.f32.mrb[0].mxu0
        %v1411 = vadd.f32 0.0, %v1410
        %v1412 = vpop.f32.mrb[0].mxu0
        %1413 = vdwg.mxu0
        %v1414 = vmul.f32 %v1386, 0.35355338
        %v1415 = vmul.f32 %v1391, 0.35355338
        %v1416 = vmul.f32 %v1396, 0.35355338
        %v1417 = vmul.f32 %v1401, 0.35355338
        %v1418 = vmul.f32 %v1406, 0.35355338
        %v1419 = vmul.f32 %v1411, 0.35355338
        %s1420 = scalar_lea.vmem %s619, 48
        %v1421 = vld [vmem:[%s1420] sm:$0xff]
        %v1422 = vld [vmem:[%s1420 + $0x8] sm:$0xff]
        %v1423 = vld [vmem:[%s1420 + $0x10] sm:$0xff]
        %v1424 = vld [vmem:[%s1420 + $0x18] sm:$0xff]
        %v1425 = vld [vmem:[%s1420 + $0x20] sm:$0xff]
        %v1426 = vld [vmem:[%s1420 + $0x28] sm:$0xff]
        %v1427 = vadd.f32 %v1414, %v1421
        %v1428 = vadd.f32 %v1415, %v1422
        %v1429 = vadd.f32 %v1416, %v1423
        %v1430 = vadd.f32 %v1417, %v1424
        %v1431 = vadd.f32 %v1418, %v1425
        %v1432 = vadd.f32 %v1419, %v1426
        %s1433 = scalar_lea.vmem %s592, 48 [#allocation5]
        %1434 = vst.msk [vmem:[%s1433] sm:$0xff] %vm1061, %v1427
        %1435 = vst.msk [vmem:[%s1433 + $0x8] sm:$0xff] %vm1061, %v1428
        %1436 = vst.msk [vmem:[%s1433 + $0x10] sm:$0xff] %vm1061, %v1429
        %1437 = vst.msk [vmem:[%s1433 + $0x18] sm:$0xff] %vm1061, %v1430
        %1438 = vst.msk [vmem:[%s1433 + $0x20] sm:$0xff] %vm1061, %v1431
        %1439 = vst.msk [vmem:[%s1433 + $0x28] sm:$0xff] %vm1061, %v1432
        %v1440 = vadd.f32 %v1427, %v632
        %v1441 = vadd.f32 %v1428, %v633
        %v1442 = vadd.f32 %v1429, %v634
        %v1443 = vadd.f32 %v1430, %v635
        %v1444 = vadd.f32 %v1431, %v636
        %v1445 = vadd.f32 %v1432, %v637
        %v1446 = vsel %vm1061, %v1440, -inf
        %1447 = vmax.xlane.f32.xlu0 %v1446
        %v1448 = vpop.xlane.xlu0 %1447
        %v1449 = vsel %vm1061, %v1441, -inf
        %1450 = vmax.xlane.f32.xlu0 %v1449
        %v1451 = vpop.xlane.xlu0 %1450
        %v1452 = vsel %vm1061, %v1442, -inf
        %1453 = vmax.xlane.f32.xlu0 %v1452
        %v1454 = vpop.xlane.xlu0 %1453
        %v1455 = vsel %vm1061, %v1443, -inf
        %1456 = vmax.xlane.f32.xlu0 %v1455
        %v1457 = vpop.xlane.xlu0 %1456
        %v1458 = vsel %vm1061, %v1444, -inf
        %1459 = vmax.xlane.f32.xlu0 %v1458
        %v1460 = vpop.xlane.xlu0 %1459
        %v1461 = vsel %vm1061, %v1445, -inf
        %1462 = vmax.xlane.f32.xlu0 %v1461
        %v1463 = vpop.xlane.xlu0 %1462
        %v1464 = vsub.f32 %v1440, %v1448
        %v1465 = vsub.f32 %v1441, %v1451
        %v1466 = vsub.f32 %v1442, %v1454
        %v1467 = vsub.f32 %v1443, %v1457
        %v1468 = vsub.f32 %v1444, %v1460
        %v1469 = vsub.f32 %v1445, %v1463
        %v1470 = vmul.f32 %v1464, 1.442695
        %v1471 = vpow.pop %v1470
        %v1472 = vmul.f32 %v1465, 1.442695
        %v1473 = vpow.pop %v1472
        %v1474 = vmul.f32 %v1466, 1.442695
        %v1475 = vpow.pop %v1474
        %v1476 = vmul.f32 %v1467, 1.442695
        %v1477 = vpow.pop %v1476
        %v1478 = vmul.f32 %v1468, 1.442695
        %v1479 = vpow.pop %v1478
        %v1480 = vmul.f32 %v1469, 1.442695
        %v1481 = vpow.pop %v1480
        %v1482 = vsel %vm1061, %v1471, 0.0
        %1483 = vadd.xlane.f32.xlu0 %v1482
        %v1484 = vpop.xlane.xlu0 %1483
        %v1485 = vsel %vm1061, %v1473, 0.0
        %1486 = vadd.xlane.f32.xlu0 %v1485
        %v1487 = vpop.xlane.xlu0 %1486
        %v1488 = vsel %vm1061, %v1475, 0.0
        %1489 = vadd.xlane.f32.xlu0 %v1488
        %v1490 = vpop.xlane.xlu0 %1489
        %v1491 = vsel %vm1061, %v1477, 0.0
        %1492 = vadd.xlane.f32.xlu0 %v1491
        %v1493 = vpop.xlane.xlu0 %1492
        %v1494 = vsel %vm1061, %v1479, 0.0
        %1495 = vadd.xlane.f32.xlu0 %v1494
        %v1496 = vpop.xlane.xlu0 %1495
        %v1497 = vsel %vm1061, %v1481, 0.0
        %1498 = vadd.xlane.f32.xlu0 %v1497
        %v1499 = vpop.xlane.xlu0 %1498
        %v1500 = vrcp.pop %v1484
        %v1501 = vmul.f32 %v1471, %v1500
        %v1502 = vrcp.pop %v1487
        %v1503 = vmul.f32 %v1473, %v1502
        %v1504 = vrcp.pop %v1490
        %v1505 = vmul.f32 %v1475, %v1504
        %v1506 = vrcp.pop %v1493
        %v1507 = vmul.f32 %v1477, %v1506
        %v1508 = vrcp.pop %v1496
        %v1509 = vmul.f32 %v1479, %v1508
        %v1510 = vrcp.pop %v1499
        %v1511 = vmul.f32 %v1481, %v1510
        %1512 = vrot.lane.b32.xlu0 %v879, 88
        %v1513 = vpop.permute.xlu0 %1512
        %1514 = vrot.lane.b32.xlu0 %v884, 88
        %v1515 = vpop.permute.xlu0 %1514
        %1516 = vrot.lane.b32.xlu0 %v889, 88
        %v1517 = vpop.permute.xlu0 %1516
        %1518 = vrot.lane.b32.xlu0 %v894, 88
        %v1519 = vpop.permute.xlu0 %1518
        %1520 = vrot.lane.b32.xlu0 %v899, 88
        %v1521 = vpop.permute.xlu0 %1520
        %1522 = vrot.lane.b32.xlu0 %v904, 88
        %v1523 = vpop.permute.xlu0 %1522
        %v1531 = vsel %vm1061, %v1501, 0
        %v1534 = vsel %vm1061, %v1503, 0
        %v1537 = vsel %vm1061, %v1505, 0
        %v1540 = vsel %vm1061, %v1507, 0
        %v1543 = vsel %vm1061, %v1509, 0
        %v1546 = vsel %vm1061, %v1511, 0
        %1548 = vmatprep.subr.mxu0 0.0
        %1549 = vmatpush1.msra.mxu0 %v1513
        %1550 = vmatprep.subr.mxu0 0.0
        %1551 = vmatpush1.msra.mxu0 %v1515
        %1552 = vmatprep.subr.mxu0 0.0
        %1553 = vmatpush1.msra.mxu0 %v1517
        %1554 = vmatprep.subr.mxu0 0.0
        %1555 = vmatpush1.msra.mxu0 %v1519
        %1556 = vmatprep.subr.mxu0 0.0
        %1557 = vmatpush1.msra.mxu0 %v1521
        %1558 = vmatprep.subr.mxu0 0.0
        %1559 = vmatpush1.msra.mxu0 %v1523
        %1560 = vmatprep.subr.mxu0 0.0
        %1561 = vmatpush1.msra.mxu0 0.0
        %1562 = vmatprep.subr.mxu0 0.0
        %1563 = vmatpush1.msra.mxu0 0.0
        %1564 = vmatprep.subr.mxu0 0.0
        %1565 = vmatpush1.msra.mxu0 0.0
        %1566 = vmatprep.subr.mxu0 0.0
        %1567 = vmatpush1.msra.mxu0 0.0
        %1568 = vmatprep.subr.mxu0 0.0
        %1569 = vmatpush1.msra.mxu0 0.0
        %1570 = vmatprep.subr.mxu0 0.0
        %1571 = vmatpush1.msra.mxu0 0.0
        %1572 = vmatprep.subr.mxu0 0.0
        %1573 = vmatpush1.msra.mxu0 0.0
        %1574 = vmatprep.subr.mxu0 0.0
        %1575 = vmatpush1.msra.mxu0 0.0
        %1576 = vmatprep.subr.mxu0 0.0
        %1577 = vmatpush1.msra.mxu0 0.0
        %1578 = vmatprep.subr.mxu0 0.0
        %1579 = vmatpush1.msra.mxu0 0.0
        %1580 = vmatprep.subr.mxu0 0.0
        %1581 = vmatpush1.msra.mxu0 0.0
        %1582 = vmatprep.subr.mxu0 0.0
        %1583 = vmatpush1.msra.mxu0 0.0
        %1584 = vmatprep.subr.mxu0 0.0
        %1585 = vmatpush1.msra.mxu0 0.0
        %1586 = vmatprep.subr.mxu0 0.0
        %1587 = vmatpush1.msra.mxu0 0.0
        %1588 = vmatprep.subr.mxu0 0.0
        %1589 = vmatpush1.msra.mxu0 0.0
        %1590 = vmatprep.subr.mxu0 0.0
        %1591 = vmatpush1.msra.mxu0 0.0
        %1592 = vmatprep.subr.mxu0 0.0
        %1593 = vmatpush1.msra.mxu0 0.0
        %1594 = vmatprep.subr.mxu0 0.0
        %1595 = vmatpush1.msra.mxu0 0.0
        %1596 = vmatprep.subr.mxu0 0.0
        %1597 = vmatpush1.msra.mxu0 0.0
        %1598 = vmatprep.subr.mxu0 0.0
        %1599 = vmatpush1.msra.mxu0 0.0
        %1600 = vmatprep.subr.mxu0 0.0
        %1601 = vmatpush1.msra.mxu0 0.0
        %1602 = vmatprep.subr.mxu0 0.0
        %1603 = vmatpush1.msra.mxu0 0.0
        %1604 = vmatprep.subr.mxu0 0.0
        %1605 = vmatpush1.msra.mxu0 0.0
        %1606 = vmatprep.subr.mxu0 0.0
        %1607 = vmatpush1.msra.mxu0 0.0
        %1608 = vmatprep.subr.mxu0 0.0
        %1609 = vmatpush1.msra.mxu0 0.0
        %1610 = vmatprep.subr.mxu0 0.0
        %1611 = vmatpush1.msra.mxu0 0.0
        %1612 = vmatprep.mubr.f32.mxu0 0.0
        %1613 = vmatmul.mubr.f32.gmra.mrb[0].mxu0 %v1531
        %v1614 = vpop.f32.mrb[0].mxu0
        %v1615 = vadd.f32 0.0, %v1614
        %v1616 = vpop.f32.mrb[0].mxu0
        %1617 = vmatprep.mubr.f32.mxu0 0.0
        %1618 = vmatmul.mubr.f32.gmra.mrb[0].mxu0 %v1534
        %v1619 = vpop.f32.mrb[0].mxu0
        %v1620 = vadd.f32 0.0, %v1619
        %v1621 = vpop.f32.mrb[0].mxu0
        %1622 = vmatprep.mubr.f32.mxu0 0.0
        %1623 = vmatmul.mubr.f32.gmra.mrb[0].mxu0 %v1537
        %v1624 = vpop.f32.mrb[0].mxu0
        %v1625 = vadd.f32 0.0, %v1624
        %v1626 = vpop.f32.mrb[0].mxu0
        %1627 = vmatprep.mubr.f32.mxu0 0.0
        %1628 = vmatmul.mubr.f32.gmra.mrb[0].mxu0 %v1540
        %v1629 = vpop.f32.mrb[0].mxu0
        %v1630 = vadd.f32 0.0, %v1629
        %v1631 = vpop.f32.mrb[0].mxu0
        %1632 = vmatprep.mubr.f32.mxu0 0.0
        %1633 = vmatmul.mubr.f32.gmra.mrb[0].mxu0 %v1543
        %v1634 = vpop.f32.mrb[0].mxu0
        %v1635 = vadd.f32 0.0, %v1634
        %v1636 = vpop.f32.mrb[0].mxu0
        %1637 = vmatprep.mubr.f32.mxu0 0.0
        %1638 = vmatmul.mubr.f32.gmra.mrb[0].mxu0 %v1546
        %v1639 = vpop.f32.mrb[0].mxu0
        %v1640 = vadd.f32 0.0, %v1639
        %v1641 = vpop.f32.mrb[0].mxu0
        %1642 = vdwg.mxu0
        %v1644 = vsel %vm911, %v1615, 0
        %v1647 = vsel %vm911, %v1620, 0
        %v1650 = vsel %vm911, %v1625, 0
        %v1653 = vsel %vm911, %v1630, 0
        %v1656 = vsel %vm911, %v1635, 0
        %v1659 = vsel %vm911, %v1640, 0
        %1661 = vmatprep.subr.mxu0 0.0
        %1662 = vmatpush1.msra.mxu0 %v908
        %1663 = vmatprep.subr.mxu0 0.0
        %1664 = vmatpush1.msra.mxu0 0.0
        %1665 = vmatprep.subr.mxu0 0.0
        %1666 = vmatpush1.msra.mxu0 0.0
        %1667 = vmatprep.subr.mxu0 0.0
        %1668 = vmatpush1.msra.mxu0 0.0
        %1669 = vmatprep.subr.mxu0 0.0
        %1670 = vmatpush1.msra.mxu0 0.0
        %1671 = vmatprep.subr.mxu0 0.0
        %1672 = vmatpush1.msra.mxu0 0.0
        %1673 = vmatprep.subr.mxu0 0.0
        %1674 = vmatpush1.msra.mxu0 0.0
        %1675 = vmatprep.subr.mxu0 0.0
        %1676 = vmatpush1.msra.mxu0 0.0
        %1677 = vmatprep.subr.mxu0 0.0
        %1678 = vmatpush1.msra.mxu0 0.0
        %1679 = vmatprep.subr.mxu0 0.0
        %1680 = vmatpush1.msra.mxu0 0.0
        %1681 = vmatprep.subr.mxu0 0.0
        %1682 = vmatpush1.msra.mxu0 0.0
        %1683 = vmatprep.subr.mxu0 0.0
        %1684 = vmatpush1.msra.mxu0 0.0
        %1685 = vmatprep.subr.mxu0 0.0
        %1686 = vmatpush1.msra.mxu0 0.0
        %1687 = vmatprep.subr.mxu0 0.0
        %1688 = vmatpush1.msra.mxu0 0.0
        %1689 = vmatprep.subr.mxu0 0.0
        %1690 = vmatpush1.msra.mxu0 0.0
        %1691 = vmatprep.subr.mxu0 0.0
        %1692 = vmatpush1.msra.mxu0 0.0
        %1693 = vmatprep.subr.mxu0 0.0
        %1694 = vmatpush1.msra.mxu0 0.0
        %1695 = vmatprep.subr.mxu0 0.0
        %1696 = vmatpush1.msra.mxu0 0.0
        %1697 = vmatprep.subr.mxu0 0.0
        %1698 = vmatpush1.msra.mxu0 0.0
        %1699 = vmatprep.subr.mxu0 0.0
        %1700 = vmatpush1.msra.mxu0 0.0
        %1701 = vmatprep.subr.mxu0 0.0
        %1702 = vmatpush1.msra.mxu0 0.0
        %1703 = vmatprep.subr.mxu0 0.0
        %1704 = vmatpush1.msra.mxu0 0.0
        %1705 = vmatprep.subr.mxu0 0.0
        %1706 = vmatpush1.msra.mxu0 0.0
        %1707 = vmatprep.subr.mxu0 0.0
        %1708 = vmatpush1.msra.mxu0 0.0
        %1709 = vmatprep.subr.mxu0 0.0
        %1710 = vmatpush1.msra.mxu0 0.0
        %1711 = vmatprep.subr.mxu0 0.0
        %1712 = vmatpush1.msra.mxu0 0.0
        %1713 = vmatprep.subr.mxu0 0.0
        %1714 = vmatpush1.msra.mxu0 0.0
        %1715 = vmatprep.subr.mxu0 0.0
        %1716 = vmatpush1.msra.mxu0 0.0
        %1717 = vmatprep.subr.mxu0 0.0
        %1718 = vmatpush1.msra.mxu0 0.0
        %1719 = vmatprep.subr.mxu0 0.0
        %1720 = vmatpush1.msra.mxu0 0.0
        %1721 = vmatprep.subr.mxu0 0.0
        %1722 = vmatpush1.msra.mxu0 0.0
        %1723 = vmatprep.subr.mxu0 0.0
        %1724 = vmatpush1.msra.mxu0 0.0
        %1725 = vmatprep.mubr.f32.mxu0 0.0
        %1726 = vmatmul.mubr.f32.gmra.mrb[0].mxu0 %v1644
        %v1727 = vpop.f32.mrb[0].mxu0
        %v1728 = vadd.f32 0.0, %v1727
        %v1729 = vpop.f32.mrb[0].mxu0
        %1730 = vmatprep.mubr.f32.mxu0 0.0
        %1731 = vmatmul.mubr.f32.gmra.mrb[0].mxu0 %v1647
        %v1732 = vpop.f32.mrb[0].mxu0
        %v1733 = vadd.f32 0.0, %v1732
        %v1734 = vpop.f32.mrb[0].mxu0
        %1735 = vmatprep.mubr.f32.mxu0 0.0
        %1736 = vmatmul.mubr.f32.gmra.mrb[0].mxu0 %v1650
        %v1737 = vpop.f32.mrb[0].mxu0
        %v1738 = vadd.f32 0.0, %v1737
        %v1739 = vpop.f32.mrb[0].mxu0
        %1740 = vmatprep.mubr.f32.mxu0 0.0
        %1741 = vmatmul.mubr.f32.gmra.mrb[0].mxu0 %v1653
        %v1742 = vpop.f32.mrb[0].mxu0
        %v1743 = vadd.f32 0.0, %v1742
        %v1744 = vpop.f32.mrb[0].mxu0
        %1745 = vmatprep.mubr.f32.mxu0 0.0
        %1746 = vmatmul.mubr.f32.gmra.mrb[0].mxu0 %v1656
        %v1747 = vpop.f32.mrb[0].mxu0
        %v1748 = vadd.f32 0.0, %v1747
        %v1749 = vpop.f32.mrb[0].mxu0
        %1750 = vmatprep.mubr.f32.mxu0 0.0
        %1751 = vmatmul.mubr.f32.gmra.mrb[0].mxu0 %v1659
        %v1752 = vpop.f32.mrb[0].mxu0
        %v1753 = vadd.f32 0.0, %v1752
        %v1754 = vpop.f32.mrb[0].mxu0
        %1755 = vdwg.mxu0
        %v1757 = vsel %vm911, %v1243, 0
        %v1760 = vsel %vm911, %v1248, 0
        %v1763 = vsel %vm911, %v1253, 0
        %v1766 = vsel %vm911, %v1258, 0
        %v1769 = vsel %vm911, %v1263, 0
        %v1772 = vsel %vm911, %v1268, 0
        %1774 = vmatprep.subr.mxu0 0.0
        %1775 = vmatpush1.msra.mxu0 %v907
        %1776 = vmatprep.subr.mxu0 0.0
        %1777 = vmatpush1.msra.mxu0 0.0
        %1778 = vmatprep.subr.mxu0 0.0
        %1779 = vmatpush1.msra.mxu0 0.0
        %1780 = vmatprep.subr.mxu0 0.0
        %1781 = vmatpush1.msra.mxu0 0.0
        %1782 = vmatprep.subr.mxu0 0.0
        %1783 = vmatpush1.msra.mxu0 0.0
        %1784 = vmatprep.subr.mxu0 0.0
        %1785 = vmatpush1.msra.mxu0 0.0
        %1786 = vmatprep.subr.mxu0 0.0
        %1787 = vmatpush1.msra.mxu0 0.0
        %1788 = vmatprep.subr.mxu0 0.0
        %1789 = vmatpush1.msra.mxu0 0.0
        %1790 = vmatprep.subr.mxu0 0.0
        %1791 = vmatpush1.msra.mxu0 0.0
        %1792 = vmatprep.subr.mxu0 0.0
        %1793 = vmatpush1.msra.mxu0 0.0
        %1794 = vmatprep.subr.mxu0 0.0
        %1795 = vmatpush1.msra.mxu0 0.0
        %1796 = vmatprep.subr.mxu0 0.0
        %1797 = vmatpush1.msra.mxu0 0.0
        %1798 = vmatprep.subr.mxu0 0.0
        %1799 = vmatpush1.msra.mxu0 0.0
        %1800 = vmatprep.subr.mxu0 0.0
        %1801 = vmatpush1.msra.mxu0 0.0
        %1802 = vmatprep.subr.mxu0 0.0
        %1803 = vmatpush1.msra.mxu0 0.0
        %1804 = vmatprep.subr.mxu0 0.0
        %1805 = vmatpush1.msra.mxu0 0.0
        %1806 = vmatprep.subr.mxu0 0.0
        %1807 = vmatpush1.msra.mxu0 0.0
        %1808 = vmatprep.subr.mxu0 0.0
        %1809 = vmatpush1.msra.mxu0 0.0
        %1810 = vmatprep.subr.mxu0 0.0
        %1811 = vmatpush1.msra.mxu0 0.0
        %1812 = vmatprep.subr.mxu0 0.0
        %1813 = vmatpush1.msra.mxu0 0.0
        %1814 = vmatprep.subr.mxu0 0.0
        %1815 = vmatpush1.msra.mxu0 0.0
        %1816 = vmatprep.subr.mxu0 0.0
        %1817 = vmatpush1.msra.mxu0 0.0
        %1818 = vmatprep.subr.mxu0 0.0
        %1819 = vmatpush1.msra.mxu0 0.0
        %1820 = vmatprep.subr.mxu0 0.0
        %1821 = vmatpush1.msra.mxu0 0.0
        %1822 = vmatprep.subr.mxu0 0.0
        %1823 = vmatpush1.msra.mxu0 0.0
        %1824 = vmatprep.subr.mxu0 0.0
        %1825 = vmatpush1.msra.mxu0 0.0
        %1826 = vmatprep.subr.mxu0 0.0
        %1827 = vmatpush1.msra.mxu0 0.0
        %1828 = vmatprep.subr.mxu0 0.0
        %1829 = vmatpush1.msra.mxu0 0.0
        %1830 = vmatprep.subr.mxu0 0.0
        %1831 = vmatpush1.msra.mxu0 0.0
        %1832 = vmatprep.subr.mxu0 0.0
        %1833 = vmatpush1.msra.mxu0 0.0
        %1834 = vmatprep.subr.mxu0 0.0
        %1835 = vmatpush1.msra.mxu0 0.0
        %1836 = vmatprep.subr.mxu0 0.0
        %1837 = vmatpush1.msra.mxu0 0.0
        %1838 = vmatprep.mubr.f32.mxu0 0.0
        %1839 = vmatmul.mubr.f32.gmra.mrb[0].mxu0 %v1757
        %v1840 = vpop.f32.mrb[0].mxu0
        %v1841 = vadd.f32 %v1728, %v1840
        %v1842 = vpop.f32.mrb[0].mxu0
        %1843 = vmatprep.mubr.f32.mxu0 0.0
        %1844 = vmatmul.mubr.f32.gmra.mrb[0].mxu0 %v1760
        %v1845 = vpop.f32.mrb[0].mxu0
        %v1846 = vadd.f32 %v1733, %v1845
        %v1847 = vpop.f32.mrb[0].mxu0
        %1848 = vmatprep.mubr.f32.mxu0 0.0
        %1849 = vmatmul.mubr.f32.gmra.mrb[0].mxu0 %v1763
        %v1850 = vpop.f32.mrb[0].mxu0
        %v1851 = vadd.f32 %v1738, %v1850
        %v1852 = vpop.f32.mrb[0].mxu0
        %1853 = vmatprep.mubr.f32.mxu0 0.0
        %1854 = vmatmul.mubr.f32.gmra.mrb[0].mxu0 %v1766
        %v1855 = vpop.f32.mrb[0].mxu0
        %v1856 = vadd.f32 %v1743, %v1855
        %v1857 = vpop.f32.mrb[0].mxu0
        %1858 = vmatprep.mubr.f32.mxu0 0.0
        %1859 = vmatmul.mubr.f32.gmra.mrb[0].mxu0 %v1769
        %v1860 = vpop.f32.mrb[0].mxu0
        %v1861 = vadd.f32 %v1748, %v1860
        %v1862 = vpop.f32.mrb[0].mxu0
        %1863 = vmatprep.mubr.f32.mxu0 0.0
        %1864 = vmatmul.mubr.f32.gmra.mrb[0].mxu0 %v1772
        %v1865 = vpop.f32.mrb[0].mxu0
        %v1866 = vadd.f32 %v1753, %v1865
        %v1867 = vpop.f32.mrb[0].mxu0
        %1868 = vdwg.mxu0
        %1869 = vrot.lane.b32.xlu0 %v741, 112
        %v1870 = vpop.permute.xlu0 %1869
        %1871 = vrot.lane.b32.xlu0 %v746, 112
        %v1872 = vpop.permute.xlu0 %1871
        %1873 = vrot.lane.b32.xlu0 %v751, 112
        %v1874 = vpop.permute.xlu0 %1873
        %1875 = vrot.lane.b32.xlu0 %v756, 112
        %v1876 = vpop.permute.xlu0 %1875
        %1877 = vrot.lane.b32.xlu0 %v761, 112
        %v1878 = vpop.permute.xlu0 %1877
        %1879 = vrot.lane.b32.xlu0 %v766, 112
        %v1880 = vpop.permute.xlu0 %1879
        %1881 = vrot.lane.b32.xlu0 %v879, 112
        %v1882 = vpop.permute.xlu0 %1881
        %1883 = vrot.lane.b32.xlu0 %v884, 112
        %v1884 = vpop.permute.xlu0 %1883
        %1885 = vrot.lane.b32.xlu0 %v889, 112
        %v1886 = vpop.permute.xlu0 %1885
        %1887 = vrot.lane.b32.xlu0 %v894, 112
        %v1888 = vpop.permute.xlu0 %1887
        %1889 = vrot.lane.b32.xlu0 %v899, 112
        %v1890 = vpop.permute.xlu0 %1889
        %1891 = vrot.lane.b32.xlu0 %v904, 112
        %v1892 = vpop.permute.xlu0 %1891
        %v1893 = vsel %vm911, %v1870, 0
        %v1895 = vsel %vm911, %v1872, 0
        %v1897 = vsel %vm911, %v1874, 0
        %v1899 = vsel %vm911, %v1876, 0
        %v1901 = vsel %vm911, %v1878, 0
        %v1903 = vsel %vm911, %v1880, 0
        %v1905 = vsel %vm911, %v1882, 0
        %v1907 = vsel %vm911, %v1884, 0
        %v1909 = vsel %vm911, %v1886, 0
        %v1911 = vsel %vm911, %v1888, 0
        %v1913 = vsel %vm911, %v1890, 0
        %v1915 = vsel %vm911, %v1892, 0
        %1917 = vmatprep.subr.mxu0 0.0
        %1918 = vmatpush1.xpose.msra.mxu0 %v1905
        %1919 = vmatprep.subr.mxu0 0.0
        %1920 = vmatpush1.xpose.msra.mxu0 %v1907
        %1921 = vmatprep.subr.mxu0 0.0
        %1922 = vmatpush1.xpose.msra.mxu0 %v1909
        %1923 = vmatprep.subr.mxu0 0.0
        %1924 = vmatpush1.xpose.msra.mxu0 %v1911
        %1925 = vmatprep.subr.mxu0 0.0
        %1926 = vmatpush1.xpose.msra.mxu0 %v1913
        %1927 = vmatprep.subr.mxu0 0.0
        %1928 = vmatpush1.xpose.msra.mxu0 %v1915
        %1929 = vmatprep.subr.mxu0 0.0
        %1930 = vmatpush1.xpose.msra.mxu0 0.0
        %1931 = vmatprep.subr.mxu0 0.0
        %1932 = vmatpush1.xpose.msra.mxu0 0.0
        %1933 = vmatprep.subr.mxu0 0.0
        %1934 = vmatpush1.xpose.msra.mxu0 0.0
        %1935 = vmatprep.subr.mxu0 0.0
        %1936 = vmatpush1.xpose.msra.mxu0 0.0
        %1937 = vmatprep.subr.mxu0 0.0
        %1938 = vmatpush1.xpose.msra.mxu0 0.0
        %1939 = vmatprep.subr.mxu0 0.0
        %1940 = vmatpush1.xpose.msra.mxu0 0.0
        %1941 = vmatprep.subr.mxu0 0.0
        %1942 = vmatpush1.xpose.msra.mxu0 0.0
        %1943 = vmatprep.subr.mxu0 0.0
        %1944 = vmatpush1.xpose.msra.mxu0 0.0
        %1945 = vmatprep.subr.mxu0 0.0
        %1946 = vmatpush1.xpose.msra.mxu0 0.0
        %1947 = vmatprep.subr.mxu0 0.0
        %1948 = vmatpush1.xpose.msra.mxu0 0.0
        %1949 = vmatprep.subr.mxu0 0.0
        %1950 = vmatpush1.xpose.msra.mxu0 0.0
        %1951 = vmatprep.subr.mxu0 0.0
        %1952 = vmatpush1.xpose.msra.mxu0 0.0
        %1953 = vmatprep.subr.mxu0 0.0
        %1954 = vmatpush1.xpose.msra.mxu0 0.0
        %1955 = vmatprep.subr.mxu0 0.0
        %1956 = vmatpush1.xpose.msra.mxu0 0.0
        %1957 = vmatprep.subr.mxu0 0.0
        %1958 = vmatpush1.xpose.msra.mxu0 0.0
        %1959 = vmatprep.subr.mxu0 0.0
        %1960 = vmatpush1.xpose.msra.mxu0 0.0
        %1961 = vmatprep.subr.mxu0 0.0
        %1962 = vmatpush1.xpose.msra.mxu0 0.0
        %1963 = vmatprep.subr.mxu0 0.0
        %1964 = vmatpush1.xpose.msra.mxu0 0.0
        %1965 = vmatprep.subr.mxu0 0.0
        %1966 = vmatpush1.xpose.msra.mxu0 0.0
        %1967 = vmatprep.subr.mxu0 0.0
        %1968 = vmatpush1.xpose.msra.mxu0 0.0
        %1969 = vmatprep.subr.mxu0 0.0
        %1970 = vmatpush1.xpose.msra.mxu0 0.0
        %1971 = vmatprep.subr.mxu0 0.0
        %1972 = vmatpush1.xpose.msra.mxu0 0.0
        %1973 = vmatprep.subr.mxu0 0.0
        %1974 = vmatpush1.xpose.msra.mxu0 0.0
        %1975 = vmatprep.subr.mxu0 0.0
        %1976 = vmatpush1.xpose.msra.mxu0 0.0
        %1977 = vmatprep.subr.mxu0 0.0
        %1978 = vmatpush1.xpose.msra.mxu0 0.0
        %1979 = vmatprep.subr.mxu0 0.0
        %1980 = vmatpush1.xpose.msra.mxu0 0.0
        %1981 = vmatprep.mubr.f32.mxu0 0.0
        %1982 = vmatmul.mubr.f32.gmra.mrb[0].mxu0 %v1893
        %v1983 = vpop.f32.mrb[0].mxu0
        %v1984 = vadd.f32 0.0, %v1983
        %v1985 = vpop.f32.mrb[0].mxu0
        %1986 = vmatprep.mubr.f32.mxu0 0.0
        %1987 = vmatmul.mubr.f32.gmra.mrb[0].mxu0 %v1895
        %v1988 = vpop.f32.mrb[0].mxu0
        %v1989 = vadd.f32 0.0, %v1988
        %v1990 = vpop.f32.mrb[0].mxu0
        %1991 = vmatprep.mubr.f32.mxu0 0.0
        %1992 = vmatmul.mubr.f32.gmra.mrb[0].mxu0 %v1897
        %v1993 = vpop.f32.mrb[0].mxu0
        %v1994 = vadd.f32 0.0, %v1993
        %v1995 = vpop.f32.mrb[0].mxu0
        %1996 = vmatprep.mubr.f32.mxu0 0.0
        %1997 = vmatmul.mubr.f32.gmra.mrb[0].mxu0 %v1899
        %v1998 = vpop.f32.mrb[0].mxu0
        %v1999 = vadd.f32 0.0, %v1998
        %v2000 = vpop.f32.mrb[0].mxu0
        %2001 = vmatprep.mubr.f32.mxu0 0.0
        %2002 = vmatmul.mubr.f32.gmra.mrb[0].mxu0 %v1901
        %v2003 = vpop.f32.mrb[0].mxu0
        %v2004 = vadd.f32 0.0, %v2003
        %v2005 = vpop.f32.mrb[0].mxu0
        %2006 = vmatprep.mubr.f32.mxu0 0.0
        %2007 = vmatmul.mubr.f32.gmra.mrb[0].mxu0 %v1903
        %v2008 = vpop.f32.mrb[0].mxu0
        %v2009 = vadd.f32 0.0, %v2008
        %v2010 = vpop.f32.mrb[0].mxu0
        %2011 = vdwg.mxu0
        %v2012 = vmul.f32 %v1984, 0.35355338
        %v2013 = vmul.f32 %v1989, 0.35355338
        %v2014 = vmul.f32 %v1994, 0.35355338
        %v2015 = vmul.f32 %v1999, 0.35355338
        %v2016 = vmul.f32 %v2004, 0.35355338
        %v2017 = vmul.f32 %v2009, 0.35355338
        %s2018 = scalar_lea.vmem %s619, 96
        %v2019 = vld [vmem:[%s2018] sm:$0xff]
        %v2020 = vld [vmem:[%s2018 + $0x8] sm:$0xff]
        %v2021 = vld [vmem:[%s2018 + $0x10] sm:$0xff]
        %v2022 = vld [vmem:[%s2018 + $0x18] sm:$0xff]
        %v2023 = vld [vmem:[%s2018 + $0x20] sm:$0xff]
        %v2024 = vld [vmem:[%s2018 + $0x28] sm:$0xff]
        %v2025 = vadd.f32 %v2012, %v2019
        %v2026 = vadd.f32 %v2013, %v2020
        %v2027 = vadd.f32 %v2014, %v2021
        %v2028 = vadd.f32 %v2015, %v2022
        %v2029 = vadd.f32 %v2016, %v2023
        %v2030 = vadd.f32 %v2017, %v2024
        %s2031 = scalar_lea.vmem %s592, 96 [#allocation5]
        %2032 = vst.msk [vmem:[%s2031] sm:$0xff] %vm1061, %v2025
        %2033 = vst.msk [vmem:[%s2031 + $0x8] sm:$0xff] %vm1061, %v2026
        %2034 = vst.msk [vmem:[%s2031 + $0x10] sm:$0xff] %vm1061, %v2027
        %2035 = vst.msk [vmem:[%s2031 + $0x18] sm:$0xff] %vm1061, %v2028
        %2036 = vst.msk [vmem:[%s2031 + $0x20] sm:$0xff] %vm1061, %v2029
        %2037 = vst.msk [vmem:[%s2031 + $0x28] sm:$0xff] %vm1061, %v2030
        %v2038 = vadd.f32 %v2025, %v632
        %v2039 = vadd.f32 %v2026, %v633
        %v2040 = vadd.f32 %v2027, %v634
        %v2041 = vadd.f32 %v2028, %v635
        %v2042 = vadd.f32 %v2029, %v636
        %v2043 = vadd.f32 %v2030, %v637
        %v2044 = vsel %vm1061, %v2038, -inf
        %2045 = vmax.xlane.f32.xlu0 %v2044
        %v2046 = vpop.xlane.xlu0 %2045
        %v2047 = vsel %vm1061, %v2039, -inf
        %2048 = vmax.xlane.f32.xlu0 %v2047
        %v2049 = vpop.xlane.xlu0 %2048
        %v2050 = vsel %vm1061, %v2040, -inf
        %2051 = vmax.xlane.f32.xlu0 %v2050
        %v2052 = vpop.xlane.xlu0 %2051
        %v2053 = vsel %vm1061, %v2041, -inf
        %2054 = vmax.xlane.f32.xlu0 %v2053
        %v2055 = vpop.xlane.xlu0 %2054
        %v2056 = vsel %vm1061, %v2042, -inf
        %2057 = vmax.xlane.f32.xlu0 %v2056
        %v2058 = vpop.xlane.xlu0 %2057
        %v2059 = vsel %vm1061, %v2043, -inf
        %2060 = vmax.xlane.f32.xlu0 %v2059
        %v2061 = vpop.xlane.xlu0 %2060
        %v2062 = vsub.f32 %v2038, %v2046
        %v2063 = vsub.f32 %v2039, %v2049
        %v2064 = vsub.f32 %v2040, %v2052
        %v2065 = vsub.f32 %v2041, %v2055
        %v2066 = vsub.f32 %v2042, %v2058
        %v2067 = vsub.f32 %v2043, %v2061
        %v2068 = vmul.f32 %v2062, 1.442695
        %v2069 = vpow.pop %v2068
        %v2070 = vmul.f32 %v2063, 1.442695
        %v2071 = vpow.pop %v2070
        %v2072 = vmul.f32 %v2064, 1.442695
        %v2073 = vpow.pop %v2072
        %v2074 = vmul.f32 %v2065, 1.442695
        %v2075 = vpow.pop %v2074
        %v2076 = vmul.f32 %v2066, 1.442695
        %v2077 = vpow.pop %v2076
        %v2078 = vmul.f32 %v2067, 1.442695
        %v2079 = vpow.pop %v2078
        %v2080 = vsel %vm1061, %v2069, 0.0
        %2081 = vadd.xlane.f32.xlu0 %v2080
        %v2082 = vpop.xlane.xlu0 %2081
        %v2083 = vsel %vm1061, %v2071, 0.0
        %2084 = vadd.xlane.f32.xlu0 %v2083
        %v2085 = vpop.xlane.xlu0 %2084
        %v2086 = vsel %vm1061, %v2073, 0.0
        %2087 = vadd.xlane.f32.xlu0 %v2086
        %v2088 = vpop.xlane.xlu0 %2087
        %v2089 = vsel %vm1061, %v2075, 0.0
        %2090 = vadd.xlane.f32.xlu0 %v2089
        %v2091 = vpop.xlane.xlu0 %2090
        %v2092 = vsel %vm1061, %v2077, 0.0
        %2093 = vadd.xlane.f32.xlu0 %v2092
        %v2094 = vpop.xlane.xlu0 %2093
        %v2095 = vsel %vm1061, %v2079, 0.0
        %2096 = vadd.xlane.f32.xlu0 %v2095
        %v2097 = vpop.xlane.xlu0 %2096
        %v2098 = vrcp.pop %v2082
        %v2099 = vmul.f32 %v2069, %v2098
        %v2100 = vrcp.pop %v2085
        %v2101 = vmul.f32 %v2071, %v2100
        %v2102 = vrcp.pop %v2088
        %v2103 = vmul.f32 %v2073, %v2102
        %v2104 = vrcp.pop %v2091
        %v2105 = vmul.f32 %v2075, %v2104
        %v2106 = vrcp.pop %v2094
        %v2107 = vmul.f32 %v2077, %v2106
        %v2108 = vrcp.pop %v2097
        %v2109 = vmul.f32 %v2079, %v2108
        %2110 = vrot.lane.b32.xlu0 %v879, 80
        %v2111 = vpop.permute.xlu0 %2110
        %2112 = vrot.lane.b32.xlu0 %v884, 80
        %v2113 = vpop.permute.xlu0 %2112
        %2114 = vrot.lane.b32.xlu0 %v889, 80
        %v2115 = vpop.permute.xlu0 %2114
        %2116 = vrot.lane.b32.xlu0 %v894, 80
        %v2117 = vpop.permute.xlu0 %2116
        %2118 = vrot.lane.b32.xlu0 %v899, 80
        %v2119 = vpop.permute.xlu0 %2118
        %2120 = vrot.lane.b32.xlu0 %v904, 80
        %v2121 = vpop.permute.xlu0 %2120
        %v2129 = vsel %vm1061, %v2099, 0
        %v2132 = vsel %vm1061, %v2101, 0
        %v2135 = vsel %vm1061, %v2103, 0
        %v2138 = vsel %vm1061, %v2105, 0
        %v2141 = vsel %vm1061, %v2107, 0
        %v2144 = vsel %vm1061, %v2109, 0
        %2146 = vmatprep.subr.mxu0 0.0
        %2147 = vmatpush1.msra.mxu0 %v2111
        %2148 = vmatprep.subr.mxu0 0.0
        %2149 = vmatpush1.msra.mxu0 %v2113
        %2150 = vmatprep.subr.mxu0 0.0
        %2151 = vmatpush1.msra.mxu0 %v2115
        %2152 = vmatprep.subr.mxu0 0.0
        %2153 = vmatpush1.msra.mxu0 %v2117
        %2154 = vmatprep.subr.mxu0 0.0
        %2155 = vmatpush1.msra.mxu0 %v2119
        %2156 = vmatprep.subr.mxu0 0.0
        %2157 = vmatpush1.msra.mxu0 %v2121
        %2158 = vmatprep.subr.mxu0 0.0
        %2159 = vmatpush1.msra.mxu0 0.0
        %2160 = vmatprep.subr.mxu0 0.0
        %2161 = vmatpush1.msra.mxu0 0.0
        %2162 = vmatprep.subr.mxu0 0.0
        %2163 = vmatpush1.msra.mxu0 0.0
        %2164 = vmatprep.subr.mxu0 0.0
        %2165 = vmatpush1.msra.mxu0 0.0
        %2166 = vmatprep.subr.mxu0 0.0
        %2167 = vmatpush1.msra.mxu0 0.0
        %2168 = vmatprep.subr.mxu0 0.0
        %2169 = vmatpush1.msra.mxu0 0.0
        %2170 = vmatprep.subr.mxu0 0.0
        %2171 = vmatpush1.msra.mxu0 0.0
        %2172 = vmatprep.subr.mxu0 0.0
        %2173 = vmatpush1.msra.mxu0 0.0
        %2174 = vmatprep.subr.mxu0 0.0
        %2175 = vmatpush1.msra.mxu0 0.0
        %2176 = vmatprep.subr.mxu0 0.0
        %2177 = vmatpush1.msra.mxu0 0.0
        %2178 = vmatprep.subr.mxu0 0.0
        %2179 = vmatpush1.msra.mxu0 0.0
        %2180 = vmatprep.subr.mxu0 0.0
        %2181 = vmatpush1.msra.mxu0 0.0
        %2182 = vmatprep.subr.mxu0 0.0
        %2183 = vmatpush1.msra.mxu0 0.0
        %2184 = vmatprep.subr.mxu0 0.0
        %2185 = vmatpush1.msra.mxu0 0.0
        %2186 = vmatprep.subr.mxu0 0.0
        %2187 = vmatpush1.msra.mxu0 0.0
        %2188 = vmatprep.subr.mxu0 0.0
        %2189 = vmatpush1.msra.mxu0 0.0
        %2190 = vmatprep.subr.mxu0 0.0
        %2191 = vmatpush1.msra.mxu0 0.0
        %2192 = vmatprep.subr.mxu0 0.0
        %2193 = vmatpush1.msra.mxu0 0.0
        %2194 = vmatprep.subr.mxu0 0.0
        %2195 = vmatpush1.msra.mxu0 0.0
        %2196 = vmatprep.subr.mxu0 0.0
        %2197 = vmatpush1.msra.mxu0 0.0
        %2198 = vmatprep.subr.mxu0 0.0
        %2199 = vmatpush1.msra.mxu0 0.0
        %2200 = vmatprep.subr.mxu0 0.0
        %2201 = vmatpush1.msra.mxu0 0.0
        %2202 = vmatprep.subr.mxu0 0.0
        %2203 = vmatpush1.msra.mxu0 0.0
        %2204 = vmatprep.subr.mxu0 0.0
        %2205 = vmatpush1.msra.mxu0 0.0
        %2206 = vmatprep.subr.mxu0 0.0
        %2207 = vmatpush1.msra.mxu0 0.0
        %2208 = vmatprep.subr.mxu0 0.0
        %2209 = vmatpush1.msra.mxu0 0.0
        %2210 = vmatprep.mubr.f32.mxu0 0.0
        %2211 = vmatmul.mubr.f32.gmra.mrb[0].mxu0 %v2129
        %v2212 = vpop.f32.mrb[0].mxu0
        %v2213 = vadd.f32 0.0, %v2212
        %v2214 = vpop.f32.mrb[0].mxu0
        %2215 = vmatprep.mubr.f32.mxu0 0.0
        %2216 = vmatmul.mubr.f32.gmra.mrb[0].mxu0 %v2132
        %v2217 = vpop.f32.mrb[0].mxu0
        %v2218 = vadd.f32 0.0, %v2217
        %v2219 = vpop.f32.mrb[0].mxu0
        %2220 = vmatprep.mubr.f32.mxu0 0.0
        %2221 = vmatmul.mubr.f32.gmra.mrb[0].mxu0 %v2135
        %v2222 = vpop.f32.mrb[0].mxu0
        %v2223 = vadd.f32 0.0, %v2222
        %v2224 = vpop.f32.mrb[0].mxu0
        %2225 = vmatprep.mubr.f32.mxu0 0.0
        %2226 = vmatmul.mubr.f32.gmra.mrb[0].mxu0 %v2138
        %v2227 = vpop.f32.mrb[0].mxu0
        %v2228 = vadd.f32 0.0, %v2227
        %v2229 = vpop.f32.mrb[0].mxu0
        %2230 = vmatprep.mubr.f32.mxu0 0.0
        %2231 = vmatmul.mubr.f32.gmra.mrb[0].mxu0 %v2141
        %v2232 = vpop.f32.mrb[0].mxu0
        %v2233 = vadd.f32 0.0, %v2232
        %v2234 = vpop.f32.mrb[0].mxu0
        %2235 = vmatprep.mubr.f32.mxu0 0.0
        %2236 = vmatmul.mubr.f32.gmra.mrb[0].mxu0 %v2144
        %v2237 = vpop.f32.mrb[0].mxu0
        %v2238 = vadd.f32 0.0, %v2237
        %v2239 = vpop.f32.mrb[0].mxu0
        %2240 = vdwg.mxu0
        %v2242 = vsel %vm911, %v2213, 0
        %v2245 = vsel %vm911, %v2218, 0
        %v2248 = vsel %vm911, %v2223, 0
        %v2251 = vsel %vm911, %v2228, 0
        %v2254 = vsel %vm911, %v2233, 0
        %v2257 = vsel %vm911, %v2238, 0
        %2259 = vmatprep.subr.mxu0 0.0
        %2260 = vmatpush1.msra.mxu0 %v909
        %2261 = vmatprep.subr.mxu0 0.0
        %2262 = vmatpush1.msra.mxu0 0.0
        %2263 = vmatprep.subr.mxu0 0.0
        %2264 = vmatpush1.msra.mxu0 0.0
        %2265 = vmatprep.subr.mxu0 0.0
        %2266 = vmatpush1.msra.mxu0 0.0
        %2267 = vmatprep.subr.mxu0 0.0
        %2268 = vmatpush1.msra.mxu0 0.0
        %2269 = vmatprep.subr.mxu0 0.0
        %2270 = vmatpush1.msra.mxu0 0.0
        %2271 = vmatprep.subr.mxu0 0.0
        %2272 = vmatpush1.msra.mxu0 0.0
        %2273 = vmatprep.subr.mxu0 0.0
        %2274 = vmatpush1.msra.mxu0 0.0
        %2275 = vmatprep.subr.mxu0 0.0
        %2276 = vmatpush1.msra.mxu0 0.0
        %2277 = vmatprep.subr.mxu0 0.0
        %2278 = vmatpush1.msra.mxu0 0.0
        %2279 = vmatprep.subr.mxu0 0.0
        %2280 = vmatpush1.msra.mxu0 0.0
        %2281 = vmatprep.subr.mxu0 0.0
        %2282 = vmatpush1.msra.mxu0 0.0
        %2283 = vmatprep.subr.mxu0 0.0
        %2284 = vmatpush1.msra.mxu0 0.0
        %2285 = vmatprep.subr.mxu0 0.0
        %2286 = vmatpush1.msra.mxu0 0.0
        %2287 = vmatprep.subr.mxu0 0.0
        %2288 = vmatpush1.msra.mxu0 0.0
        %2289 = vmatprep.subr.mxu0 0.0
        %2290 = vmatpush1.msra.mxu0 0.0
        %2291 = vmatprep.subr.mxu0 0.0
        %2292 = vmatpush1.msra.mxu0 0.0
        %2293 = vmatprep.subr.mxu0 0.0
        %2294 = vmatpush1.msra.mxu0 0.0
        %2295 = vmatprep.subr.mxu0 0.0
        %2296 = vmatpush1.msra.mxu0 0.0
        %2297 = vmatprep.subr.mxu0 0.0
        %2298 = vmatpush1.msra.mxu0 0.0
        %2299 = vmatprep.subr.mxu0 0.0
        %2300 = vmatpush1.msra.mxu0 0.0
        %2301 = vmatprep.subr.mxu0 0.0
        %2302 = vmatpush1.msra.mxu0 0.0
        %2303 = vmatprep.subr.mxu0 0.0
        %2304 = vmatpush1.msra.mxu0 0.0
        %2305 = vmatprep.subr.mxu0 0.0
        %2306 = vmatpush1.msra.mxu0 0.0
        %2307 = vmatprep.subr.mxu0 0.0
        %2308 = vmatpush1.msra.mxu0 0.0
        %2309 = vmatprep.subr.mxu0 0.0
        %2310 = vmatpush1.msra.mxu0 0.0
        %2311 = vmatprep.subr.mxu0 0.0
        %2312 = vmatpush1.msra.mxu0 0.0
        %2313 = vmatprep.subr.mxu0 0.0
        %2314 = vmatpush1.msra.mxu0 0.0
        %2315 = vmatprep.subr.mxu0 0.0
        %2316 = vmatpush1.msra.mxu0 0.0
        %2317 = vmatprep.subr.mxu0 0.0
        %2318 = vmatpush1.msra.mxu0 0.0
        %2319 = vmatprep.subr.mxu0 0.0
        %2320 = vmatpush1.msra.mxu0 0.0
        %2321 = vmatprep.subr.mxu0 0.0
        %2322 = vmatpush1.msra.mxu0 0.0
        %2323 = vmatprep.mubr.f32.mxu0 0.0
        %2324 = vmatmul.mubr.f32.gmra.mrb[0].mxu0 %v2242
        %v2325 = vpop.f32.mrb[0].mxu0
        %v2326 = vadd.f32 0.0, %v2325
        %v2327 = vpop.f32.mrb[0].mxu0
        %2328 = vmatprep.mubr.f32.mxu0 0.0
        %2329 = vmatmul.mubr.f32.gmra.mrb[0].mxu0 %v2245
        %v2330 = vpop.f32.mrb[0].mxu0
        %v2331 = vadd.f32 0.0, %v2330
        %v2332 = vpop.f32.mrb[0].mxu0
        %2333 = vmatprep.mubr.f32.mxu0 0.0
        %2334 = vmatmul.mubr.f32.gmra.mrb[0].mxu0 %v2248
        %v2335 = vpop.f32.mrb[0].mxu0
        %v2336 = vadd.f32 0.0, %v2335
        %v2337 = vpop.f32.mrb[0].mxu0
        %2338 = vmatprep.mubr.f32.mxu0 0.0
        %2339 = vmatmul.mubr.f32.gmra.mrb[0].mxu0 %v2251
        %v2340 = vpop.f32.mrb[0].mxu0
        %v2341 = vadd.f32 0.0, %v2340
        %v2342 = vpop.f32.mrb[0].mxu0
        %2343 = vmatprep.mubr.f32.mxu0 0.0
        %2344 = vmatmul.mubr.f32.gmra.mrb[0].mxu0 %v2254
        %v2345 = vpop.f32.mrb[0].mxu0
        %v2346 = vadd.f32 0.0, %v2345
        %v2347 = vpop.f32.mrb[0].mxu0
        %2348 = vmatprep.mubr.f32.mxu0 0.0
        %2349 = vmatmul.mubr.f32.gmra.mrb[0].mxu0 %v2257
        %v2350 = vpop.f32.mrb[0].mxu0
        %v2351 = vadd.f32 0.0, %v2350
        %v2352 = vpop.f32.mrb[0].mxu0
        %2353 = vdwg.mxu0
        %v2354 = vadd.f32 %v1841, %v2326
        %v2355 = vadd.f32 %v1846, %v2331
        %v2356 = vadd.f32 %v1851, %v2336
        %v2357 = vadd.f32 %v1856, %v2341
        %v2358 = vadd.f32 %v1861, %v2346
        %v2359 = vadd.f32 %v1866, %v2351
        %2360 = vrot.lane.b32.xlu0 %v741, 104
        %v2361 = vpop.permute.xlu0 %2360
        %2362 = vrot.lane.b32.xlu0 %v746, 104
        %v2363 = vpop.permute.xlu0 %2362
        %2364 = vrot.lane.b32.xlu0 %v751, 104
        %v2365 = vpop.permute.xlu0 %2364
        %2366 = vrot.lane.b32.xlu0 %v756, 104
        %v2367 = vpop.permute.xlu0 %2366
        %2368 = vrot.lane.b32.xlu0 %v761, 104
        %v2369 = vpop.permute.xlu0 %2368
        %2370 = vrot.lane.b32.xlu0 %v766, 104
        %v2371 = vpop.permute.xlu0 %2370
        %2372 = vrot.lane.b32.xlu0 %v879, 104
        %v2373 = vpop.permute.xlu0 %2372
        %2374 = vrot.lane.b32.xlu0 %v884, 104
        %v2375 = vpop.permute.xlu0 %2374
        %2376 = vrot.lane.b32.xlu0 %v889, 104
        %v2377 = vpop.permute.xlu0 %2376
        %2378 = vrot.lane.b32.xlu0 %v894, 104
        %v2379 = vpop.permute.xlu0 %2378
        %2380 = vrot.lane.b32.xlu0 %v899, 104
        %v2381 = vpop.permute.xlu0 %2380
        %2382 = vrot.lane.b32.xlu0 %v904, 104
        %v2383 = vpop.permute.xlu0 %2382
        %v2384 = vsel %vm911, %v2361, 0
        %v2386 = vsel %vm911, %v2363, 0
        %v2388 = vsel %vm911, %v2365, 0
        %v2390 = vsel %vm911, %v2367, 0
        %v2392 = vsel %vm911, %v2369, 0
        %v2394 = vsel %vm911, %v2371, 0
        %v2396 = vsel %vm911, %v2373, 0
        %v2398 = vsel %vm911, %v2375, 0
        %v2400 = vsel %vm911, %v2377, 0
        %v2402 = vsel %vm911, %v2379, 0
        %v2404 = vsel %vm911, %v2381, 0
        %v2406 = vsel %vm911, %v2383, 0
        %2408 = vmatprep.subr.mxu0 0.0
        %2409 = vmatpush1.xpose.msra.mxu0 %v2396
        %2410 = vmatprep.subr.mxu0 0.0
        %2411 = vmatpush1.xpose.msra.mxu0 %v2398
        %2412 = vmatprep.subr.mxu0 0.0
        %2413 = vmatpush1.xpose.msra.mxu0 %v2400
        %2414 = vmatprep.subr.mxu0 0.0
        %2415 = vmatpush1.xpose.msra.mxu0 %v2402
        %2416 = vmatprep.subr.mxu0 0.0
        %2417 = vmatpush1.xpose.msra.mxu0 %v2404
        %2418 = vmatprep.subr.mxu0 0.0
        %2419 = vmatpush1.xpose.msra.mxu0 %v2406
        %2420 = vmatprep.subr.mxu0 0.0
        %2421 = vmatpush1.xpose.msra.mxu0 0.0
        %2422 = vmatprep.subr.mxu0 0.0
        %2423 = vmatpush1.xpose.msra.mxu0 0.0
        %2424 = vmatprep.subr.mxu0 0.0
        %2425 = vmatpush1.xpose.msra.mxu0 0.0
        %2426 = vmatprep.subr.mxu0 0.0
        %2427 = vmatpush1.xpose.msra.mxu0 0.0
        %2428 = vmatprep.subr.mxu0 0.0
        %2429 = vmatpush1.xpose.msra.mxu0 0.0
        %2430 = vmatprep.subr.mxu0 0.0
        %2431 = vmatpush1.xpose.msra.mxu0 0.0
        %2432 = vmatprep.subr.mxu0 0.0
        %2433 = vmatpush1.xpose.msra.mxu0 0.0
        %2434 = vmatprep.subr.mxu0 0.0
        %2435 = vmatpush1.xpose.msra.mxu0 0.0
        %2436 = vmatprep.subr.mxu0 0.0
        %2437 = vmatpush1.xpose.msra.mxu0 0.0
        %2438 = vmatprep.subr.mxu0 0.0
        %2439 = vmatpush1.xpose.msra.mxu0 0.0
        %2440 = vmatprep.subr.mxu0 0.0
        %2441 = vmatpush1.xpose.msra.mxu0 0.0
        %2442 = vmatprep.subr.mxu0 0.0
        %2443 = vmatpush1.xpose.msra.mxu0 0.0
        %2444 = vmatprep.subr.mxu0 0.0
        %2445 = vmatpush1.xpose.msra.mxu0 0.0
        %2446 = vmatprep.subr.mxu0 0.0
        %2447 = vmatpush1.xpose.msra.mxu0 0.0
        %2448 = vmatprep.subr.mxu0 0.0
        %2449 = vmatpush1.xpose.msra.mxu0 0.0
        %2450 = vmatprep.subr.mxu0 0.0
        %2451 = vmatpush1.xpose.msra.mxu0 0.0
        %2452 = vmatprep.subr.mxu0 0.0
        %2453 = vmatpush1.xpose.msra.mxu0 0.0
        %2454 = vmatprep.subr.mxu0 0.0
        %2455 = vmatpush1.xpose.msra.mxu0 0.0
        %2456 = vmatprep.subr.mxu0 0.0
        %2457 = vmatpush1.xpose.msra.mxu0 0.0
        %2458 = vmatprep.subr.mxu0 0.0
        %2459 = vmatpush1.xpose.msra.mxu0 0.0
        %2460 = vmatprep.subr.mxu0 0.0
        %2461 = vmatpush1.xpose.msra.mxu0 0.0
        %2462 = vmatprep.subr.mxu0 0.0
        %2463 = vmatpush1.xpose.msra.mxu0 0.0
        %2464 = vmatprep.subr.mxu0 0.0
        %2465 = vmatpush1.xpose.msra.mxu0 0.0
        %2466 = vmatprep.subr.mxu0 0.0
        %2467 = vmatpush1.xpose.msra.mxu0 0.0
        %2468 = vmatprep.subr.mxu0 0.0
        %2469 = vmatpush1.xpose.msra.mxu0 0.0
        %2470 = vmatprep.subr.mxu0 0.0
        %2471 = vmatpush1.xpose.msra.mxu0 0.0
        %2472 = vmatprep.mubr.f32.mxu0 0.0
        %2473 = vmatmul.mubr.f32.gmra.mrb[0].mxu0 %v2384
        %v2474 = vpop.f32.mrb[0].mxu0
        %v2475 = vadd.f32 0.0, %v2474
        %v2476 = vpop.f32.mrb[0].mxu0
        %2477 = vmatprep.mubr.f32.mxu0 0.0
        %2478 = vmatmul.mubr.f32.gmra.mrb[0].mxu0 %v2386
        %v2479 = vpop.f32.mrb[0].mxu0
        %v2480 = vadd.f32 0.0, %v2479
        %v2481 = vpop.f32.mrb[0].mxu0
        %2482 = vmatprep.mubr.f32.mxu0 0.0
        %2483 = vmatmul.mubr.f32.gmra.mrb[0].mxu0 %v2388
        %v2484 = vpop.f32.mrb[0].mxu0
        %v2485 = vadd.f32 0.0, %v2484
        %v2486 = vpop.f32.mrb[0].mxu0
        %2487 = vmatprep.mubr.f32.mxu0 0.0
        %2488 = vmatmul.mubr.f32.gmra.mrb[0].mxu0 %v2390
        %v2489 = vpop.f32.mrb[0].mxu0
        %v2490 = vadd.f32 0.0, %v2489
        %v2491 = vpop.f32.mrb[0].mxu0
        %2492 = vmatprep.mubr.f32.mxu0 0.0
        %2493 = vmatmul.mubr.f32.gmra.mrb[0].mxu0 %v2392
        %v2494 = vpop.f32.mrb[0].mxu0
        %v2495 = vadd.f32 0.0, %v2494
        %v2496 = vpop.f32.mrb[0].mxu0
        %2497 = vmatprep.mubr.f32.mxu0 0.0
        %2498 = vmatmul.mubr.f32.gmra.mrb[0].mxu0 %v2394
        %v2499 = vpop.f32.mrb[0].mxu0
        %v2500 = vadd.f32 0.0, %v2499
        %v2501 = vpop.f32.mrb[0].mxu0
        %2502 = vdwg.mxu0
        %v2503 = vmul.f32 %v2475, 0.35355338
        %v2504 = vmul.f32 %v2480, 0.35355338
        %v2505 = vmul.f32 %v2485, 0.35355338
        %v2506 = vmul.f32 %v2490, 0.35355338
        %v2507 = vmul.f32 %v2495, 0.35355338
        %v2508 = vmul.f32 %v2500, 0.35355338
        %s2509 = scalar_lea.vmem %s619, 144
        %v2510 = vld [vmem:[%s2509] sm:$0xff]
        %v2511 = vld [vmem:[%s2509 + $0x8] sm:$0xff]
        %v2512 = vld [vmem:[%s2509 + $0x10] sm:$0xff]
        %v2513 = vld [vmem:[%s2509 + $0x18] sm:$0xff]
        %v2514 = vld [vmem:[%s2509 + $0x20] sm:$0xff]
        %v2515 = vld [vmem:[%s2509 + $0x28] sm:$0xff]
        %v2516 = vadd.f32 %v2503, %v2510
        %v2517 = vadd.f32 %v2504, %v2511
        %v2518 = vadd.f32 %v2505, %v2512
        %v2519 = vadd.f32 %v2506, %v2513
        %v2520 = vadd.f32 %v2507, %v2514
        %v2521 = vadd.f32 %v2508, %v2515
        %s2522 = scalar_lea.vmem %s592, 144 [#allocation5]
        %2523 = vst.msk [vmem:[%s2522] sm:$0xff] %vm1061, %v2516
        %2524 = vst.msk [vmem:[%s2522 + $0x8] sm:$0xff] %vm1061, %v2517
        %2525 = vst.msk [vmem:[%s2522 + $0x10] sm:$0xff] %vm1061, %v2518
        %2526 = vst.msk [vmem:[%s2522 + $0x18] sm:$0xff] %vm1061, %v2519
        %2527 = vst.msk [vmem:[%s2522 + $0x20] sm:$0xff] %vm1061, %v2520
        %2528 = vst.msk [vmem:[%s2522 + $0x28] sm:$0xff] %vm1061, %v2521
        %v2529 = vadd.f32 %v2516, %v632
        %v2530 = vadd.f32 %v2517, %v633
        %v2531 = vadd.f32 %v2518, %v634
        %v2532 = vadd.f32 %v2519, %v635
        %v2533 = vadd.f32 %v2520, %v636
        %v2534 = vadd.f32 %v2521, %v637
        %v2535 = vsel %vm1061, %v2529, -inf
        %2536 = vmax.xlane.f32.xlu0 %v2535
        %v2537 = vpop.xlane.xlu0 %2536
        %v2538 = vsel %vm1061, %v2530, -inf
        %2539 = vmax.xlane.f32.xlu0 %v2538
        %v2540 = vpop.xlane.xlu0 %2539
        %v2541 = vsel %vm1061, %v2531, -inf
        %2542 = vmax.xlane.f32.xlu0 %v2541
        %v2543 = vpop.xlane.xlu0 %2542
        %v2544 = vsel %vm1061, %v2532, -inf
        %2545 = vmax.xlane.f32.xlu0 %v2544
        %v2546 = vpop.xlane.xlu0 %2545
        %v2547 = vsel %vm1061, %v2533, -inf
        %2548 = vmax.xlane.f32.xlu0 %v2547
        %v2549 = vpop.xlane.xlu0 %2548
        %v2550 = vsel %vm1061, %v2534, -inf
        %2551 = vmax.xlane.f32.xlu0 %v2550
        %v2552 = vpop.xlane.xlu0 %2551
        %v2553 = vsub.f32 %v2529, %v2537
        %v2554 = vsub.f32 %v2530, %v2540
        %v2555 = vsub.f32 %v2531, %v2543
        %v2556 = vsub.f32 %v2532, %v2546
        %v2557 = vsub.f32 %v2533, %v2549
        %v2558 = vsub.f32 %v2534, %v2552
        %v2559 = vmul.f32 %v2553, 1.442695
        %v2560 = vpow.pop %v2559
        %v2561 = vmul.f32 %v2554, 1.442695
        %v2562 = vpow.pop %v2561
        %v2563 = vmul.f32 %v2555, 1.442695
        %v2564 = vpow.pop %v2563
        %v2565 = vmul.f32 %v2556, 1.442695
        %v2566 = vpow.pop %v2565
        %v2567 = vmul.f32 %v2557, 1.442695
        %v2568 = vpow.pop %v2567
        %v2569 = vmul.f32 %v2558, 1.442695
        %v2570 = vpow.pop %v2569
        %v2571 = vsel %vm1061, %v2560, 0.0
        %2572 = vadd.xlane.f32.xlu0 %v2571
        %v2573 = vpop.xlane.xlu0 %2572
        %v2574 = vsel %vm1061, %v2562, 0.0
        %2575 = vadd.xlane.f32.xlu0 %v2574
        %v2576 = vpop.xlane.xlu0 %2575
        %v2577 = vsel %vm1061, %v2564, 0.0
        %2578 = vadd.xlane.f32.xlu0 %v2577
        %v2579 = vpop.xlane.xlu0 %2578
        %v2580 = vsel %vm1061, %v2566, 0.0
        %2581 = vadd.xlane.f32.xlu0 %v2580
        %v2582 = vpop.xlane.xlu0 %2581
        %v2583 = vsel %vm1061, %v2568, 0.0
        %2584 = vadd.xlane.f32.xlu0 %v2583
        %v2585 = vpop.xlane.xlu0 %2584
        %v2586 = vsel %vm1061, %v2570, 0.0
        %2587 = vadd.xlane.f32.xlu0 %v2586
        %v2588 = vpop.xlane.xlu0 %2587
        %v2589 = vrcp.pop %v2573
        %v2590 = vmul.f32 %v2560, %v2589
        %v2591 = vrcp.pop %v2576
        %v2592 = vmul.f32 %v2562, %v2591
        %v2593 = vrcp.pop %v2579
        %v2594 = vmul.f32 %v2564, %v2593
        %v2595 = vrcp.pop %v2582
        %v2596 = vmul.f32 %v2566, %v2595
        %v2597 = vrcp.pop %v2585
        %v2598 = vmul.f32 %v2568, %v2597
        %v2599 = vrcp.pop %v2588
        %v2600 = vmul.f32 %v2570, %v2599
        %2601 = vrot.lane.b32.xlu0 %v879, 72
        %v2602 = vpop.permute.xlu0 %2601
        %2603 = vrot.lane.b32.xlu0 %v884, 72
        %v2604 = vpop.permute.xlu0 %2603
        %2605 = vrot.lane.b32.xlu0 %v889, 72
        %v2606 = vpop.permute.xlu0 %2605
        %2607 = vrot.lane.b32.xlu0 %v894, 72
        %v2608 = vpop.permute.xlu0 %2607
        %2609 = vrot.lane.b32.xlu0 %v899, 72
        %v2610 = vpop.permute.xlu0 %2609
        %2611 = vrot.lane.b32.xlu0 %v904, 72
        %v2612 = vpop.permute.xlu0 %2611
        %v2620 = vsel %vm1061, %v2590, 0
        %v2623 = vsel %vm1061, %v2592, 0
        %v2626 = vsel %vm1061, %v2594, 0
        %v2629 = vsel %vm1061, %v2596, 0
        %v2632 = vsel %vm1061, %v2598, 0
        %v2635 = vsel %vm1061, %v2600, 0
        %2637 = vmatprep.subr.mxu0 0.0
        %2638 = vmatpush1.msra.mxu0 %v2602
        %2639 = vmatprep.subr.mxu0 0.0
        %2640 = vmatpush1.msra.mxu0 %v2604
        %2641 = vmatprep.subr.mxu0 0.0
        %2642 = vmatpush1.msra.mxu0 %v2606
        %2643 = vmatprep.subr.mxu0 0.0
        %2644 = vmatpush1.msra.mxu0 %v2608
        %2645 = vmatprep.subr.mxu0 0.0
        %2646 = vmatpush1.msra.mxu0 %v2610
        %2647 = vmatprep.subr.mxu0 0.0
        %2648 = vmatpush1.msra.mxu0 %v2612
        %2649 = vmatprep.subr.mxu0 0.0
        %2650 = vmatpush1.msra.mxu0 0.0
        %2651 = vmatprep.subr.mxu0 0.0
        %2652 = vmatpush1.msra.mxu0 0.0
        %2653 = vmatprep.subr.mxu0 0.0
        %2654 = vmatpush1.msra.mxu0 0.0
        %2655 = vmatprep.subr.mxu0 0.0
        %2656 = vmatpush1.msra.mxu0 0.0
        %2657 = vmatprep.subr.mxu0 0.0
        %2658 = vmatpush1.msra.mxu0 0.0
        %2659 = vmatprep.subr.mxu0 0.0
        %2660 = vmatpush1.msra.mxu0 0.0
        %2661 = vmatprep.subr.mxu0 0.0
        %2662 = vmatpush1.msra.mxu0 0.0
        %2663 = vmatprep.subr.mxu0 0.0
        %2664 = vmatpush1.msra.mxu0 0.0
        %2665 = vmatprep.subr.mxu0 0.0
        %2666 = vmatpush1.msra.mxu0 0.0
        %2667 = vmatprep.subr.mxu0 0.0
        %2668 = vmatpush1.msra.mxu0 0.0
        %2669 = vmatprep.subr.mxu0 0.0
        %2670 = vmatpush1.msra.mxu0 0.0
        %2671 = vmatprep.subr.mxu0 0.0
        %2672 = vmatpush1.msra.mxu0 0.0
        %2673 = vmatprep.subr.mxu0 0.0
        %2674 = vmatpush1.msra.mxu0 0.0
        %2675 = vmatprep.subr.mxu0 0.0
        %2676 = vmatpush1.msra.mxu0 0.0
        %2677 = vmatprep.subr.mxu0 0.0
        %2678 = vmatpush1.msra.mxu0 0.0
        %2679 = vmatprep.subr.mxu0 0.0
        %2680 = vmatpush1.msra.mxu0 0.0
        %2681 = vmatprep.subr.mxu0 0.0
        %2682 = vmatpush1.msra.mxu0 0.0
        %2683 = vmatprep.subr.mxu0 0.0
        %2684 = vmatpush1.msra.mxu0 0.0
        %2685 = vmatprep.subr.mxu0 0.0
        %2686 = vmatpush1.msra.mxu0 0.0
        %2687 = vmatprep.subr.mxu0 0.0
        %2688 = vmatpush1.msra.mxu0 0.0
        %2689 = vmatprep.subr.mxu0 0.0
        %2690 = vmatpush1.msra.mxu0 0.0
        %2691 = vmatprep.subr.mxu0 0.0
        %2692 = vmatpush1.msra.mxu0 0.0
        %2693 = vmatprep.subr.mxu0 0.0
        %2694 = vmatpush1.msra.mxu0 0.0
        %2695 = vmatprep.subr.mxu0 0.0
        %2696 = vmatpush1.msra.mxu0 0.0
        %2697 = vmatprep.subr.mxu0 0.0
        %2698 = vmatpush1.msra.mxu0 0.0
        %2699 = vmatprep.subr.mxu0 0.0
        %2700 = vmatpush1.msra.mxu0 0.0
        %2701 = vmatprep.mubr.f32.mxu0 0.0
        %2702 = vmatmul.mubr.f32.gmra.mrb[0].mxu0 %v2620
        %v2703 = vpop.f32.mrb[0].mxu0
        %v2704 = vadd.f32 0.0, %v2703
        %v2705 = vpop.f32.mrb[0].mxu0
        %2706 = vmatprep.mubr.f32.mxu0 0.0
        %2707 = vmatmul.mubr.f32.gmra.mrb[0].mxu0 %v2623
        %v2708 = vpop.f32.mrb[0].mxu0
        %v2709 = vadd.f32 0.0, %v2708
        %v2710 = vpop.f32.mrb[0].mxu0
        %2711 = vmatprep.mubr.f32.mxu0 0.0
        %2712 = vmatmul.mubr.f32.gmra.mrb[0].mxu0 %v2626
        %v2713 = vpop.f32.mrb[0].mxu0
        %v2714 = vadd.f32 0.0, %v2713
        %v2715 = vpop.f32.mrb[0].mxu0
        %2716 = vmatprep.mubr.f32.mxu0 0.0
        %2717 = vmatmul.mubr.f32.gmra.mrb[0].mxu0 %v2629
        %v2718 = vpop.f32.mrb[0].mxu0
        %v2719 = vadd.f32 0.0, %v2718
        %v2720 = vpop.f32.mrb[0].mxu0
        %2721 = vmatprep.mubr.f32.mxu0 0.0
        %2722 = vmatmul.mubr.f32.gmra.mrb[0].mxu0 %v2632
        %v2723 = vpop.f32.mrb[0].mxu0
        %v2724 = vadd.f32 0.0, %v2723
        %v2725 = vpop.f32.mrb[0].mxu0
        %2726 = vmatprep.mubr.f32.mxu0 0.0
        %2727 = vmatmul.mubr.f32.gmra.mrb[0].mxu0 %v2635
        %v2728 = vpop.f32.mrb[0].mxu0
        %v2729 = vadd.f32 0.0, %v2728
        %v2730 = vpop.f32.mrb[0].mxu0
        %2731 = vdwg.mxu0
        %v2733 = vsel %vm911, %v2704, 0
        %v2736 = vsel %vm911, %v2709, 0
        %v2739 = vsel %vm911, %v2714, 0
        %v2742 = vsel %vm911, %v2719, 0
        %v2745 = vsel %vm911, %v2724, 0
        %v2748 = vsel %vm911, %v2729, 0
        %2750 = vmatprep.subr.mxu0 0.0
        %2751 = vmatpush1.msra.mxu0 %v910
        %2752 = vmatprep.subr.mxu0 0.0
        %2753 = vmatpush1.msra.mxu0 0.0
        %2754 = vmatprep.subr.mxu0 0.0
        %2755 = vmatpush1.msra.mxu0 0.0
        %2756 = vmatprep.subr.mxu0 0.0
        %2757 = vmatpush1.msra.mxu0 0.0
        %2758 = vmatprep.subr.mxu0 0.0
        %2759 = vmatpush1.msra.mxu0 0.0
        %2760 = vmatprep.subr.mxu0 0.0
        %2761 = vmatpush1.msra.mxu0 0.0
        %2762 = vmatprep.subr.mxu0 0.0
        %2763 = vmatpush1.msra.mxu0 0.0
        %2764 = vmatprep.subr.mxu0 0.0
        %2765 = vmatpush1.msra.mxu0 0.0
        %2766 = vmatprep.subr.mxu0 0.0
        %2767 = vmatpush1.msra.mxu0 0.0
        %2768 = vmatprep.subr.mxu0 0.0
        %2769 = vmatpush1.msra.mxu0 0.0
        %2770 = vmatprep.subr.mxu0 0.0
        %2771 = vmatpush1.msra.mxu0 0.0
        %2772 = vmatprep.subr.mxu0 0.0
        %2773 = vmatpush1.msra.mxu0 0.0
        %2774 = vmatprep.subr.mxu0 0.0
        %2775 = vmatpush1.msra.mxu0 0.0
        %2776 = vmatprep.subr.mxu0 0.0
        %2777 = vmatpush1.msra.mxu0 0.0
        %2778 = vmatprep.subr.mxu0 0.0
        %2779 = vmatpush1.msra.mxu0 0.0
        %2780 = vmatprep.subr.mxu0 0.0
        %2781 = vmatpush1.msra.mxu0 0.0
        %2782 = vmatprep.subr.mxu0 0.0
        %2783 = vmatpush1.msra.mxu0 0.0
        %2784 = vmatprep.subr.mxu0 0.0
        %2785 = vmatpush1.msra.mxu0 0.0
        %2786 = vmatprep.subr.mxu0 0.0
        %2787 = vmatpush1.msra.mxu0 0.0
        %2788 = vmatprep.subr.mxu0 0.0
        %2789 = vmatpush1.msra.mxu0 0.0
        %2790 = vmatprep.subr.mxu0 0.0
        %2791 = vmatpush1.msra.mxu0 0.0
        %2792 = vmatprep.subr.mxu0 0.0
        %2793 = vmatpush1.msra.mxu0 0.0
        %2794 = vmatprep.subr.mxu0 0.0
        %2795 = vmatpush1.msra.mxu0 0.0
        %2796 = vmatprep.subr.mxu0 0.0
        %2797 = vmatpush1.msra.mxu0 0.0
        %2798 = vmatprep.subr.mxu0 0.0
        %2799 = vmatpush1.msra.mxu0 0.0
        %2800 = vmatprep.subr.mxu0 0.0
        %2801 = vmatpush1.msra.mxu0 0.0
        %2802 = vmatprep.subr.mxu0 0.0
        %2803 = vmatpush1.msra.mxu0 0.0
        %2804 = vmatprep.subr.mxu0 0.0
        %2805 = vmatpush1.msra.mxu0 0.0
        %2806 = vmatprep.subr.mxu0 0.0
        %2807 = vmatpush1.msra.mxu0 0.0
        %2808 = vmatprep.subr.mxu0 0.0
        %2809 = vmatpush1.msra.mxu0 0.0
        %2810 = vmatprep.subr.mxu0 0.0
        %2811 = vmatpush1.msra.mxu0 0.0
        %2812 = vmatprep.subr.mxu0 0.0
        %2813 = vmatpush1.msra.mxu0 0.0
        %2814 = vmatprep.mubr.f32.mxu0 0.0
        %2815 = vmatmul.mubr.f32.gmra.mrb[0].mxu0 %v2733
        %v2816 = vpop.f32.mrb[0].mxu0
        %v2817 = vadd.f32 0.0, %v2816
        %v2818 = vpop.f32.mrb[0].mxu0
        %2819 = vmatprep.mubr.f32.mxu0 0.0
        %2820 = vmatmul.mubr.f32.gmra.mrb[0].mxu0 %v2736
        %v2821 = vpop.f32.mrb[0].mxu0
        %v2822 = vadd.f32 0.0, %v2821
        %v2823 = vpop.f32.mrb[0].mxu0
        %2824 = vmatprep.mubr.f32.mxu0 0.0
        %2825 = vmatmul.mubr.f32.gmra.mrb[0].mxu0 %v2739
        %v2826 = vpop.f32.mrb[0].mxu0
        %v2827 = vadd.f32 0.0, %v2826
        %v2828 = vpop.f32.mrb[0].mxu0
        %2829 = vmatprep.mubr.f32.mxu0 0.0
        %2830 = vmatmul.mubr.f32.gmra.mrb[0].mxu0 %v2742
        %v2831 = vpop.f32.mrb[0].mxu0
        %v2832 = vadd.f32 0.0, %v2831
        %v2833 = vpop.f32.mrb[0].mxu0
        %2834 = vmatprep.mubr.f32.mxu0 0.0
        %2835 = vmatmul.mubr.f32.gmra.mrb[0].mxu0 %v2745
        %v2836 = vpop.f32.mrb[0].mxu0
        %v2837 = vadd.f32 0.0, %v2836
        %v2838 = vpop.f32.mrb[0].mxu0
        %2839 = vmatprep.mubr.f32.mxu0 0.0
        %2840 = vmatmul.mubr.f32.gmra.mrb[0].mxu0 %v2748
        %v2841 = vpop.f32.mrb[0].mxu0
        %v2842 = vadd.f32 0.0, %v2841
        %v2843 = vpop.f32.mrb[0].mxu0
        %2844 = vdwg.mxu0
        %v2845 = vadd.f32 %v2354, %v2817
        %v2846 = vadd.f32 %v2355, %v2822
        %v2847 = vadd.f32 %v2356, %v2827
        %v2848 = vadd.f32 %v2357, %v2832
        %v2849 = vadd.f32 %v2358, %v2837
        %v2850 = vadd.f32 %v2359, %v2842
        %v2851 = vld [vmem:[%s10] sm:$0x1]
        %v2853 = vlaneseq
        %v2854 = vshrl.u32 %v2853, 7
        %v2855 = vsub.s32 0, %v2854
        %v2856 = vrot.slane %v2851, %v2855
        %v2858 = vadd.f32 %v2845, %v2856
        %v2859 = vadd.f32 %v2846, %v2856
        %v2860 = vadd.f32 %v2847, %v2856
        %v2861 = vadd.f32 %v2848, %v2856
        %v2862 = vadd.f32 %v2849, %v2856
        %v2863 = vadd.f32 %v2850, %v2856
        %v2864 = vadd.f32 %v626, %v2858
        %v2865 = vadd.f32 %v627, %v2859
        %v2866 = vadd.f32 %v628, %v2860
        %v2867 = vadd.f32 %v629, %v2861
        %v2868 = vadd.f32 %v630, %v2862
        %v2869 = vadd.f32 %v631, %v2863
        %v2870 = vsel %vm655, %v2864, 0.0
        %v2871 = vsel %vm655, %v2865, 0.0
        %v2872 = vadd.f32 %v2870, %v2871
        %v2873 = vsel %vm655, %v2866, 0.0
        %v2874 = vadd.f32 %v2872, %v2873
        %v2875 = vsel %vm655, %v2867, 0.0
        %v2876 = vadd.f32 %v2874, %v2875
        %v2877 = vsel %vm655, %v2868, 0.0
        %v2878 = vadd.f32 %v2876, %v2877
        %v2879 = vsel %vm655, %v2869, 0.0
        %v2880 = vadd.f32 %v2878, %v2879
        %v2881 = vrot.slane %v2880, 4
        %v2882 = vadd.f32 %v2880, %v2881
        %v2883 = vrot.slane %v2882, 2
        %v2884 = vadd.f32 %v2882, %v2883
        %v2885 = vrot.slane %v2884, 1
        %v2886 = vadd.f32 %v2884, %v2885
        %v2887 = vrcp.pop 48.0
        %v2888 = vmul.f32 %v2886, %v2887
        %v2889 = vsub.f32 %v2864, %v2888
        %v2890 = vsub.f32 %v2865, %v2888
        %v2891 = vsub.f32 %v2866, %v2888
        %v2892 = vsub.f32 %v2867, %v2888
        %v2893 = vsub.f32 %v2868, %v2888
        %v2894 = vsub.f32 %v2869, %v2888
        %v2895 = vmul.f32 %v2889, %v2889
        %v2896 = vmul.f32 %v2890, %v2890
        %v2897 = vmul.f32 %v2891, %v2891
        %v2898 = vmul.f32 %v2892, %v2892
        %v2899 = vmul.f32 %v2893, %v2893
        %v2900 = vmul.f32 %v2894, %v2894
        %v2901 = vsel %vm655, %v2895, 0.0
        %v2902 = vsel %vm655, %v2896, 0.0
        %v2903 = vadd.f32 %v2901, %v2902
        %v2904 = vsel %vm655, %v2897, 0.0
        %v2905 = vadd.f32 %v2903, %v2904
        %v2906 = vsel %vm655, %v2898, 0.0
        %v2907 = vadd.f32 %v2905, %v2906
        %v2908 = vsel %vm655, %v2899, 0.0
        %v2909 = vadd.f32 %v2907, %v2908
        %v2910 = vsel %vm655, %v2900, 0.0
        %v2911 = vadd.f32 %v2909, %v2910
        %v2912 = vrot.slane %v2911, 4
        %v2913 = vadd.f32 %v2911, %v2912
        %v2914 = vrot.slane %v2913, 2
        %v2915 = vadd.f32 %v2913, %v2914
        %v2916 = vrot.slane %v2915, 1
        %v2917 = vadd.f32 %v2915, %v2916
        %v2918 = vmul.f32 %v2917, %v2887
        %v2919 = vadd.f32 %v2918, 1e-05
        %v2920 = vrsqrt.pop %v2919
        %v2921 = vmul.f32 %v2889, %v2920
        %v2922 = vmul.f32 %v2890, %v2920
        %v2923 = vmul.f32 %v2891, %v2920
        %v2924 = vmul.f32 %v2892, %v2920
        %v2925 = vmul.f32 %v2893, %v2920
        %v2926 = vmul.f32 %v2894, %v2920
        %v2927 = vld [vmem:[%s15] sm:$0x1]
        %v2928 = vlaneseq
        %v2929 = vshrl.u32 %v2928, 7
        %v2930 = vsub.s32 0, %v2929
        %v2931 = vrot.slane %v2927, %v2930
        %v2932 = vmul.f32 %v2921, %v2931
        %v2933 = vmul.f32 %v2922, %v2931
        %v2934 = vmul.f32 %v2923, %v2931
        %v2935 = vmul.f32 %v2924, %v2931
        %v2936 = vmul.f32 %v2925, %v2931
        %v2937 = vmul.f32 %v2926, %v2931
        %v2938 = vld [vmem:[%s15 + $0x1] sm:$0x1]
        %v2939 = vlaneseq
        %v2940 = vshrl.u32 %v2939, 7
        %v2941 = vsub.s32 0, %v2940
        %v2942 = vrot.slane %v2938, %v2941
        %v2943 = vadd.f32 %v2932, %v2942
        %v2944 = vadd.f32 %v2933, %v2942
        %v2945 = vadd.f32 %v2934, %v2942
        %v2946 = vadd.f32 %v2935, %v2942
        %v2947 = vadd.f32 %v2936, %v2942
        %v2948 = vadd.f32 %v2937, %v2942
        %v2949 = vld [vmem:[%s11] sm:$0xff]
        %v2950 = vld [vmem:[%s11 + $0x8] sm:$0xff]
        %v2951 = vld [vmem:[%s11 + $0x10] sm:$0xff]
        %v2952 = vld [vmem:[%s11 + $0x18] sm:$0xff]
        %v2953 = vld [vmem:[%s12] sm:$0x1]
        %v2955 = vlaneseq
        %v2956 = vshrl.u32 %v2955, 7
        %v2957 = vsub.s32 0, %v2956
        %v2958 = vrot.slane %v2953, %v2957
        %v2961 = vsel %vm655, %v2943, 0
        %v2964 = vsel %vm655, %v2944, 0
        %v2967 = vsel %vm655, %v2945, 0
        %v2970 = vsel %vm655, %v2946, 0
        %v2973 = vsel %vm655, %v2947, 0
        %v2976 = vsel %vm655, %v2948, 0
        %2978 = vmatprep.subr.mxu0 0.0
        %2979 = vmatpush1.msra.mxu0 %v2949
        %2980 = vmatprep.subr.mxu0 0.0
        %2981 = vmatpush1.msra.mxu0 %v2950
        %2982 = vmatprep.subr.mxu0 0.0
        %2983 = vmatpush1.msra.mxu0 %v2951
        %2984 = vmatprep.subr.mxu0 0.0
        %2985 = vmatpush1.msra.mxu0 %v2952
        %2986 = vmatprep.subr.mxu0 0.0
        %2987 = vmatpush1.msra.mxu0 0.0
        %2988 = vmatprep.subr.mxu0 0.0
        %2989 = vmatpush1.msra.mxu0 0.0
        %2990 = vmatprep.subr.mxu0 0.0
        %2991 = vmatpush1.msra.mxu0 0.0
        %2992 = vmatprep.subr.mxu0 0.0
        %2993 = vmatpush1.msra.mxu0 0.0
        %2994 = vmatprep.subr.mxu0 0.0
        %2995 = vmatpush1.msra.mxu0 0.0
        %2996 = vmatprep.subr.mxu0 0.0
        %2997 = vmatpush1.msra.mxu0 0.0
        %2998 = vmatprep.subr.mxu0 0.0
        %2999 = vmatpush1.msra.mxu0 0.0
        %3000 = vmatprep.subr.mxu0 0.0
        %3001 = vmatpush1.msra.mxu0 0.0
        %3002 = vmatprep.subr.mxu0 0.0
        %3003 = vmatpush1.msra.mxu0 0.0
        %3004 = vmatprep.subr.mxu0 0.0
        %3005 = vmatpush1.msra.mxu0 0.0
        %3006 = vmatprep.subr.mxu0 0.0
        %3007 = vmatpush1.msra.mxu0 0.0
        %3008 = vmatprep.subr.mxu0 0.0
        %3009 = vmatpush1.msra.mxu0 0.0
        %3010 = vmatprep.subr.mxu0 0.0
        %3011 = vmatpush1.msra.mxu0 0.0
        %3012 = vmatprep.subr.mxu0 0.0
        %3013 = vmatpush1.msra.mxu0 0.0
        %3014 = vmatprep.subr.mxu0 0.0
        %3015 = vmatpush1.msra.mxu0 0.0
        %3016 = vmatprep.subr.mxu0 0.0
        %3017 = vmatpush1.msra.mxu0 0.0
        %3018 = vmatprep.subr.mxu0 0.0
        %3019 = vmatpush1.msra.mxu0 0.0
        %3020 = vmatprep.subr.mxu0 0.0
        %3021 = vmatpush1.msra.mxu0 0.0
        %3022 = vmatprep.subr.mxu0 0.0
        %3023 = vmatpush1.msra.mxu0 0.0
        %3024 = vmatprep.subr.mxu0 0.0
        %3025 = vmatpush1.msra.mxu0 0.0
        %3026 = vmatprep.subr.mxu0 0.0
        %3027 = vmatpush1.msra.mxu0 0.0
        %3028 = vmatprep.subr.mxu0 0.0
        %3029 = vmatpush1.msra.mxu0 0.0
        %3030 = vmatprep.subr.mxu0 0.0
        %3031 = vmatpush1.msra.mxu0 0.0
        %3032 = vmatprep.subr.mxu0 0.0
        %3033 = vmatpush1.msra.mxu0 0.0
        %3034 = vmatprep.subr.mxu0 0.0
        %3035 = vmatpush1.msra.mxu0 0.0
        %3036 = vmatprep.subr.mxu0 0.0
        %3037 = vmatpush1.msra.mxu0 0.0
        %3038 = vmatprep.subr.mxu0 0.0
        %3039 = vmatpush1.msra.mxu0 0.0
        %3040 = vmatprep.subr.mxu0 0.0
        %3041 = vmatpush1.msra.mxu0 0.0
        %3042 = vmatprep.mubr.f32.mxu0 0.0
        %3043 = vmatmul.mubr.f32.gmra.mrb[0].mxu0 %v2961
        %v3044 = vpop.f32.mrb[0].mxu0
        %v3045 = vadd.f32 %v2958, %v3044
        %v3046 = vpop.f32.mrb[0].mxu0
        %3047 = vmatprep.mubr.f32.mxu0 0.0
        %3048 = vmatmul.mubr.f32.gmra.mrb[0].mxu0 %v2964
        %v3049 = vpop.f32.mrb[0].mxu0
        %v3050 = vadd.f32 %v2958, %v3049
        %v3051 = vpop.f32.mrb[0].mxu0
        %3052 = vmatprep.mubr.f32.mxu0 0.0
        %3053 = vmatmul.mubr.f32.gmra.mrb[0].mxu0 %v2967
        %v3054 = vpop.f32.mrb[0].mxu0
        %v3055 = vadd.f32 %v2958, %v3054
        %v3056 = vpop.f32.mrb[0].mxu0
        %3057 = vmatprep.mubr.f32.mxu0 0.0
        %3058 = vmatmul.mubr.f32.gmra.mrb[0].mxu0 %v2970
        %v3059 = vpop.f32.mrb[0].mxu0
        %v3060 = vadd.f32 %v2958, %v3059
        %v3061 = vpop.f32.mrb[0].mxu0
        %3062 = vmatprep.mubr.f32.mxu0 0.0
        %3063 = vmatmul.mubr.f32.gmra.mrb[0].mxu0 %v2973
        %v3064 = vpop.f32.mrb[0].mxu0
        %v3065 = vadd.f32 %v2958, %v3064
        %v3066 = vpop.f32.mrb[0].mxu0
        %3067 = vmatprep.mubr.f32.mxu0 0.0
        %3068 = vmatmul.mubr.f32.gmra.mrb[0].mxu0 %v2976
        %v3069 = vpop.f32.mrb[0].mxu0
        %v3070 = vadd.f32 %v2958, %v3069
        %v3071 = vpop.f32.mrb[0].mxu0
        %3072 = vdwg.mxu0
        %v3073 = vmul.f32 %v3045, 0.5
        %v3074 = vmul.f32 %v3050, 0.5
        %v3075 = vmul.f32 %v3055, 0.5
        %v3076 = vmul.f32 %v3060, 0.5
        %v3077 = vmul.f32 %v3065, 0.5
        %v3078 = vmul.f32 %v3070, 0.5
        %v3079 = vmul.f32 %v3045, 0.70710677
        %v3080 = vmul.f32 %v3050, 0.70710677
        %v3081 = vmul.f32 %v3055, 0.70710677
        %v3082 = vmul.f32 %v3060, 0.70710677
        %v3083 = vmul.f32 %v3065, 0.70710677
        %v3084 = vmul.f32 %v3070, 0.70710677
        %vm3085 = vcmp.ge.f32.partialorder %v3079, 0.0
        %vm3086 = vcmp.ge.f32.partialorder %v3080, 0.0
        %vm3087 = vcmp.ge.f32.partialorder %v3081, 0.0
        %vm3088 = vcmp.ge.f32.partialorder %v3082, 0.0
        %vm3089 = vcmp.ge.f32.partialorder %v3083, 0.0
        %vm3090 = vcmp.ge.f32.partialorder %v3084, 0.0
        %v3091 = vsub.f32 0.0, %v3079
        %v3092 = vsub.f32 0.0, %v3080
        %v3093 = vsub.f32 0.0, %v3081
        %v3094 = vsub.f32 0.0, %v3082
        %v3095 = vsub.f32 0.0, %v3083
        %v3096 = vsub.f32 0.0, %v3084
        %v3097 = vsel %vm3085, %v3079, %v3091
        %v3098 = vsel %vm3086, %v3080, %v3092
        %v3099 = vsel %vm3087, %v3081, %v3093
        %v3100 = vsel %vm3088, %v3082, %v3094
        %v3101 = vsel %vm3089, %v3083, %v3095
        %v3102 = vsel %vm3090, %v3084, %v3096
        %v3103 = vmul.f32 %v3097, 0.3275911
        %v3104 = vmul.f32 %v3098, 0.3275911
        %v3105 = vmul.f32 %v3099, 0.3275911
        %v3106 = vmul.f32 %v3100, 0.3275911
        %v3107 = vmul.f32 %v3101, 0.3275911
        %v3108 = vmul.f32 %v3102, 0.3275911
        %v3109 = vadd.f32 %v3103, 1.0
        %v3110 = vadd.f32 %v3104, 1.0
        %v3111 = vadd.f32 %v3105, 1.0
        %v3112 = vadd.f32 %v3106, 1.0
        %v3113 = vadd.f32 %v3107, 1.0
        %v3114 = vadd.f32 %v3108, 1.0
        %v3115 = vrcp.pop %v3109
        %v3116 = vmul.f32 1.0, %v3115
        %v3117 = vrcp.pop %v3110
        %v3118 = vmul.f32 1.0, %v3117
        %v3119 = vrcp.pop %v3111
        %v3120 = vmul.f32 1.0, %v3119
        %v3121 = vrcp.pop %v3112
        %v3122 = vmul.f32 1.0, %v3121
        %v3123 = vrcp.pop %v3113
        %v3124 = vmul.f32 1.0, %v3123
        %v3125 = vrcp.pop %v3114
        %v3126 = vmul.f32 1.0, %v3125
        %v3127 = vmul.f32 %v3116, 1.0614054
        %v3128 = vmul.f32 %v3118, 1.0614054
        %v3129 = vmul.f32 %v3120, 1.0614054
        %v3130 = vmul.f32 %v3122, 1.0614054
        %v3131 = vmul.f32 %v3124, 1.0614054
        %v3132 = vmul.f32 %v3126, 1.0614054
        %v3133 = vadd.f32 %v3127, -1.4531521
        %v3134 = vadd.f32 %v3128, -1.4531521
        %v3135 = vadd.f32 %v3129, -1.4531521
        %v3136 = vadd.f32 %v3130, -1.4531521
        %v3137 = vadd.f32 %v3131, -1.4531521
        %v3138 = vadd.f32 %v3132, -1.4531521
        %v3139 = vmul.f32 %v3116, %v3133
        %v3140 = vmul.f32 %v3118, %v3134
        %v3141 = vmul.f32 %v3120, %v3135
        %v3142 = vmul.f32 %v3122, %v3136
        %v3143 = vmul.f32 %v3124, %v3137
        %v3144 = vmul.f32 %v3126, %v3138
        %v3145 = vadd.f32 %v3139, 1.4214138
        %v3146 = vadd.f32 %v3140, 1.4214138
        %v3147 = vadd.f32 %v3141, 1.4214138
        %v3148 = vadd.f32 %v3142, 1.4214138
        %v3149 = vadd.f32 %v3143, 1.4214138
        %v3150 = vadd.f32 %v3144, 1.4214138
        %v3151 = vmul.f32 %v3116, %v3145
        %v3152 = vmul.f32 %v3118, %v3146
        %v3153 = vmul.f32 %v3120, %v3147
        %v3154 = vmul.f32 %v3122, %v3148
        %v3155 = vmul.f32 %v3124, %v3149
        %v3156 = vmul.f32 %v3126, %v3150
        %v3157 = vadd.f32 %v3151, -0.28449672
        %v3158 = vadd.f32 %v3152, -0.28449672
        %v3159 = vadd.f32 %v3153, -0.28449672
        %v3160 = vadd.f32 %v3154, -0.28449672
        %v3161 = vadd.f32 %v3155, -0.28449672
        %v3162 = vadd.f32 %v3156, -0.28449672
        %v3163 = vmul.f32 %v3116, %v3157
        %v3164 = vmul.f32 %v3118, %v3158
        %v3165 = vmul.f32 %v3120, %v3159
        %v3166 = vmul.f32 %v3122, %v3160
        %v3167 = vmul.f32 %v3124, %v3161
        %v3168 = vmul.f32 %v3126, %v3162
        %v3169 = vadd.f32 %v3163, 0.2548296
        %v3170 = vadd.f32 %v3164, 0.2548296
        %v3171 = vadd.f32 %v3165, 0.2548296
        %v3172 = vadd.f32 %v3166, 0.2548296
        %v3173 = vadd.f32 %v3167, 0.2548296
        %v3174 = vadd.f32 %v3168, 0.2548296
        %v3175 = vmul.f32 %v3116, %v3169
        %v3176 = vmul.f32 %v3118, %v3170
        %v3177 = vmul.f32 %v3120, %v3171
        %v3178 = vmul.f32 %v3122, %v3172
        %v3179 = vmul.f32 %v3124, %v3173
        %v3180 = vmul.f32 %v3126, %v3174
        %v3181 = vsub.f32 0.0, %v3097
        %v3182 = vsub.f32 0.0, %v3098
        %v3183 = vsub.f32 0.0, %v3099
        %v3184 = vsub.f32 0.0, %v3100
        %v3185 = vsub.f32 0.0, %v3101
        %v3186 = vsub.f32 0.0, %v3102
        %v3187 = vmul.f32 %v3181, %v3097
        %v3188 = vmul.f32 %v3182, %v3098
        %v3189 = vmul.f32 %v3183, %v3099
        %v3190 = vmul.f32 %v3184, %v3100
        %v3191 = vmul.f32 %v3185, %v3101
        %v3192 = vmul.f32 %v3186, %v3102
        %v3193 = vmul.f32 %v3187, 1.442695
        %v3194 = vpow.pop %v3193
        %v3195 = vmul.f32 %v3188, 1.442695
        %v3196 = vpow.pop %v3195
        %v3197 = vmul.f32 %v3189, 1.442695
        %v3198 = vpow.pop %v3197
        %v3199 = vmul.f32 %v3190, 1.442695
        %v3200 = vpow.pop %v3199
        %v3201 = vmul.f32 %v3191, 1.442695
        %v3202 = vpow.pop %v3201
        %v3203 = vmul.f32 %v3192, 1.442695
        %v3204 = vpow.pop %v3203
        %v3205 = vmul.f32 %v3175, %v3194
        %v3206 = vmul.f32 %v3176, %v3196
        %v3207 = vmul.f32 %v3177, %v3198
        %v3208 = vmul.f32 %v3178, %v3200
        %v3209 = vmul.f32 %v3179, %v3202
        %v3210 = vmul.f32 %v3180, %v3204
        %v3211 = vsub.f32 1.0, %v3205
        %v3212 = vsub.f32 1.0, %v3206
        %v3213 = vsub.f32 1.0, %v3207
        %v3214 = vsub.f32 1.0, %v3208
        %v3215 = vsub.f32 1.0, %v3209
        %v3216 = vsub.f32 1.0, %v3210
        %v3217 = vsub.f32 0.0, %v3211
        %v3218 = vsub.f32 0.0, %v3212
        %v3219 = vsub.f32 0.0, %v3213
        %v3220 = vsub.f32 0.0, %v3214
        %v3221 = vsub.f32 0.0, %v3215
        %v3222 = vsub.f32 0.0, %v3216
        %v3223 = vsel %vm3085, %v3211, %v3217
        %v3224 = vsel %vm3086, %v3212, %v3218
        %v3225 = vsel %vm3087, %v3213, %v3219
        %v3226 = vsel %vm3088, %v3214, %v3220
        %v3227 = vsel %vm3089, %v3215, %v3221
        %v3228 = vsel %vm3090, %v3216, %v3222
        %v3229 = vadd.f32 %v3223, 1.0
        %v3230 = vadd.f32 %v3224, 1.0
        %v3231 = vadd.f32 %v3225, 1.0
        %v3232 = vadd.f32 %v3226, 1.0
        %v3233 = vadd.f32 %v3227, 1.0
        %v3234 = vadd.f32 %v3228, 1.0
        %v3235 = vmul.f32 %v3073, %v3229
        %v3236 = vmul.f32 %v3074, %v3230
        %v3237 = vmul.f32 %v3075, %v3231
        %v3238 = vmul.f32 %v3076, %v3232
        %v3239 = vmul.f32 %v3077, %v3233
        %v3240 = vmul.f32 %v3078, %v3234
        %v3241 = vld [vmem:[%s13] sm:$0xff]
        %v3242 = vld [vmem:[%s13 + $0x8] sm:$0xff]
        %v3243 = vld [vmem:[%s13 + $0x10] sm:$0xff]
        %v3244 = vld [vmem:[%s13 + $0x18] sm:$0xff]
        %v3245 = vld [vmem:[%s13 + $0x20] sm:$0xff]
        %v3246 = vld [vmem:[%s13 + $0x28] sm:$0xff]
        %v3247 = vld [vmem:[%s13 + $0x30] sm:$0xff]
        %v3248 = vld [vmem:[%s13 + $0x38] sm:$0xff]
        %v3249 = vld [vmem:[%s14] sm:$0x1]
        %v3251 = vlaneseq
        %v3252 = vshrl.u32 %v3251, 7
        %v3253 = vsub.s32 0, %v3252
        %v3254 = vrot.slane %v3249, %v3253
        %vm3256 = vcmask 523264
        %v3258 = vsel %vm3256, %v3235, 0
        %v3261 = vsel %vm3256, %v3236, 0
        %v3264 = vsel %vm3256, %v3237, 0
        %v3267 = vsel %vm3256, %v3238, 0
        %v3270 = vsel %vm3256, %v3239, 0
        %v3273 = vsel %vm3256, %v3240, 0
        %3275 = vmatprep.subr.mxu0 0.0
        %3276 = vmatpush1.msra.mxu0 %v3241
        %3277 = vmatprep.subr.mxu0 0.0
        %3278 = vmatpush1.msra.mxu0 %v3242
        %3279 = vmatprep.subr.mxu0 0.0
        %3280 = vmatpush1.msra.mxu0 %v3243
        %3281 = vmatprep.subr.mxu0 0.0
        %3282 = vmatpush1.msra.mxu0 %v3244
        %3283 = vmatprep.subr.mxu0 0.0
        %3284 = vmatpush1.msra.mxu0 %v3245
        %3285 = vmatprep.subr.mxu0 0.0
        %3286 = vmatpush1.msra.mxu0 %v3246
        %3287 = vmatprep.subr.mxu0 0.0
        %3288 = vmatpush1.msra.mxu0 %v3247
        %3289 = vmatprep.subr.mxu0 0.0
        %3290 = vmatpush1.msra.mxu0 %v3248
        %3291 = vmatprep.subr.mxu0 0.0
        %3292 = vmatpush1.msra.mxu0 0.0
        %3293 = vmatprep.subr.mxu0 0.0
        %3294 = vmatpush1.msra.mxu0 0.0
        %3295 = vmatprep.subr.mxu0 0.0
        %3296 = vmatpush1.msra.mxu0 0.0
        %3297 = vmatprep.subr.mxu0 0.0
        %3298 = vmatpush1.msra.mxu0 0.0
        %3299 = vmatprep.subr.mxu0 0.0
        %3300 = vmatpush1.msra.mxu0 0.0
        %3301 = vmatprep.subr.mxu0 0.0
        %3302 = vmatpush1.msra.mxu0 0.0
        %3303 = vmatprep.subr.mxu0 0.0
        %3304 = vmatpush1.msra.mxu0 0.0
        %3305 = vmatprep.subr.mxu0 0.0
        %3306 = vmatpush1.msra.mxu0 0.0
        %3307 = vmatprep.subr.mxu0 0.0
        %3308 = vmatpush1.msra.mxu0 0.0
        %3309 = vmatprep.subr.mxu0 0.0
        %3310 = vmatpush1.msra.mxu0 0.0
        %3311 = vmatprep.subr.mxu0 0.0
        %3312 = vmatpush1.msra.mxu0 0.0
        %3313 = vmatprep.subr.mxu0 0.0
        %3314 = vmatpush1.msra.mxu0 0.0
        %3315 = vmatprep.subr.mxu0 0.0
        %3316 = vmatpush1.msra.mxu0 0.0
        %3317 = vmatprep.subr.mxu0 0.0
        %3318 = vmatpush1.msra.mxu0 0.0
        %3319 = vmatprep.subr.mxu0 0.0
        %3320 = vmatpush1.msra.mxu0 0.0
        %3321 = vmatprep.subr.mxu0 0.0
        %3322 = vmatpush1.msra.mxu0 0.0
        %3323 = vmatprep.subr.mxu0 0.0
        %3324 = vmatpush1.msra.mxu0 0.0
        %3325 = vmatprep.subr.mxu0 0.0
        %3326 = vmatpush1.msra.mxu0 0.0
        %3327 = vmatprep.subr.mxu0 0.0
        %3328 = vmatpush1.msra.mxu0 0.0
        %3329 = vmatprep.subr.mxu0 0.0
        %3330 = vmatpush1.msra.mxu0 0.0
        %3331 = vmatprep.subr.mxu0 0.0
        %3332 = vmatpush1.msra.mxu0 0.0
        %3333 = vmatprep.subr.mxu0 0.0
        %3334 = vmatpush1.msra.mxu0 0.0
        %3335 = vmatprep.subr.mxu0 0.0
        %3336 = vmatpush1.msra.mxu0 0.0
        %3337 = vmatprep.subr.mxu0 0.0
        %3338 = vmatpush1.msra.mxu0 0.0
        %3339 = vmatprep.mubr.f32.mxu0 0.0
        %3340 = vmatmul.mubr.f32.gmra.mrb[0].mxu0 %v3258
        %v3341 = vpop.f32.mrb[0].mxu0
        %v3342 = vadd.f32 %v3254, %v3341
        %v3343 = vpop.f32.mrb[0].mxu0
        %3344 = vmatprep.mubr.f32.mxu0 0.0
        %3345 = vmatmul.mubr.f32.gmra.mrb[0].mxu0 %v3261
        %v3346 = vpop.f32.mrb[0].mxu0
        %v3347 = vadd.f32 %v3254, %v3346
        %v3348 = vpop.f32.mrb[0].mxu0
        %3349 = vmatprep.mubr.f32.mxu0 0.0
        %3350 = vmatmul.mubr.f32.gmra.mrb[0].mxu0 %v3264
        %v3351 = vpop.f32.mrb[0].mxu0
        %v3352 = vadd.f32 %v3254, %v3351
        %v3353 = vpop.f32.mrb[0].mxu0
        %3354 = vmatprep.mubr.f32.mxu0 0.0
        %3355 = vmatmul.mubr.f32.gmra.mrb[0].mxu0 %v3267
        %v3356 = vpop.f32.mrb[0].mxu0
        %v3357 = vadd.f32 %v3254, %v3356
        %v3358 = vpop.f32.mrb[0].mxu0
        %3359 = vmatprep.mubr.f32.mxu0 0.0
        %3360 = vmatmul.mubr.f32.gmra.mrb[0].mxu0 %v3270
        %v3361 = vpop.f32.mrb[0].mxu0
        %v3362 = vadd.f32 %v3254, %v3361
        %v3363 = vpop.f32.mrb[0].mxu0
        %3364 = vmatprep.mubr.f32.mxu0 0.0
        %3365 = vmatmul.mubr.f32.gmra.mrb[0].mxu0 %v3273
        %v3366 = vpop.f32.mrb[0].mxu0
        %v3367 = vadd.f32 %v3254, %v3366
        %v3368 = vpop.f32.mrb[0].mxu0
        %3369 = vdwg.mxu0
        %v3370 = vadd.f32 %v2943, %v3342
        %v3371 = vadd.f32 %v2944, %v3347
        %v3372 = vadd.f32 %v2945, %v3352
        %v3373 = vadd.f32 %v2946, %v3357
        %v3374 = vadd.f32 %v2947, %v3362
        %v3375 = vadd.f32 %v2948, %v3367
        %v3376 = vsel %vm655, %v3370, 0.0
        %v3377 = vsel %vm655, %v3371, 0.0
        %v3378 = vadd.f32 %v3376, %v3377
        %v3379 = vsel %vm655, %v3372, 0.0
        %v3380 = vadd.f32 %v3378, %v3379
        %v3381 = vsel %vm655, %v3373, 0.0
        %v3382 = vadd.f32 %v3380, %v3381
        %v3383 = vsel %vm655, %v3374, 0.0
        %v3384 = vadd.f32 %v3382, %v3383
        %v3385 = vsel %vm655, %v3375, 0.0
        %v3386 = vadd.f32 %v3384, %v3385
        %v3387 = vrot.slane %v3386, 4
        %v3388 = vadd.f32 %v3386, %v3387
        %v3389 = vrot.slane %v3388, 2
        %v3390 = vadd.f32 %v3388, %v3389
        %v3391 = vrot.slane %v3390, 1
        %v3392 = vadd.f32 %v3390, %v3391
        %v3393 = vmul.f32 %v3392, %v2887
        %v3394 = vsub.f32 %v3370, %v3393
        %v3395 = vsub.f32 %v3371, %v3393
        %v3396 = vsub.f32 %v3372, %v3393
        %v3397 = vsub.f32 %v3373, %v3393
        %v3398 = vsub.f32 %v3374, %v3393
        %v3399 = vsub.f32 %v3375, %v3393
        %v3400 = vmul.f32 %v3394, %v3394
        %v3401 = vmul.f32 %v3395, %v3395
        %v3402 = vmul.f32 %v3396, %v3396
        %v3403 = vmul.f32 %v3397, %v3397
        %v3404 = vmul.f32 %v3398, %v3398
        %v3405 = vmul.f32 %v3399, %v3399
        %v3406 = vsel %vm655, %v3400, 0.0
        %v3407 = vsel %vm655, %v3401, 0.0
        %v3408 = vadd.f32 %v3406, %v3407
        %v3409 = vsel %vm655, %v3402, 0.0
        %v3410 = vadd.f32 %v3408, %v3409
        %v3411 = vsel %vm655, %v3403, 0.0
        %v3412 = vadd.f32 %v3410, %v3411
        %v3413 = vsel %vm655, %v3404, 0.0
        %v3414 = vadd.f32 %v3412, %v3413
        %v3415 = vsel %vm655, %v3405, 0.0
        %v3416 = vadd.f32 %v3414, %v3415
        %v3417 = vrot.slane %v3416, 4
        %v3418 = vadd.f32 %v3416, %v3417
        %v3419 = vrot.slane %v3418, 2
        %v3420 = vadd.f32 %v3418, %v3419
        %v3421 = vrot.slane %v3420, 1
        %v3422 = vadd.f32 %v3420, %v3421
        %v3423 = vmul.f32 %v3422, %v2887
        %v3424 = vadd.f32 %v3423, 1e-05
        %v3425 = vrsqrt.pop %v3424
        %v3426 = vmul.f32 %v3394, %v3425
        %v3427 = vmul.f32 %v3395, %v3425
        %v3428 = vmul.f32 %v3396, %v3425
        %v3429 = vmul.f32 %v3397, %v3425
        %v3430 = vmul.f32 %v3398, %v3425
        %v3431 = vmul.f32 %v3399, %v3425
        %v3432 = vld [vmem:[%s16] sm:$0x1]
        %v3433 = vlaneseq
        %v3434 = vshrl.u32 %v3433, 7
        %v3435 = vsub.s32 0, %v3434
        %v3436 = vrot.slane %v3432, %v3435
        %v3437 = vmul.f32 %v3426, %v3436
        %v3438 = vmul.f32 %v3427, %v3436
        %v3439 = vmul.f32 %v3428, %v3436
        %v3440 = vmul.f32 %v3429, %v3436
        %v3441 = vmul.f32 %v3430, %v3436
        %v3442 = vmul.f32 %v3431, %v3436
        %v3443 = vld [vmem:[%s16 + $0x1] sm:$0x1]
        %v3444 = vlaneseq
        %v3445 = vshrl.u32 %v3444, 7
        %v3446 = vsub.s32 0, %v3445
        %v3447 = vrot.slane %v3443, %v3446
        %v3448 = vadd.f32 %v3437, %v3447
        %v3449 = vadd.f32 %v3438, %v3447
        %v3450 = vadd.f32 %v3439, %v3447
        %v3451 = vadd.f32 %v3440, %v3447
        %v3452 = vadd.f32 %v3441, %v3447
        %v3453 = vadd.f32 %v3442, %v3447
        %3454 = vst.msk [vmem:[%s624] sm:$0xff] %vm655, %v3448
        %3455 = vst.msk [vmem:[%s624 + $0x8] sm:$0xff] %vm655, %v3449
        %3456 = vst.msk [vmem:[%s624 + $0x10] sm:$0xff] %vm655, %v3450
        %3457 = vst.msk [vmem:[%s624 + $0x18] sm:$0xff] %vm655, %v3451
        %3458 = vst.msk [vmem:[%s624 + $0x20] sm:$0xff] %vm655, %v3452
        %3459 = vst.msk [vmem:[%s624 + $0x28] sm:$0xff] %vm655, %v3453
        %s3460 = smul.u32 6, %s43
        %p3461 = scmp.lt.s32.totalorder %s3460, 17
        %s3462 = scalar_select %p3461, %s3460, 17
        %s3463 = smul.addr %s3462, 8
        %s3464 = scalar_lea.vmem %s17, %s3463
        %s3465 = sand.u32 %s416, 1
        %s3466 = scalar_lea.sflag [#allocation6], %s3465
        %s3467 = sand.u32 %s416, 1
        %s3468 = smul.addr %s3467, 192
        %s3469 = scalar_lea.vmem [#allocation5], %s3468
        // Predicated region
        $region81: #{cdtsti_forward.5} parent=79 // pred_check
          %p3470 = pneg %p400
        $region82: #{cdtsti_forward.5} parent=79 // pred_check_branch
          %3472 = sbr.rel (%p3470) target = $region84
        $region83: #{cdtsti_forward.5} parent=79 // pred_region
          %s3473 = smul.u32 6, %s43
        $region84: #{cdtsti_forward.5} parent=79 // pred_fallthru
          _
        // Predicated region
        $region85: #{cdtsti_forward.5} parent=79 // pred_check
          %p3474 = pneg %p426
        $region86: #{cdtsti_forward.5} parent=79 // pred_check_branch
          %3476 = sbr.rel (%p3474) target = $region88
        $region87: #{cdtsti_forward.5} parent=79 // pred_region
          %s3478 = ssub.s32 3072, 3072
          %3479 = vsyncadd %s3466, %s3478
          %s3480 = smul.addr %s43, 24
          %s3481 = smul.addr %s3480, 128
          %s3482 = scalar_lea.hbm %s18, %s3481
          %s3483 = sshll.u32 %s3469, 4
          %s3484 = int_to_ptr.vmem [resolvable:$true] %s3483
          %3489 = dma.vmem_to_hbm [thread:$0]  %s3484, 3072, %s3482, %s3466, 128, 128, 8
        $region88: #{cdtsti_forward.5} parent=79 // pred_fallthru
          _
      $region80: #{cdtsti_forward.5} parent=5 // pred_fallthru
        _
      %p3490 = scmp.le.s32.totalorder 2, %s38
      // Predicated region
      $region89: #{cdtsti_forward.5} parent=5 // pred_check
        %p3491 = pneg %p3490
      $region90: #{cdtsti_forward.5} parent=5 // pred_check_branch
        %3493 = sbr.rel (%p3491) target = $region92
      $region91: #{cdtsti_forward.5} parent=5 // pred_region
        %s3494 = ssub.s32 %s38, 2
        // Predicated region
        $region93: #{cdtsti_forward.5} parent=91 // pred_check
          %p3495 = pneg %p406
        $region94: #{cdtsti_forward.5} parent=91 // pred_check_branch
          %3497 = sbr.rel (%p3495) target = $region96
        $region95: #{cdtsti_forward.5} parent=91 // pred_region
          %s3498 = smul.u32 6, %s44
          %p3499 = scmp.lt.s32.totalorder %s3498, 17
          %s3500 = scalar_select %p3499, %s3498, 17
          %s3501 = smul.addr %s3500, 8
          %s3502 = scalar_lea.vmem %s17, %s3501
        $region96: #{cdtsti_forward.5} parent=91 // pred_fallthru
          _
        // Predicated region
        $region97: #{cdtsti_forward.5} parent=91 // pred_check
          %p3503 = pneg %p432
        $region98: #{cdtsti_forward.5} parent=91 // pred_check_branch
          %3505 = sbr.rel (%p3503) target = $region100
        $region99: #{cdtsti_forward.5} parent=91 // pred_region
          %s3506 = sand.u32 %s417, 1
          %s3507 = scalar_lea.sflag [#allocation6], %s3506
          %s3508 = sand.u32 %s417, 1
          %s3509 = smul.addr %s3508, 192
          %s3510 = scalar_lea.vmem [#allocation5], %s3509
          %3511 = dma.done %s3507, 3072
        $region100: #{cdtsti_forward.5} parent=91 // pred_fallthru
          _
      $region92: #{cdtsti_forward.5} parent=5 // pred_fallthru
        _
    $region6: #{cdtsti_forward.5} parent=1 // loop_footer
      %s42 = sadd.s32 1, %s38
    $region7: #{cdtsti_forward.5} parent=1 // loop_footer_branch
      %37 = sbr.rel target = $region3
    $region8: #{cdtsti_forward.5} parent=1 // loop_exit
      _
    %3512 = vsyncpa [#allocation6], 1
    %s3513 = scalar_lea.sflag [#allocation6], 1
    %3514 = vsyncpa %s3513, 1

</llo_original>
